<compile_context>
chip_gen: v6e
topology: v6e:2x2x1
jax: 0.10.0
libtpu: 0.0.40
codegen_flags: <defaults>
</compile_context>

<pallas_src>
import functools

import jax
import jax.numpy as jnp
from jax.experimental import pallas as pl
from jax.experimental.pallas import tpu as pltpu


# ----------------------------------------------------------------------------
# Static model configuration + per-GEMM tiling metadata (pure Python, so it is
# static under jit; the param pytree passed to jit contains only arrays).
# ----------------------------------------------------------------------------
CONV_CFGS = [  # (Cout, Cin, kh, kw, stride, pad)
    (64, 3, 11, 11, 4, 2),
    (192, 64, 5, 5, 1, 2),
    (384, 192, 3, 3, 1, 1),
    (256, 384, 3, 3, 1, 1),
    (256, 256, 3, 3, 1, 1),
]
FC_CFGS = [(4096, 256 * 6 * 6), (4096, 4096), (2, 4096)]  # (Cout, Cin)


def _round_up(x, m):
    return (x + m - 1) // m * m


def _gemm_meta(K, N, tk_cap=512, tn_cap=512):
    tk = min(_round_up(K, 128), tk_cap)
    tn = min(_round_up(N, 128), tn_cap)
    return dict(K=K, N=N, tk=tk, tn=tn, Kp=_round_up(K, tk), Np=_round_up(N, tn))


CONV_META = []
for (_cout, _cin, _kh, _kw, _s, _p) in CONV_CFGS:
    _m = _gemm_meta(_kh * _kw * _cin, _cout)
    _m.update(kh=_kh, kw=_kw, stride=_s, pad=_p)
    CONV_META.append(_m)
FC_META = [_gemm_meta(cin, cout) for (cout, cin) in FC_CFGS]


# ----------------------------------------------------------------------------
# Pallas kernel: tiled GEMM with f32 accumulator, fused bias add + optional ReLU.
# ----------------------------------------------------------------------------
def _gemm_bias_act_kernel(a_ref, b_ref, bias_ref, o_ref, acc_ref, *, apply_relu):
    k = pl.program_id(2)

    @pl.when(k == 0)
    def _():
        acc_ref[...] = jnp.zeros_like(acc_ref)

    acc_ref[...] += jnp.dot(
        a_ref[...], b_ref[...], preferred_element_type=jnp.float32
    )

    @pl.when(k == pl.num_programs(2) - 1)
    def _():
        out = acc_ref[...] + bias_ref[...]  # (tm, tn) + (1, tn) broadcast, f32
        if apply_relu:
            out = jnp.maximum(out, 0.0)
        o_ref[...] = out.astype(o_ref.dtype)


def gemm_bias_act(a, w_p, bias_p, meta, apply_relu, out_dtype=jnp.bfloat16):
    """a: [M, K] (any float dtype), w_p: [Kp, Np] bf16 pre-padded,
    bias_p: [1, Np] f32 pre-padded -> [M, N] in out_dtype."""
    M, K = a.shape
    assert K == meta["K"], (K, meta["K"])
    Kp, Np = w_p.shape
    tk, tn, N = meta["tk"], meta["tn"], meta["N"]

    tm = min(_round_up(M, 16), 128)  # 16-aligned for bf16 sublane packing
    Mp = _round_up(M, tm)
    a_p = jnp.pad(a, ((0, Mp - M), (0, Kp - K))).astype(jnp.bfloat16)

    out_itemsize = 2 if out_dtype == jnp.bfloat16 else 4
    cost = pl.CostEstimate(
        flops=2 * M * N * K,
        transcendentals=0,
        bytes_accessed=Mp * Kp * 2 + Kp * Np * 2 + Np * 4 + Mp * Np * out_itemsize,
    )

    out = pl.pallas_call(
        functools.partial(_gemm_bias_act_kernel, apply_relu=apply_relu),
        out_shape=jax.ShapeDtypeStruct((Mp, Np), out_dtype),
        grid_spec=pltpu.PrefetchScalarGridSpec(
            num_scalar_prefetch=0,
            grid=(Mp // tm, Np // tn, Kp // tk),
            in_specs=[
                pl.BlockSpec((tm, tk), lambda i, j, k: (i, k)),
                pl.BlockSpec((tk, tn), lambda i, j, k: (k, j)),
                pl.BlockSpec((1, tn), lambda i, j, k: (0, j)),
            ],
            out_specs=pl.BlockSpec((tm, tn), lambda i, j, k: (i, j)),
            scratch_shapes=[pltpu.VMEM((tm, tn), jnp.float32)],
        ),
        compiler_params=pltpu.CompilerParams(
            dimension_semantics=("parallel", "parallel", "arbitrary")
        ),
        cost_estimate=cost,
    )(a_p, w_p, bias_p)
    return out[:M, :N]


# ----------------------------------------------------------------------------
# JAX glue (NHWC throughout the feature extractor).
# ----------------------------------------------------------------------------
def _im2col_nhwc(x, kh, kw, stride, pad):
    """x: (B, H, W, C) -> (B*Ho*Wo, kh*kw*C) with K ordered (kh, kw, C)."""
    x_p = jnp.pad(x, ((0, 0), (pad, pad), (pad, pad), (0, 0)))
    B, Hp, Wp, C = x_p.shape
    Ho = (Hp - kh) // stride + 1
    Wo = (Wp - kw) // stride + 1
    patches = []
    for i in range(kh):
        for j in range(kw):
            patches.append(
                x_p[
                    :,
                    i : i + (Ho - 1) * stride + 1 : stride,
                    j : j + (Wo - 1) * stride + 1 : stride,
                    :,
                ]
            )  # (B, Ho, Wo, C)
    col = jnp.stack(patches, axis=3)  # (B, Ho, Wo, kh*kw, C) -- lane-contiguous C
    return col.reshape(B * Ho * Wo, kh * kw * C), Ho, Wo


def conv2d_relu(x, w_p, bias_p, meta, apply_relu=True):
    """x: (B, H, W, Cin) NHWC -> (B, Ho, Wo, Cout) NHWC, bf16."""
    B = x.shape[0]
    col, Ho, Wo = _im2col_nhwc(x, meta["kh"], meta["kw"], meta["stride"], meta["pad"])
    out = gemm_bias_act(col, w_p, bias_p, meta, apply_relu, out_dtype=jnp.bfloat16)
    return out.reshape(B, Ho, Wo, meta["N"])


def maxpool2d(x, k=3, s=2):
    """x: (B, H, W, C) NHWC."""
    B, H, W, C = x.shape
    Ho = (H - k) // s + 1
    Wo = (W - k) // s + 1
    out = None
    for i in range(k):
        for j in range(k):
            patch = x[:, i : i + (Ho - 1) * s + 1 : s, j : j + (Wo - 1) * s + 1 : s, :]
            out = patch if out is None else jnp.maximum(out, patch)
    return out


def adaptive_avg_pool2d(x, out_h=6, out_w=6):
    """x: (B, H, W, C) NHWC -> (B, out_h, out_w, C)."""
    B, H, W, C = x.shape
    rows = []
    for i in range(out_h):
        hs, he = (i * H) // out_h, -(-((i + 1) * H) // out_h)
        cols = []
        for j in range(out_w):
            ws, we = (j * W) // out_w, -(-((j + 1) * W) // out_w)
            cols.append(jnp.mean(x[:, hs:he, ws:we, :], axis=(1, 2)))
        rows.append(jnp.stack(cols, axis=1))  # (B, out_w, C)
    return jnp.stack(rows, axis=1)  # (B, out_h, out_w, C)


# ----------------------------------------------------------------------------
# Parameters: PyTorch-layout master weights + one-time GEMM-ready prep.
# ----------------------------------------------------------------------------
def init_params(key):
    params = {}
    keys = jax.random.split(key, len(CONV_CFGS) + len(FC_CFGS))
    for n, (cout, cin, kh, kw, _, _) in enumerate(CONV_CFGS):
        fan_in = cin * kh * kw
        params[f"conv{n}_w"] = (
            jax.random.normal(keys[n], (cout, cin, kh, kw), jnp.float32)
            * (2.0 / fan_in) ** 0.5
        )
        params[f"conv{n}_b"] = jnp.zeros((cout,), jnp.float32)
    for n, (cout, cin) in enumerate(FC_CFGS):
        params[f"fc{n}_w"] = (
            jax.random.normal(keys[len(CONV_CFGS) + n], (cout, cin), jnp.float32)
            * (2.0 / cin) ** 0.5
        )
        params[f"fc{n}_b"] = jnp.zeros((cout,), jnp.float32)
    return params


def prepare_params(params):
    """One-time: transpose/reshape -> [K, N], pad to tile multiples, cast to bf16."""
    prepped = {}
    for n, meta in enumerate(CONV_META):
        cout, cin, kh, kw, _, _ = CONV_CFGS[n]
        w = params[f"conv{n}_w"]  # (Cout, Cin, kh, kw)
        # K ordering (kh, kw, Cin) to match NHWC im2col.
        w_mat = jnp.transpose(w, (2, 3, 1, 0)).reshape(kh * kw * cin, cout)
        prepped[f"conv{n}_w"] = jnp.pad(
            w_mat, ((0, meta["Kp"] - meta["K"]), (0, meta["Np"] - meta["N"]))
        ).astype(jnp.bfloat16)
        prepped[f"conv{n}_b"] = jnp.pad(
            params[f"conv{n}_b"].reshape(1, -1), ((0, 0), (0, meta["Np"] - meta["N"]))
        ).astype(jnp.float32)
    for n, meta in enumerate(FC_META):
        w_mat = params[f"fc{n}_w"].T  # (Cin, Cout)
        prepped[f"fc{n}_w"] = jnp.pad(
            w_mat, ((0, meta["Kp"] - meta["K"]), (0, meta["Np"] - meta["N"]))
        ).astype(jnp.bfloat16)
        prepped[f"fc{n}_b"] = jnp.pad(
            params[f"fc{n}_b"].reshape(1, -1), ((0, 0), (0, meta["Np"] - meta["N"]))
        ).astype(jnp.float32)
    return prepped


# ----------------------------------------------------------------------------
# Forward (eval semantics: Dropout == identity).
# ----------------------------------------------------------------------------
def forward(p, x):
    # NCHW (PyTorch) -> NHWC once.
    x = jnp.transpose(x, (0, 2, 3, 1))
    # features (self.in_f)
    x = conv2d_relu(x, p["conv0_w"], p["conv0_b"], CONV_META[0])
    x = maxpool2d(x, 3, 2)
    x = conv2d_relu(x, p["conv1_w"], p["conv1_b"], CONV_META[1])
    x = maxpool2d(x, 3, 2)
    x = conv2d_relu(x, p["conv2_w"], p["conv2_b"], CONV_META[2])
    x = conv2d_relu(x, p["conv3_w"], p["conv3_b"], CONV_META[3])
    x = conv2d_relu(x, p["conv4_w"], p["conv4_b"], CONV_META[4])
    x = maxpool2d(x, 3, 2)
    # avgpool + flatten (PyTorch flattens NCHW, i.e. channel-major).
    x = adaptive_avg_pool2d(x, 6, 6)  # (B, 6, 6, C)
    x = jnp.transpose(x, (0, 3, 1, 2)).reshape(x.shape[0], -1)  # (B, 256*6*6)
    # classifier (self.cla); Dropout is identity in eval mode.
    x = gemm_bias_act(x, p["fc0_w"], p["fc0_b"], FC_META[0], True, jnp.bfloat16)
    x = gemm_bias_act(x, p["fc1_w"], p["fc1_b"], FC_META[1], True, jnp.bfloat16)
    x = gemm_bias_act(x, p["fc2_w"], p["fc2_b"], FC_META[2], False, jnp.float32)
    return x


if __name__ == "__main__":
    key = jax.random.PRNGKey(0)
    pkey, xkey = jax.random.split(key)
    params = init_params(pkey)
    prepped = prepare_params(params)  # one-time weight prep (transpose/pad/bf16)
    # Small input consistent with the module's stride/pool pipeline (NCHW).
    x = jax.random.normal(xkey, (2, 3, 63, 63), jnp.float32)

    fwd = jax.jit(forward)
    out = fwd(prepped, x)
    out = jax.block_until_ready(out)
    assert out.shape == (2, 2), out.shape
    assert bool(jnp.all(jnp.isfinite(out)))
    print("KERNEL_OK")
</pallas_src>

<mosaic_0001>
module attributes {stable_mosaic.version = 11 : i64} {
  func.func @_gemm_bias_act_kernel(%arg0: i32, %arg1: i32, %arg2: i32, %arg3: memref<128x384xbf16, #tpu.memory_space<vmem>>, %arg4: memref<384x128xbf16, #tpu.memory_space<vmem>>, %arg5: memref<1x128xf32, #tpu.memory_space<vmem>>, %arg6: memref<128x128xbf16, #tpu.memory_space<vmem>>, %arg7: memref<128x128xf32, #tpu.memory_space<vmem>>) attributes {dimension_semantics = [#tpu.dimension_semantics<parallel>, #tpu.dimension_semantics<parallel>, #tpu.dimension_semantics<arbitrary>], iteration_bounds = array<i64: 4, 1, 1>, scalar_prefetch = 0 : i64, scratch_operands = 1 : i64, tpu.core_type = #tpu.core_type<tc>, window_params = [{transform_indices = @transform_0, window_bounds = array<i64: 128, 384>}, {transform_indices = @transform_1, window_bounds = array<i64: 384, 128>}, {transform_indices = @transform_2, window_bounds = array<i64: 1, 128>}, {transform_indices = @transform_3, window_bounds = array<i64: 128, 128>}]} {
    %c0_i32 = arith.constant 0 : i32
    %0 = arith.cmpi eq, %arg2, %c0_i32 : i32
    %1 = arith.extui %0 : i1 to i32
    %c0_i32_0 = arith.constant 0 : i32
    %2 = arith.cmpi ne, %1, %c0_i32_0 : i32
    scf.if %2 {
      %cst_10 = arith.constant 0.000000e+00 : f32
      %12 = vector.broadcast %cst_10 : f32 to vector<128x128xf32>
      %c0_11 = arith.constant 0 : index
      %c0_12 = arith.constant 0 : index
      %13 = vector.load %arg7[%c0_11, %c0_12] : memref<128x128xf32, #tpu.memory_space<vmem>>, vector<128x128xf32>
      tpu.vector_store %arg7[%c0_11, %c0_12], %12 {strides = array<i32>} : memref<128x128xf32, #tpu.memory_space<vmem>>, vector<128x128xf32>,
    } else {
    }
    %c0 = arith.constant 0 : index
    %c0_1 = arith.constant 0 : index
    %3 = vector.load %arg7[%c0, %c0_1] : memref<128x128xf32, #tpu.memory_space<vmem>>, vector<128x128xf32>
    %c0_2 = arith.constant 0 : index
    %c0_3 = arith.constant 0 : index
    %4 = vector.load %arg3[%c0_2, %c0_3] : memref<128x384xbf16, #tpu.memory_space<vmem>>, vector<128x384xbf16>
    %c0_4 = arith.constant 0 : index
    %c0_5 = arith.constant 0 : index
    %5 = vector.load %arg4[%c0_4, %c0_5] : memref<384x128xbf16, #tpu.memory_space<vmem>>, vector<384x128xbf16>
    %cst = arith.constant dense<0.000000e+00> : vector<128x128xf32>
    %6 = tpu.matmul %4, %5, %cst {dimension_numbers = #tpu.dot_dimension_numbers<[1], [0], [0], [1], [0, 0, 1, 1], [], []>} : vector<128x384xbf16>, vector<384x128xbf16>, vector<128x128xf32> -> vector<128x128xf32>
    %7 = arith.addf %3, %6 : vector<128x128xf32>
    %c0_6 = arith.constant 0 : index
    %c0_7 = arith.constant 0 : index
    %8 = vector.load %arg7[%c0_6, %c0_7] : memref<128x128xf32, #tpu.memory_space<vmem>>, vector<128x128xf32>
    tpu.vector_store %arg7[%c0_6, %c0_7], %7 {strides = array<i32>} : memref<128x128xf32, #tpu.memory_space<vmem>>, vector<128x128xf32>,
    %c0_i32_8 = arith.constant 0 : i32
    %9 = arith.cmpi eq, %arg2, %c0_i32_8 : i32
    %10 = arith.extui %9 : i1 to i32
    %c0_i32_9 = arith.constant 0 : i32
    %11 = arith.cmpi ne, %10, %c0_i32_9 : i32
    scf.if %11 {
      %c0_10 = arith.constant 0 : index
      %c0_11 = arith.constant 0 : index
      %12 = vector.load %arg7[%c0_10, %c0_11] : memref<128x128xf32, #tpu.memory_space<vmem>>, vector<128x128xf32>
      %c0_12 = arith.constant 0 : index
      %c0_13 = arith.constant 0 : index
      %13 = vector.load %arg5[%c0_12, %c0_13] : memref<1x128xf32, #tpu.memory_space<vmem>>, vector<1x128xf32>
      %14 = vector.broadcast %13 : vector<1x128xf32> to vector<128x128xf32>
      %15 = arith.addf %12, %14 : vector<128x128xf32>
      %cst_14 = arith.constant 0.000000e+00 : f32
      %16 = vector.broadcast %cst_14 : f32 to vector<128x128xf32>
      %17 = arith.maximumf %15, %16 : vector<128x128xf32>
      %18 = arith.truncf %17 : vector<128x128xf32> to vector<128x128xbf16>
      %c0_15 = arith.constant 0 : index
      %c0_16 = arith.constant 0 : index
      %19 = vector.load %arg6[%c0_15, %c0_16] : memref<128x128xbf16, #tpu.memory_space<vmem>>, vector<128x128xbf16>
      tpu.vector_store %arg6[%c0_15, %c0_16], %18 {strides = array<i32>} : memref<128x128xbf16, #tpu.memory_space<vmem>>, vector<128x128xbf16>,
    } else {
    }
    return
  }
  func.func @transform_0(%arg0: i32, %arg1: i32, %arg2: i32) -> (i32, i32) {
    %c0_i32 = arith.constant 0 : i32
    return %arg0, %arg2 : i32, i32
  }
  func.func @transform_1(%arg0: i32, %arg1: i32, %arg2: i32) -> (i32, i32) {
    %c0_i32 = arith.constant 0 : i32
    return %arg2, %arg1 : i32, i32
  }
  func.func @transform_2(%arg0: i32, %arg1: i32, %arg2: i32) -> (i32, i32) {
    %c0_i32 = arith.constant 0 : i32
    %c0_i32_0 = arith.constant 0 : i32
    return %c0_i32, %arg1 : i32, i32
  }
  func.func @transform_3(%arg0: i32, %arg1: i32, %arg2: i32) -> (i32, i32) {
    %c0_i32 = arith.constant 0 : i32
    return %arg0, %arg1 : i32, i32
  }
}

module attributes {stable_mosaic.version = 11 : i64} {
  func.func @_gemm_bias_act_kernel(%arg0: i32, %arg1: i32, %arg2: i32, %arg3: memref<112x512xbf16, #tpu.memory_space<vmem>>, %arg4: memref<512x256xbf16, #tpu.memory_space<vmem>>, %arg5: memref<1x256xf32, #tpu.memory_space<vmem>>, %arg6: memref<112x256xbf16, #tpu.memory_space<vmem>>, %arg7: memref<112x256xf32, #tpu.memory_space<vmem>>) attributes {dimension_semantics = [#tpu.dimension_semantics<parallel>, #tpu.dimension_semantics<parallel>, #tpu.dimension_semantics<arbitrary>], iteration_bounds = array<i64: 1, 1, 4>, scalar_prefetch = 0 : i64, scratch_operands = 1 : i64, tpu.core_type = #tpu.core_type<tc>, window_params = [{transform_indices = @transform_0, window_bounds = array<i64: 112, 512>}, {transform_indices = @transform_1, window_bounds = array<i64: 512, 256>}, {transform_indices = @transform_2, window_bounds = array<i64: 1, 256>}, {transform_indices = @transform_3, window_bounds = array<i64: 112, 256>}]} {
    %c0_i32 = arith.constant 0 : i32
    %0 = arith.cmpi eq, %arg2, %c0_i32 : i32
    %1 = arith.extui %0 : i1 to i32
    %c0_i32_0 = arith.constant 0 : i32
    %2 = arith.cmpi ne, %1, %c0_i32_0 : i32
    scf.if %2 {
      %cst_9 = arith.constant 0.000000e+00 : f32
      %12 = vector.broadcast %cst_9 : f32 to vector<112x256xf32>
      %c0_10 = arith.constant 0 : index
      %c0_11 = arith.constant 0 : index
      %13 = vector.load %arg7[%c0_10, %c0_11] : memref<112x256xf32, #tpu.memory_space<vmem>>, vector<112x256xf32>
      tpu.vector_store %arg7[%c0_10, %c0_11], %12 {strides = array<i32>} : memref<112x256xf32, #tpu.memory_space<vmem>>, vector<112x256xf32>,
    } else {
    }
    %c0 = arith.constant 0 : index
    %c0_1 = arith.constant 0 : index
    %3 = vector.load %arg7[%c0, %c0_1] : memref<112x256xf32, #tpu.memory_space<vmem>>, vector<112x256xf32>
    %c0_2 = arith.constant 0 : index
    %c0_3 = arith.constant 0 : index
    %4 = vector.load %arg3[%c0_2, %c0_3] : memref<112x512xbf16, #tpu.memory_space<vmem>>, vector<112x512xbf16>
    %c0_4 = arith.constant 0 : index
    %c0_5 = arith.constant 0 : index
    %5 = vector.load %arg4[%c0_4, %c0_5] : memref<512x256xbf16, #tpu.memory_space<vmem>>, vector<512x256xbf16>
    %cst = arith.constant dense<0.000000e+00> : vector<112x256xf32>
    %6 = tpu.matmul %4, %5, %cst {dimension_numbers = #tpu.dot_dimension_numbers<[1], [0], [0], [1], [0, 0, 1, 1], [], []>} : vector<112x512xbf16>, vector<512x256xbf16>, vector<112x256xf32> -> vector<112x256xf32>
    %7 = arith.addf %3, %6 : vector<112x256xf32>
    %c0_6 = arith.constant 0 : index
    %c0_7 = arith.constant 0 : index
    %8 = vector.load %arg7[%c0_6, %c0_7] : memref<112x256xf32, #tpu.memory_space<vmem>>, vector<112x256xf32>
    tpu.vector_store %arg7[%c0_6, %c0_7], %7 {strides = array<i32>} : memref<112x256xf32, #tpu.memory_space<vmem>>, vector<112x256xf32>,
    %c3_i32 = arith.constant 3 : i32
    %9 = arith.cmpi eq, %arg2, %c3_i32 : i32
    %10 = arith.extui %9 : i1 to i32
    %c0_i32_8 = arith.constant 0 : i32
    %11 = arith.cmpi ne, %10, %c0_i32_8 : i32
    scf.if %11 {
      %c0_9 = arith.constant 0 : index
      %c0_10 = arith.constant 0 : index
      %12 = vector.load %arg7[%c0_9, %c0_10] : memref<112x256xf32, #tpu.memory_space<vmem>>, vector<112x256xf32>
      %c0_11 = arith.constant 0 : index
      %c0_12 = arith.constant 0 : index
      %13 = vector.load %arg5[%c0_11, %c0_12] : memref<1x256xf32, #tpu.memory_space<vmem>>, vector<1x256xf32>
      %14 = vector.broadcast %13 : vector<1x256xf32> to vector<112x256xf32>
      %15 = arith.addf %12, %14 : vector<112x256xf32>
      %cst_13 = arith.constant 0.000000e+00 : f32
      %16 = vector.broadcast %cst_13 : f32 to vector<112x256xf32>
      %17 = arith.maximumf %15, %16 : vector<112x256xf32>
      %18 = arith.truncf %17 : vector<112x256xf32> to vector<112x256xbf16>
      %c0_14 = arith.constant 0 : index
      %c0_15 = arith.constant 0 : index
      %19 = vector.load %arg6[%c0_14, %c0_15] : memref<112x256xbf16, #tpu.memory_space<vmem>>, vector<112x256xbf16>
      tpu.vector_store %arg6[%c0_14, %c0_15], %18 {strides = array<i32>} : memref<112x256xbf16, #tpu.memory_space<vmem>>, vector<112x256xbf16>,
    } else {
    }
    return
  }
  func.func @transform_0(%arg0: i32, %arg1: i32, %arg2: i32) -> (i32, i32) {
    %c0_i32 = arith.constant 0 : i32
    return %arg0, %arg2 : i32, i32
  }
  func.func @transform_1(%arg0: i32, %arg1: i32, %arg2: i32) -> (i32, i32) {
    %c0_i32 = arith.constant 0 : i32
    return %arg2, %arg1 : i32, i32
  }
  func.func @transform_2(%arg0: i32, %arg1: i32, %arg2: i32) -> (i32, i32) {
    %c0_i32 = arith.constant 0 : i32
    %c0_i32_0 = arith.constant 0 : i32
    return %c0_i32, %arg1 : i32, i32
  }
  func.func @transform_3(%arg0: i32, %arg1: i32, %arg2: i32) -> (i32, i32) {
    %c0_i32 = arith.constant 0 : i32
    return %arg0, %arg1 : i32, i32
  }
}

module attributes {stable_mosaic.version = 11 : i64} {
  func.func @_gemm_bias_act_kernel(%arg0: i32, %arg1: i32, %arg2: i32, %arg3: memref<32x512xbf16, #tpu.memory_space<vmem>>, %arg4: memref<512x384xbf16, #tpu.memory_space<vmem>>, %arg5: memref<1x384xf32, #tpu.memory_space<vmem>>, %arg6: memref<32x384xbf16, #tpu.memory_space<vmem>>, %arg7: memref<32x384xf32, #tpu.memory_space<vmem>>) attributes {dimension_semantics = [#tpu.dimension_semantics<parallel>, #tpu.dimension_semantics<parallel>, #tpu.dimension_semantics<arbitrary>], iteration_bounds = array<i64: 1, 1, 4>, scalar_prefetch = 0 : i64, scratch_operands = 1 : i64, tpu.core_type = #tpu.core_type<tc>, window_params = [{transform_indices = @transform_0, window_bounds = array<i64: 32, 512>}, {transform_indices = @transform_1, window_bounds = array<i64: 512, 384>}, {transform_indices = @transform_2, window_bounds = array<i64: 1, 384>}, {transform_indices = @transform_3, window_bounds = array<i64: 32, 384>}]} {
    %c0_i32 = arith.constant 0 : i32
    %0 = arith.cmpi eq, %arg2, %c0_i32 : i32
    %1 = arith.extui %0 : i1 to i32
    %c0_i32_0 = arith.constant 0 : i32
    %2 = arith.cmpi ne, %1, %c0_i32_0 : i32
    scf.if %2 {
      %cst_9 = arith.constant 0.000000e+00 : f32
      %12 = vector.broadcast %cst_9 : f32 to vector<32x384xf32>
      %c0_10 = arith.constant 0 : index
      %c0_11 = arith.constant 0 : index
      %13 = vector.load %arg7[%c0_10, %c0_11] : memref<32x384xf32, #tpu.memory_space<vmem>>, vector<32x384xf32>
      tpu.vector_store %arg7[%c0_10, %c0_11], %12 {strides = array<i32>} : memref<32x384xf32, #tpu.memory_space<vmem>>, vector<32x384xf32>,
    } else {
    }
    %c0 = arith.constant 0 : index
    %c0_1 = arith.constant 0 : index
    %3 = vector.load %arg7[%c0, %c0_1] : memref<32x384xf32, #tpu.memory_space<vmem>>, vector<32x384xf32>
    %c0_2 = arith.constant 0 : index
    %c0_3 = arith.constant 0 : index
    %4 = vector.load %arg3[%c0_2, %c0_3] : memref<32x512xbf16, #tpu.memory_space<vmem>>, vector<32x512xbf16>
    %c0_4 = arith.constant 0 : index
    %c0_5 = arith.constant 0 : index
    %5 = vector.load %arg4[%c0_4, %c0_5] : memref<512x384xbf16, #tpu.memory_space<vmem>>, vector<512x384xbf16>
    %cst = arith.constant dense<0.000000e+00> : vector<32x384xf32>
    %6 = tpu.matmul %4, %5, %cst {dimension_numbers = #tpu.dot_dimension_numbers<[1], [0], [0], [1], [0, 0, 1, 1], [], []>} : vector<32x512xbf16>, vector<512x384xbf16>, vector<32x384xf32> -> vector<32x384xf32>
    %7 = arith.addf %3, %6 : vector<32x384xf32>
    %c0_6 = arith.constant 0 : index
    %c0_7 = arith.constant 0 : index
    %8 = vector.load %arg7[%c0_6, %c0_7] : memref<32x384xf32, #tpu.memory_space<vmem>>, vector<32x384xf32>
    tpu.vector_store %arg7[%c0_6, %c0_7], %7 {strides = array<i32>} : memref<32x384xf32, #tpu.memory_space<vmem>>, vector<32x384xf32>,
    %c3_i32 = arith.constant 3 : i32
    %9 = arith.cmpi eq, %arg2, %c3_i32 : i32
    %10 = arith.extui %9 : i1 to i32
    %c0_i32_8 = arith.constant 0 : i32
    %11 = arith.cmpi ne, %10, %c0_i32_8 : i32
    scf.if %11 {
      %c0_9 = arith.constant 0 : index
      %c0_10 = arith.constant 0 : index
      %12 = vector.load %arg7[%c0_9, %c0_10] : memref<32x384xf32, #tpu.memory_space<vmem>>, vector<32x384xf32>
      %c0_11 = arith.constant 0 : index
      %c0_12 = arith.constant 0 : index
      %13 = vector.load %arg5[%c0_11, %c0_12] : memref<1x384xf32, #tpu.memory_space<vmem>>, vector<1x384xf32>
      %14 = vector.broadcast %13 : vector<1x384xf32> to vector<32x384xf32>
      %15 = arith.addf %12, %14 : vector<32x384xf32>
      %cst_13 = arith.constant 0.000000e+00 : f32
      %16 = vector.broadcast %cst_13 : f32 to vector<32x384xf32>
      %17 = arith.maximumf %15, %16 : vector<32x384xf32>
      %18 = arith.truncf %17 : vector<32x384xf32> to vector<32x384xbf16>
      %c0_14 = arith.constant 0 : index
      %c0_15 = arith.constant 0 : index
      %19 = vector.load %arg6[%c0_14, %c0_15] : memref<32x384xbf16, #tpu.memory_space<vmem>>, vector<32x384xbf16>
      tpu.vector_store %arg6[%c0_14, %c0_15], %18 {strides = array<i32>} : memref<32x384xbf16, #tpu.memory_space<vmem>>, vector<32x384xbf16>,
    } else {
    }
    return
  }
  func.func @transform_0(%arg0: i32, %arg1: i32, %arg2: i32) -> (i32, i32) {
    %c0_i32 = arith.constant 0 : i32
    return %arg0, %arg2 : i32, i32
  }
  func.func @transform_1(%arg0: i32, %arg1: i32, %arg2: i32) -> (i32, i32) {
    %c0_i32 = arith.constant 0 : i32
    return %arg2, %arg1 : i32, i32
  }
  func.func @transform_2(%arg0: i32, %arg1: i32, %arg2: i32) -> (i32, i32) {
    %c0_i32 = arith.constant 0 : i32
    %c0_i32_0 = arith.constant 0 : i32
    return %c0_i32, %arg1 : i32, i32
  }
  func.func @transform_3(%arg0: i32, %arg1: i32, %arg2: i32) -> (i32, i32) {
    %c0_i32 = arith.constant 0 : i32
    return %arg0, %arg1 : i32, i32
  }
}

module attributes {stable_mosaic.version = 11 : i64} {
  func.func @_gemm_bias_act_kernel(%arg0: i32, %arg1: i32, %arg2: i32, %arg3: memref<32x512xbf16, #tpu.memory_space<vmem>>, %arg4: memref<512x256xbf16, #tpu.memory_space<vmem>>, %arg5: memref<1x256xf32, #tpu.memory_space<vmem>>, %arg6: memref<32x256xbf16, #tpu.memory_space<vmem>>, %arg7: memref<32x256xf32, #tpu.memory_space<vmem>>) attributes {dimension_semantics = [#tpu.dimension_semantics<parallel>, #tpu.dimension_semantics<parallel>, #tpu.dimension_semantics<arbitrary>], iteration_bounds = array<i64: 1, 1, 7>, scalar_prefetch = 0 : i64, scratch_operands = 1 : i64, tpu.core_type = #tpu.core_type<tc>, window_params = [{transform_indices = @transform_0, window_bounds = array<i64: 32, 512>}, {transform_indices = @transform_1, window_bounds = array<i64: 512, 256>}, {transform_indices = @transform_2, window_bounds = array<i64: 1, 256>}, {transform_indices = @transform_3, window_bounds = array<i64: 32, 256>}]} {
    %c0_i32 = arith.constant 0 : i32
    %0 = arith.cmpi eq, %arg2, %c0_i32 : i32
    %1 = arith.extui %0 : i1 to i32
    %c0_i32_0 = arith.constant 0 : i32
    %2 = arith.cmpi ne, %1, %c0_i32_0 : i32
    scf.if %2 {
      %cst_9 = arith.constant 0.000000e+00 : f32
      %12 = vector.broadcast %cst_9 : f32 to vector<32x256xf32>
      %c0_10 = arith.constant 0 : index
      %c0_11 = arith.constant 0 : index
      %13 = vector.load %arg7[%c0_10, %c0_11] : memref<32x256xf32, #tpu.memory_space<vmem>>, vector<32x256xf32>
      tpu.vector_store %arg7[%c0_10, %c0_11], %12 {strides = array<i32>} : memref<32x256xf32, #tpu.memory_space<vmem>>, vector<32x256xf32>,
    } else {
    }
    %c0 = arith.constant 0 : index
    %c0_1 = arith.constant 0 : index
    %3 = vector.load %arg7[%c0, %c0_1] : memref<32x256xf32, #tpu.memory_space<vmem>>, vector<32x256xf32>
    %c0_2 = arith.constant 0 : index
    %c0_3 = arith.constant 0 : index
    %4 = vector.load %arg3[%c0_2, %c0_3] : memref<32x512xbf16, #tpu.memory_space<vmem>>, vector<32x512xbf16>
    %c0_4 = arith.constant 0 : index
    %c0_5 = arith.constant 0 : index
    %5 = vector.load %arg4[%c0_4, %c0_5] : memref<512x256xbf16, #tpu.memory_space<vmem>>, vector<512x256xbf16>
    %cst = arith.constant dense<0.000000e+00> : vector<32x256xf32>
    %6 = tpu.matmul %4, %5, %cst {dimension_numbers = #tpu.dot_dimension_numbers<[1], [0], [0], [1], [0, 0, 1, 1], [], []>} : vector<32x512xbf16>, vector<512x256xbf16>, vector<32x256xf32> -> vector<32x256xf32>
    %7 = arith.addf %3, %6 : vector<32x256xf32>
    %c0_6 = arith.constant 0 : index
    %c0_7 = arith.constant 0 : index
    %8 = vector.load %arg7[%c0_6, %c0_7] : memref<32x256xf32, #tpu.memory_space<vmem>>, vector<32x256xf32>
    tpu.vector_store %arg7[%c0_6, %c0_7], %7 {strides = array<i32>} : memref<32x256xf32, #tpu.memory_space<vmem>>, vector<32x256xf32>,
    %c6_i32 = arith.constant 6 : i32
    %9 = arith.cmpi eq, %arg2, %c6_i32 : i32
    %10 = arith.extui %9 : i1 to i32
    %c0_i32_8 = arith.constant 0 : i32
    %11 = arith.cmpi ne, %10, %c0_i32_8 : i32
    scf.if %11 {
      %c0_9 = arith.constant 0 : index
      %c0_10 = arith.constant 0 : index
      %12 = vector.load %arg7[%c0_9, %c0_10] : memref<32x256xf32, #tpu.memory_space<vmem>>, vector<32x256xf32>
      %c0_11 = arith.constant 0 : index
      %c0_12 = arith.constant 0 : index
      %13 = vector.load %arg5[%c0_11, %c0_12] : memref<1x256xf32, #tpu.memory_space<vmem>>, vector<1x256xf32>
      %14 = vector.broadcast %13 : vector<1x256xf32> to vector<32x256xf32>
      %15 = arith.addf %12, %14 : vector<32x256xf32>
      %cst_13 = arith.constant 0.000000e+00 : f32
      %16 = vector.broadcast %cst_13 : f32 to vector<32x256xf32>
      %17 = arith.maximumf %15, %16 : vector<32x256xf32>
      %18 = arith.truncf %17 : vector<32x256xf32> to vector<32x256xbf16>
      %c0_14 = arith.constant 0 : index
      %c0_15 = arith.constant 0 : index
      %19 = vector.load %arg6[%c0_14, %c0_15] : memref<32x256xbf16, #tpu.memory_space<vmem>>, vector<32x256xbf16>
      tpu.vector_store %arg6[%c0_14, %c0_15], %18 {strides = array<i32>} : memref<32x256xbf16, #tpu.memory_space<vmem>>, vector<32x256xbf16>,
    } else {
    }
    return
  }
  func.func @transform_0(%arg0: i32, %arg1: i32, %arg2: i32) -> (i32, i32) {
    %c0_i32 = arith.constant 0 : i32
    return %arg0, %arg2 : i32, i32
  }
  func.func @transform_1(%arg0: i32, %arg1: i32, %arg2: i32) -> (i32, i32) {
    %c0_i32 = arith.constant 0 : i32
    return %arg2, %arg1 : i32, i32
  }
  func.func @transform_2(%arg0: i32, %arg1: i32, %arg2: i32) -> (i32, i32) {
    %c0_i32 = arith.constant 0 : i32
    %c0_i32_0 = arith.constant 0 : i32
    return %c0_i32, %arg1 : i32, i32
  }
  func.func @transform_3(%arg0: i32, %arg1: i32, %arg2: i32) -> (i32, i32) {
    %c0_i32 = arith.constant 0 : i32
    return %arg0, %arg1 : i32, i32
  }
}

module attributes {stable_mosaic.version = 11 : i64} {
  func.func @_gemm_bias_act_kernel(%arg0: i32, %arg1: i32, %arg2: i32, %arg3: memref<32x512xbf16, #tpu.memory_space<vmem>>, %arg4: memref<512x256xbf16, #tpu.memory_space<vmem>>, %arg5: memref<1x256xf32, #tpu.memory_space<vmem>>, %arg6: memref<32x256xbf16, #tpu.memory_space<vmem>>, %arg7: memref<32x256xf32, #tpu.memory_space<vmem>>) attributes {dimension_semantics = [#tpu.dimension_semantics<parallel>, #tpu.dimension_semantics<parallel>, #tpu.dimension_semantics<arbitrary>], iteration_bounds = array<i64: 1, 1, 5>, scalar_prefetch = 0 : i64, scratch_operands = 1 : i64, tpu.core_type = #tpu.core_type<tc>, window_params = [{transform_indices = @transform_0, window_bounds = array<i64: 32, 512>}, {transform_indices = @transform_1, window_bounds = array<i64: 512, 256>}, {transform_indices = @transform_2, window_bounds = array<i64: 1, 256>}, {transform_indices = @transform_3, window_bounds = array<i64: 32, 256>}]} {
    %c0_i32 = arith.constant 0 : i32
    %0 = arith.cmpi eq, %arg2, %c0_i32 : i32
    %1 = arith.extui %0 : i1 to i32
    %c0_i32_0 = arith.constant 0 : i32
    %2 = arith.cmpi ne, %1, %c0_i32_0 : i32
    scf.if %2 {
      %cst_9 = arith.constant 0.000000e+00 : f32
      %12 = vector.broadcast %cst_9 : f32 to vector<32x256xf32>
      %c0_10 = arith.constant 0 : index
      %c0_11 = arith.constant 0 : index
      %13 = vector.load %arg7[%c0_10, %c0_11] : memref<32x256xf32, #tpu.memory_space<vmem>>, vector<32x256xf32>
      tpu.vector_store %arg7[%c0_10, %c0_11], %12 {strides = array<i32>} : memref<32x256xf32, #tpu.memory_space<vmem>>, vector<32x256xf32>,
    } else {
    }
    %c0 = arith.constant 0 : index
    %c0_1 = arith.constant 0 : index
    %3 = vector.load %arg7[%c0, %c0_1] : memref<32x256xf32, #tpu.memory_space<vmem>>, vector<32x256xf32>
    %c0_2 = arith.constant 0 : index
    %c0_3 = arith.constant 0 : index
    %4 = vector.load %arg3[%c0_2, %c0_3] : memref<32x512xbf16, #tpu.memory_space<vmem>>, vector<32x512xbf16>
    %c0_4 = arith.constant 0 : index
    %c0_5 = arith.constant 0 : index
    %5 = vector.load %arg4[%c0_4, %c0_5] : memref<512x256xbf16, #tpu.memory_space<vmem>>, vector<512x256xbf16>
    %cst = arith.constant dense<0.000000e+00> : vector<32x256xf32>
    %6 = tpu.matmul %4, %5, %cst {dimension_numbers = #tpu.dot_dimension_numbers<[1], [0], [0], [1], [0, 0, 1, 1], [], []>} : vector<32x512xbf16>, vector<512x256xbf16>, vector<32x256xf32> -> vector<32x256xf32>
    %7 = arith.addf %3, %6 : vector<32x256xf32>
    %c0_6 = arith.constant 0 : index
    %c0_7 = arith.constant 0 : index
    %8 = vector.load %arg7[%c0_6, %c0_7] : memref<32x256xf32, #tpu.memory_space<vmem>>, vector<32x256xf32>
    tpu.vector_store %arg7[%c0_6, %c0_7], %7 {strides = array<i32>} : memref<32x256xf32, #tpu.memory_space<vmem>>, vector<32x256xf32>,
    %c4_i32 = arith.constant 4 : i32
    %9 = arith.cmpi eq, %arg2, %c4_i32 : i32
    %10 = arith.extui %9 : i1 to i32
    %c0_i32_8 = arith.constant 0 : i32
    %11 = arith.cmpi ne, %10, %c0_i32_8 : i32
    scf.if %11 {
      %c0_9 = arith.constant 0 : index
      %c0_10 = arith.constant 0 : index
      %12 = vector.load %arg7[%c0_9, %c0_10] : memref<32x256xf32, #tpu.memory_space<vmem>>, vector<32x256xf32>
      %c0_11 = arith.constant 0 : index
      %c0_12 = arith.constant 0 : index
      %13 = vector.load %arg5[%c0_11, %c0_12] : memref<1x256xf32, #tpu.memory_space<vmem>>, vector<1x256xf32>
      %14 = vector.broadcast %13 : vector<1x256xf32> to vector<32x256xf32>
      %15 = arith.addf %12, %14 : vector<32x256xf32>
      %cst_13 = arith.constant 0.000000e+00 : f32
      %16 = vector.broadcast %cst_13 : f32 to vector<32x256xf32>
      %17 = arith.maximumf %15, %16 : vector<32x256xf32>
      %18 = arith.truncf %17 : vector<32x256xf32> to vector<32x256xbf16>
      %c0_14 = arith.constant 0 : index
      %c0_15 = arith.constant 0 : index
      %19 = vector.load %arg6[%c0_14, %c0_15] : memref<32x256xbf16, #tpu.memory_space<vmem>>, vector<32x256xbf16>
      tpu.vector_store %arg6[%c0_14, %c0_15], %18 {strides = array<i32>} : memref<32x256xbf16, #tpu.memory_space<vmem>>, vector<32x256xbf16>,
    } else {
    }
    return
  }
  func.func @transform_0(%arg0: i32, %arg1: i32, %arg2: i32) -> (i32, i32) {
    %c0_i32 = arith.constant 0 : i32
    return %arg0, %arg2 : i32, i32
  }
  func.func @transform_1(%arg0: i32, %arg1: i32, %arg2: i32) -> (i32, i32) {
    %c0_i32 = arith.constant 0 : i32
    return %arg2, %arg1 : i32, i32
  }
  func.func @transform_2(%arg0: i32, %arg1: i32, %arg2: i32) -> (i32, i32) {
    %c0_i32 = arith.constant 0 : i32
    %c0_i32_0 = arith.constant 0 : i32
    return %c0_i32, %arg1 : i32, i32
  }
  func.func @transform_3(%arg0: i32, %arg1: i32, %arg2: i32) -> (i32, i32) {
    %c0_i32 = arith.constant 0 : i32
    return %arg0, %arg1 : i32, i32
  }
}

module attributes {stable_mosaic.version = 11 : i64} {
  func.func @_gemm_bias_act_kernel(%arg0: i32, %arg1: i32, %arg2: i32, %arg3: memref<16x512xbf16, #tpu.memory_space<vmem>>, %arg4: memref<512x512xbf16, #tpu.memory_space<vmem>>, %arg5: memref<1x512xf32, #tpu.memory_space<vmem>>, %arg6: memref<16x512xbf16, #tpu.memory_space<vmem>>, %arg7: memref<16x512xf32, #tpu.memory_space<vmem>>) attributes {dimension_semantics = [#tpu.dimension_semantics<parallel>, #tpu.dimension_semantics<parallel>, #tpu.dimension_semantics<arbitrary>], iteration_bounds = array<i64: 1, 8, 18>, scalar_prefetch = 0 : i64, scratch_operands = 1 : i64, tpu.core_type = #tpu.core_type<tc>, window_params = [{transform_indices = @transform_0, window_bounds = array<i64: 16, 512>}, {transform_indices = @transform_1, window_bounds = array<i64: 512, 512>}, {transform_indices = @transform_2, window_bounds = array<i64: 1, 512>}, {transform_indices = @transform_3, window_bounds = array<i64: 16, 512>}]} {
    %c0_i32 = arith.constant 0 : i32
    %0 = arith.cmpi eq, %arg2, %c0_i32 : i32
    %1 = arith.extui %0 : i1 to i32
    %c0_i32_0 = arith.constant 0 : i32
    %2 = arith.cmpi ne, %1, %c0_i32_0 : i32
    scf.if %2 {
      %cst_9 = arith.constant 0.000000e+00 : f32
      %12 = vector.broadcast %cst_9 : f32 to vector<16x512xf32>
      %c0_10 = arith.constant 0 : index
      %c0_11 = arith.constant 0 : index
      %13 = vector.load %arg7[%c0_10, %c0_11] : memref<16x512xf32, #tpu.memory_space<vmem>>, vector<16x512xf32>
      tpu.vector_store %arg7[%c0_10, %c0_11], %12 {strides = array<i32>} : memref<16x512xf32, #tpu.memory_space<vmem>>, vector<16x512xf32>,
    } else {
    }
    %c0 = arith.constant 0 : index
    %c0_1 = arith.constant 0 : index
    %3 = vector.load %arg7[%c0, %c0_1] : memref<16x512xf32, #tpu.memory_space<vmem>>, vector<16x512xf32>
    %c0_2 = arith.constant 0 : index
    %c0_3 = arith.constant 0 : index
    %4 = vector.load %arg3[%c0_2, %c0_3] : memref<16x512xbf16, #tpu.memory_space<vmem>>, vector<16x512xbf16>
    %c0_4 = arith.constant 0 : index
    %c0_5 = arith.constant 0 : index
    %5 = vector.load %arg4[%c0_4, %c0_5] : memref<512x512xbf16, #tpu.memory_space<vmem>>, vector<512x512xbf16>
    %cst = arith.constant dense<0.000000e+00> : vector<16x512xf32>
    %6 = tpu.matmul %4, %5, %cst {dimension_numbers = #tpu.dot_dimension_numbers<[1], [0], [0], [1], [0, 0, 1, 1], [], []>} : vector<16x512xbf16>, vector<512x512xbf16>, vector<16x512xf32> -> vector<16x512xf32>
    %7 = arith.addf %3, %6 : vector<16x512xf32>
    %c0_6 = arith.constant 0 : index
    %c0_7 = arith.constant 0 : index
    %8 = vector.load %arg7[%c0_6, %c0_7] : memref<16x512xf32, #tpu.memory_space<vmem>>, vector<16x512xf32>
    tpu.vector_store %arg7[%c0_6, %c0_7], %7 {strides = array<i32>} : memref<16x512xf32, #tpu.memory_space<vmem>>, vector<16x512xf32>,
    %c17_i32 = arith.constant 17 : i32
    %9 = arith.cmpi eq, %arg2, %c17_i32 : i32
    %10 = arith.extui %9 : i1 to i32
    %c0_i32_8 = arith.constant 0 : i32
    %11 = arith.cmpi ne, %10, %c0_i32_8 : i32
    scf.if %11 {
      %c0_9 = arith.constant 0 : index
      %c0_10 = arith.constant 0 : index
      %12 = vector.load %arg7[%c0_9, %c0_10] : memref<16x512xf32, #tpu.memory_space<vmem>>, vector<16x512xf32>
      %c0_11 = arith.constant 0 : index
      %c0_12 = arith.constant 0 : index
      %13 = vector.load %arg5[%c0_11, %c0_12] : memref<1x512xf32, #tpu.memory_space<vmem>>, vector<1x512xf32>
      %14 = vector.broadcast %13 : vector<1x512xf32> to vector<16x512xf32>
      %15 = arith.addf %12, %14 : vector<16x512xf32>
      %cst_13 = arith.constant 0.000000e+00 : f32
      %16 = vector.broadcast %cst_13 : f32 to vector<16x512xf32>
      %17 = arith.maximumf %15, %16 : vector<16x512xf32>
      %18 = arith.truncf %17 : vector<16x512xf32> to vector<16x512xbf16>
      %c0_14 = arith.constant 0 : index
      %c0_15 = arith.constant 0 : index
      %19 = vector.load %arg6[%c0_14, %c0_15] : memref<16x512xbf16, #tpu.memory_space<vmem>>, vector<16x512xbf16>
      tpu.vector_store %arg6[%c0_14, %c0_15], %18 {strides = array<i32>} : memref<16x512xbf16, #tpu.memory_space<vmem>>, vector<16x512xbf16>,
    } else {
    }
    return
  }
  func.func @transform_0(%arg0: i32, %arg1: i32, %arg2: i32) -> (i32, i32) {
    %c0_i32 = arith.constant 0 : i32
    return %arg0, %arg2 : i32, i32
  }
  func.func @transform_1(%arg0: i32, %arg1: i32, %arg2: i32) -> (i32, i32) {
    %c0_i32 = arith.constant 0 : i32
    return %arg2, %arg1 : i32, i32
  }
  func.func @transform_2(%arg0: i32, %arg1: i32, %arg2: i32) -> (i32, i32) {
    %c0_i32 = arith.constant 0 : i32
    %c0_i32_0 = arith.constant 0 : i32
    return %c0_i32, %arg1 : i32, i32
  }
  func.func @transform_3(%arg0: i32, %arg1: i32, %arg2: i32) -> (i32, i32) {
    %c0_i32 = arith.constant 0 : i32
    return %arg0, %arg1 : i32, i32
  }
}

module attributes {stable_mosaic.version = 11 : i64} {
  func.func @_gemm_bias_act_kernel(%arg0: i32, %arg1: i32, %arg2: i32, %arg3: memref<16x512xbf16, #tpu.memory_space<vmem>>, %arg4: memref<512x512xbf16, #tpu.memory_space<vmem>>, %arg5: memref<1x512xf32, #tpu.memory_space<vmem>>, %arg6: memref<16x512xbf16, #tpu.memory_space<vmem>>, %arg7: memref<16x512xf32, #tpu.memory_space<vmem>>) attributes {dimension_semantics = [#tpu.dimension_semantics<parallel>, #tpu.dimension_semantics<parallel>, #tpu.dimension_semantics<arbitrary>], iteration_bounds = array<i64: 1, 8, 8>, scalar_prefetch = 0 : i64, scratch_operands = 1 : i64, tpu.core_type = #tpu.core_type<tc>, window_params = [{transform_indices = @transform_0, window_bounds = array<i64: 16, 512>}, {transform_indices = @transform_1, window_bounds = array<i64: 512, 512>}, {transform_indices = @transform_2, window_bounds = array<i64: 1, 512>}, {transform_indices = @transform_3, window_bounds = array<i64: 16, 512>}]} {
    %c0_i32 = arith.constant 0 : i32
    %0 = arith.cmpi eq, %arg2, %c0_i32 : i32
    %1 = arith.extui %0 : i1 to i32
    %c0_i32_0 = arith.constant 0 : i32
    %2 = arith.cmpi ne, %1, %c0_i32_0 : i32
    scf.if %2 {
      %cst_9 = arith.constant 0.000000e+00 : f32
      %12 = vector.broadcast %cst_9 : f32 to vector<16x512xf32>
      %c0_10 = arith.constant 0 : index
      %c0_11 = arith.constant 0 : index
      %13 = vector.load %arg7[%c0_10, %c0_11] : memref<16x512xf32, #tpu.memory_space<vmem>>, vector<16x512xf32>
      tpu.vector_store %arg7[%c0_10, %c0_11], %12 {strides = array<i32>} : memref<16x512xf32, #tpu.memory_space<vmem>>, vector<16x512xf32>,
    } else {
    }
    %c0 = arith.constant 0 : index
    %c0_1 = arith.constant 0 : index
    %3 = vector.load %arg7[%c0, %c0_1] : memref<16x512xf32, #tpu.memory_space<vmem>>, vector<16x512xf32>
    %c0_2 = arith.constant 0 : index
    %c0_3 = arith.constant 0 : index
    %4 = vector.load %arg3[%c0_2, %c0_3] : memref<16x512xbf16, #tpu.memory_space<vmem>>, vector<16x512xbf16>
    %c0_4 = arith.constant 0 : index
    %c0_5 = arith.constant 0 : index
    %5 = vector.load %arg4[%c0_4, %c0_5] : memref<512x512xbf16, #tpu.memory_space<vmem>>, vector<512x512xbf16>
    %cst = arith.constant dense<0.000000e+00> : vector<16x512xf32>
    %6 = tpu.matmul %4, %5, %cst {dimension_numbers = #tpu.dot_dimension_numbers<[1], [0], [0], [1], [0, 0, 1, 1], [], []>} : vector<16x512xbf16>, vector<512x512xbf16>, vector<16x512xf32> -> vector<16x512xf32>
    %7 = arith.addf %3, %6 : vector<16x512xf32>
    %c0_6 = arith.constant 0 : index
    %c0_7 = arith.constant 0 : index
    %8 = vector.load %arg7[%c0_6, %c0_7] : memref<16x512xf32, #tpu.memory_space<vmem>>, vector<16x512xf32>
    tpu.vector_store %arg7[%c0_6, %c0_7], %7 {strides = array<i32>} : memref<16x512xf32, #tpu.memory_space<vmem>>, vector<16x512xf32>,
    %c7_i32 = arith.constant 7 : i32
    %9 = arith.cmpi eq, %arg2, %c7_i32 : i32
    %10 = arith.extui %9 : i1 to i32
    %c0_i32_8 = arith.constant 0 : i32
    %11 = arith.cmpi ne, %10, %c0_i32_8 : i32
    scf.if %11 {
      %c0_9 = arith.constant 0 : index
      %c0_10 = arith.constant 0 : index
      %12 = vector.load %arg7[%c0_9, %c0_10] : memref<16x512xf32, #tpu.memory_space<vmem>>, vector<16x512xf32>
      %c0_11 = arith.constant 0 : index
      %c0_12 = arith.constant 0 : index
      %13 = vector.load %arg5[%c0_11, %c0_12] : memref<1x512xf32, #tpu.memory_space<vmem>>, vector<1x512xf32>
      %14 = vector.broadcast %13 : vector<1x512xf32> to vector<16x512xf32>
      %15 = arith.addf %12, %14 : vector<16x512xf32>
      %cst_13 = arith.constant 0.000000e+00 : f32
      %16 = vector.broadcast %cst_13 : f32 to vector<16x512xf32>
      %17 = arith.maximumf %15, %16 : vector<16x512xf32>
      %18 = arith.truncf %17 : vector<16x512xf32> to vector<16x512xbf16>
      %c0_14 = arith.constant 0 : index
      %c0_15 = arith.constant 0 : index
      %19 = vector.load %arg6[%c0_14, %c0_15] : memref<16x512xbf16, #tpu.memory_space<vmem>>, vector<16x512xbf16>
      tpu.vector_store %arg6[%c0_14, %c0_15], %18 {strides = array<i32>} : memref<16x512xbf16, #tpu.memory_space<vmem>>, vector<16x512xbf16>,
    } else {
    }
    return
  }
  func.func @transform_0(%arg0: i32, %arg1: i32, %arg2: i32) -> (i32, i32) {
    %c0_i32 = arith.constant 0 : i32
    return %arg0, %arg2 : i32, i32
  }
  func.func @transform_1(%arg0: i32, %arg1: i32, %arg2: i32) -> (i32, i32) {
    %c0_i32 = arith.constant 0 : i32
    return %arg2, %arg1 : i32, i32
  }
  func.func @transform_2(%arg0: i32, %arg1: i32, %arg2: i32) -> (i32, i32) {
    %c0_i32 = arith.constant 0 : i32
    %c0_i32_0 = arith.constant 0 : i32
    return %c0_i32, %arg1 : i32, i32
  }
  func.func @transform_3(%arg0: i32, %arg1: i32, %arg2: i32) -> (i32, i32) {
    %c0_i32 = arith.constant 0 : i32
    return %arg0, %arg1 : i32, i32
  }
}

module attributes {stable_mosaic.version = 11 : i64} {
  func.func @_gemm_bias_act_kernel(%arg0: i32, %arg1: i32, %arg2: i32, %arg3: memref<16x512xbf16, #tpu.memory_space<vmem>>, %arg4: memref<512x128xbf16, #tpu.memory_space<vmem>>, %arg5: memref<1x128xf32, #tpu.memory_space<vmem>>, %arg6: memref<16x128xf32, #tpu.memory_space<vmem>>, %arg7: memref<16x128xf32, #tpu.memory_space<vmem>>) attributes {dimension_semantics = [#tpu.dimension_semantics<parallel>, #tpu.dimension_semantics<parallel>, #tpu.dimension_semantics<arbitrary>], iteration_bounds = array<i64: 1, 1, 8>, scalar_prefetch = 0 : i64, scratch_operands = 1 : i64, tpu.core_type = #tpu.core_type<tc>, window_params = [{transform_indices = @transform_0, window_bounds = array<i64: 16, 512>}, {transform_indices = @transform_1, window_bounds = array<i64: 512, 128>}, {transform_indices = @transform_2, window_bounds = array<i64: 1, 128>}, {transform_indices = @transform_3, window_bounds = array<i64: 16, 128>}]} {
    %c0_i32 = arith.constant 0 : i32
    %0 = arith.cmpi eq, %arg2, %c0_i32 : i32
    %1 = arith.extui %0 : i1 to i32
    %c0_i32_0 = arith.constant 0 : i32
    %2 = arith.cmpi ne, %1, %c0_i32_0 : i32
    scf.if %2 {
      %cst_9 = arith.constant 0.000000e+00 : f32
      %12 = vector.broadcast %cst_9 : f32 to vector<16x128xf32>
      %c0_10 = arith.constant 0 : index
      %c0_11 = arith.constant 0 : index
      %13 = vector.load %arg7[%c0_10, %c0_11] : memref<16x128xf32, #tpu.memory_space<vmem>>, vector<16x128xf32>
      tpu.vector_store %arg7[%c0_10, %c0_11], %12 {strides = array<i32>} : memref<16x128xf32, #tpu.memory_space<vmem>>, vector<16x128xf32>,
    } else {
    }
    %c0 = arith.constant 0 : index
    %c0_1 = arith.constant 0 : index
    %3 = vector.load %arg7[%c0, %c0_1] : memref<16x128xf32, #tpu.memory_space<vmem>>, vector<16x128xf32>
    %c0_2 = arith.constant 0 : index
    %c0_3 = arith.constant 0 : index
    %4 = vector.load %arg3[%c0_2, %c0_3] : memref<16x512xbf16, #tpu.memory_space<vmem>>, vector<16x512xbf16>
    %c0_4 = arith.constant 0 : index
    %c0_5 = arith.constant 0 : index
    %5 = vector.load %arg4[%c0_4, %c0_5] : memref<512x128xbf16, #tpu.memory_space<vmem>>, vector<512x128xbf16>
    %cst = arith.constant dense<0.000000e+00> : vector<16x128xf32>
    %6 = tpu.matmul %4, %5, %cst {dimension_numbers = #tpu.dot_dimension_numbers<[1], [0], [0], [1], [0, 0, 1, 1], [], []>} : vector<16x512xbf16>, vector<512x128xbf16>, vector<16x128xf32> -> vector<16x128xf32>
    %7 = arith.addf %3, %6 : vector<16x128xf32>
    %c0_6 = arith.constant 0 : index
    %c0_7 = arith.constant 0 : index
    %8 = vector.load %arg7[%c0_6, %c0_7] : memref<16x128xf32, #tpu.memory_space<vmem>>, vector<16x128xf32>
    tpu.vector_store %arg7[%c0_6, %c0_7], %7 {strides = array<i32>} : memref<16x128xf32, #tpu.memory_space<vmem>>, vector<16x128xf32>,
    %c7_i32 = arith.constant 7 : i32
    %9 = arith.cmpi eq, %arg2, %c7_i32 : i32
    %10 = arith.extui %9 : i1 to i32
    %c0_i32_8 = arith.constant 0 : i32
    %11 = arith.cmpi ne, %10, %c0_i32_8 : i32
    scf.if %11 {
      %c0_9 = arith.constant 0 : index
      %c0_10 = arith.constant 0 : index
      %12 = vector.load %arg7[%c0_9, %c0_10] : memref<16x128xf32, #tpu.memory_space<vmem>>, vector<16x128xf32>
      %c0_11 = arith.constant 0 : index
      %c0_12 = arith.constant 0 : index
      %13 = vector.load %arg5[%c0_11, %c0_12] : memref<1x128xf32, #tpu.memory_space<vmem>>, vector<1x128xf32>
      %14 = vector.broadcast %13 : vector<1x128xf32> to vector<16x128xf32>
      %15 = arith.addf %12, %14 : vector<16x128xf32>
      %c0_13 = arith.constant 0 : index
      %c0_14 = arith.constant 0 : index
      %16 = vector.load %arg6[%c0_13, %c0_14] : memref<16x128xf32, #tpu.memory_space<vmem>>, vector<16x128xf32>
      tpu.vector_store %arg6[%c0_13, %c0_14], %15 {strides = array<i32>} : memref<16x128xf32, #tpu.memory_space<vmem>>, vector<16x128xf32>,
    } else {
    }
    return
  }
  func.func @transform_0(%arg0: i32, %arg1: i32, %arg2: i32) -> (i32, i32) {
    %c0_i32 = arith.constant 0 : i32
    return %arg0, %arg2 : i32, i32
  }
  func.func @transform_1(%arg0: i32, %arg1: i32, %arg2: i32) -> (i32, i32) {
    %c0_i32 = arith.constant 0 : i32
    return %arg2, %arg1 : i32, i32
  }
  func.func @transform_2(%arg0: i32, %arg1: i32, %arg2: i32) -> (i32, i32) {
    %c0_i32 = arith.constant 0 : i32
    %c0_i32_0 = arith.constant 0 : i32
    return %c0_i32, %arg1 : i32, i32
  }
  func.func @transform_3(%arg0: i32, %arg1: i32, %arg2: i32) -> (i32, i32) {
    %c0_i32 = arith.constant 0 : i32
    return %arg0, %arg1 : i32, i32
  }
}

</mosaic_0001>

<llo_original>
// kernel: forward.8
$region0: #{forward.8}
  #allocation0 [shape = 'u32[]', space=smem, size = 0x4, offset = 0x4, fixed_abs, tag = 'smem constant byte address 0x4 - core index']
  #allocation1 [shape = 'u32[144,128]{1,0:T(1,128)}', space=vmem, size = 0x12000, scoped, tag = 'internal scratch']
  #allocation2 [shape = 'f32[128,128]{1,0:T(8,128)}', space=vmem, size = 0x10000, scoped, tag = 'scratch operand']
  %s0 = inlined_call_operand.vmem [shape: bf16[512,384], index: 0, kind: input, shape index: {}]
  %s1 = inlined_call_operand.vmem [shape: bf16[384,128], index: 1, kind: input, shape index: {}]
  %s2 = inlined_call_operand.vmem [shape: f32[1,128], index: 2, kind: input, shape index: {}]
  %s3 = inlined_call_operand.vmem [shape: bf16[512,128], index: 3, kind: output, shape index: {}]
  %s4 = sld [smem:[#allocation0]]
  $region53: #{forward.8} parent=0
    _
  %s6 = ssub.s32 1, %s4
  %s7 = scalar_select 0, %s6, %s4
  loop: start=0, step=1, limit=6
  $region2: #{forward.8} parent=0 // loop_pre_header
    _
  $region3: #{forward.8} parent=0 // loop_header
    %s9 = sphi 0, %s13
    %p10 = scmp.ge.s32.totalorder %s9, 6
    %s16 = sphi 0, %s35
    %s17 = sphi 0, %s31
    %s18 = sphi 0, %s27
    %s19 = sphi 0, %s16
    %s20 = sphi 0, %s17
    %s21 = sphi 0, %s18
    %s22 = sphi 0, %s19
    %s23 = sphi 0, %s20
    %s24 = sphi 0, %s21
    %s40 = sphi 0, %s42
    %s43 = sphi 0, %s40
    %s44 = sphi 0, %s43
    %s60 = sphi 0, %s44
    %s68 = sphi 0, %s70
    %s71 = sphi 0, %s68
    %s72 = sphi 0, %s71
    %s88 = sphi 0, %s72
    %s94 = sphi 0, %s96
    %s97 = sphi 0, %s94
    %s98 = sphi 0, %s97
    %s114 = sphi 0, %s98
    %s122 = sphi 0, %s124
    %s125 = sphi 0, %s122
    %s126 = sphi 0, %s125
    %s142 = sphi 0, %s126
  $region4: #{forward.8} parent=0 // loop_header_branch
    %12 = sbr.rel (%p10) target = $region8
  $region5: #{forward.8} parent=0 // loop_body
    %s14 = ssub.s32 %s9, 1
    %s15 = ssub.s32 %s9, 2
    %s25 = sadd.s32 1, %s18
    %p26 = scmp.ge.s32.totalorder %s25, 1
    %s27 = scalar_select %p26, 0, %s25
    %s28 = sadd.s32 1, %s17
    %s29 = scalar_select %p26, %s28, %s17
    %p30 = scmp.ge.s32.totalorder %s29, 1
    %s31 = scalar_select %p30, 0, %s29
    %s32 = sadd.s32 1, %s16
    %s33 = scalar_select %p30, %s32, %s16
    %p34 = scmp.ge.s32.totalorder %s33, 4
    %s35 = scalar_select %p34, 0, %s33
    %s36 = ssub.s32 %s16, %s35
    %s37 = ssub.s32 %s18, %s27
    %s38 = sor.u32 %s36, %s37
    %p39 = scmp.eq.s32.totalorder %s38, 0
    %s41 = sadd.s32 %s40, 1
    %s42 = scalar_select %p39, %s40, %s41
    %p45 = pneg %p39
    %p46 = scmp.eq.s32.totalorder %s9, 3
    %p47 = por %p45, %p46
    %p48 = scmp.ne.s32.totalorder %s40, %s43
    %p49 = scmp.eq.s32.totalorder %s9, 0
    %p50 = por %p48, %p49
    %p51 = scmp.ne.s32.totalorder %s40, %s43
    %p52 = scmp.eq.s32.totalorder %s14, 3
    %p53 = por %p51, %p52
    %p54 = scmp.ne.s32.totalorder %s43, %s44
    %p55 = scmp.eq.s32.totalorder %s14, 0
    %p56 = por %p54, %p55
    %p57 = scmp.ne.s32.totalorder %s43, %s44
    %p58 = scmp.eq.s32.totalorder %s15, 3
    %p59 = por %p57, %p58
    %p61 = scmp.ne.s32.totalorder %s44, %s60
    %p62 = scmp.eq.s32.totalorder %s15, 0
    %p63 = por %p61, %p62
    %s64 = ssub.s32 %s18, %s27
    %s65 = ssub.s32 %s17, %s31
    %s66 = sor.u32 %s64, %s65
    %p67 = scmp.eq.s32.totalorder %s66, 0
    %s69 = sadd.s32 %s68, 1
    %s70 = scalar_select %p67, %s68, %s69
    %p73 = pneg %p67
    %p74 = scmp.eq.s32.totalorder %s9, 3
    %p75 = por %p73, %p74
    %p76 = scmp.ne.s32.totalorder %s68, %s71
    %p77 = scmp.eq.s32.totalorder %s9, 0
    %p78 = por %p76, %p77
    %p79 = scmp.ne.s32.totalorder %s68, %s71
    %p80 = scmp.eq.s32.totalorder %s14, 3
    %p81 = por %p79, %p80
    %p82 = scmp.ne.s32.totalorder %s71, %s72
    %p83 = scmp.eq.s32.totalorder %s14, 0
    %p84 = por %p82, %p83
    %p85 = scmp.ne.s32.totalorder %s71, %s72
    %p86 = scmp.eq.s32.totalorder %s15, 3
    %p87 = por %p85, %p86
    %p89 = scmp.ne.s32.totalorder %s72, %s88
    %p90 = scmp.eq.s32.totalorder %s15, 0
    %p91 = por %p89, %p90
    %s92 = ssub.s32 %s17, %s31
    %p93 = scmp.eq.s32.totalorder %s92, 0
    %s95 = sadd.s32 %s94, 1
    %s96 = scalar_select %p93, %s94, %s95
    %p99 = pneg %p93
    %p100 = scmp.eq.s32.totalorder %s9, 3
    %p101 = por %p99, %p100
    %p102 = scmp.ne.s32.totalorder %s94, %s97
    %p103 = scmp.eq.s32.totalorder %s9, 0
    %p104 = por %p102, %p103
    %p105 = scmp.ne.s32.totalorder %s94, %s97
    %p106 = scmp.eq.s32.totalorder %s14, 3
    %p107 = por %p105, %p106
    %p108 = scmp.ne.s32.totalorder %s97, %s98
    %p109 = scmp.eq.s32.totalorder %s14, 0
    %p110 = por %p108, %p109
    %p111 = scmp.ne.s32.totalorder %s97, %s98
    %p112 = scmp.eq.s32.totalorder %s15, 3
    %p113 = por %p111, %p112
    %p115 = scmp.ne.s32.totalorder %s98, %s114
    %p116 = scmp.eq.s32.totalorder %s15, 0
    %p117 = por %p115, %p116
    %s118 = ssub.s32 %s16, %s35
    %s119 = ssub.s32 %s17, %s31
    %s120 = sor.u32 %s118, %s119
    %p121 = scmp.eq.s32.totalorder %s120, 0
    %s123 = sadd.s32 %s122, 1
    %s124 = scalar_select %p121, %s122, %s123
    %p127 = pneg %p121
    %p128 = scmp.eq.s32.totalorder %s9, 3
    %p129 = por %p127, %p128
    %p130 = scmp.ne.s32.totalorder %s122, %s125
    %p131 = scmp.eq.s32.totalorder %s9, 0
    %p132 = por %p130, %p131
    %p133 = scmp.ne.s32.totalorder %s122, %s125
    %p134 = scmp.eq.s32.totalorder %s14, 3
    %p135 = por %p133, %p134
    %p136 = scmp.ne.s32.totalorder %s125, %s126
    %p137 = scmp.eq.s32.totalorder %s14, 0
    %p138 = por %p136, %p137
    %p139 = scmp.ne.s32.totalorder %s125, %s126
    %p140 = scmp.eq.s32.totalorder %s15, 3
    %p141 = por %p139, %p140
    %p143 = scmp.ne.s32.totalorder %s126, %s142
    %p144 = scmp.eq.s32.totalorder %s15, 0
    %p145 = por %p143, %p144
    %p146 = scmp.le.s32.totalorder 1, %s9
    %p147 = scmp.lt.s32.totalorder %s9, 5
    %p148 = pnand %p146, %p147
    %p149 = pneg %p148
    // Predicated region
    $region9: #{forward.8} parent=5 // pred_check
      _
    $region10: #{forward.8} parent=5 // pred_check_branch
      %151 = sbr.rel (%p148) target = $region12
    $region11: #{forward.8} parent=5 // pred_region
      %s152 = ssub.s32 %s9, 1
      // Predicated region
      $region13: #{forward.8} parent=11 // pred_check
        %p153 = pneg %p84
      $region14: #{forward.8} parent=11 // pred_check_branch
        %155 = sbr.rel (%p153) target = $region16
      $region15: #{forward.8} parent=11 // pred_region
        %s156 = smul.u32 48, %s21
        %p157 = scmp.lt.s32.totalorder %s156, 47
        %s158 = scalar_select %p157, %s156, 47
        %p159 = scmp.lt.s32.totalorder %s20, 0
        %s160 = scalar_select %p159, %s20, 0
        %s161 = sadd.s32 %s160, %s158
        %s162 = smul.addr %s161, 4
        %s163 = scalar_lea.vmem %s1, %s162
        %s164 = smul.u32 48, %s21
      $region16: #{forward.8} parent=11 // pred_fallthru
        _
      // Predicated region
      $region17: #{forward.8} parent=11 // pred_check
        %p165 = pneg %p110
      $region18: #{forward.8} parent=11 // pred_check_branch
        %167 = sbr.rel (%p165) target = $region20
      $region19: #{forward.8} parent=11 // pred_region
        %p168 = scmp.lt.s32.totalorder %s20, 0
        %s169 = scalar_select %p168, %s20, 0
        %s170 = scalar_lea.vmem %s2, %s169
      $region20: #{forward.8} parent=11 // pred_fallthru
        _
    $region12: #{forward.8} parent=5 // pred_fallthru
      _
    %p171 = scmp.lt.s32.totalorder %s9, 4
    // Predicated region
    $region21: #{forward.8} parent=5 // pred_check
      %p172 = pneg %p171
    $region22: #{forward.8} parent=5 // pred_check_branch
      %174 = sbr.rel (%p172) target = $region24
    $region23: #{forward.8} parent=5 // pred_region
      // Predicated region
      $region25: #{forward.8} parent=23 // pred_check
        %p175 = pneg %p50
      $region26: #{forward.8} parent=23 // pred_check_branch
        %177 = sbr.rel (%p175) target = $region28
      $region27: #{forward.8} parent=23 // pred_region
        %s178 = smul.u32 16, %s16
        %s179 = smul.u32 3, %s18
        %p180 = scmp.lt.s32.totalorder %s178, 63
        %s181 = scalar_select %p180, %s178, 63
        %p182 = scmp.lt.s32.totalorder %s179, 2
        %s183 = scalar_select %p182, %s179, 2
        %s184 = smul.addr %s181, 3
        %s185 = sadd.s32 %s183, %s184
        %s186 = smul.addr %s185, 4
        %s187 = scalar_lea.vmem %s0, %s186
        %s188 = smul.u32 16, %s16
        %s189 = smul.u32 3, %s18
      $region28: #{forward.8} parent=23 // pred_fallthru
        _
    $region24: #{forward.8} parent=5 // pred_fallthru
      _
    %p190 = scmp.le.s32.totalorder 1, %s9
    %p191 = scmp.lt.s32.totalorder %s9, 5
    %p192 = pnand %p190, %p191
    %p193 = pneg %p192
    // Predicated region
    $region29: #{forward.8} parent=5 // pred_check
      _
    $region30: #{forward.8} parent=5 // pred_check_branch
      %195 = sbr.rel (%p192) target = $region32
    $region31: #{forward.8} parent=5 // pred_region
      %s196 = ssub.s32 %s9, 1
      %s197 = smul.u32 16, %s19
      %s198 = smul.u32 3, %s21
      %p199 = scmp.lt.s32.totalorder %s197, 63
      %s200 = scalar_select %p199, %s197, 63
      %p201 = scmp.lt.s32.totalorder %s198, 2
      %s202 = scalar_select %p201, %s198, 2
      %s203 = smul.addr %s200, 3
      %s204 = sadd.s32 %s202, %s203
      %s205 = smul.addr %s204, 4
      %s206 = scalar_lea.vmem %s0, %s205
      %p207 = pneg %p56
      %p208 = pneg %p53
      %s209 = smul.u32 48, %s21
      %p210 = scmp.lt.s32.totalorder %s209, 47
      %s211 = scalar_select %p210, %s209, 47
      %p212 = scmp.lt.s32.totalorder %s20, 0
      %s213 = scalar_select %p212, %s20, 0
      %s214 = sadd.s32 %s213, %s211
      %s215 = smul.addr %s214, 4
      %s216 = scalar_lea.vmem %s1, %s215
      %p217 = pneg %p84
      %p218 = pneg %p81
      %p219 = scmp.lt.s32.totalorder %s20, 0
      %s220 = scalar_select %p219, %s20, 0
      %s221 = scalar_lea.vmem %s2, %s220
      %p222 = pneg %p110
      %p223 = pneg %p107
      %p224 = pneg %p138
      %p225 = pneg %p135
      %s226 = smul.u32 16, %s19
      %p227 = scmp.lt.s32.totalorder %s226, 63
      %s228 = scalar_select %p227, %s226, 63
      %p229 = scmp.lt.s32.totalorder %s20, 0
      %s230 = scalar_select %p229, %s20, 0
      %s231 = sadd.s32 %s230, %s228
      %s232 = smul.addr %s231, 4
      %s233 = scalar_lea.vmem %s3, %s232
      %s234 = smul.u32 16, %s19
      %s235 = smul.u32 3, %s21
      %p236 = scmp.lt.s32.totalorder %s234, 63
      %s237 = scalar_select %p236, %s234, 63
      %p238 = scmp.lt.s32.totalorder %s235, 2
      %s239 = scalar_select %p238, %s235, 2
      %s240 = smul.addr %s237, 3
      %s241 = sadd.s32 %s239, %s240
      %s242 = smul.addr %s241, 4
      %s243 = scalar_lea.vmem %s0, %s242
      %s244 = smul.u32 16, %s19
      %s245 = smul.u32 3, %s21
      %s246 = smul.u32 48, %s21
      %p247 = scmp.lt.s32.totalorder %s246, 47
      %s248 = scalar_select %p247, %s246, 47
      %p249 = scmp.lt.s32.totalorder %s20, 0
      %s250 = scalar_select %p249, %s20, 0
      %s251 = sadd.s32 %s250, %s248
      %s252 = smul.addr %s251, 4
      %s253 = scalar_lea.vmem %s1, %s252
      %s254 = smul.u32 48, %s21
      %p255 = scmp.lt.s32.totalorder %s20, 0
      %s256 = scalar_select %p255, %s20, 0
      %s257 = scalar_lea.vmem %s2, %s256
      %s258 = smul.u32 16, %s19
      %p259 = scmp.lt.s32.totalorder %s258, 63
      %s260 = scalar_select %p259, %s258, 63
      %p261 = scmp.lt.s32.totalorder %s20, 0
      %s262 = scalar_select %p261, %s20, 0
      %s263 = sadd.s32 %s262, %s260
      %s264 = smul.addr %s263, 4
      %s265 = scalar_lea.vmem %s3, %s264
      %s266 = smul.u32 16, %s19
      %p268 = scmp.eq.s32.totalorder %s21, 0
      // Predicated region
      $region33: #{forward.8} parent=31 // pred_check
        %p269 = pneg %p268
      $region34: #{forward.8} parent=31 // pred_check_branch
        %271 = sbr.rel (%p269) target = $region36
      $region35: #{forward.8} parent=31 // pred_region
        %272 = vst [vmem:[#allocation2] sm:$0xff] 0.0
        %273 = vst [vmem:[#allocation2 + $0x8] sm:$0xff] 0.0
        %274 = vst [vmem:[#allocation2 + $0x10] sm:$0xff] 0.0
        %275 = vst [vmem:[#allocation2 + $0x18] sm:$0xff] 0.0
        %276 = vst [vmem:[#allocation2 + $0x20] sm:$0xff] 0.0
        %277 = vst [vmem:[#allocation2 + $0x28] sm:$0xff] 0.0
        %278 = vst [vmem:[#allocation2 + $0x30] sm:$0xff] 0.0
        %279 = vst [vmem:[#allocation2 + $0x38] sm:$0xff] 0.0
        %280 = vst [vmem:[#allocation2 + $0x40] sm:$0xff] 0.0
        %281 = vst [vmem:[#allocation2 + $0x48] sm:$0xff] 0.0
        %282 = vst [vmem:[#allocation2 + $0x50] sm:$0xff] 0.0
        %283 = vst [vmem:[#allocation2 + $0x58] sm:$0xff] 0.0
        %284 = vst [vmem:[#allocation2 + $0x60] sm:$0xff] 0.0
        %285 = vst [vmem:[#allocation2 + $0x68] sm:$0xff] 0.0
        %286 = vst [vmem:[#allocation2 + $0x70] sm:$0xff] 0.0
        %287 = vst [vmem:[#allocation2 + $0x78] sm:$0xff] 0.0
      $region36: #{forward.8} parent=31 // pred_fallthru
        _
      %v288 = vld [vmem:[#allocation2] sm:$0xff]
      %v289 = vld [vmem:[#allocation2 + $0x8] sm:$0xff]
      %v290 = vld [vmem:[#allocation2 + $0x10] sm:$0xff]
      %v291 = vld [vmem:[#allocation2 + $0x18] sm:$0xff]
      %v292 = vld [vmem:[#allocation2 + $0x20] sm:$0xff]
      %v293 = vld [vmem:[#allocation2 + $0x28] sm:$0xff]
      %v294 = vld [vmem:[#allocation2 + $0x30] sm:$0xff]
      %v295 = vld [vmem:[#allocation2 + $0x38] sm:$0xff]
      %v296 = vld [vmem:[#allocation2 + $0x40] sm:$0xff]
      %v297 = vld [vmem:[#allocation2 + $0x48] sm:$0xff]
      %v298 = vld [vmem:[#allocation2 + $0x50] sm:$0xff]
      %v299 = vld [vmem:[#allocation2 + $0x58] sm:$0xff]
      %v300 = vld [vmem:[#allocation2 + $0x60] sm:$0xff]
      %v301 = vld [vmem:[#allocation2 + $0x68] sm:$0xff]
      %v302 = vld [vmem:[#allocation2 + $0x70] sm:$0xff]
      %v303 = vld [vmem:[#allocation2 + $0x78] sm:$0xff]
      %v304 = vld [vmem:[%s243] sm:$0xff]
      %v305 = vld [vmem:[%s243 + $0x8] sm:$0xf]
      %v306 = vld [vmem:[%s243 + $0xc] sm:$0xff]
      %v307 = vld [vmem:[%s243 + $0x14] sm:$0xf]
      %v308 = vld [vmem:[%s243 + $0x18] sm:$0xff]
      %v309 = vld [vmem:[%s243 + $0x20] sm:$0xf]
      %v310 = vld [vmem:[%s243 + $0x24] sm:$0xff]
      %v311 = vld [vmem:[%s243 + $0x2c] sm:$0xf]
      %v312 = vld [vmem:[%s243 + $0x30] sm:$0xff]
      %v313 = vld [vmem:[%s243 + $0x38] sm:$0xf]
      %v314 = vld [vmem:[%s243 + $0x3c] sm:$0xff]
      %v315 = vld [vmem:[%s243 + $0x44] sm:$0xf]
      %v316 = vld [vmem:[%s243 + $0x48] sm:$0xff]
      %v317 = vld [vmem:[%s243 + $0x50] sm:$0xf]
      %v318 = vld [vmem:[%s243 + $0x54] sm:$0xff]
      %v319 = vld [vmem:[%s243 + $0x5c] sm:$0xf]
      %v320 = vld [vmem:[%s243 + $0x60] sm:$0xff]
      %v321 = vld [vmem:[%s243 + $0x68] sm:$0xf]
      %v322 = vld [vmem:[%s243 + $0x6c] sm:$0xff]
      %v323 = vld [vmem:[%s243 + $0x74] sm:$0xf]
      %v324 = vld [vmem:[%s243 + $0x78] sm:$0xff]
      %v325 = vld [vmem:[%s243 + $0x80] sm:$0xf]
      %v326 = vld [vmem:[%s243 + $0x84] sm:$0xff]
      %v327 = vld [vmem:[%s243 + $0x8c] sm:$0xf]
      %v328 = vld [vmem:[%s243 + $0x90] sm:$0xff]
      %v329 = vld [vmem:[%s243 + $0x98] sm:$0xf]
      %v330 = vld [vmem:[%s243 + $0x9c] sm:$0xff]
      %v331 = vld [vmem:[%s243 + $0xa4] sm:$0xf]
      %v332 = vld [vmem:[%s243 + $0xa8] sm:$0xff]
      %v333 = vld [vmem:[%s243 + $0xb0] sm:$0xf]
      %v334 = vld [vmem:[%s243 + $0xb4] sm:$0xff]
      %v335 = vld [vmem:[%s243 + $0xbc] sm:$0xf]
      %v336 = vld [vmem:[%s253] sm:$0xf]
      %v337 = vld [vmem:[%s253 + $0x4] sm:$0xf]
      %v338 = vld [vmem:[%s253 + $0x8] sm:$0xf]
      %v339 = vld [vmem:[%s253 + $0xc] sm:$0xf]
      %v340 = vld [vmem:[%s253 + $0x10] sm:$0xf]
      %v341 = vld [vmem:[%s253 + $0x14] sm:$0xf]
      %v342 = vld [vmem:[%s253 + $0x18] sm:$0xf]
      %v343 = vld [vmem:[%s253 + $0x1c] sm:$0xf]
      %v344 = vld [vmem:[%s253 + $0x20] sm:$0xf]
      %v345 = vld [vmem:[%s253 + $0x24] sm:$0xf]
      %v346 = vld [vmem:[%s253 + $0x28] sm:$0xf]
      %v347 = vld [vmem:[%s253 + $0x2c] sm:$0xf]
      %v348 = vld [vmem:[%s253 + $0x30] sm:$0xf]
      %v349 = vld [vmem:[%s253 + $0x34] sm:$0xf]
      %v350 = vld [vmem:[%s253 + $0x38] sm:$0xf]
      %v351 = vld [vmem:[%s253 + $0x3c] sm:$0xf]
      %v352 = vld [vmem:[%s253 + $0x40] sm:$0xf]
      %v353 = vld [vmem:[%s253 + $0x44] sm:$0xf]
      %v354 = vld [vmem:[%s253 + $0x48] sm:$0xf]
      %v355 = vld [vmem:[%s253 + $0x4c] sm:$0xf]
      %v356 = vld [vmem:[%s253 + $0x50] sm:$0xf]
      %v357 = vld [vmem:[%s253 + $0x54] sm:$0xf]
      %v358 = vld [vmem:[%s253 + $0x58] sm:$0xf]
      %v359 = vld [vmem:[%s253 + $0x5c] sm:$0xf]
      %v360 = vld [vmem:[%s253 + $0x60] sm:$0xf]
      %v361 = vld [vmem:[%s253 + $0x64] sm:$0xf]
      %v362 = vld [vmem:[%s253 + $0x68] sm:$0xf]
      %v363 = vld [vmem:[%s253 + $0x6c] sm:$0xf]
      %v364 = vld [vmem:[%s253 + $0x70] sm:$0xf]
      %v365 = vld [vmem:[%s253 + $0x74] sm:$0xf]
      %v366 = vld [vmem:[%s253 + $0x78] sm:$0xf]
      %v367 = vld [vmem:[%s253 + $0x7c] sm:$0xf]
      %v368 = vld [vmem:[%s253 + $0x80] sm:$0xf]
      %v369 = vld [vmem:[%s253 + $0x84] sm:$0xf]
      %v370 = vld [vmem:[%s253 + $0x88] sm:$0xf]
      %v371 = vld [vmem:[%s253 + $0x8c] sm:$0xf]
      %v372 = vld [vmem:[%s253 + $0x90] sm:$0xf]
      %v373 = vld [vmem:[%s253 + $0x94] sm:$0xf]
      %v374 = vld [vmem:[%s253 + $0x98] sm:$0xf]
      %v375 = vld [vmem:[%s253 + $0x9c] sm:$0xf]
      %v376 = vld [vmem:[%s253 + $0xa0] sm:$0xf]
      %v377 = vld [vmem:[%s253 + $0xa4] sm:$0xf]
      %v378 = vld [vmem:[%s253 + $0xa8] sm:$0xf]
      %v379 = vld [vmem:[%s253 + $0xac] sm:$0xf]
      %v380 = vld [vmem:[%s253 + $0xb0] sm:$0xf]
      %v381 = vld [vmem:[%s253 + $0xb4] sm:$0xf]
      %v382 = vld [vmem:[%s253 + $0xb8] sm:$0xf]
      %v383 = vld [vmem:[%s253 + $0xbc] sm:$0xf]
      %v416 = vunpack.c.l.b16 %v304
      %v417 = vunpack.c.h.b16 %v304
      %v418 = vunpack.c.l.b16 %v305
      %v419 = vunpack.c.l.b16 %v306
      %v420 = vunpack.c.h.b16 %v306
      %v421 = vunpack.c.l.b16 %v307
      %v422 = vunpack.c.l.b16 %v308
      %v423 = vunpack.c.h.b16 %v308
      %v424 = vunpack.c.l.b16 %v309
      %v425 = vunpack.c.l.b16 %v310
      %v426 = vunpack.c.h.b16 %v310
      %v427 = vunpack.c.l.b16 %v311
      %v428 = vunpack.c.l.b16 %v312
      %v429 = vunpack.c.h.b16 %v312
      %v430 = vunpack.c.l.b16 %v313
      %v431 = vunpack.c.l.b16 %v314
      %v432 = vunpack.c.h.b16 %v314
      %v433 = vunpack.c.l.b16 %v315
      %v434 = vunpack.c.l.b16 %v316
      %v435 = vunpack.c.h.b16 %v316
      %v436 = vunpack.c.l.b16 %v317
      %v437 = vunpack.c.l.b16 %v318
      %v438 = vunpack.c.h.b16 %v318
      %v439 = vunpack.c.l.b16 %v319
      %v440 = vunpack.c.l.b16 %v320
      %v441 = vunpack.c.h.b16 %v320
      %v442 = vunpack.c.l.b16 %v321
      %v443 = vunpack.c.l.b16 %v322
      %v444 = vunpack.c.h.b16 %v322
      %v445 = vunpack.c.l.b16 %v323
      %v446 = vunpack.c.l.b16 %v324
      %v447 = vunpack.c.h.b16 %v324
      %v448 = vunpack.c.l.b16 %v325
      %v449 = vunpack.c.l.b16 %v326
      %v450 = vunpack.c.h.b16 %v326
      %v451 = vunpack.c.l.b16 %v327
      %v452 = vunpack.c.l.b16 %v328
      %v453 = vunpack.c.h.b16 %v328
      %v454 = vunpack.c.l.b16 %v329
      %v455 = vunpack.c.l.b16 %v330
      %v456 = vunpack.c.h.b16 %v330
      %v457 = vunpack.c.l.b16 %v331
      %v458 = vunpack.c.l.b16 %v332
      %v459 = vunpack.c.h.b16 %v332
      %v460 = vunpack.c.l.b16 %v333
      %v461 = vunpack.c.l.b16 %v334
      %v462 = vunpack.c.h.b16 %v334
      %v463 = vunpack.c.l.b16 %v335
      %v464 = vpack.c.b16 %v419, %v416
      %v465 = vpack.c.b16 %v420, %v417
      %v466 = vpack.c.b16 %v421, %v418
      %v467 = vpack.c.b16 %v425, %v422
      %v468 = vpack.c.b16 %v426, %v423
      %v469 = vpack.c.b16 %v427, %v424
      %v470 = vpack.c.b16 %v431, %v428
      %v471 = vpack.c.b16 %v432, %v429
      %v472 = vpack.c.b16 %v433, %v430
      %v473 = vpack.c.b16 %v437, %v434
      %v474 = vpack.c.b16 %v438, %v435
      %v475 = vpack.c.b16 %v439, %v436
      %v476 = vpack.c.b16 %v443, %v440
      %v477 = vpack.c.b16 %v444, %v441
      %v478 = vpack.c.b16 %v445, %v442
      %v479 = vpack.c.b16 %v449, %v446
      %v480 = vpack.c.b16 %v450, %v447
      %v481 = vpack.c.b16 %v451, %v448
      %v482 = vpack.c.b16 %v455, %v452
      %v483 = vpack.c.b16 %v456, %v453
      %v484 = vpack.c.b16 %v457, %v454
      %v485 = vpack.c.b16 %v461, %v458
      %v486 = vpack.c.b16 %v462, %v459
      %v487 = vpack.c.b16 %v463, %v460
      %v560 = vunpack.c.l.b16 %v336
      %v561 = vunpack.c.l.b16 %v337
      %v562 = vunpack.c.l.b16 %v338
      %v563 = vunpack.c.l.b16 %v339
      %v564 = vunpack.c.l.b16 %v340
      %v565 = vunpack.c.l.b16 %v341
      %v566 = vunpack.c.l.b16 %v342
      %v567 = vunpack.c.l.b16 %v343
      %v568 = vunpack.c.l.b16 %v344
      %v569 = vunpack.c.l.b16 %v345
      %v570 = vunpack.c.l.b16 %v346
      %v571 = vunpack.c.l.b16 %v347
      %v572 = vunpack.c.l.b16 %v348
      %v573 = vunpack.c.l.b16 %v349
      %v574 = vunpack.c.l.b16 %v350
      %v575 = vunpack.c.l.b16 %v351
      %v576 = vunpack.c.l.b16 %v352
      %v577 = vunpack.c.l.b16 %v353
      %v578 = vunpack.c.l.b16 %v354
      %v579 = vunpack.c.l.b16 %v355
      %v580 = vunpack.c.l.b16 %v356
      %v581 = vunpack.c.l.b16 %v357
      %v582 = vunpack.c.l.b16 %v358
      %v583 = vunpack.c.l.b16 %v359
      %v584 = vunpack.c.l.b16 %v360
      %v585 = vunpack.c.l.b16 %v361
      %v586 = vunpack.c.l.b16 %v362
      %v587 = vunpack.c.l.b16 %v363
      %v588 = vunpack.c.l.b16 %v364
      %v589 = vunpack.c.l.b16 %v365
      %v590 = vunpack.c.l.b16 %v366
      %v591 = vunpack.c.l.b16 %v367
      %v592 = vunpack.c.l.b16 %v368
      %v593 = vunpack.c.l.b16 %v369
      %v594 = vunpack.c.l.b16 %v370
      %v595 = vunpack.c.l.b16 %v371
      %v596 = vunpack.c.l.b16 %v372
      %v597 = vunpack.c.l.b16 %v373
      %v598 = vunpack.c.l.b16 %v374
      %v599 = vunpack.c.l.b16 %v375
      %v600 = vunpack.c.l.b16 %v376
      %v601 = vunpack.c.l.b16 %v377
      %v602 = vunpack.c.l.b16 %v378
      %v603 = vunpack.c.l.b16 %v379
      %v604 = vunpack.c.l.b16 %v380
      %v605 = vunpack.c.l.b16 %v381
      %v606 = vunpack.c.l.b16 %v382
      %v607 = vunpack.c.l.b16 %v383
      %v608 = vpack.c.b16 %v561, %v560
      %v609 = vpack.c.b16 %v563, %v562
      %v610 = vpack.c.b16 %v565, %v564
      %v611 = vpack.c.b16 %v567, %v566
      %v612 = vpack.c.b16 %v569, %v568
      %v613 = vpack.c.b16 %v571, %v570
      %v614 = vpack.c.b16 %v573, %v572
      %v615 = vpack.c.b16 %v575, %v574
      %v616 = vpack.c.b16 %v577, %v576
      %v617 = vpack.c.b16 %v579, %v578
      %v618 = vpack.c.b16 %v581, %v580
      %v619 = vpack.c.b16 %v583, %v582
      %v620 = vpack.c.b16 %v585, %v584
      %v621 = vpack.c.b16 %v587, %v586
      %v622 = vpack.c.b16 %v589, %v588
      %v623 = vpack.c.b16 %v591, %v590
      %v624 = vpack.c.b16 %v593, %v592
      %v625 = vpack.c.b16 %v595, %v594
      %v626 = vpack.c.b16 %v597, %v596
      %v627 = vpack.c.b16 %v599, %v598
      %v628 = vpack.c.b16 %v601, %v600
      %v629 = vpack.c.b16 %v603, %v602
      %v630 = vpack.c.b16 %v605, %v604
      %v631 = vpack.c.b16 %v607, %v606
      %656 = vmatprep.subr.bf16.mxu0 0
      %657 = vmatpush1.bf16.msra.mxu0 %v615
      %658 = vmatprep.subr.bf16.mxu0 0
      %659 = vmatpush1.bf16.msra.mxu0 %v614
      %660 = vmatprep.subr.bf16.mxu0 0
      %661 = vmatpush1.bf16.msra.mxu0 %v613
      %662 = vmatprep.subr.bf16.mxu0 0
      %663 = vmatpush1.bf16.msra.mxu0 %v612
      %664 = vmatprep.subr.bf16.mxu0 0
      %665 = vmatpush1.bf16.msra.mxu0 %v611
      %666 = vmatprep.subr.bf16.mxu0 0
      %667 = vmatpush1.bf16.msra.mxu0 %v610
      %668 = vmatprep.subr.bf16.mxu0 0
      %669 = vmatpush1.bf16.msra.mxu0 %v609
      %670 = vmatprep.subr.bf16.mxu0 0
      %671 = vmatpush1.bf16.msra.mxu0 %v608
      %672 = vmatprep.subr.bf16.mxu0 0
      %673 = vmatpush2.bf16.msra.mxu0 %v623
      %674 = vmatprep.subr.bf16.mxu0 0
      %675 = vmatpush2.bf16.msra.mxu0 %v622
      %676 = vmatprep.subr.bf16.mxu0 0
      %677 = vmatpush2.bf16.msra.mxu0 %v621
      %678 = vmatprep.subr.bf16.mxu0 0
      %679 = vmatpush2.bf16.msra.mxu0 %v620
      %680 = vmatprep.subr.bf16.mxu0 0
      %681 = vmatpush2.bf16.msra.mxu0 %v619
      %682 = vmatprep.subr.bf16.mxu0 0
      %683 = vmatpush2.bf16.msra.mxu0 %v618
      %684 = vmatprep.subr.bf16.mxu0 0
      %685 = vmatpush2.bf16.msra.mxu0 %v617
      %686 = vmatprep.subr.bf16.mxu0 0
      %687 = vmatpush2.bf16.msra.mxu0 %v616
      %688 = vmatprep.mubr.bf16.mxu0 %v465
      %689 = vmatmul.mubr.bf16.gmra.mxu0 %v464
      %v690 = vpop.f32.mrf.mxu0
      %v691 = vadd.f32 0.0, %v690
      %v692 = vpop.f32.mrf.mxu0
      %v693 = vpop.f32.mrf.mxu0
      %v694 = vadd.f32 0.0, %v693
      %v695 = vpop.f32.mrf.mxu0
      %696 = vmatprep.mubr.bf16.mxu0 %v468
      %697 = vmatmul.mubr.bf16.gmra.mxu0 %v467
      %v698 = vpop.f32.mrf.mxu0
      %v699 = vadd.f32 0.0, %v698
      %v700 = vpop.f32.mrf.mxu0
      %v701 = vpop.f32.mrf.mxu0
      %v702 = vadd.f32 0.0, %v701
      %v703 = vpop.f32.mrf.mxu0
      %704 = vmatprep.mubr.bf16.mxu0 %v471
      %705 = vmatmul.mubr.bf16.gmra.mxu0 %v470
      %v706 = vpop.f32.mrf.mxu0
      %v707 = vadd.f32 0.0, %v706
      %v708 = vpop.f32.mrf.mxu0
      %v709 = vpop.f32.mrf.mxu0
      %v710 = vadd.f32 0.0, %v709
      %v711 = vpop.f32.mrf.mxu0
      %712 = vmatprep.mubr.bf16.mxu0 %v474
      %713 = vmatmul.mubr.bf16.gmra.mxu0 %v473
      %v714 = vpop.f32.mrf.mxu0
      %v715 = vadd.f32 0.0, %v714
      %v716 = vpop.f32.mrf.mxu0
      %v717 = vpop.f32.mrf.mxu0
      %v718 = vadd.f32 0.0, %v717
      %v719 = vpop.f32.mrf.mxu0
      %720 = vmatprep.mubr.bf16.mxu0 %v477
      %721 = vmatmul.mubr.bf16.gmra.mxu0 %v476
      %v722 = vpop.f32.mrf.mxu0
      %v723 = vadd.f32 0.0, %v722
      %v724 = vpop.f32.mrf.mxu0
      %v725 = vpop.f32.mrf.mxu0
      %v726 = vadd.f32 0.0, %v725
      %v727 = vpop.f32.mrf.mxu0
      %728 = vmatprep.mubr.bf16.mxu0 %v480
      %729 = vmatmul.mubr.bf16.gmra.mxu0 %v479
      %v730 = vpop.f32.mrf.mxu0
      %v731 = vadd.f32 0.0, %v730
      %v732 = vpop.f32.mrf.mxu0
      %v733 = vpop.f32.mrf.mxu0
      %v734 = vadd.f32 0.0, %v733
      %v735 = vpop.f32.mrf.mxu0
      %736 = vmatprep.mubr.bf16.mxu0 %v483
      %737 = vmatmul.mubr.bf16.gmra.mxu0 %v482
      %v738 = vpop.f32.mrf.mxu0
      %v739 = vadd.f32 0.0, %v738
      %v740 = vpop.f32.mrf.mxu0
      %v741 = vpop.f32.mrf.mxu0
      %v742 = vadd.f32 0.0, %v741
      %v743 = vpop.f32.mrf.mxu0
      %744 = vmatprep.mubr.bf16.mxu0 %v486
      %745 = vmatmul.mubr.bf16.gmra.mxu0 %v485
      %v746 = vpop.f32.mrf.mxu0
      %v747 = vadd.f32 0.0, %v746
      %v748 = vpop.f32.mrf.mxu0
      %v749 = vpop.f32.mrf.mxu0
      %v750 = vadd.f32 0.0, %v749
      %v751 = vpop.f32.mrf.mxu0
      %752 = vdwg.mxu0
      %753 = vmatprep.subr.bf16.mxu0 0
      %754 = vmatpush1.bf16.msra.mxu0 %v631
      %755 = vmatprep.subr.bf16.mxu0 0
      %756 = vmatpush1.bf16.msra.mxu0 %v630
      %757 = vmatprep.subr.bf16.mxu0 0
      %758 = vmatpush1.bf16.msra.mxu0 %v629
      %759 = vmatprep.subr.bf16.mxu0 0
      %760 = vmatpush1.bf16.msra.mxu0 %v628
      %761 = vmatprep.subr.bf16.mxu0 0
      %762 = vmatpush1.bf16.msra.mxu0 %v627
      %763 = vmatprep.subr.bf16.mxu0 0
      %764 = vmatpush1.bf16.msra.mxu0 %v626
      %765 = vmatprep.subr.bf16.mxu0 0
      %766 = vmatpush1.bf16.msra.mxu0 %v625
      %767 = vmatprep.subr.bf16.mxu0 0
      %768 = vmatpush1.bf16.msra.mxu0 %v624
      %769 = vmatprep.subr.bf16.mxu0 0
      %770 = vmatpush2.bf16.msra.mxu0 0
      %771 = vmatprep.subr.bf16.mxu0 0
      %772 = vmatpush2.bf16.msra.mxu0 0
      %773 = vmatprep.subr.bf16.mxu0 0
      %774 = vmatpush2.bf16.msra.mxu0 0
      %775 = vmatprep.subr.bf16.mxu0 0
      %776 = vmatpush2.bf16.msra.mxu0 0
      %777 = vmatprep.subr.bf16.mxu0 0
      %778 = vmatpush2.bf16.msra.mxu0 0
      %779 = vmatprep.subr.bf16.mxu0 0
      %780 = vmatpush2.bf16.msra.mxu0 0
      %781 = vmatprep.subr.bf16.mxu0 0
      %782 = vmatpush2.bf16.msra.mxu0 0
      %783 = vmatprep.subr.bf16.mxu0 0
      %784 = vmatpush2.bf16.msra.mxu0 0
      %785 = vmatprep.mubr.bf16.mxu0 0
      %786 = vmatmul.mubr.bf16.gmra.mxu0 %v466
      %v787 = vpop.f32.mrf.mxu0
      %v788 = vadd.f32 %v691, %v787
      %v789 = vpop.f32.mrf.mxu0
      %v790 = vpop.f32.mrf.mxu0
      %v791 = vadd.f32 %v694, %v790
      %v792 = vpop.f32.mrf.mxu0
      %793 = vmatprep.mubr.bf16.mxu0 0
      %794 = vmatmul.mubr.bf16.gmra.mxu0 %v469
      %v795 = vpop.f32.mrf.mxu0
      %v796 = vadd.f32 %v699, %v795
      %v797 = vpop.f32.mrf.mxu0
      %v798 = vpop.f32.mrf.mxu0
      %v799 = vadd.f32 %v702, %v798
      %v800 = vpop.f32.mrf.mxu0
      %801 = vmatprep.mubr.bf16.mxu0 0
      %802 = vmatmul.mubr.bf16.gmra.mxu0 %v472
      %v803 = vpop.f32.mrf.mxu0
      %v804 = vadd.f32 %v707, %v803
      %v805 = vpop.f32.mrf.mxu0
      %v806 = vpop.f32.mrf.mxu0
      %v807 = vadd.f32 %v710, %v806
      %v808 = vpop.f32.mrf.mxu0
      %809 = vmatprep.mubr.bf16.mxu0 0
      %810 = vmatmul.mubr.bf16.gmra.mxu0 %v475
      %v811 = vpop.f32.mrf.mxu0
      %v812 = vadd.f32 %v715, %v811
      %v813 = vpop.f32.mrf.mxu0
      %v814 = vpop.f32.mrf.mxu0
      %v815 = vadd.f32 %v718, %v814
      %v816 = vpop.f32.mrf.mxu0
      %817 = vmatprep.mubr.bf16.mxu0 0
      %818 = vmatmul.mubr.bf16.gmra.mxu0 %v478
      %v819 = vpop.f32.mrf.mxu0
      %v820 = vadd.f32 %v723, %v819
      %v821 = vpop.f32.mrf.mxu0
      %v822 = vpop.f32.mrf.mxu0
      %v823 = vadd.f32 %v726, %v822
      %v824 = vpop.f32.mrf.mxu0
      %825 = vmatprep.mubr.bf16.mxu0 0
      %826 = vmatmul.mubr.bf16.gmra.mxu0 %v481
      %v827 = vpop.f32.mrf.mxu0
      %v828 = vadd.f32 %v731, %v827
      %v829 = vpop.f32.mrf.mxu0
      %v830 = vpop.f32.mrf.mxu0
      %v831 = vadd.f32 %v734, %v830
      %v832 = vpop.f32.mrf.mxu0
      %833 = vmatprep.mubr.bf16.mxu0 0
      %834 = vmatmul.mubr.bf16.gmra.mxu0 %v484
      %v835 = vpop.f32.mrf.mxu0
      %v836 = vadd.f32 %v739, %v835
      %v837 = vpop.f32.mrf.mxu0
      %v838 = vpop.f32.mrf.mxu0
      %v839 = vadd.f32 %v742, %v838
      %v840 = vpop.f32.mrf.mxu0
      %841 = vmatprep.mubr.bf16.mxu0 0
      %842 = vmatmul.mubr.bf16.gmra.mxu0 %v487
      %v843 = vpop.f32.mrf.mxu0
      %v844 = vadd.f32 %v747, %v843
      %v845 = vpop.f32.mrf.mxu0
      %v846 = vpop.f32.mrf.mxu0
      %v847 = vadd.f32 %v750, %v846
      %v848 = vpop.f32.mrf.mxu0
      %849 = vdwg.mxu0
      %v850 = vadd.f32 %v288, %v788
      %v851 = vadd.f32 %v289, %v791
      %v852 = vadd.f32 %v290, %v796
      %v853 = vadd.f32 %v291, %v799
      %v854 = vadd.f32 %v292, %v804
      %v855 = vadd.f32 %v293, %v807
      %v856 = vadd.f32 %v294, %v812
      %v857 = vadd.f32 %v295, %v815
      %v858 = vadd.f32 %v296, %v820
      %v859 = vadd.f32 %v297, %v823
      %v860 = vadd.f32 %v298, %v828
      %v861 = vadd.f32 %v299, %v831
      %v862 = vadd.f32 %v300, %v836
      %v863 = vadd.f32 %v301, %v839
      %v864 = vadd.f32 %v302, %v844
      %v865 = vadd.f32 %v303, %v847
      %866 = vst [vmem:[#allocation2] sm:$0xff] %v850
      %867 = vst [vmem:[#allocation2 + $0x8] sm:$0xff] %v851
      %868 = vst [vmem:[#allocation2 + $0x10] sm:$0xff] %v852
      %869 = vst [vmem:[#allocation2 + $0x18] sm:$0xff] %v853
      %870 = vst [vmem:[#allocation2 + $0x20] sm:$0xff] %v854
      %871 = vst [vmem:[#allocation2 + $0x28] sm:$0xff] %v855
      %872 = vst [vmem:[#allocation2 + $0x30] sm:$0xff] %v856
      %873 = vst [vmem:[#allocation2 + $0x38] sm:$0xff] %v857
      %874 = vst [vmem:[#allocation2 + $0x40] sm:$0xff] %v858
      %875 = vst [vmem:[#allocation2 + $0x48] sm:$0xff] %v859
      %876 = vst [vmem:[#allocation2 + $0x50] sm:$0xff] %v860
      %877 = vst [vmem:[#allocation2 + $0x58] sm:$0xff] %v861
      %878 = vst [vmem:[#allocation2 + $0x60] sm:$0xff] %v862
      %879 = vst [vmem:[#allocation2 + $0x68] sm:$0xff] %v863
      %880 = vst [vmem:[#allocation2 + $0x70] sm:$0xff] %v864
      %881 = vst [vmem:[#allocation2 + $0x78] sm:$0xff] %v865
      // Predicated region
      $region37: #{forward.8} parent=31 // pred_check
        %p882 = pneg %p268
      $region38: #{forward.8} parent=31 // pred_check_branch
        %884 = sbr.rel (%p882) target = $region40
      $region39: #{forward.8} parent=31 // pred_region
        %v885 = vld [vmem:[#allocation2] sm:$0xff]
        %v886 = vld [vmem:[#allocation2 + $0x8] sm:$0xff]
        %v887 = vld [vmem:[#allocation2 + $0x10] sm:$0xff]
        %v888 = vld [vmem:[#allocation2 + $0x18] sm:$0xff]
        %v889 = vld [vmem:[#allocation2 + $0x20] sm:$0xff]
        %v890 = vld [vmem:[#allocation2 + $0x28] sm:$0xff]
        %v891 = vld [vmem:[#allocation2 + $0x30] sm:$0xff]
        %v892 = vld [vmem:[#allocation2 + $0x38] sm:$0xff]
        %v893 = vld [vmem:[#allocation2 + $0x40] sm:$0xff]
        %v894 = vld [vmem:[#allocation2 + $0x48] sm:$0xff]
        %v895 = vld [vmem:[#allocation2 + $0x50] sm:$0xff]
        %v896 = vld [vmem:[#allocation2 + $0x58] sm:$0xff]
        %v897 = vld [vmem:[#allocation2 + $0x60] sm:$0xff]
        %v898 = vld [vmem:[#allocation2 + $0x68] sm:$0xff]
        %v899 = vld [vmem:[#allocation2 + $0x70] sm:$0xff]
        %v900 = vld [vmem:[#allocation2 + $0x78] sm:$0xff]
        %v901 = vld [vmem:[%s257] sm:$0x1]
        %v903 = vlaneseq
        %v904 = vshrl.u32 %v903, 7
        %v905 = vsub.s32 0, %v904
        %v906 = vrot.slane %v901, %v905
        %v908 = vadd.f32 %v885, %v906
        %v909 = vadd.f32 %v886, %v906
        %v910 = vadd.f32 %v887, %v906
        %v911 = vadd.f32 %v888, %v906
        %v912 = vadd.f32 %v889, %v906
        %v913 = vadd.f32 %v890, %v906
        %v914 = vadd.f32 %v891, %v906
        %v915 = vadd.f32 %v892, %v906
        %v916 = vadd.f32 %v893, %v906
        %v917 = vadd.f32 %v894, %v906
        %v918 = vadd.f32 %v895, %v906
        %v919 = vadd.f32 %v896, %v906
        %v920 = vadd.f32 %v897, %v906
        %v921 = vadd.f32 %v898, %v906
        %v922 = vadd.f32 %v899, %v906
        %v923 = vadd.f32 %v900, %v906
        %v924 = vmax.f32 %v908, 0.0
        %v925 = vmax.f32 %v909, 0.0
        %v926 = vmax.f32 %v910, 0.0
        %v927 = vmax.f32 %v911, 0.0
        %v928 = vmax.f32 %v912, 0.0
        %v929 = vmax.f32 %v913, 0.0
        %v930 = vmax.f32 %v914, 0.0
        %v931 = vmax.f32 %v915, 0.0
        %v932 = vmax.f32 %v916, 0.0
        %v933 = vmax.f32 %v917, 0.0
        %v934 = vmax.f32 %v918, 0.0
        %v935 = vmax.f32 %v919, 0.0
        %v936 = vmax.f32 %v920, 0.0
        %v937 = vmax.f32 %v921, 0.0
        %v938 = vmax.f32 %v922, 0.0
        %v939 = vmax.f32 %v923, 0.0
        %v940 = vpack.c.bf16 %v925, %v924
        %v941 = vpack.c.bf16 %v927, %v926
        %v942 = vpack.c.bf16 %v929, %v928
        %v943 = vpack.c.bf16 %v931, %v930
        %v944 = vpack.c.bf16 %v933, %v932
        %v945 = vpack.c.bf16 %v935, %v934
        %v946 = vpack.c.bf16 %v937, %v936
        %v947 = vpack.c.bf16 %v939, %v938
        %v956 = vunpack.c.l.b16 %v940
        %v957 = vunpack.c.h.b16 %v940
        %v958 = vunpack.c.l.b16 %v941
        %v959 = vunpack.c.h.b16 %v941
        %v960 = vunpack.c.l.b16 %v942
        %v961 = vunpack.c.h.b16 %v942
        %v962 = vunpack.c.l.b16 %v943
        %v963 = vunpack.c.h.b16 %v943
        %v964 = vunpack.c.l.b16 %v944
        %v965 = vunpack.c.h.b16 %v944
        %v966 = vunpack.c.l.b16 %v945
        %v967 = vunpack.c.h.b16 %v945
        %v968 = vunpack.c.l.b16 %v946
        %v969 = vunpack.c.h.b16 %v946
        %v970 = vunpack.c.l.b16 %v947
        %v971 = vunpack.c.h.b16 %v947
        %v972 = vpack.c.b16 %v956, %v956
        %v973 = vpack.c.b16 %v957, %v957
        %v974 = vpack.c.b16 %v958, %v958
        %v975 = vpack.c.b16 %v959, %v959
        %v976 = vpack.c.b16 %v960, %v960
        %v977 = vpack.c.b16 %v961, %v961
        %v978 = vpack.c.b16 %v962, %v962
        %v979 = vpack.c.b16 %v963, %v963
        %v980 = vpack.c.b16 %v964, %v964
        %v981 = vpack.c.b16 %v965, %v965
        %v982 = vpack.c.b16 %v966, %v966
        %v983 = vpack.c.b16 %v967, %v967
        %v984 = vpack.c.b16 %v968, %v968
        %v985 = vpack.c.b16 %v969, %v969
        %v986 = vpack.c.b16 %v970, %v970
        %v987 = vpack.c.b16 %v971, %v971
        %1004 = vst [vmem:[%s265] sm:$0xf] %v972
        %1005 = vst [vmem:[%s265 + $0x4] sm:$0xf] %v973
        %1006 = vst [vmem:[%s265 + $0x8] sm:$0xf] %v974
        %1007 = vst [vmem:[%s265 + $0xc] sm:$0xf] %v975
        %1008 = vst [vmem:[%s265 + $0x10] sm:$0xf] %v976
        %1009 = vst [vmem:[%s265 + $0x14] sm:$0xf] %v977
        %1010 = vst [vmem:[%s265 + $0x18] sm:$0xf] %v978
        %1011 = vst [vmem:[%s265 + $0x1c] sm:$0xf] %v979
        %1012 = vst [vmem:[%s265 + $0x20] sm:$0xf] %v980
        %1013 = vst [vmem:[%s265 + $0x24] sm:$0xf] %v981
        %1014 = vst [vmem:[%s265 + $0x28] sm:$0xf] %v982
        %1015 = vst [vmem:[%s265 + $0x2c] sm:$0xf] %v983
        %1016 = vst [vmem:[%s265 + $0x30] sm:$0xf] %v984
        %1017 = vst [vmem:[%s265 + $0x34] sm:$0xf] %v985
        %1018 = vst [vmem:[%s265 + $0x38] sm:$0xf] %v986
        %1019 = vst [vmem:[%s265 + $0x3c] sm:$0xf] %v987
      $region40: #{forward.8} parent=31 // pred_fallthru
        _
      %s1020 = smul.u32 16, %s19
      %p1021 = scmp.lt.s32.totalorder %s1020, 63
      %s1022 = scalar_select %p1021, %s1020, 63
      %p1023 = scmp.lt.s32.totalorder %s20, 0
      %s1024 = scalar_select %p1023, %s20, 0
      %s1025 = sadd.s32 %s1024, %s1022
      %s1026 = smul.addr %s1025, 4
      %s1027 = scalar_lea.vmem %s3, %s1026
      // Predicated region
      $region41: #{forward.8} parent=31 // pred_check
        %p1028 = pneg %p135
      $region42: #{forward.8} parent=31 // pred_check_branch
        %1030 = sbr.rel (%p1028) target = $region44
      $region43: #{forward.8} parent=31 // pred_region
        %s1031 = smul.u32 16, %s19
      $region44: #{forward.8} parent=31 // pred_fallthru
        _
    $region32: #{forward.8} parent=5 // pred_fallthru
      _
    %p1032 = scmp.le.s32.totalorder 2, %s9
    // Predicated region
    $region45: #{forward.8} parent=5 // pred_check
      %p1033 = pneg %p1032
    $region46: #{forward.8} parent=5 // pred_check_branch
      %1035 = sbr.rel (%p1033) target = $region48
    $region47: #{forward.8} parent=5 // pred_region
      %s1036 = ssub.s32 %s9, 2
      // Predicated region
      $region49: #{forward.8} parent=47 // pred_check
        %p1037 = pneg %p141
      $region50: #{forward.8} parent=47 // pred_check_branch
        %1039 = sbr.rel (%p1037) target = $region52
      $region51: #{forward.8} parent=47 // pred_region
        %s1040 = smul.u32 16, %s22
        %p1041 = scmp.lt.s32.totalorder %s1040, 63
        %s1042 = scalar_select %p1041, %s1040, 63
        %p1043 = scmp.lt.s32.totalorder %s23, 0
        %s1044 = scalar_select %p1043, %s23, 0
        %s1045 = sadd.s32 %s1044, %s1042
        %s1046 = smul.addr %s1045, 4
        %s1047 = scalar_lea.vmem %s3, %s1046
      $region52: #{forward.8} parent=47 // pred_fallthru
        _
    $region48: #{forward.8} parent=5 // pred_fallthru
      _
  $region6: #{forward.8} parent=0 // loop_footer
    %s13 = sadd.s32 1, %s9
  $region7: #{forward.8} parent=0 // loop_footer_branch
    %8 = sbr.rel target = $region3
  $region8: #{forward.8} parent=0 // loop_exit
    _

// kernel: forward.9
$region0: #{forward.9}
  #allocation0 [shape = 'u32[]', space=smem, size = 0x4, offset = 0x4, fixed_abs, tag = 'smem constant byte address 0x4 - core index']
  #allocation1 [shape = 'u32[144,128]{1,0:T(1,128)}', space=vmem, size = 0x12000, scoped, tag = 'internal scratch']
  #allocation2 [shape = 'f32[112,256]{1,0:T(8,128)}', space=vmem, size = 0x1c000, scoped, tag = 'scratch operand']
  %s0 = inlined_call_operand.vmem [shape: bf16[112,2048], index: 0, kind: input, shape index: {}]
  %s1 = inlined_call_operand.vmem [shape: bf16[2048,256], index: 1, kind: input, shape index: {}]
  %s2 = inlined_call_operand.vmem [shape: f32[1,256], index: 2, kind: input, shape index: {}]
  %s3 = inlined_call_operand.vmem [shape: bf16[112,256], index: 3, kind: output, shape index: {}]
  %s4 = sld [smem:[#allocation0]]
  $region76: #{forward.9} parent=0
    _
  %s6 = ssub.s32 1, %s4
  %s7 = scalar_select 0, %s6, %s4
  $region1: #{forward.9} parent=0
    #allocation3 [shape = 'u8[229376]{0}', space=vmem, size = 0x38000, scoped, tag = 'input window, operand 0']
    loop: start=0, step=1, limit=6
    $region2: #{forward.9} parent=1 // loop_pre_header
      _
    $region3: #{forward.9} parent=1 // loop_header
      %s9 = sphi 0, %s13
      %p10 = scmp.ge.s32.totalorder %s9, 6
      %s16 = sphi 0, %s35
      %s17 = sphi 0, %s31
      %s18 = sphi 0, %s27
      %s19 = sphi 0, %s16
      %s20 = sphi 0, %s17
      %s21 = sphi 0, %s18
      %s22 = sphi 0, %s19
      %s23 = sphi 0, %s20
      %s24 = sphi 0, %s21
      %s40 = sphi 0, %s42
      %s43 = sphi 0, %s40
      %s44 = sphi 0, %s43
      %s60 = sphi 0, %s44
      %s68 = sphi 0, %s70
      %s71 = sphi 0, %s68
      %s72 = sphi 0, %s71
      %s88 = sphi 0, %s72
      %s94 = sphi 0, %s96
      %s97 = sphi 0, %s94
      %s98 = sphi 0, %s97
      %s114 = sphi 0, %s98
      %s122 = sphi 0, %s124
      %s125 = sphi 0, %s122
      %s126 = sphi 0, %s125
      %s142 = sphi 0, %s126
    $region4: #{forward.9} parent=1 // loop_header_branch
      %12 = sbr.rel (%p10) target = $region8
    $region5: #{forward.9} parent=1 // loop_body
      %s14 = ssub.s32 %s9, 1
      %s15 = ssub.s32 %s9, 2
      %s25 = sadd.s32 1, %s18
      %p26 = scmp.ge.s32.totalorder %s25, 4
      %s27 = scalar_select %p26, 0, %s25
      %s28 = sadd.s32 1, %s17
      %s29 = scalar_select %p26, %s28, %s17
      %p30 = scmp.ge.s32.totalorder %s29, 1
      %s31 = scalar_select %p30, 0, %s29
      %s32 = sadd.s32 1, %s16
      %s33 = scalar_select %p30, %s32, %s16
      %p34 = scmp.ge.s32.totalorder %s33, 1
      %s35 = scalar_select %p34, 0, %s33
      %s36 = ssub.s32 %s16, %s35
      %s37 = ssub.s32 %s18, %s27
      %s38 = sor.u32 %s36, %s37
      %p39 = scmp.eq.s32.totalorder %s38, 0
      %s41 = sadd.s32 %s40, 1
      %s42 = scalar_select %p39, %s40, %s41
      %p45 = pneg %p39
      %p46 = scmp.eq.s32.totalorder %s9, 3
      %p47 = por %p45, %p46
      %p48 = scmp.ne.s32.totalorder %s40, %s43
      %p49 = scmp.eq.s32.totalorder %s9, 0
      %p50 = por %p48, %p49
      %p51 = scmp.ne.s32.totalorder %s40, %s43
      %p52 = scmp.eq.s32.totalorder %s14, 3
      %p53 = por %p51, %p52
      %p54 = scmp.ne.s32.totalorder %s43, %s44
      %p55 = scmp.eq.s32.totalorder %s14, 0
      %p56 = por %p54, %p55
      %p57 = scmp.ne.s32.totalorder %s43, %s44
      %p58 = scmp.eq.s32.totalorder %s15, 3
      %p59 = por %p57, %p58
      %p61 = scmp.ne.s32.totalorder %s44, %s60
      %p62 = scmp.eq.s32.totalorder %s15, 0
      %p63 = por %p61, %p62
      %s64 = ssub.s32 %s18, %s27
      %s65 = ssub.s32 %s17, %s31
      %s66 = sor.u32 %s64, %s65
      %p67 = scmp.eq.s32.totalorder %s66, 0
      %s69 = sadd.s32 %s68, 1
      %s70 = scalar_select %p67, %s68, %s69
      %p73 = pneg %p67
      %p74 = scmp.eq.s32.totalorder %s9, 3
      %p75 = por %p73, %p74
      %p76 = scmp.ne.s32.totalorder %s68, %s71
      %p77 = scmp.eq.s32.totalorder %s9, 0
      %p78 = por %p76, %p77
      %p79 = scmp.ne.s32.totalorder %s68, %s71
      %p80 = scmp.eq.s32.totalorder %s14, 3
      %p81 = por %p79, %p80
      %p82 = scmp.ne.s32.totalorder %s71, %s72
      %p83 = scmp.eq.s32.totalorder %s14, 0
      %p84 = por %p82, %p83
      %p85 = scmp.ne.s32.totalorder %s71, %s72
      %p86 = scmp.eq.s32.totalorder %s15, 3
      %p87 = por %p85, %p86
      %p89 = scmp.ne.s32.totalorder %s72, %s88
      %p90 = scmp.eq.s32.totalorder %s15, 0
      %p91 = por %p89, %p90
      %s92 = ssub.s32 %s17, %s31
      %p93 = scmp.eq.s32.totalorder %s92, 0
      %s95 = sadd.s32 %s94, 1
      %s96 = scalar_select %p93, %s94, %s95
      %p99 = pneg %p93
      %p100 = scmp.eq.s32.totalorder %s9, 3
      %p101 = por %p99, %p100
      %p102 = scmp.ne.s32.totalorder %s94, %s97
      %p103 = scmp.eq.s32.totalorder %s9, 0
      %p104 = por %p102, %p103
      %p105 = scmp.ne.s32.totalorder %s94, %s97
      %p106 = scmp.eq.s32.totalorder %s14, 3
      %p107 = por %p105, %p106
      %p108 = scmp.ne.s32.totalorder %s97, %s98
      %p109 = scmp.eq.s32.totalorder %s14, 0
      %p110 = por %p108, %p109
      %p111 = scmp.ne.s32.totalorder %s97, %s98
      %p112 = scmp.eq.s32.totalorder %s15, 3
      %p113 = por %p111, %p112
      %p115 = scmp.ne.s32.totalorder %s98, %s114
      %p116 = scmp.eq.s32.totalorder %s15, 0
      %p117 = por %p115, %p116
      %s118 = ssub.s32 %s16, %s35
      %s119 = ssub.s32 %s17, %s31
      %s120 = sor.u32 %s118, %s119
      %p121 = scmp.eq.s32.totalorder %s120, 0
      %s123 = sadd.s32 %s122, 1
      %s124 = scalar_select %p121, %s122, %s123
      %p127 = pneg %p121
      %p128 = scmp.eq.s32.totalorder %s9, 3
      %p129 = por %p127, %p128
      %p130 = scmp.ne.s32.totalorder %s122, %s125
      %p131 = scmp.eq.s32.totalorder %s9, 0
      %p132 = por %p130, %p131
      %p133 = scmp.ne.s32.totalorder %s122, %s125
      %p134 = scmp.eq.s32.totalorder %s14, 3
      %p135 = por %p133, %p134
      %p136 = scmp.ne.s32.totalorder %s125, %s126
      %p137 = scmp.eq.s32.totalorder %s14, 0
      %p138 = por %p136, %p137
      %p139 = scmp.ne.s32.totalorder %s125, %s126
      %p140 = scmp.eq.s32.totalorder %s15, 3
      %p141 = por %p139, %p140
      %p143 = scmp.ne.s32.totalorder %s126, %s142
      %p144 = scmp.eq.s32.totalorder %s15, 0
      %p145 = por %p143, %p144
      %p146 = scmp.le.s32.totalorder 1, %s9
      %p147 = scmp.lt.s32.totalorder %s9, 5
      %p148 = pnand %p146, %p147
      %p149 = pneg %p148
      // Predicated region
      $region9: #{forward.9} parent=5 // pred_check
        _
      $region10: #{forward.9} parent=5 // pred_check_branch
        %151 = sbr.rel (%p148) target = $region12
      $region11: #{forward.9} parent=5 // pred_region
        %s152 = ssub.s32 %s9, 1
        // Predicated region
        $region13: #{forward.9} parent=11 // pred_check
          %p153 = pneg %p110
        $region14: #{forward.9} parent=11 // pred_check_branch
          %155 = sbr.rel (%p153) target = $region16
        $region15: #{forward.9} parent=11 // pred_region
          %s156 = smul.u32 2, %s20
          %p157 = scmp.lt.s32.totalorder %s156, 1
          %s158 = scalar_select %p157, %s156, 1
          %s159 = scalar_lea.vmem %s2, %s158
          %s160 = smul.u32 2, %s20
        $region16: #{forward.9} parent=11 // pred_fallthru
          _
      $region12: #{forward.9} parent=5 // pred_fallthru
        _
      %p161 = scmp.lt.s32.totalorder %s9, 4
      // Predicated region
      $region17: #{forward.9} parent=5 // pred_check
        %p162 = pneg %p161
      $region18: #{forward.9} parent=5 // pred_check_branch
        %164 = sbr.rel (%p162) target = $region20
      $region19: #{forward.9} parent=5 // pred_region
        // Predicated region
        $region21: #{forward.9} parent=19 // pred_check
          %p165 = pneg %p50
        $region22: #{forward.9} parent=19 // pred_check_branch
          %167 = sbr.rel (%p165) target = $region24
        $region23: #{forward.9} parent=19 // pred_region
          %s168 = sand.u32 %s40, 1
          %s169 = sand.u32 %s40, 1
          %s170 = smul.addr %s169, 224
          %s171 = scalar_lea.vmem [#allocation3], %s170
          %s172 = smul.u32 14, %s16
          %s173 = smul.u32 4, %s18
          %s174 = smul.addr %s172, 16
          %s175 = sadd.s32 %s173, %s174
          %s176 = smul.addr %s175, 4
          %s177 = scalar_lea.vmem %s0, %s176
          // Predicated region
          $region25: #{forward.9} parent=23 // pred_check
            _
          $region26: #{forward.9} parent=23 // pred_check_branch
            %179 = sbr.rel (0) target = $region28
          $region27: #{forward.9} parent=23 // pred_region
            // Predicated region
            $region29: #{forward.9} parent=27 // pred_check
              _
            $region30: #{forward.9} parent=27 // pred_check_branch
              %181 = sbr.rel (0) target = $region32
            $region31: #{forward.9} parent=27 // pred_region
              loop: start=0, step=1, limit=1
              $region33: #{forward.9} parent=31 // loop_pre_header
                _
              $region34: #{forward.9} parent=31 // loop_header
                %s183 = sphi 0, %s187
                %p184 = scmp.ge.s32.totalorder %s183, 1
                %s188 = sphi %s177, %s177
                %s189 = sphi %s171, %s171
              $region35: #{forward.9} parent=31 // loop_header_branch
                %186 = sbr.rel (%p184) target = $region39
              $region36: #{forward.9} parent=31 // loop_body
                %v190 = vld [vmem:[%s188] sm:$0xff]
                %191 = vst [vmem:[%s189] sm:$0xff] %v190
                %v192 = vld [vmem:[%s188 + $0x8] sm:$0xff]
                %193 = vst [vmem:[%s189 + $0x8] sm:$0xff] %v192
                %v194 = vld [vmem:[%s188 + $0x40] sm:$0xff]
                %195 = vst [vmem:[%s189 + $0x10] sm:$0xff] %v194
                %v196 = vld [vmem:[%s188 + $0x48] sm:$0xff]
                %197 = vst [vmem:[%s189 + $0x18] sm:$0xff] %v196
                %v198 = vld [vmem:[%s188 + $0x80] sm:$0xff]
                %199 = vst [vmem:[%s189 + $0x20] sm:$0xff] %v198
                %v200 = vld [vmem:[%s188 + $0x88] sm:$0xff]
                %201 = vst [vmem:[%s189 + $0x28] sm:$0xff] %v200
                %v202 = vld [vmem:[%s188 + $0xc0] sm:$0xff]
                %203 = vst [vmem:[%s189 + $0x30] sm:$0xff] %v202
                %v204 = vld [vmem:[%s188 + $0xc8] sm:$0xff]
                %205 = vst [vmem:[%s189 + $0x38] sm:$0xff] %v204
                %v206 = vld [vmem:[%s188 + $0x100] sm:$0xff]
                %207 = vst [vmem:[%s189 + $0x40] sm:$0xff] %v206
                %v208 = vld [vmem:[%s188 + $0x108] sm:$0xff]
                %209 = vst [vmem:[%s189 + $0x48] sm:$0xff] %v208
                %v210 = vld [vmem:[%s188 + $0x140] sm:$0xff]
                %211 = vst [vmem:[%s189 + $0x50] sm:$0xff] %v210
                %v212 = vld [vmem:[%s188 + $0x148] sm:$0xff]
                %213 = vst [vmem:[%s189 + $0x58] sm:$0xff] %v212
                %v214 = vld [vmem:[%s188 + $0x180] sm:$0xff]
                %215 = vst [vmem:[%s189 + $0x60] sm:$0xff] %v214
                %v216 = vld [vmem:[%s188 + $0x188] sm:$0xff]
                %217 = vst [vmem:[%s189 + $0x68] sm:$0xff] %v216
                %v218 = vld [vmem:[%s188 + $0x1c0] sm:$0xff]
                %219 = vst [vmem:[%s189 + $0x70] sm:$0xff] %v218
                %v220 = vld [vmem:[%s188 + $0x1c8] sm:$0xff]
                %221 = vst [vmem:[%s189 + $0x78] sm:$0xff] %v220
                %v222 = vld [vmem:[%s188 + $0x200] sm:$0xff]
                %223 = vst [vmem:[%s189 + $0x80] sm:$0xff] %v222
                %v224 = vld [vmem:[%s188 + $0x208] sm:$0xff]
                %225 = vst [vmem:[%s189 + $0x88] sm:$0xff] %v224
                %v226 = vld [vmem:[%s188 + $0x240] sm:$0xff]
                %227 = vst [vmem:[%s189 + $0x90] sm:$0xff] %v226
                %v228 = vld [vmem:[%s188 + $0x248] sm:$0xff]
                %229 = vst [vmem:[%s189 + $0x98] sm:$0xff] %v228
                %v230 = vld [vmem:[%s188 + $0x280] sm:$0xff]
                %231 = vst [vmem:[%s189 + $0xa0] sm:$0xff] %v230
                %v232 = vld [vmem:[%s188 + $0x288] sm:$0xff]
                %233 = vst [vmem:[%s189 + $0xa8] sm:$0xff] %v232
                %v234 = vld [vmem:[%s188 + $0x2c0] sm:$0xff]
                %235 = vst [vmem:[%s189 + $0xb0] sm:$0xff] %v234
                %v236 = vld [vmem:[%s188 + $0x2c8] sm:$0xff]
                %237 = vst [vmem:[%s189 + $0xb8] sm:$0xff] %v236
                %v238 = vld [vmem:[%s188 + $0x300] sm:$0xff]
                %239 = vst [vmem:[%s189 + $0xc0] sm:$0xff] %v238
                %v240 = vld [vmem:[%s188 + $0x308] sm:$0xff]
                %241 = vst [vmem:[%s189 + $0xc8] sm:$0xff] %v240
                %v242 = vld [vmem:[%s188 + $0x340] sm:$0xff]
                %243 = vst [vmem:[%s189 + $0xd0] sm:$0xff] %v242
                %v244 = vld [vmem:[%s188 + $0x348] sm:$0xff]
                %245 = vst [vmem:[%s189 + $0xd8] sm:$0xff] %v244
              $region37: #{forward.9} parent=31 // loop_footer
                %s187 = sadd.s32 1, %s183
              $region38: #{forward.9} parent=31 // loop_footer_branch
                %182 = sbr.rel target = $region34
              $region39: #{forward.9} parent=31 // loop_exit
                _
            $region32: #{forward.9} parent=27 // pred_fallthru
              _
            // Predicated region
            $region40: #{forward.9} parent=27 // pred_check
              _
            $region41: #{forward.9} parent=27 // pred_check_branch
              %247 = sbr.rel target = $region43
            $region42: #{forward.9} parent=27 // pred_region
              _
            $region43: #{forward.9} parent=27 // pred_fallthru
              _
          $region28: #{forward.9} parent=23 // pred_fallthru
            _
          %248 = vnop
        $region24: #{forward.9} parent=19 // pred_fallthru
          _
        // Predicated region
        $region44: #{forward.9} parent=19 // pred_check
          %p249 = pneg %p78
        $region45: #{forward.9} parent=19 // pred_check_branch
          %251 = sbr.rel (%p249) target = $region47
        $region46: #{forward.9} parent=19 // pred_region
          %s252 = smul.u32 64, %s18
          %s253 = smul.u32 2, %s17
          %p254 = scmp.lt.s32.totalorder %s252, 255
          %s255 = scalar_select %p254, %s252, 255
          %p256 = scmp.lt.s32.totalorder %s253, 1
          %s257 = scalar_select %p256, %s253, 1
          %s258 = smul.addr %s255, 2
          %s259 = sadd.s32 %s257, %s258
          %s260 = smul.addr %s259, 4
          %s261 = scalar_lea.vmem %s1, %s260
          %s262 = smul.u32 64, %s18
          %s263 = smul.u32 2, %s17
        $region47: #{forward.9} parent=19 // pred_fallthru
          _
      $region20: #{forward.9} parent=5 // pred_fallthru
        _
      %p264 = scmp.le.s32.totalorder 1, %s9
      %p265 = scmp.lt.s32.totalorder %s9, 5
      %p266 = pnand %p264, %p265
      %p267 = pneg %p266
      // Predicated region
      $region48: #{forward.9} parent=5 // pred_check
        _
      $region49: #{forward.9} parent=5 // pred_check_branch
        %269 = sbr.rel (%p266) target = $region51
      $region50: #{forward.9} parent=5 // pred_region
        %s270 = ssub.s32 %s9, 1
        %s271 = sand.u32 %s43, 1
        %s272 = sand.u32 %s43, 1
        %s273 = smul.addr %s272, 224
        %s274 = scalar_lea.vmem [#allocation3], %s273
        // Predicated region
        $region52: #{forward.9} parent=50 // pred_check
          %p275 = pneg %p56
        $region53: #{forward.9} parent=50 // pred_check_branch
          %277 = sbr.rel (%p275) target = $region55
        $region54: #{forward.9} parent=50 // pred_region
          _
        $region55: #{forward.9} parent=50 // pred_fallthru
          _
        %s278 = sand.u32 %s43, 1
        %s279 = sand.u32 %s43, 1
        %s280 = smul.addr %s279, 224
        %s281 = scalar_lea.vmem [#allocation3], %s280
        %p282 = pneg %p56
        %p283 = pneg %p53
        %s284 = smul.u32 64, %s21
        %s285 = smul.u32 2, %s20
        %p286 = scmp.lt.s32.totalorder %s284, 255
        %s287 = scalar_select %p286, %s284, 255
        %p288 = scmp.lt.s32.totalorder %s285, 1
        %s289 = scalar_select %p288, %s285, 1
        %s290 = smul.addr %s287, 2
        %s291 = sadd.s32 %s289, %s290
        %s292 = smul.addr %s291, 4
        %s293 = scalar_lea.vmem %s1, %s292
        %p294 = pneg %p84
        %p295 = pneg %p81
        %s296 = smul.u32 2, %s20
        %p297 = scmp.lt.s32.totalorder %s296, 1
        %s298 = scalar_select %p297, %s296, 1
        %s299 = scalar_lea.vmem %s2, %s298
        %p300 = pneg %p110
        %p301 = pneg %p107
        %p302 = pneg %p138
        %p303 = pneg %p135
        %s304 = smul.u32 14, %s19
        %s305 = smul.u32 2, %s20
        %p306 = scmp.lt.s32.totalorder %s304, 13
        %s307 = scalar_select %p306, %s304, 13
        %p308 = scmp.lt.s32.totalorder %s305, 1
        %s309 = scalar_select %p308, %s305, 1
        %s310 = smul.addr %s307, 2
        %s311 = sadd.s32 %s309, %s310
        %s312 = smul.addr %s311, 4
        %s313 = scalar_lea.vmem %s3, %s312
        %s314 = smul.u32 14, %s19
        %s315 = smul.u32 4, %s21
        %s316 = smul.u32 64, %s21
        %s317 = smul.u32 2, %s20
        %p318 = scmp.lt.s32.totalorder %s316, 255
        %s319 = scalar_select %p318, %s316, 255
        %p320 = scmp.lt.s32.totalorder %s317, 1
        %s321 = scalar_select %p320, %s317, 1
        %s322 = smul.addr %s319, 2
        %s323 = sadd.s32 %s321, %s322
        %s324 = smul.addr %s323, 4
        %s325 = scalar_lea.vmem %s1, %s324
        %s326 = smul.u32 64, %s21
        %s327 = smul.u32 2, %s20
        %s328 = smul.u32 2, %s20
        %p329 = scmp.lt.s32.totalorder %s328, 1
        %s330 = scalar_select %p329, %s328, 1
        %s331 = scalar_lea.vmem %s2, %s330
        %s332 = smul.u32 2, %s20
        %s333 = smul.u32 14, %s19
        %s334 = smul.u32 2, %s20
        %p335 = scmp.lt.s32.totalorder %s333, 13
        %s336 = scalar_select %p335, %s333, 13
        %p337 = scmp.lt.s32.totalorder %s334, 1
        %s338 = scalar_select %p337, %s334, 1
        %s339 = smul.addr %s336, 2
        %s340 = sadd.s32 %s338, %s339
        %s341 = smul.addr %s340, 4
        %s342 = scalar_lea.vmem %s3, %s341
        %s343 = smul.u32 14, %s19
        %s344 = smul.u32 2, %s20
        %p345 = scmp.eq.s32.totalorder %s21, 0
        // Predicated region
        $region56: #{forward.9} parent=50 // pred_check
          %p346 = pneg %p345
        $region57: #{forward.9} parent=50 // pred_check_branch
          %348 = sbr.rel (%p346) target = $region59
        $region58: #{forward.9} parent=50 // pred_region
          %349 = vst [vmem:[#allocation2] sm:$0xff] 0.0
          %350 = vst [vmem:[#allocation2 + $0x8] sm:$0xff] 0.0
          %351 = vst [vmem:[#allocation2 + $0x10] sm:$0xff] 0.0
          %352 = vst [vmem:[#allocation2 + $0x18] sm:$0xff] 0.0
          %353 = vst [vmem:[#allocation2 + $0x20] sm:$0xff] 0.0
          %354 = vst [vmem:[#allocation2 + $0x28] sm:$0xff] 0.0
          %355 = vst [vmem:[#allocation2 + $0x30] sm:$0xff] 0.0
          %356 = vst [vmem:[#allocation2 + $0x38] sm:$0xff] 0.0
          %357 = vst [vmem:[#allocation2 + $0x40] sm:$0xff] 0.0
          %358 = vst [vmem:[#allocation2 + $0x48] sm:$0xff] 0.0
          %359 = vst [vmem:[#allocation2 + $0x50] sm:$0xff] 0.0
          %360 = vst [vmem:[#allocation2 + $0x58] sm:$0xff] 0.0
          %361 = vst [vmem:[#allocation2 + $0x60] sm:$0xff] 0.0
          %362 = vst [vmem:[#allocation2 + $0x68] sm:$0xff] 0.0
          %363 = vst [vmem:[#allocation2 + $0x70] sm:$0xff] 0.0
          %364 = vst [vmem:[#allocation2 + $0x78] sm:$0xff] 0.0
          %365 = vst [vmem:[#allocation2 + $0x80] sm:$0xff] 0.0
          %366 = vst [vmem:[#allocation2 + $0x88] sm:$0xff] 0.0
          %367 = vst [vmem:[#allocation2 + $0x90] sm:$0xff] 0.0
          %368 = vst [vmem:[#allocation2 + $0x98] sm:$0xff] 0.0
          %369 = vst [vmem:[#allocation2 + $0xa0] sm:$0xff] 0.0
          %370 = vst [vmem:[#allocation2 + $0xa8] sm:$0xff] 0.0
          %371 = vst [vmem:[#allocation2 + $0xb0] sm:$0xff] 0.0
          %372 = vst [vmem:[#allocation2 + $0xb8] sm:$0xff] 0.0
          %373 = vst [vmem:[#allocation2 + $0xc0] sm:$0xff] 0.0
          %374 = vst [vmem:[#allocation2 + $0xc8] sm:$0xff] 0.0
          %375 = vst [vmem:[#allocation2 + $0xd0] sm:$0xff] 0.0
          %376 = vst [vmem:[#allocation2 + $0xd8] sm:$0xff] 0.0
        $region59: #{forward.9} parent=50 // pred_fallthru
          _
        %v377 = vld [vmem:[#allocation2] sm:$0xff]
        %v378 = vld [vmem:[#allocation2 + $0x8] sm:$0xff]
        %v379 = vld [vmem:[#allocation2 + $0x10] sm:$0xff]
        %v380 = vld [vmem:[#allocation2 + $0x18] sm:$0xff]
        %v381 = vld [vmem:[#allocation2 + $0x20] sm:$0xff]
        %v382 = vld [vmem:[#allocation2 + $0x28] sm:$0xff]
        %v383 = vld [vmem:[#allocation2 + $0x30] sm:$0xff]
        %v384 = vld [vmem:[#allocation2 + $0x38] sm:$0xff]
        %v385 = vld [vmem:[#allocation2 + $0x40] sm:$0xff]
        %v386 = vld [vmem:[#allocation2 + $0x48] sm:$0xff]
        %v387 = vld [vmem:[#allocation2 + $0x50] sm:$0xff]
        %v388 = vld [vmem:[#allocation2 + $0x58] sm:$0xff]
        %v389 = vld [vmem:[#allocation2 + $0x60] sm:$0xff]
        %v390 = vld [vmem:[#allocation2 + $0x68] sm:$0xff]
        %v391 = vld [vmem:[#allocation2 + $0x70] sm:$0xff]
        %v392 = vld [vmem:[#allocation2 + $0x78] sm:$0xff]
        %v393 = vld [vmem:[#allocation2 + $0x80] sm:$0xff]
        %v394 = vld [vmem:[#allocation2 + $0x88] sm:$0xff]
        %v395 = vld [vmem:[#allocation2 + $0x90] sm:$0xff]
        %v396 = vld [vmem:[#allocation2 + $0x98] sm:$0xff]
        %v397 = vld [vmem:[#allocation2 + $0xa0] sm:$0xff]
        %v398 = vld [vmem:[#allocation2 + $0xa8] sm:$0xff]
        %v399 = vld [vmem:[#allocation2 + $0xb0] sm:$0xff]
        %v400 = vld [vmem:[#allocation2 + $0xb8] sm:$0xff]
        %v401 = vld [vmem:[#allocation2 + $0xc0] sm:$0xff]
        %v402 = vld [vmem:[#allocation2 + $0xc8] sm:$0xff]
        %v403 = vld [vmem:[#allocation2 + $0xd0] sm:$0xff]
        %v404 = vld [vmem:[#allocation2 + $0xd8] sm:$0xff]
        %v405 = vld [vmem:[%s274] sm:$0xff]
        %v406 = vld [vmem:[%s274 + $0x8] sm:$0xff]
        %v407 = vld [vmem:[%s274 + $0x10] sm:$0xff]
        %v408 = vld [vmem:[%s274 + $0x18] sm:$0xff]
        %v409 = vld [vmem:[%s274 + $0x20] sm:$0xff]
        %v410 = vld [vmem:[%s274 + $0x28] sm:$0xff]
        %v411 = vld [vmem:[%s274 + $0x30] sm:$0xff]
        %v412 = vld [vmem:[%s274 + $0x38] sm:$0xff]
        %v413 = vld [vmem:[%s274 + $0x40] sm:$0xff]
        %v414 = vld [vmem:[%s274 + $0x48] sm:$0xff]
        %v415 = vld [vmem:[%s274 + $0x50] sm:$0xff]
        %v416 = vld [vmem:[%s274 + $0x58] sm:$0xff]
        %v417 = vld [vmem:[%s274 + $0x60] sm:$0xff]
        %v418 = vld [vmem:[%s274 + $0x68] sm:$0xff]
        %v419 = vld [vmem:[%s274 + $0x70] sm:$0xff]
        %v420 = vld [vmem:[%s274 + $0x78] sm:$0xff]
        %v421 = vld [vmem:[%s274 + $0x80] sm:$0xff]
        %v422 = vld [vmem:[%s274 + $0x88] sm:$0xff]
        %v423 = vld [vmem:[%s274 + $0x90] sm:$0xff]
        %v424 = vld [vmem:[%s274 + $0x98] sm:$0xff]
        %v425 = vld [vmem:[%s274 + $0xa0] sm:$0xff]
        %v426 = vld [vmem:[%s274 + $0xa8] sm:$0xff]
        %v427 = vld [vmem:[%s274 + $0xb0] sm:$0xff]
        %v428 = vld [vmem:[%s274 + $0xb8] sm:$0xff]
        %v429 = vld [vmem:[%s274 + $0xc0] sm:$0xff]
        %v430 = vld [vmem:[%s274 + $0xc8] sm:$0xff]
        %v431 = vld [vmem:[%s274 + $0xd0] sm:$0xff]
        %v432 = vld [vmem:[%s274 + $0xd8] sm:$0xff]
        %v433 = vld [vmem:[%s325] sm:$0xff]
        %v434 = vld [vmem:[%s325 + $0x8] sm:$0xff]
        %v435 = vld [vmem:[%s325 + $0x10] sm:$0xff]
        %v436 = vld [vmem:[%s325 + $0x18] sm:$0xff]
        %v437 = vld [vmem:[%s325 + $0x20] sm:$0xff]
        %v438 = vld [vmem:[%s325 + $0x28] sm:$0xff]
        %v439 = vld [vmem:[%s325 + $0x30] sm:$0xff]
        %v440 = vld [vmem:[%s325 + $0x38] sm:$0xff]
        %v441 = vld [vmem:[%s325 + $0x40] sm:$0xff]
        %v442 = vld [vmem:[%s325 + $0x48] sm:$0xff]
        %v443 = vld [vmem:[%s325 + $0x50] sm:$0xff]
        %v444 = vld [vmem:[%s325 + $0x58] sm:$0xff]
        %v445 = vld [vmem:[%s325 + $0x60] sm:$0xff]
        %v446 = vld [vmem:[%s325 + $0x68] sm:$0xff]
        %v447 = vld [vmem:[%s325 + $0x70] sm:$0xff]
        %v448 = vld [vmem:[%s325 + $0x78] sm:$0xff]
        %v449 = vld [vmem:[%s325 + $0x80] sm:$0xff]
        %v450 = vld [vmem:[%s325 + $0x88] sm:$0xff]
        %v451 = vld [vmem:[%s325 + $0x90] sm:$0xff]
        %v452 = vld [vmem:[%s325 + $0x98] sm:$0xff]
        %v453 = vld [vmem:[%s325 + $0xa0] sm:$0xff]
        %v454 = vld [vmem:[%s325 + $0xa8] sm:$0xff]
        %v455 = vld [vmem:[%s325 + $0xb0] sm:$0xff]
        %v456 = vld [vmem:[%s325 + $0xb8] sm:$0xff]
        %v457 = vld [vmem:[%s325 + $0xc0] sm:$0xff]
        %v458 = vld [vmem:[%s325 + $0xc8] sm:$0xff]
        %v459 = vld [vmem:[%s325 + $0xd0] sm:$0xff]
        %v460 = vld [vmem:[%s325 + $0xd8] sm:$0xff]
        %v461 = vld [vmem:[%s325 + $0xe0] sm:$0xff]
        %v462 = vld [vmem:[%s325 + $0xe8] sm:$0xff]
        %v463 = vld [vmem:[%s325 + $0xf0] sm:$0xff]
        %v464 = vld [vmem:[%s325 + $0xf8] sm:$0xff]
        %v465 = vld [vmem:[%s325 + $0x100] sm:$0xff]
        %v466 = vld [vmem:[%s325 + $0x108] sm:$0xff]
        %v467 = vld [vmem:[%s325 + $0x110] sm:$0xff]
        %v468 = vld [vmem:[%s325 + $0x118] sm:$0xff]
        %v469 = vld [vmem:[%s325 + $0x120] sm:$0xff]
        %v470 = vld [vmem:[%s325 + $0x128] sm:$0xff]
        %v471 = vld [vmem:[%s325 + $0x130] sm:$0xff]
        %v472 = vld [vmem:[%s325 + $0x138] sm:$0xff]
        %v473 = vld [vmem:[%s325 + $0x140] sm:$0xff]
        %v474 = vld [vmem:[%s325 + $0x148] sm:$0xff]
        %v475 = vld [vmem:[%s325 + $0x150] sm:$0xff]
        %v476 = vld [vmem:[%s325 + $0x158] sm:$0xff]
        %v477 = vld [vmem:[%s325 + $0x160] sm:$0xff]
        %v478 = vld [vmem:[%s325 + $0x168] sm:$0xff]
        %v479 = vld [vmem:[%s325 + $0x170] sm:$0xff]
        %v480 = vld [vmem:[%s325 + $0x178] sm:$0xff]
        %v481 = vld [vmem:[%s325 + $0x180] sm:$0xff]
        %v482 = vld [vmem:[%s325 + $0x188] sm:$0xff]
        %v483 = vld [vmem:[%s325 + $0x190] sm:$0xff]
        %v484 = vld [vmem:[%s325 + $0x198] sm:$0xff]
        %v485 = vld [vmem:[%s325 + $0x1a0] sm:$0xff]
        %v486 = vld [vmem:[%s325 + $0x1a8] sm:$0xff]
        %v487 = vld [vmem:[%s325 + $0x1b0] sm:$0xff]
        %v488 = vld [vmem:[%s325 + $0x1b8] sm:$0xff]
        %v489 = vld [vmem:[%s325 + $0x1c0] sm:$0xff]
        %v490 = vld [vmem:[%s325 + $0x1c8] sm:$0xff]
        %v491 = vld [vmem:[%s325 + $0x1d0] sm:$0xff]
        %v492 = vld [vmem:[%s325 + $0x1d8] sm:$0xff]
        %v493 = vld [vmem:[%s325 + $0x1e0] sm:$0xff]
        %v494 = vld [vmem:[%s325 + $0x1e8] sm:$0xff]
        %v495 = vld [vmem:[%s325 + $0x1f0] sm:$0xff]
        %v496 = vld [vmem:[%s325 + $0x1f8] sm:$0xff]
        %v525 = vunpack.c.l.b16 %v405
        %v526 = vunpack.c.h.b16 %v405
        %v527 = vunpack.c.l.b16 %v406
        %v528 = vunpack.c.h.b16 %v406
        %v529 = vunpack.c.l.b16 %v407
        %v530 = vunpack.c.h.b16 %v407
        %v531 = vunpack.c.l.b16 %v408
        %v532 = vunpack.c.h.b16 %v408
        %v533 = vunpack.c.l.b16 %v409
        %v534 = vunpack.c.h.b16 %v409
        %v535 = vunpack.c.l.b16 %v410
        %v536 = vunpack.c.h.b16 %v410
        %v537 = vunpack.c.l.b16 %v411
        %v538 = vunpack.c.h.b16 %v411
        %v539 = vunpack.c.l.b16 %v412
        %v540 = vunpack.c.h.b16 %v412
        %v541 = vunpack.c.l.b16 %v413
        %v542 = vunpack.c.h.b16 %v413
        %v543 = vunpack.c.l.b16 %v414
        %v544 = vunpack.c.h.b16 %v414
        %v545 = vunpack.c.l.b16 %v415
        %v546 = vunpack.c.h.b16 %v415
        %v547 = vunpack.c.l.b16 %v416
        %v548 = vunpack.c.h.b16 %v416
        %v549 = vunpack.c.l.b16 %v417
        %v550 = vunpack.c.h.b16 %v417
        %v551 = vunpack.c.l.b16 %v418
        %v552 = vunpack.c.h.b16 %v418
        %v553 = vunpack.c.l.b16 %v419
        %v554 = vunpack.c.h.b16 %v419
        %v555 = vunpack.c.l.b16 %v420
        %v556 = vunpack.c.h.b16 %v420
        %v557 = vunpack.c.l.b16 %v421
        %v558 = vunpack.c.h.b16 %v421
        %v559 = vunpack.c.l.b16 %v422
        %v560 = vunpack.c.h.b16 %v422
        %v561 = vunpack.c.l.b16 %v423
        %v562 = vunpack.c.h.b16 %v423
        %v563 = vunpack.c.l.b16 %v424
        %v564 = vunpack.c.h.b16 %v424
        %v565 = vunpack.c.l.b16 %v425
        %v566 = vunpack.c.h.b16 %v425
        %v567 = vunpack.c.l.b16 %v426
        %v568 = vunpack.c.h.b16 %v426
        %v569 = vunpack.c.l.b16 %v427
        %v570 = vunpack.c.h.b16 %v427
        %v571 = vunpack.c.l.b16 %v428
        %v572 = vunpack.c.h.b16 %v428
        %v573 = vunpack.c.l.b16 %v429
        %v574 = vunpack.c.h.b16 %v429
        %v575 = vunpack.c.l.b16 %v430
        %v576 = vunpack.c.h.b16 %v430
        %v577 = vunpack.c.l.b16 %v431
        %v578 = vunpack.c.h.b16 %v431
        %v579 = vunpack.c.l.b16 %v432
        %v580 = vunpack.c.h.b16 %v432
        %v581 = vpack.c.b16 %v529, %v525
        %v582 = vpack.c.b16 %v530, %v526
        %v583 = vpack.c.b16 %v531, %v527
        %v584 = vpack.c.b16 %v532, %v528
        %v585 = vpack.c.b16 %v537, %v533
        %v586 = vpack.c.b16 %v538, %v534
        %v587 = vpack.c.b16 %v539, %v535
        %v588 = vpack.c.b16 %v540, %v536
        %v589 = vpack.c.b16 %v545, %v541
        %v590 = vpack.c.b16 %v546, %v542
        %v591 = vpack.c.b16 %v547, %v543
        %v592 = vpack.c.b16 %v548, %v544
        %v593 = vpack.c.b16 %v553, %v549
        %v594 = vpack.c.b16 %v554, %v550
        %v595 = vpack.c.b16 %v555, %v551
        %v596 = vpack.c.b16 %v556, %v552
        %v597 = vpack.c.b16 %v561, %v557
        %v598 = vpack.c.b16 %v562, %v558
        %v599 = vpack.c.b16 %v563, %v559
        %v600 = vpack.c.b16 %v564, %v560
        %v601 = vpack.c.b16 %v569, %v565
        %v602 = vpack.c.b16 %v570, %v566
        %v603 = vpack.c.b16 %v571, %v567
        %v604 = vpack.c.b16 %v572, %v568
        %v605 = vpack.c.b16 %v577, %v573
        %v606 = vpack.c.b16 %v578, %v574
        %v607 = vpack.c.b16 %v579, %v575
        %v608 = vpack.c.b16 %v580, %v576
        %v701 = vunpack.c.l.b16 %v433
        %v702 = vunpack.c.h.b16 %v433
        %v703 = vunpack.c.l.b16 %v434
        %v704 = vunpack.c.h.b16 %v434
        %v705 = vunpack.c.l.b16 %v435
        %v706 = vunpack.c.h.b16 %v435
        %v707 = vunpack.c.l.b16 %v436
        %v708 = vunpack.c.h.b16 %v436
        %v709 = vunpack.c.l.b16 %v437
        %v710 = vunpack.c.h.b16 %v437
        %v711 = vunpack.c.l.b16 %v438
        %v712 = vunpack.c.h.b16 %v438
        %v713 = vunpack.c.l.b16 %v439
        %v714 = vunpack.c.h.b16 %v439
        %v715 = vunpack.c.l.b16 %v440
        %v716 = vunpack.c.h.b16 %v440
        %v717 = vunpack.c.l.b16 %v441
        %v718 = vunpack.c.h.b16 %v441
        %v719 = vunpack.c.l.b16 %v442
        %v720 = vunpack.c.h.b16 %v442
        %v721 = vunpack.c.l.b16 %v443
        %v722 = vunpack.c.h.b16 %v443
        %v723 = vunpack.c.l.b16 %v444
        %v724 = vunpack.c.h.b16 %v444
        %v725 = vunpack.c.l.b16 %v445
        %v726 = vunpack.c.h.b16 %v445
        %v727 = vunpack.c.l.b16 %v446
        %v728 = vunpack.c.h.b16 %v446
        %v729 = vunpack.c.l.b16 %v447
        %v730 = vunpack.c.h.b16 %v447
        %v731 = vunpack.c.l.b16 %v448
        %v732 = vunpack.c.h.b16 %v448
        %v733 = vunpack.c.l.b16 %v449
        %v734 = vunpack.c.h.b16 %v449
        %v735 = vunpack.c.l.b16 %v450
        %v736 = vunpack.c.h.b16 %v450
        %v737 = vunpack.c.l.b16 %v451
        %v738 = vunpack.c.h.b16 %v451
        %v739 = vunpack.c.l.b16 %v452
        %v740 = vunpack.c.h.b16 %v452
        %v741 = vunpack.c.l.b16 %v453
        %v742 = vunpack.c.h.b16 %v453
        %v743 = vunpack.c.l.b16 %v454
        %v744 = vunpack.c.h.b16 %v454
        %v745 = vunpack.c.l.b16 %v455
        %v746 = vunpack.c.h.b16 %v455
        %v747 = vunpack.c.l.b16 %v456
        %v748 = vunpack.c.h.b16 %v456
        %v749 = vunpack.c.l.b16 %v457
        %v750 = vunpack.c.h.b16 %v457
        %v751 = vunpack.c.l.b16 %v458
        %v752 = vunpack.c.h.b16 %v458
        %v753 = vunpack.c.l.b16 %v459
        %v754 = vunpack.c.h.b16 %v459
        %v755 = vunpack.c.l.b16 %v460
        %v756 = vunpack.c.h.b16 %v460
        %v757 = vunpack.c.l.b16 %v461
        %v758 = vunpack.c.h.b16 %v461
        %v759 = vunpack.c.l.b16 %v462
        %v760 = vunpack.c.h.b16 %v462
        %v761 = vunpack.c.l.b16 %v463
        %v762 = vunpack.c.h.b16 %v463
        %v763 = vunpack.c.l.b16 %v464
        %v764 = vunpack.c.h.b16 %v464
        %v765 = vunpack.c.l.b16 %v465
        %v766 = vunpack.c.h.b16 %v465
        %v767 = vunpack.c.l.b16 %v466
        %v768 = vunpack.c.h.b16 %v466
        %v769 = vunpack.c.l.b16 %v467
        %v770 = vunpack.c.h.b16 %v467
        %v771 = vunpack.c.l.b16 %v468
        %v772 = vunpack.c.h.b16 %v468
        %v773 = vunpack.c.l.b16 %v469
        %v774 = vunpack.c.h.b16 %v469
        %v775 = vunpack.c.l.b16 %v470
        %v776 = vunpack.c.h.b16 %v470
        %v777 = vunpack.c.l.b16 %v471
        %v778 = vunpack.c.h.b16 %v471
        %v779 = vunpack.c.l.b16 %v472
        %v780 = vunpack.c.h.b16 %v472
        %v781 = vunpack.c.l.b16 %v473
        %v782 = vunpack.c.h.b16 %v473
        %v783 = vunpack.c.l.b16 %v474
        %v784 = vunpack.c.h.b16 %v474
        %v785 = vunpack.c.l.b16 %v475
        %v786 = vunpack.c.h.b16 %v475
        %v787 = vunpack.c.l.b16 %v476
        %v788 = vunpack.c.h.b16 %v476
        %v789 = vunpack.c.l.b16 %v477
        %v790 = vunpack.c.h.b16 %v477
        %v791 = vunpack.c.l.b16 %v478
        %v792 = vunpack.c.h.b16 %v478
        %v793 = vunpack.c.l.b16 %v479
        %v794 = vunpack.c.h.b16 %v479
        %v795 = vunpack.c.l.b16 %v480
        %v796 = vunpack.c.h.b16 %v480
        %v797 = vunpack.c.l.b16 %v481
        %v798 = vunpack.c.h.b16 %v481
        %v799 = vunpack.c.l.b16 %v482
        %v800 = vunpack.c.h.b16 %v482
        %v801 = vunpack.c.l.b16 %v483
        %v802 = vunpack.c.h.b16 %v483
        %v803 = vunpack.c.l.b16 %v484
        %v804 = vunpack.c.h.b16 %v484
        %v805 = vunpack.c.l.b16 %v485
        %v806 = vunpack.c.h.b16 %v485
        %v807 = vunpack.c.l.b16 %v486
        %v808 = vunpack.c.h.b16 %v486
        %v809 = vunpack.c.l.b16 %v487
        %v810 = vunpack.c.h.b16 %v487
        %v811 = vunpack.c.l.b16 %v488
        %v812 = vunpack.c.h.b16 %v488
        %v813 = vunpack.c.l.b16 %v489
        %v814 = vunpack.c.h.b16 %v489
        %v815 = vunpack.c.l.b16 %v490
        %v816 = vunpack.c.h.b16 %v490
        %v817 = vunpack.c.l.b16 %v491
        %v818 = vunpack.c.h.b16 %v491
        %v819 = vunpack.c.l.b16 %v492
        %v820 = vunpack.c.h.b16 %v492
        %v821 = vunpack.c.l.b16 %v493
        %v822 = vunpack.c.h.b16 %v493
        %v823 = vunpack.c.l.b16 %v494
        %v824 = vunpack.c.h.b16 %v494
        %v825 = vunpack.c.l.b16 %v495
        %v826 = vunpack.c.h.b16 %v495
        %v827 = vunpack.c.l.b16 %v496
        %v828 = vunpack.c.h.b16 %v496
        %v829 = vpack.c.b16 %v703, %v701
        %v830 = vpack.c.b16 %v704, %v702
        %v831 = vpack.c.b16 %v707, %v705
        %v832 = vpack.c.b16 %v708, %v706
        %v833 = vpack.c.b16 %v711, %v709
        %v834 = vpack.c.b16 %v712, %v710
        %v835 = vpack.c.b16 %v715, %v713
        %v836 = vpack.c.b16 %v716, %v714
        %v837 = vpack.c.b16 %v719, %v717
        %v838 = vpack.c.b16 %v720, %v718
        %v839 = vpack.c.b16 %v723, %v721
        %v840 = vpack.c.b16 %v724, %v722
        %v841 = vpack.c.b16 %v727, %v725
        %v842 = vpack.c.b16 %v728, %v726
        %v843 = vpack.c.b16 %v731, %v729
        %v844 = vpack.c.b16 %v732, %v730
        %v845 = vpack.c.b16 %v735, %v733
        %v846 = vpack.c.b16 %v736, %v734
        %v847 = vpack.c.b16 %v739, %v737
        %v848 = vpack.c.b16 %v740, %v738
        %v849 = vpack.c.b16 %v743, %v741
        %v850 = vpack.c.b16 %v744, %v742
        %v851 = vpack.c.b16 %v747, %v745
        %v852 = vpack.c.b16 %v748, %v746
        %v853 = vpack.c.b16 %v751, %v749
        %v854 = vpack.c.b16 %v752, %v750
        %v855 = vpack.c.b16 %v755, %v753
        %v856 = vpack.c.b16 %v756, %v754
        %v857 = vpack.c.b16 %v759, %v757
        %v858 = vpack.c.b16 %v760, %v758
        %v859 = vpack.c.b16 %v763, %v761
        %v860 = vpack.c.b16 %v764, %v762
        %v861 = vpack.c.b16 %v767, %v765
        %v862 = vpack.c.b16 %v768, %v766
        %v863 = vpack.c.b16 %v771, %v769
        %v864 = vpack.c.b16 %v772, %v770
        %v865 = vpack.c.b16 %v775, %v773
        %v866 = vpack.c.b16 %v776, %v774
        %v867 = vpack.c.b16 %v779, %v777
        %v868 = vpack.c.b16 %v780, %v778
        %v869 = vpack.c.b16 %v783, %v781
        %v870 = vpack.c.b16 %v784, %v782
        %v871 = vpack.c.b16 %v787, %v785
        %v872 = vpack.c.b16 %v788, %v786
        %v873 = vpack.c.b16 %v791, %v789
        %v874 = vpack.c.b16 %v792, %v790
        %v875 = vpack.c.b16 %v795, %v793
        %v876 = vpack.c.b16 %v796, %v794
        %v877 = vpack.c.b16 %v799, %v797
        %v878 = vpack.c.b16 %v800, %v798
        %v879 = vpack.c.b16 %v803, %v801
        %v880 = vpack.c.b16 %v804, %v802
        %v881 = vpack.c.b16 %v807, %v805
        %v882 = vpack.c.b16 %v808, %v806
        %v883 = vpack.c.b16 %v811, %v809
        %v884 = vpack.c.b16 %v812, %v810
        %v885 = vpack.c.b16 %v815, %v813
        %v886 = vpack.c.b16 %v816, %v814
        %v887 = vpack.c.b16 %v819, %v817
        %v888 = vpack.c.b16 %v820, %v818
        %v889 = vpack.c.b16 %v823, %v821
        %v890 = vpack.c.b16 %v824, %v822
        %v891 = vpack.c.b16 %v827, %v825
        %v892 = vpack.c.b16 %v828, %v826
        %957 = vmatprep.subr.bf16.mxu0 %v844
        %958 = vmatpush1.bf16.msra.mxu0 %v843
        %959 = vmatprep.subr.bf16.mxu0 %v842
        %960 = vmatpush1.bf16.msra.mxu0 %v841
        %961 = vmatprep.subr.bf16.mxu0 %v840
        %962 = vmatpush1.bf16.msra.mxu0 %v839
        %963 = vmatprep.subr.bf16.mxu0 %v838
        %964 = vmatpush1.bf16.msra.mxu0 %v837
        %965 = vmatprep.subr.bf16.mxu0 %v836
        %966 = vmatpush1.bf16.msra.mxu0 %v835
        %967 = vmatprep.subr.bf16.mxu0 %v834
        %968 = vmatpush1.bf16.msra.mxu0 %v833
        %969 = vmatprep.subr.bf16.mxu0 %v832
        %970 = vmatpush1.bf16.msra.mxu0 %v831
        %971 = vmatprep.subr.bf16.mxu0 %v830
        %972 = vmatpush1.bf16.msra.mxu0 %v829
        %973 = vmatprep.subr.bf16.mxu0 %v860
        %974 = vmatpush2.bf16.msra.mxu0 %v859
        %975 = vmatprep.subr.bf16.mxu0 %v858
        %976 = vmatpush2.bf16.msra.mxu0 %v857
        %977 = vmatprep.subr.bf16.mxu0 %v856
        %978 = vmatpush2.bf16.msra.mxu0 %v855
        %979 = vmatprep.subr.bf16.mxu0 %v854
        %980 = vmatpush2.bf16.msra.mxu0 %v853
        %981 = vmatprep.subr.bf16.mxu0 %v852
        %982 = vmatpush2.bf16.msra.mxu0 %v851
        %983 = vmatprep.subr.bf16.mxu0 %v850
        %984 = vmatpush2.bf16.msra.mxu0 %v849
        %985 = vmatprep.subr.bf16.mxu0 %v848
        %986 = vmatpush2.bf16.msra.mxu0 %v847
        %987 = vmatprep.subr.bf16.mxu0 %v846
        %988 = vmatpush2.bf16.msra.mxu0 %v845
        %989 = vmatprep.mubr.bf16.mxu0 %v582
        %990 = vmatmul.mubr.bf16.gmra.mxu0 %v581
        %v991 = vpop.f32.mrf.mxu0
        %v992 = vadd.f32 0.0, %v991
        %v993 = vpop.f32.mrf.mxu0
        %v994 = vadd.f32 0.0, %v993
        %v995 = vpop.f32.mrf.mxu0
        %v996 = vadd.f32 0.0, %v995
        %v997 = vpop.f32.mrf.mxu0
        %v998 = vadd.f32 0.0, %v997
        %999 = vmatprep.mubr.bf16.mxu0 %v586
        %1000 = vmatmul.mubr.bf16.gmra.mxu0 %v585
        %v1001 = vpop.f32.mrf.mxu0
        %v1002 = vadd.f32 0.0, %v1001
        %v1003 = vpop.f32.mrf.mxu0
        %v1004 = vadd.f32 0.0, %v1003
        %v1005 = vpop.f32.mrf.mxu0
        %v1006 = vadd.f32 0.0, %v1005
        %v1007 = vpop.f32.mrf.mxu0
        %v1008 = vadd.f32 0.0, %v1007
        %1009 = vmatprep.mubr.bf16.mxu0 %v590
        %1010 = vmatmul.mubr.bf16.gmra.mxu0 %v589
        %v1011 = vpop.f32.mrf.mxu0
        %v1012 = vadd.f32 0.0, %v1011
        %v1013 = vpop.f32.mrf.mxu0
        %v1014 = vadd.f32 0.0, %v1013
        %v1015 = vpop.f32.mrf.mxu0
        %v1016 = vadd.f32 0.0, %v1015
        %v1017 = vpop.f32.mrf.mxu0
        %v1018 = vadd.f32 0.0, %v1017
        %1019 = vmatprep.mubr.bf16.mxu0 %v594
        %1020 = vmatmul.mubr.bf16.gmra.mxu0 %v593
        %v1021 = vpop.f32.mrf.mxu0
        %v1022 = vadd.f32 0.0, %v1021
        %v1023 = vpop.f32.mrf.mxu0
        %v1024 = vadd.f32 0.0, %v1023
        %v1025 = vpop.f32.mrf.mxu0
        %v1026 = vadd.f32 0.0, %v1025
        %v1027 = vpop.f32.mrf.mxu0
        %v1028 = vadd.f32 0.0, %v1027
        %1029 = vmatprep.mubr.bf16.mxu0 %v598
        %1030 = vmatmul.mubr.bf16.gmra.mxu0 %v597
        %v1031 = vpop.f32.mrf.mxu0
        %v1032 = vadd.f32 0.0, %v1031
        %v1033 = vpop.f32.mrf.mxu0
        %v1034 = vadd.f32 0.0, %v1033
        %v1035 = vpop.f32.mrf.mxu0
        %v1036 = vadd.f32 0.0, %v1035
        %v1037 = vpop.f32.mrf.mxu0
        %v1038 = vadd.f32 0.0, %v1037
        %1039 = vmatprep.mubr.bf16.mxu0 %v602
        %1040 = vmatmul.mubr.bf16.gmra.mxu0 %v601
        %v1041 = vpop.f32.mrf.mxu0
        %v1042 = vadd.f32 0.0, %v1041
        %v1043 = vpop.f32.mrf.mxu0
        %v1044 = vadd.f32 0.0, %v1043
        %v1045 = vpop.f32.mrf.mxu0
        %v1046 = vadd.f32 0.0, %v1045
        %v1047 = vpop.f32.mrf.mxu0
        %v1048 = vadd.f32 0.0, %v1047
        %1049 = vmatprep.mubr.bf16.mxu0 %v606
        %1050 = vmatmul.mubr.bf16.gmra.mxu0 %v605
        %v1051 = vpop.f32.mrf.mxu0
        %v1052 = vadd.f32 0.0, %v1051
        %v1053 = vpop.f32.mrf.mxu0
        %v1054 = vadd.f32 0.0, %v1053
        %v1055 = vpop.f32.mrf.mxu0
        %v1056 = vadd.f32 0.0, %v1055
        %v1057 = vpop.f32.mrf.mxu0
        %v1058 = vadd.f32 0.0, %v1057
        %1059 = vdwg.mxu0
        %1060 = vmatprep.subr.bf16.mxu0 %v876
        %1061 = vmatpush1.bf16.msra.mxu0 %v875
        %1062 = vmatprep.subr.bf16.mxu0 %v874
        %1063 = vmatpush1.bf16.msra.mxu0 %v873
        %1064 = vmatprep.subr.bf16.mxu0 %v872
        %1065 = vmatpush1.bf16.msra.mxu0 %v871
        %1066 = vmatprep.subr.bf16.mxu0 %v870
        %1067 = vmatpush1.bf16.msra.mxu0 %v869
        %1068 = vmatprep.subr.bf16.mxu0 %v868
        %1069 = vmatpush1.bf16.msra.mxu0 %v867
        %1070 = vmatprep.subr.bf16.mxu0 %v866
        %1071 = vmatpush1.bf16.msra.mxu0 %v865
        %1072 = vmatprep.subr.bf16.mxu0 %v864
        %1073 = vmatpush1.bf16.msra.mxu0 %v863
        %1074 = vmatprep.subr.bf16.mxu0 %v862
        %1075 = vmatpush1.bf16.msra.mxu0 %v861
        %1076 = vmatprep.subr.bf16.mxu0 %v892
        %1077 = vmatpush2.bf16.msra.mxu0 %v891
        %1078 = vmatprep.subr.bf16.mxu0 %v890
        %1079 = vmatpush2.bf16.msra.mxu0 %v889
        %1080 = vmatprep.subr.bf16.mxu0 %v888
        %1081 = vmatpush2.bf16.msra.mxu0 %v887
        %1082 = vmatprep.subr.bf16.mxu0 %v886
        %1083 = vmatpush2.bf16.msra.mxu0 %v885
        %1084 = vmatprep.subr.bf16.mxu0 %v884
        %1085 = vmatpush2.bf16.msra.mxu0 %v883
        %1086 = vmatprep.subr.bf16.mxu0 %v882
        %1087 = vmatpush2.bf16.msra.mxu0 %v881
        %1088 = vmatprep.subr.bf16.mxu0 %v880
        %1089 = vmatpush2.bf16.msra.mxu0 %v879
        %1090 = vmatprep.subr.bf16.mxu0 %v878
        %1091 = vmatpush2.bf16.msra.mxu0 %v877
        %1092 = vmatprep.mubr.bf16.mxu0 %v584
        %1093 = vmatmul.mubr.bf16.gmra.mxu0 %v583
        %v1094 = vpop.f32.mrf.mxu0
        %v1095 = vadd.f32 %v992, %v1094
        %v1096 = vpop.f32.mrf.mxu0
        %v1097 = vadd.f32 %v994, %v1096
        %v1098 = vpop.f32.mrf.mxu0
        %v1099 = vadd.f32 %v996, %v1098
        %v1100 = vpop.f32.mrf.mxu0
        %v1101 = vadd.f32 %v998, %v1100
        %1102 = vmatprep.mubr.bf16.mxu0 %v588
        %1103 = vmatmul.mubr.bf16.gmra.mxu0 %v587
        %v1104 = vpop.f32.mrf.mxu0
        %v1105 = vadd.f32 %v1002, %v1104
        %v1106 = vpop.f32.mrf.mxu0
        %v1107 = vadd.f32 %v1004, %v1106
        %v1108 = vpop.f32.mrf.mxu0
        %v1109 = vadd.f32 %v1006, %v1108
        %v1110 = vpop.f32.mrf.mxu0
        %v1111 = vadd.f32 %v1008, %v1110
        %1112 = vmatprep.mubr.bf16.mxu0 %v592
        %1113 = vmatmul.mubr.bf16.gmra.mxu0 %v591
        %v1114 = vpop.f32.mrf.mxu0
        %v1115 = vadd.f32 %v1012, %v1114
        %v1116 = vpop.f32.mrf.mxu0
        %v1117 = vadd.f32 %v1014, %v1116
        %v1118 = vpop.f32.mrf.mxu0
        %v1119 = vadd.f32 %v1016, %v1118
        %v1120 = vpop.f32.mrf.mxu0
        %v1121 = vadd.f32 %v1018, %v1120
        %1122 = vmatprep.mubr.bf16.mxu0 %v596
        %1123 = vmatmul.mubr.bf16.gmra.mxu0 %v595
        %v1124 = vpop.f32.mrf.mxu0
        %v1125 = vadd.f32 %v1022, %v1124
        %v1126 = vpop.f32.mrf.mxu0
        %v1127 = vadd.f32 %v1024, %v1126
        %v1128 = vpop.f32.mrf.mxu0
        %v1129 = vadd.f32 %v1026, %v1128
        %v1130 = vpop.f32.mrf.mxu0
        %v1131 = vadd.f32 %v1028, %v1130
        %1132 = vmatprep.mubr.bf16.mxu0 %v600
        %1133 = vmatmul.mubr.bf16.gmra.mxu0 %v599
        %v1134 = vpop.f32.mrf.mxu0
        %v1135 = vadd.f32 %v1032, %v1134
        %v1136 = vpop.f32.mrf.mxu0
        %v1137 = vadd.f32 %v1034, %v1136
        %v1138 = vpop.f32.mrf.mxu0
        %v1139 = vadd.f32 %v1036, %v1138
        %v1140 = vpop.f32.mrf.mxu0
        %v1141 = vadd.f32 %v1038, %v1140
        %1142 = vmatprep.mubr.bf16.mxu0 %v604
        %1143 = vmatmul.mubr.bf16.gmra.mxu0 %v603
        %v1144 = vpop.f32.mrf.mxu0
        %v1145 = vadd.f32 %v1042, %v1144
        %v1146 = vpop.f32.mrf.mxu0
        %v1147 = vadd.f32 %v1044, %v1146
        %v1148 = vpop.f32.mrf.mxu0
        %v1149 = vadd.f32 %v1046, %v1148
        %v1150 = vpop.f32.mrf.mxu0
        %v1151 = vadd.f32 %v1048, %v1150
        %1152 = vmatprep.mubr.bf16.mxu0 %v608
        %1153 = vmatmul.mubr.bf16.gmra.mxu0 %v607
        %v1154 = vpop.f32.mrf.mxu0
        %v1155 = vadd.f32 %v1052, %v1154
        %v1156 = vpop.f32.mrf.mxu0
        %v1157 = vadd.f32 %v1054, %v1156
        %v1158 = vpop.f32.mrf.mxu0
        %v1159 = vadd.f32 %v1056, %v1158
        %v1160 = vpop.f32.mrf.mxu0
        %v1161 = vadd.f32 %v1058, %v1160
        %1162 = vdwg.mxu0
        %v1163 = vadd.f32 %v377, %v1095
        %v1164 = vadd.f32 %v378, %v1097
        %v1165 = vadd.f32 %v379, %v1099
        %v1166 = vadd.f32 %v380, %v1101
        %v1167 = vadd.f32 %v381, %v1105
        %v1168 = vadd.f32 %v382, %v1107
        %v1169 = vadd.f32 %v383, %v1109
        %v1170 = vadd.f32 %v384, %v1111
        %v1171 = vadd.f32 %v385, %v1115
        %v1172 = vadd.f32 %v386, %v1117
        %v1173 = vadd.f32 %v387, %v1119
        %v1174 = vadd.f32 %v388, %v1121
        %v1175 = vadd.f32 %v389, %v1125
        %v1176 = vadd.f32 %v390, %v1127
        %v1177 = vadd.f32 %v391, %v1129
        %v1178 = vadd.f32 %v392, %v1131
        %v1179 = vadd.f32 %v393, %v1135
        %v1180 = vadd.f32 %v394, %v1137
        %v1181 = vadd.f32 %v395, %v1139
        %v1182 = vadd.f32 %v396, %v1141
        %v1183 = vadd.f32 %v397, %v1145
        %v1184 = vadd.f32 %v398, %v1147
        %v1185 = vadd.f32 %v399, %v1149
        %v1186 = vadd.f32 %v400, %v1151
        %v1187 = vadd.f32 %v401, %v1155
        %v1188 = vadd.f32 %v402, %v1157
        %v1189 = vadd.f32 %v403, %v1159
        %v1190 = vadd.f32 %v404, %v1161
        %1191 = vst [vmem:[#allocation2] sm:$0xff] %v1163
        %1192 = vst [vmem:[#allocation2 + $0x8] sm:$0xff] %v1164
        %1193 = vst [vmem:[#allocation2 + $0x10] sm:$0xff] %v1165
        %1194 = vst [vmem:[#allocation2 + $0x18] sm:$0xff] %v1166
        %1195 = vst [vmem:[#allocation2 + $0x20] sm:$0xff] %v1167
        %1196 = vst [vmem:[#allocation2 + $0x28] sm:$0xff] %v1168
        %1197 = vst [vmem:[#allocation2 + $0x30] sm:$0xff] %v1169
        %1198 = vst [vmem:[#allocation2 + $0x38] sm:$0xff] %v1170
        %1199 = vst [vmem:[#allocation2 + $0x40] sm:$0xff] %v1171
        %1200 = vst [vmem:[#allocation2 + $0x48] sm:$0xff] %v1172
        %1201 = vst [vmem:[#allocation2 + $0x50] sm:$0xff] %v1173
        %1202 = vst [vmem:[#allocation2 + $0x58] sm:$0xff] %v1174
        %1203 = vst [vmem:[#allocation2 + $0x60] sm:$0xff] %v1175
        %1204 = vst [vmem:[#allocation2 + $0x68] sm:$0xff] %v1176
        %1205 = vst [vmem:[#allocation2 + $0x70] sm:$0xff] %v1177
        %1206 = vst [vmem:[#allocation2 + $0x78] sm:$0xff] %v1178
        %1207 = vst [vmem:[#allocation2 + $0x80] sm:$0xff] %v1179
        %1208 = vst [vmem:[#allocation2 + $0x88] sm:$0xff] %v1180
        %1209 = vst [vmem:[#allocation2 + $0x90] sm:$0xff] %v1181
        %1210 = vst [vmem:[#allocation2 + $0x98] sm:$0xff] %v1182
        %1211 = vst [vmem:[#allocation2 + $0xa0] sm:$0xff] %v1183
        %1212 = vst [vmem:[#allocation2 + $0xa8] sm:$0xff] %v1184
        %1213 = vst [vmem:[#allocation2 + $0xb0] sm:$0xff] %v1185
        %1214 = vst [vmem:[#allocation2 + $0xb8] sm:$0xff] %v1186
        %1215 = vst [vmem:[#allocation2 + $0xc0] sm:$0xff] %v1187
        %1216 = vst [vmem:[#allocation2 + $0xc8] sm:$0xff] %v1188
        %1217 = vst [vmem:[#allocation2 + $0xd0] sm:$0xff] %v1189
        %1218 = vst [vmem:[#allocation2 + $0xd8] sm:$0xff] %v1190
        %p1219 = scmp.eq.s32.totalorder %s21, 3
        // Predicated region
        $region60: #{forward.9} parent=50 // pred_check
          %p1220 = pneg %p1219
        $region61: #{forward.9} parent=50 // pred_check_branch
          %1222 = sbr.rel (%p1220) target = $region63
        $region62: #{forward.9} parent=50 // pred_region
          %v1223 = vld [vmem:[#allocation2] sm:$0xff]
          %v1224 = vld [vmem:[#allocation2 + $0x8] sm:$0xff]
          %v1225 = vld [vmem:[#allocation2 + $0x10] sm:$0xff]
          %v1226 = vld [vmem:[#allocation2 + $0x18] sm:$0xff]
          %v1227 = vld [vmem:[#allocation2 + $0x20] sm:$0xff]
          %v1228 = vld [vmem:[#allocation2 + $0x28] sm:$0xff]
          %v1229 = vld [vmem:[#allocation2 + $0x30] sm:$0xff]
          %v1230 = vld [vmem:[#allocation2 + $0x38] sm:$0xff]
          %v1231 = vld [vmem:[#allocation2 + $0x40] sm:$0xff]
          %v1232 = vld [vmem:[#allocation2 + $0x48] sm:$0xff]
          %v1233 = vld [vmem:[#allocation2 + $0x50] sm:$0xff]
          %v1234 = vld [vmem:[#allocation2 + $0x58] sm:$0xff]
          %v1235 = vld [vmem:[#allocation2 + $0x60] sm:$0xff]
          %v1236 = vld [vmem:[#allocation2 + $0x68] sm:$0xff]
          %v1237 = vld [vmem:[#allocation2 + $0x70] sm:$0xff]
          %v1238 = vld [vmem:[#allocation2 + $0x78] sm:$0xff]
          %v1239 = vld [vmem:[#allocation2 + $0x80] sm:$0xff]
          %v1240 = vld [vmem:[#allocation2 + $0x88] sm:$0xff]
          %v1241 = vld [vmem:[#allocation2 + $0x90] sm:$0xff]
          %v1242 = vld [vmem:[#allocation2 + $0x98] sm:$0xff]
          %v1243 = vld [vmem:[#allocation2 + $0xa0] sm:$0xff]
          %v1244 = vld [vmem:[#allocation2 + $0xa8] sm:$0xff]
          %v1245 = vld [vmem:[#allocation2 + $0xb0] sm:$0xff]
          %v1246 = vld [vmem:[#allocation2 + $0xb8] sm:$0xff]
          %v1247 = vld [vmem:[#allocation2 + $0xc0] sm:$0xff]
          %v1248 = vld [vmem:[#allocation2 + $0xc8] sm:$0xff]
          %v1249 = vld [vmem:[#allocation2 + $0xd0] sm:$0xff]
          %v1250 = vld [vmem:[#allocation2 + $0xd8] sm:$0xff]
          %v1251 = vld [vmem:[%s331] sm:$0x3]
          %v1253 = vlaneseq
          %v1254 = vshrl.u32 %v1253, 7
          %v1255 = vsub.s32 0, %v1254
          %v1256 = vrot.slane %v1251, %v1255
          %v1257 = vlaneseq
          %v1258 = vshrl.u32 %v1257, 7
          %v1259 = vsub.s32 1, %v1258
          %v1260 = vrot.slane %v1251, %v1259
          %v1263 = vadd.f32 %v1223, %v1256
          %v1264 = vadd.f32 %v1224, %v1260
          %v1265 = vadd.f32 %v1225, %v1256
          %v1266 = vadd.f32 %v1226, %v1260
          %v1267 = vadd.f32 %v1227, %v1256
          %v1268 = vadd.f32 %v1228, %v1260
          %v1269 = vadd.f32 %v1229, %v1256
          %v1270 = vadd.f32 %v1230, %v1260
          %v1271 = vadd.f32 %v1231, %v1256
          %v1272 = vadd.f32 %v1232, %v1260
          %v1273 = vadd.f32 %v1233, %v1256
          %v1274 = vadd.f32 %v1234, %v1260
          %v1275 = vadd.f32 %v1235, %v1256
          %v1276 = vadd.f32 %v1236, %v1260
          %v1277 = vadd.f32 %v1237, %v1256
          %v1278 = vadd.f32 %v1238, %v1260
          %v1279 = vadd.f32 %v1239, %v1256
          %v1280 = vadd.f32 %v1240, %v1260
          %v1281 = vadd.f32 %v1241, %v1256
          %v1282 = vadd.f32 %v1242, %v1260
          %v1283 = vadd.f32 %v1243, %v1256
          %v1284 = vadd.f32 %v1244, %v1260
          %v1285 = vadd.f32 %v1245, %v1256
          %v1286 = vadd.f32 %v1246, %v1260
          %v1287 = vadd.f32 %v1247, %v1256
          %v1288 = vadd.f32 %v1248, %v1260
          %v1289 = vadd.f32 %v1249, %v1256
          %v1290 = vadd.f32 %v1250, %v1260
          %v1291 = vmax.f32 %v1263, 0.0
          %v1292 = vmax.f32 %v1264, 0.0
          %v1293 = vmax.f32 %v1265, 0.0
          %v1294 = vmax.f32 %v1266, 0.0
          %v1295 = vmax.f32 %v1267, 0.0
          %v1296 = vmax.f32 %v1268, 0.0
          %v1297 = vmax.f32 %v1269, 0.0
          %v1298 = vmax.f32 %v1270, 0.0
          %v1299 = vmax.f32 %v1271, 0.0
          %v1300 = vmax.f32 %v1272, 0.0
          %v1301 = vmax.f32 %v1273, 0.0
          %v1302 = vmax.f32 %v1274, 0.0
          %v1303 = vmax.f32 %v1275, 0.0
          %v1304 = vmax.f32 %v1276, 0.0
          %v1305 = vmax.f32 %v1277, 0.0
          %v1306 = vmax.f32 %v1278, 0.0
          %v1307 = vmax.f32 %v1279, 0.0
          %v1308 = vmax.f32 %v1280, 0.0
          %v1309 = vmax.f32 %v1281, 0.0
          %v1310 = vmax.f32 %v1282, 0.0
          %v1311 = vmax.f32 %v1283, 0.0
          %v1312 = vmax.f32 %v1284, 0.0
          %v1313 = vmax.f32 %v1285, 0.0
          %v1314 = vmax.f32 %v1286, 0.0
          %v1315 = vmax.f32 %v1287, 0.0
          %v1316 = vmax.f32 %v1288, 0.0
          %v1317 = vmax.f32 %v1289, 0.0
          %v1318 = vmax.f32 %v1290, 0.0
          %v1319 = vpack.c.bf16 %v1293, %v1291
          %v1320 = vpack.c.bf16 %v1294, %v1292
          %v1321 = vpack.c.bf16 %v1297, %v1295
          %v1322 = vpack.c.bf16 %v1298, %v1296
          %v1323 = vpack.c.bf16 %v1301, %v1299
          %v1324 = vpack.c.bf16 %v1302, %v1300
          %v1325 = vpack.c.bf16 %v1305, %v1303
          %v1326 = vpack.c.bf16 %v1306, %v1304
          %v1327 = vpack.c.bf16 %v1309, %v1307
          %v1328 = vpack.c.bf16 %v1310, %v1308
          %v1329 = vpack.c.bf16 %v1313, %v1311
          %v1330 = vpack.c.bf16 %v1314, %v1312
          %v1331 = vpack.c.bf16 %v1317, %v1315
          %v1332 = vpack.c.bf16 %v1318, %v1316
          %v1347 = vunpack.c.l.b16 %v1319
          %v1348 = vunpack.c.l.b16 %v1320
          %v1349 = vunpack.c.h.b16 %v1319
          %v1350 = vunpack.c.h.b16 %v1320
          %v1351 = vunpack.c.l.b16 %v1321
          %v1352 = vunpack.c.l.b16 %v1322
          %v1353 = vunpack.c.h.b16 %v1321
          %v1354 = vunpack.c.h.b16 %v1322
          %v1355 = vunpack.c.l.b16 %v1323
          %v1356 = vunpack.c.l.b16 %v1324
          %v1357 = vunpack.c.h.b16 %v1323
          %v1358 = vunpack.c.h.b16 %v1324
          %v1359 = vunpack.c.l.b16 %v1325
          %v1360 = vunpack.c.l.b16 %v1326
          %v1361 = vunpack.c.h.b16 %v1325
          %v1362 = vunpack.c.h.b16 %v1326
          %v1363 = vunpack.c.l.b16 %v1327
          %v1364 = vunpack.c.l.b16 %v1328
          %v1365 = vunpack.c.h.b16 %v1327
          %v1366 = vunpack.c.h.b16 %v1328
          %v1367 = vunpack.c.l.b16 %v1329
          %v1368 = vunpack.c.l.b16 %v1330
          %v1369 = vunpack.c.h.b16 %v1329
          %v1370 = vunpack.c.h.b16 %v1330
          %v1371 = vunpack.c.l.b16 %v1331
          %v1372 = vunpack.c.l.b16 %v1332
          %v1373 = vunpack.c.h.b16 %v1331
          %v1374 = vunpack.c.h.b16 %v1332
          %v1375 = vpack.c.b16 %v1348, %v1347
          %v1376 = vpack.c.b16 %v1350, %v1349
          %v1377 = vpack.c.b16 %v1352, %v1351
          %v1378 = vpack.c.b16 %v1354, %v1353
          %v1379 = vpack.c.b16 %v1356, %v1355
          %v1380 = vpack.c.b16 %v1358, %v1357
          %v1381 = vpack.c.b16 %v1360, %v1359
          %v1382 = vpack.c.b16 %v1362, %v1361
          %v1383 = vpack.c.b16 %v1364, %v1363
          %v1384 = vpack.c.b16 %v1366, %v1365
          %v1385 = vpack.c.b16 %v1368, %v1367
          %v1386 = vpack.c.b16 %v1370, %v1369
          %v1387 = vpack.c.b16 %v1372, %v1371
          %v1388 = vpack.c.b16 %v1374, %v1373
          %1403 = vst [vmem:[%s342] sm:$0xff] %v1375
          %1404 = vst [vmem:[%s342 + $0x8] sm:$0xff] %v1376
          %1405 = vst [vmem:[%s342 + $0x10] sm:$0xff] %v1377
          %1406 = vst [vmem:[%s342 + $0x18] sm:$0xff] %v1378
          %1407 = vst [vmem:[%s342 + $0x20] sm:$0xff] %v1379
          %1408 = vst [vmem:[%s342 + $0x28] sm:$0xff] %v1380
          %1409 = vst [vmem:[%s342 + $0x30] sm:$0xff] %v1381
          %1410 = vst [vmem:[%s342 + $0x38] sm:$0xff] %v1382
          %1411 = vst [vmem:[%s342 + $0x40] sm:$0xff] %v1383
          %1412 = vst [vmem:[%s342 + $0x48] sm:$0xff] %v1384
          %1413 = vst [vmem:[%s342 + $0x50] sm:$0xff] %v1385
          %1414 = vst [vmem:[%s342 + $0x58] sm:$0xff] %v1386
          %1415 = vst [vmem:[%s342 + $0x60] sm:$0xff] %v1387
          %1416 = vst [vmem:[%s342 + $0x68] sm:$0xff] %v1388
        $region63: #{forward.9} parent=50 // pred_fallthru
          _
        %s1417 = smul.u32 14, %s19
        %s1418 = smul.u32 2, %s20
        %p1419 = scmp.lt.s32.totalorder %s1417, 13
        %s1420 = scalar_select %p1419, %s1417, 13
        %p1421 = scmp.lt.s32.totalorder %s1418, 1
        %s1422 = scalar_select %p1421, %s1418, 1
        %s1423 = smul.addr %s1420, 2
        %s1424 = sadd.s32 %s1422, %s1423
        %s1425 = smul.addr %s1424, 4
        %s1426 = scalar_lea.vmem %s3, %s1425
        // Predicated region
        $region64: #{forward.9} parent=50 // pred_check
          %p1427 = pneg %p135
        $region65: #{forward.9} parent=50 // pred_check_branch
          %1429 = sbr.rel (%p1427) target = $region67
        $region66: #{forward.9} parent=50 // pred_region
          %s1430 = smul.u32 14, %s19
          %s1431 = smul.u32 2, %s20
        $region67: #{forward.9} parent=50 // pred_fallthru
          _
        // Predicated region
        $region68: #{forward.9} parent=50 // pred_check
          %p1432 = pneg %p135
        $region69: #{forward.9} parent=50 // pred_check_branch
          %1434 = sbr.rel (%p1432) target = $region71
        $region70: #{forward.9} parent=50 // pred_region
          %s1435 = smul.u32 14, %s19
          %s1436 = smul.u32 2, %s20
          %p1437 = scmp.lt.s32.totalorder %s1435, 13
          %s1438 = scalar_select %p1437, %s1435, 13
          %p1439 = scmp.lt.s32.totalorder %s1436, 1
          %s1440 = scalar_select %p1439, %s1436, 1
          %s1441 = smul.addr %s1438, 2
          %s1442 = sadd.s32 %s1440, %s1441
          %s1443 = smul.addr %s1442, 4
          %s1444 = scalar_lea.vmem %s3, %s1443
        $region71: #{forward.9} parent=50 // pred_fallthru
          _
      $region51: #{forward.9} parent=5 // pred_fallthru
        _
      %p1445 = scmp.le.s32.totalorder 2, %s9
      // Predicated region
      $region72: #{forward.9} parent=5 // pred_check
        %p1446 = pneg %p1445
      $region73: #{forward.9} parent=5 // pred_check_branch
        %1448 = sbr.rel (%p1446) target = $region75
      $region74: #{forward.9} parent=5 // pred_region
        %s1449 = ssub.s32 %s9, 2
      $region75: #{forward.9} parent=5 // pred_fallthru
        _
    $region6: #{forward.9} parent=1 // loop_footer
      %s13 = sadd.s32 1, %s9
    $region7: #{forward.9} parent=1 // loop_footer_branch
      %8 = sbr.rel target = $region3
    $region8: #{forward.9} parent=1 // loop_exit
      _

// kernel: forward.10
$region0: #{forward.10}
  #allocation0 [shape = 'u32[]', space=smem, size = 0x4, offset = 0x4, fixed_abs, tag = 'smem constant byte address 0x4 - core index']
  #allocation1 [shape = 'u32[144,128]{1,0:T(1,128)}', space=vmem, size = 0x12000, scoped, tag = 'internal scratch']
  #allocation2 [shape = 'f32[32,384]{1,0:T(8,128)}', space=vmem, size = 0xc000, scoped, tag = 'scratch operand']
  %s0 = inlined_call_operand.vmem [shape: bf16[32,2048], index: 0, kind: input, shape index: {}]
  %s1 = inlined_call_operand.vmem [shape: bf16[2048,384], index: 1, kind: input, shape index: {}]
  %s2 = inlined_call_operand.vmem [shape: f32[1,384], index: 2, kind: input, shape index: {}]
  %s3 = inlined_call_operand.vmem [shape: bf16[32,384], index: 3, kind: output, shape index: {}]
  %s4 = sld [smem:[#allocation0]]
  $region76: #{forward.10} parent=0
    _
  %s6 = ssub.s32 1, %s4
  %s7 = scalar_select 0, %s6, %s4
  $region1: #{forward.10} parent=0
    #allocation3 [shape = 'u8[65536]{0}', space=vmem, size = 0x10000, scoped, tag = 'input window, operand 0']
    loop: start=0, step=1, limit=6
    $region2: #{forward.10} parent=1 // loop_pre_header
      _
    $region3: #{forward.10} parent=1 // loop_header
      %s9 = sphi 0, %s13
      %p10 = scmp.ge.s32.totalorder %s9, 6
      %s16 = sphi 0, %s35
      %s17 = sphi 0, %s31
      %s18 = sphi 0, %s27
      %s19 = sphi 0, %s16
      %s20 = sphi 0, %s17
      %s21 = sphi 0, %s18
      %s22 = sphi 0, %s19
      %s23 = sphi 0, %s20
      %s24 = sphi 0, %s21
      %s40 = sphi 0, %s42
      %s43 = sphi 0, %s40
      %s44 = sphi 0, %s43
      %s60 = sphi 0, %s44
      %s68 = sphi 0, %s70
      %s71 = sphi 0, %s68
      %s72 = sphi 0, %s71
      %s88 = sphi 0, %s72
      %s94 = sphi 0, %s96
      %s97 = sphi 0, %s94
      %s98 = sphi 0, %s97
      %s114 = sphi 0, %s98
      %s122 = sphi 0, %s124
      %s125 = sphi 0, %s122
      %s126 = sphi 0, %s125
      %s142 = sphi 0, %s126
    $region4: #{forward.10} parent=1 // loop_header_branch
      %12 = sbr.rel (%p10) target = $region8
    $region5: #{forward.10} parent=1 // loop_body
      %s14 = ssub.s32 %s9, 1
      %s15 = ssub.s32 %s9, 2
      %s25 = sadd.s32 1, %s18
      %p26 = scmp.ge.s32.totalorder %s25, 4
      %s27 = scalar_select %p26, 0, %s25
      %s28 = sadd.s32 1, %s17
      %s29 = scalar_select %p26, %s28, %s17
      %p30 = scmp.ge.s32.totalorder %s29, 1
      %s31 = scalar_select %p30, 0, %s29
      %s32 = sadd.s32 1, %s16
      %s33 = scalar_select %p30, %s32, %s16
      %p34 = scmp.ge.s32.totalorder %s33, 1
      %s35 = scalar_select %p34, 0, %s33
      %s36 = ssub.s32 %s16, %s35
      %s37 = ssub.s32 %s18, %s27
      %s38 = sor.u32 %s36, %s37
      %p39 = scmp.eq.s32.totalorder %s38, 0
      %s41 = sadd.s32 %s40, 1
      %s42 = scalar_select %p39, %s40, %s41
      %p45 = pneg %p39
      %p46 = scmp.eq.s32.totalorder %s9, 3
      %p47 = por %p45, %p46
      %p48 = scmp.ne.s32.totalorder %s40, %s43
      %p49 = scmp.eq.s32.totalorder %s9, 0
      %p50 = por %p48, %p49
      %p51 = scmp.ne.s32.totalorder %s40, %s43
      %p52 = scmp.eq.s32.totalorder %s14, 3
      %p53 = por %p51, %p52
      %p54 = scmp.ne.s32.totalorder %s43, %s44
      %p55 = scmp.eq.s32.totalorder %s14, 0
      %p56 = por %p54, %p55
      %p57 = scmp.ne.s32.totalorder %s43, %s44
      %p58 = scmp.eq.s32.totalorder %s15, 3
      %p59 = por %p57, %p58
      %p61 = scmp.ne.s32.totalorder %s44, %s60
      %p62 = scmp.eq.s32.totalorder %s15, 0
      %p63 = por %p61, %p62
      %s64 = ssub.s32 %s18, %s27
      %s65 = ssub.s32 %s17, %s31
      %s66 = sor.u32 %s64, %s65
      %p67 = scmp.eq.s32.totalorder %s66, 0
      %s69 = sadd.s32 %s68, 1
      %s70 = scalar_select %p67, %s68, %s69
      %p73 = pneg %p67
      %p74 = scmp.eq.s32.totalorder %s9, 3
      %p75 = por %p73, %p74
      %p76 = scmp.ne.s32.totalorder %s68, %s71
      %p77 = scmp.eq.s32.totalorder %s9, 0
      %p78 = por %p76, %p77
      %p79 = scmp.ne.s32.totalorder %s68, %s71
      %p80 = scmp.eq.s32.totalorder %s14, 3
      %p81 = por %p79, %p80
      %p82 = scmp.ne.s32.totalorder %s71, %s72
      %p83 = scmp.eq.s32.totalorder %s14, 0
      %p84 = por %p82, %p83
      %p85 = scmp.ne.s32.totalorder %s71, %s72
      %p86 = scmp.eq.s32.totalorder %s15, 3
      %p87 = por %p85, %p86
      %p89 = scmp.ne.s32.totalorder %s72, %s88
      %p90 = scmp.eq.s32.totalorder %s15, 0
      %p91 = por %p89, %p90
      %s92 = ssub.s32 %s17, %s31
      %p93 = scmp.eq.s32.totalorder %s92, 0
      %s95 = sadd.s32 %s94, 1
      %s96 = scalar_select %p93, %s94, %s95
      %p99 = pneg %p93
      %p100 = scmp.eq.s32.totalorder %s9, 3
      %p101 = por %p99, %p100
      %p102 = scmp.ne.s32.totalorder %s94, %s97
      %p103 = scmp.eq.s32.totalorder %s9, 0
      %p104 = por %p102, %p103
      %p105 = scmp.ne.s32.totalorder %s94, %s97
      %p106 = scmp.eq.s32.totalorder %s14, 3
      %p107 = por %p105, %p106
      %p108 = scmp.ne.s32.totalorder %s97, %s98
      %p109 = scmp.eq.s32.totalorder %s14, 0
      %p110 = por %p108, %p109
      %p111 = scmp.ne.s32.totalorder %s97, %s98
      %p112 = scmp.eq.s32.totalorder %s15, 3
      %p113 = por %p111, %p112
      %p115 = scmp.ne.s32.totalorder %s98, %s114
      %p116 = scmp.eq.s32.totalorder %s15, 0
      %p117 = por %p115, %p116
      %s118 = ssub.s32 %s16, %s35
      %s119 = ssub.s32 %s17, %s31
      %s120 = sor.u32 %s118, %s119
      %p121 = scmp.eq.s32.totalorder %s120, 0
      %s123 = sadd.s32 %s122, 1
      %s124 = scalar_select %p121, %s122, %s123
      %p127 = pneg %p121
      %p128 = scmp.eq.s32.totalorder %s9, 3
      %p129 = por %p127, %p128
      %p130 = scmp.ne.s32.totalorder %s122, %s125
      %p131 = scmp.eq.s32.totalorder %s9, 0
      %p132 = por %p130, %p131
      %p133 = scmp.ne.s32.totalorder %s122, %s125
      %p134 = scmp.eq.s32.totalorder %s14, 3
      %p135 = por %p133, %p134
      %p136 = scmp.ne.s32.totalorder %s125, %s126
      %p137 = scmp.eq.s32.totalorder %s14, 0
      %p138 = por %p136, %p137
      %p139 = scmp.ne.s32.totalorder %s125, %s126
      %p140 = scmp.eq.s32.totalorder %s15, 3
      %p141 = por %p139, %p140
      %p143 = scmp.ne.s32.totalorder %s126, %s142
      %p144 = scmp.eq.s32.totalorder %s15, 0
      %p145 = por %p143, %p144
      %p146 = scmp.le.s32.totalorder 1, %s9
      %p147 = scmp.lt.s32.totalorder %s9, 5
      %p148 = pnand %p146, %p147
      %p149 = pneg %p148
      // Predicated region
      $region9: #{forward.10} parent=5 // pred_check
        _
      $region10: #{forward.10} parent=5 // pred_check_branch
        %151 = sbr.rel (%p148) target = $region12
      $region11: #{forward.10} parent=5 // pred_region
        %s152 = ssub.s32 %s9, 1
        // Predicated region
        $region13: #{forward.10} parent=11 // pred_check
          %p153 = pneg %p110
        $region14: #{forward.10} parent=11 // pred_check_branch
          %155 = sbr.rel (%p153) target = $region16
        $region15: #{forward.10} parent=11 // pred_region
          %s156 = smul.u32 3, %s20
          %p157 = scmp.lt.s32.totalorder %s156, 2
          %s158 = scalar_select %p157, %s156, 2
          %s159 = scalar_lea.vmem %s2, %s158
          %s160 = smul.u32 3, %s20
        $region16: #{forward.10} parent=11 // pred_fallthru
          _
      $region12: #{forward.10} parent=5 // pred_fallthru
        _
      %p161 = scmp.lt.s32.totalorder %s9, 4
      // Predicated region
      $region17: #{forward.10} parent=5 // pred_check
        %p162 = pneg %p161
      $region18: #{forward.10} parent=5 // pred_check_branch
        %164 = sbr.rel (%p162) target = $region20
      $region19: #{forward.10} parent=5 // pred_region
        // Predicated region
        $region21: #{forward.10} parent=19 // pred_check
          %p165 = pneg %p50
        $region22: #{forward.10} parent=19 // pred_check_branch
          %167 = sbr.rel (%p165) target = $region24
        $region23: #{forward.10} parent=19 // pred_region
          %s168 = sand.u32 %s40, 1
          %s169 = sand.u32 %s40, 1
          %s170 = smul.addr %s169, 64
          %s171 = scalar_lea.vmem [#allocation3], %s170
          %s172 = smul.u32 4, %s16
          %s173 = smul.u32 4, %s18
          %s174 = smul.addr %s172, 16
          %s175 = sadd.s32 %s173, %s174
          %s176 = smul.addr %s175, 4
          %s177 = scalar_lea.vmem %s0, %s176
          // Predicated region
          $region25: #{forward.10} parent=23 // pred_check
            _
          $region26: #{forward.10} parent=23 // pred_check_branch
            %179 = sbr.rel (0) target = $region28
          $region27: #{forward.10} parent=23 // pred_region
            // Predicated region
            $region29: #{forward.10} parent=27 // pred_check
              _
            $region30: #{forward.10} parent=27 // pred_check_branch
              %181 = sbr.rel (0) target = $region32
            $region31: #{forward.10} parent=27 // pred_region
              loop: start=0, step=1, limit=1
              $region33: #{forward.10} parent=31 // loop_pre_header
                _
              $region34: #{forward.10} parent=31 // loop_header
                %s183 = sphi 0, %s187
                %p184 = scmp.ge.s32.totalorder %s183, 1
                %s188 = sphi %s177, %s177
                %s189 = sphi %s171, %s171
              $region35: #{forward.10} parent=31 // loop_header_branch
                %186 = sbr.rel (%p184) target = $region39
              $region36: #{forward.10} parent=31 // loop_body
                %v190 = vld [vmem:[%s188] sm:$0xff]
                %191 = vst [vmem:[%s189] sm:$0xff] %v190
                %v192 = vld [vmem:[%s188 + $0x8] sm:$0xff]
                %193 = vst [vmem:[%s189 + $0x8] sm:$0xff] %v192
                %v194 = vld [vmem:[%s188 + $0x40] sm:$0xff]
                %195 = vst [vmem:[%s189 + $0x10] sm:$0xff] %v194
                %v196 = vld [vmem:[%s188 + $0x48] sm:$0xff]
                %197 = vst [vmem:[%s189 + $0x18] sm:$0xff] %v196
                %v198 = vld [vmem:[%s188 + $0x80] sm:$0xff]
                %199 = vst [vmem:[%s189 + $0x20] sm:$0xff] %v198
                %v200 = vld [vmem:[%s188 + $0x88] sm:$0xff]
                %201 = vst [vmem:[%s189 + $0x28] sm:$0xff] %v200
                %v202 = vld [vmem:[%s188 + $0xc0] sm:$0xff]
                %203 = vst [vmem:[%s189 + $0x30] sm:$0xff] %v202
                %v204 = vld [vmem:[%s188 + $0xc8] sm:$0xff]
                %205 = vst [vmem:[%s189 + $0x38] sm:$0xff] %v204
              $region37: #{forward.10} parent=31 // loop_footer
                %s187 = sadd.s32 1, %s183
              $region38: #{forward.10} parent=31 // loop_footer_branch
                %182 = sbr.rel target = $region34
              $region39: #{forward.10} parent=31 // loop_exit
                _
            $region32: #{forward.10} parent=27 // pred_fallthru
              _
            // Predicated region
            $region40: #{forward.10} parent=27 // pred_check
              _
            $region41: #{forward.10} parent=27 // pred_check_branch
              %207 = sbr.rel target = $region43
            $region42: #{forward.10} parent=27 // pred_region
              _
            $region43: #{forward.10} parent=27 // pred_fallthru
              _
          $region28: #{forward.10} parent=23 // pred_fallthru
            _
          %208 = vnop
        $region24: #{forward.10} parent=19 // pred_fallthru
          _
        // Predicated region
        $region44: #{forward.10} parent=19 // pred_check
          %p209 = pneg %p78
        $region45: #{forward.10} parent=19 // pred_check_branch
          %211 = sbr.rel (%p209) target = $region47
        $region46: #{forward.10} parent=19 // pred_region
          %s212 = smul.u32 64, %s18
          %s213 = smul.u32 3, %s17
          %p214 = scmp.lt.s32.totalorder %s212, 255
          %s215 = scalar_select %p214, %s212, 255
          %p216 = scmp.lt.s32.totalorder %s213, 2
          %s217 = scalar_select %p216, %s213, 2
          %s218 = smul.addr %s215, 3
          %s219 = sadd.s32 %s217, %s218
          %s220 = smul.addr %s219, 4
          %s221 = scalar_lea.vmem %s1, %s220
          %s222 = smul.u32 64, %s18
          %s223 = smul.u32 3, %s17
        $region47: #{forward.10} parent=19 // pred_fallthru
          _
      $region20: #{forward.10} parent=5 // pred_fallthru
        _
      %p224 = scmp.le.s32.totalorder 1, %s9
      %p225 = scmp.lt.s32.totalorder %s9, 5
      %p226 = pnand %p224, %p225
      %p227 = pneg %p226
      // Predicated region
      $region48: #{forward.10} parent=5 // pred_check
        _
      $region49: #{forward.10} parent=5 // pred_check_branch
        %229 = sbr.rel (%p226) target = $region51
      $region50: #{forward.10} parent=5 // pred_region
        %s230 = ssub.s32 %s9, 1
        %s231 = sand.u32 %s43, 1
        %s232 = sand.u32 %s43, 1
        %s233 = smul.addr %s232, 64
        %s234 = scalar_lea.vmem [#allocation3], %s233
        // Predicated region
        $region52: #{forward.10} parent=50 // pred_check
          %p235 = pneg %p56
        $region53: #{forward.10} parent=50 // pred_check_branch
          %237 = sbr.rel (%p235) target = $region55
        $region54: #{forward.10} parent=50 // pred_region
          _
        $region55: #{forward.10} parent=50 // pred_fallthru
          _
        %s238 = sand.u32 %s43, 1
        %s239 = sand.u32 %s43, 1
        %s240 = smul.addr %s239, 64
        %s241 = scalar_lea.vmem [#allocation3], %s240
        %p242 = pneg %p56
        %p243 = pneg %p53
        %s244 = smul.u32 64, %s21
        %s245 = smul.u32 3, %s20
        %p246 = scmp.lt.s32.totalorder %s244, 255
        %s247 = scalar_select %p246, %s244, 255
        %p248 = scmp.lt.s32.totalorder %s245, 2
        %s249 = scalar_select %p248, %s245, 2
        %s250 = smul.addr %s247, 3
        %s251 = sadd.s32 %s249, %s250
        %s252 = smul.addr %s251, 4
        %s253 = scalar_lea.vmem %s1, %s252
        %p254 = pneg %p84
        %p255 = pneg %p81
        %s256 = smul.u32 3, %s20
        %p257 = scmp.lt.s32.totalorder %s256, 2
        %s258 = scalar_select %p257, %s256, 2
        %s259 = scalar_lea.vmem %s2, %s258
        %p260 = pneg %p110
        %p261 = pneg %p107
        %p262 = pneg %p138
        %p263 = pneg %p135
        %s264 = smul.u32 4, %s19
        %s265 = smul.u32 3, %s20
        %p266 = scmp.lt.s32.totalorder %s264, 3
        %s267 = scalar_select %p266, %s264, 3
        %p268 = scmp.lt.s32.totalorder %s265, 2
        %s269 = scalar_select %p268, %s265, 2
        %s270 = smul.addr %s267, 3
        %s271 = sadd.s32 %s269, %s270
        %s272 = smul.addr %s271, 4
        %s273 = scalar_lea.vmem %s3, %s272
        %s274 = smul.u32 4, %s19
        %s275 = smul.u32 4, %s21
        %s276 = smul.u32 64, %s21
        %s277 = smul.u32 3, %s20
        %p278 = scmp.lt.s32.totalorder %s276, 255
        %s279 = scalar_select %p278, %s276, 255
        %p280 = scmp.lt.s32.totalorder %s277, 2
        %s281 = scalar_select %p280, %s277, 2
        %s282 = smul.addr %s279, 3
        %s283 = sadd.s32 %s281, %s282
        %s284 = smul.addr %s283, 4
        %s285 = scalar_lea.vmem %s1, %s284
        %s286 = smul.u32 64, %s21
        %s287 = smul.u32 3, %s20
        %s288 = smul.u32 3, %s20
        %p289 = scmp.lt.s32.totalorder %s288, 2
        %s290 = scalar_select %p289, %s288, 2
        %s291 = scalar_lea.vmem %s2, %s290
        %s292 = smul.u32 3, %s20
        %s293 = smul.u32 4, %s19
        %s294 = smul.u32 3, %s20
        %p295 = scmp.lt.s32.totalorder %s293, 3
        %s296 = scalar_select %p295, %s293, 3
        %p297 = scmp.lt.s32.totalorder %s294, 2
        %s298 = scalar_select %p297, %s294, 2
        %s299 = smul.addr %s296, 3
        %s300 = sadd.s32 %s298, %s299
        %s301 = smul.addr %s300, 4
        %s302 = scalar_lea.vmem %s3, %s301
        %s303 = smul.u32 4, %s19
        %s304 = smul.u32 3, %s20
        %p306 = scmp.eq.s32.totalorder %s21, 0
        // Predicated region
        $region56: #{forward.10} parent=50 // pred_check
          %p307 = pneg %p306
        $region57: #{forward.10} parent=50 // pred_check_branch
          %309 = sbr.rel (%p307) target = $region59
        $region58: #{forward.10} parent=50 // pred_region
          %310 = vst [vmem:[#allocation2] sm:$0xff] 0.0
          %311 = vst [vmem:[#allocation2 + $0x8] sm:$0xff] 0.0
          %312 = vst [vmem:[#allocation2 + $0x10] sm:$0xff] 0.0
          %313 = vst [vmem:[#allocation2 + $0x18] sm:$0xff] 0.0
          %314 = vst [vmem:[#allocation2 + $0x20] sm:$0xff] 0.0
          %315 = vst [vmem:[#allocation2 + $0x28] sm:$0xff] 0.0
          %316 = vst [vmem:[#allocation2 + $0x30] sm:$0xff] 0.0
          %317 = vst [vmem:[#allocation2 + $0x38] sm:$0xff] 0.0
          %318 = vst [vmem:[#allocation2 + $0x40] sm:$0xff] 0.0
          %319 = vst [vmem:[#allocation2 + $0x48] sm:$0xff] 0.0
          %320 = vst [vmem:[#allocation2 + $0x50] sm:$0xff] 0.0
          %321 = vst [vmem:[#allocation2 + $0x58] sm:$0xff] 0.0
        $region59: #{forward.10} parent=50 // pred_fallthru
          _
        %v322 = vld [vmem:[#allocation2] sm:$0xff]
        %v323 = vld [vmem:[#allocation2 + $0x8] sm:$0xff]
        %v324 = vld [vmem:[#allocation2 + $0x10] sm:$0xff]
        %v325 = vld [vmem:[#allocation2 + $0x18] sm:$0xff]
        %v326 = vld [vmem:[#allocation2 + $0x20] sm:$0xff]
        %v327 = vld [vmem:[#allocation2 + $0x28] sm:$0xff]
        %v328 = vld [vmem:[#allocation2 + $0x30] sm:$0xff]
        %v329 = vld [vmem:[#allocation2 + $0x38] sm:$0xff]
        %v330 = vld [vmem:[#allocation2 + $0x40] sm:$0xff]
        %v331 = vld [vmem:[#allocation2 + $0x48] sm:$0xff]
        %v332 = vld [vmem:[#allocation2 + $0x50] sm:$0xff]
        %v333 = vld [vmem:[#allocation2 + $0x58] sm:$0xff]
        %v334 = vld [vmem:[%s234] sm:$0xff]
        %v335 = vld [vmem:[%s234 + $0x8] sm:$0xff]
        %v336 = vld [vmem:[%s234 + $0x10] sm:$0xff]
        %v337 = vld [vmem:[%s234 + $0x18] sm:$0xff]
        %v338 = vld [vmem:[%s234 + $0x20] sm:$0xff]
        %v339 = vld [vmem:[%s234 + $0x28] sm:$0xff]
        %v340 = vld [vmem:[%s234 + $0x30] sm:$0xff]
        %v341 = vld [vmem:[%s234 + $0x38] sm:$0xff]
        %v342 = vld [vmem:[%s285] sm:$0xff]
        %v343 = vld [vmem:[%s285 + $0x8] sm:$0xf]
        %v344 = vld [vmem:[%s285 + $0xc] sm:$0xff]
        %v345 = vld [vmem:[%s285 + $0x14] sm:$0xf]
        %v346 = vld [vmem:[%s285 + $0x18] sm:$0xff]
        %v347 = vld [vmem:[%s285 + $0x20] sm:$0xf]
        %v348 = vld [vmem:[%s285 + $0x24] sm:$0xff]
        %v349 = vld [vmem:[%s285 + $0x2c] sm:$0xf]
        %v350 = vld [vmem:[%s285 + $0x30] sm:$0xff]
        %v351 = vld [vmem:[%s285 + $0x38] sm:$0xf]
        %v352 = vld [vmem:[%s285 + $0x3c] sm:$0xff]
        %v353 = vld [vmem:[%s285 + $0x44] sm:$0xf]
        %v354 = vld [vmem:[%s285 + $0x48] sm:$0xff]
        %v355 = vld [vmem:[%s285 + $0x50] sm:$0xf]
        %v356 = vld [vmem:[%s285 + $0x54] sm:$0xff]
        %v357 = vld [vmem:[%s285 + $0x5c] sm:$0xf]
        %v358 = vld [vmem:[%s285 + $0x60] sm:$0xff]
        %v359 = vld [vmem:[%s285 + $0x68] sm:$0xf]
        %v360 = vld [vmem:[%s285 + $0x6c] sm:$0xff]
        %v361 = vld [vmem:[%s285 + $0x74] sm:$0xf]
        %v362 = vld [vmem:[%s285 + $0x78] sm:$0xff]
        %v363 = vld [vmem:[%s285 + $0x80] sm:$0xf]
        %v364 = vld [vmem:[%s285 + $0x84] sm:$0xff]
        %v365 = vld [vmem:[%s285 + $0x8c] sm:$0xf]
        %v366 = vld [vmem:[%s285 + $0x90] sm:$0xff]
        %v367 = vld [vmem:[%s285 + $0x98] sm:$0xf]
        %v368 = vld [vmem:[%s285 + $0x9c] sm:$0xff]
        %v369 = vld [vmem:[%s285 + $0xa4] sm:$0xf]
        %v370 = vld [vmem:[%s285 + $0xa8] sm:$0xff]
        %v371 = vld [vmem:[%s285 + $0xb0] sm:$0xf]
        %v372 = vld [vmem:[%s285 + $0xb4] sm:$0xff]
        %v373 = vld [vmem:[%s285 + $0xbc] sm:$0xf]
        %v374 = vld [vmem:[%s285 + $0xc0] sm:$0xff]
        %v375 = vld [vmem:[%s285 + $0xc8] sm:$0xf]
        %v376 = vld [vmem:[%s285 + $0xcc] sm:$0xff]
        %v377 = vld [vmem:[%s285 + $0xd4] sm:$0xf]
        %v378 = vld [vmem:[%s285 + $0xd8] sm:$0xff]
        %v379 = vld [vmem:[%s285 + $0xe0] sm:$0xf]
        %v380 = vld [vmem:[%s285 + $0xe4] sm:$0xff]
        %v381 = vld [vmem:[%s285 + $0xec] sm:$0xf]
        %v382 = vld [vmem:[%s285 + $0xf0] sm:$0xff]
        %v383 = vld [vmem:[%s285 + $0xf8] sm:$0xf]
        %v384 = vld [vmem:[%s285 + $0xfc] sm:$0xff]
        %v385 = vld [vmem:[%s285 + $0x104] sm:$0xf]
        %v386 = vld [vmem:[%s285 + $0x108] sm:$0xff]
        %v387 = vld [vmem:[%s285 + $0x110] sm:$0xf]
        %v388 = vld [vmem:[%s285 + $0x114] sm:$0xff]
        %v389 = vld [vmem:[%s285 + $0x11c] sm:$0xf]
        %v390 = vld [vmem:[%s285 + $0x120] sm:$0xff]
        %v391 = vld [vmem:[%s285 + $0x128] sm:$0xf]
        %v392 = vld [vmem:[%s285 + $0x12c] sm:$0xff]
        %v393 = vld [vmem:[%s285 + $0x134] sm:$0xf]
        %v394 = vld [vmem:[%s285 + $0x138] sm:$0xff]
        %v395 = vld [vmem:[%s285 + $0x140] sm:$0xf]
        %v396 = vld [vmem:[%s285 + $0x144] sm:$0xff]
        %v397 = vld [vmem:[%s285 + $0x14c] sm:$0xf]
        %v398 = vld [vmem:[%s285 + $0x150] sm:$0xff]
        %v399 = vld [vmem:[%s285 + $0x158] sm:$0xf]
        %v400 = vld [vmem:[%s285 + $0x15c] sm:$0xff]
        %v401 = vld [vmem:[%s285 + $0x164] sm:$0xf]
        %v402 = vld [vmem:[%s285 + $0x168] sm:$0xff]
        %v403 = vld [vmem:[%s285 + $0x170] sm:$0xf]
        %v404 = vld [vmem:[%s285 + $0x174] sm:$0xff]
        %v405 = vld [vmem:[%s285 + $0x17c] sm:$0xf]
        %v406 = vld [vmem:[%s285 + $0x180] sm:$0xff]
        %v407 = vld [vmem:[%s285 + $0x188] sm:$0xf]
        %v408 = vld [vmem:[%s285 + $0x18c] sm:$0xff]
        %v409 = vld [vmem:[%s285 + $0x194] sm:$0xf]
        %v410 = vld [vmem:[%s285 + $0x198] sm:$0xff]
        %v411 = vld [vmem:[%s285 + $0x1a0] sm:$0xf]
        %v412 = vld [vmem:[%s285 + $0x1a4] sm:$0xff]
        %v413 = vld [vmem:[%s285 + $0x1ac] sm:$0xf]
        %v414 = vld [vmem:[%s285 + $0x1b0] sm:$0xff]
        %v415 = vld [vmem:[%s285 + $0x1b8] sm:$0xf]
        %v416 = vld [vmem:[%s285 + $0x1bc] sm:$0xff]
        %v417 = vld [vmem:[%s285 + $0x1c4] sm:$0xf]
        %v418 = vld [vmem:[%s285 + $0x1c8] sm:$0xff]
        %v419 = vld [vmem:[%s285 + $0x1d0] sm:$0xf]
        %v420 = vld [vmem:[%s285 + $0x1d4] sm:$0xff]
        %v421 = vld [vmem:[%s285 + $0x1dc] sm:$0xf]
        %v422 = vld [vmem:[%s285 + $0x1e0] sm:$0xff]
        %v423 = vld [vmem:[%s285 + $0x1e8] sm:$0xf]
        %v424 = vld [vmem:[%s285 + $0x1ec] sm:$0xff]
        %v425 = vld [vmem:[%s285 + $0x1f4] sm:$0xf]
        %v426 = vld [vmem:[%s285 + $0x1f8] sm:$0xff]
        %v427 = vld [vmem:[%s285 + $0x200] sm:$0xf]
        %v428 = vld [vmem:[%s285 + $0x204] sm:$0xff]
        %v429 = vld [vmem:[%s285 + $0x20c] sm:$0xf]
        %v430 = vld [vmem:[%s285 + $0x210] sm:$0xff]
        %v431 = vld [vmem:[%s285 + $0x218] sm:$0xf]
        %v432 = vld [vmem:[%s285 + $0x21c] sm:$0xff]
        %v433 = vld [vmem:[%s285 + $0x224] sm:$0xf]
        %v434 = vld [vmem:[%s285 + $0x228] sm:$0xff]
        %v435 = vld [vmem:[%s285 + $0x230] sm:$0xf]
        %v436 = vld [vmem:[%s285 + $0x234] sm:$0xff]
        %v437 = vld [vmem:[%s285 + $0x23c] sm:$0xf]
        %v438 = vld [vmem:[%s285 + $0x240] sm:$0xff]
        %v439 = vld [vmem:[%s285 + $0x248] sm:$0xf]
        %v440 = vld [vmem:[%s285 + $0x24c] sm:$0xff]
        %v441 = vld [vmem:[%s285 + $0x254] sm:$0xf]
        %v442 = vld [vmem:[%s285 + $0x258] sm:$0xff]
        %v443 = vld [vmem:[%s285 + $0x260] sm:$0xf]
        %v444 = vld [vmem:[%s285 + $0x264] sm:$0xff]
        %v445 = vld [vmem:[%s285 + $0x26c] sm:$0xf]
        %v446 = vld [vmem:[%s285 + $0x270] sm:$0xff]
        %v447 = vld [vmem:[%s285 + $0x278] sm:$0xf]
        %v448 = vld [vmem:[%s285 + $0x27c] sm:$0xff]
        %v449 = vld [vmem:[%s285 + $0x284] sm:$0xf]
        %v450 = vld [vmem:[%s285 + $0x288] sm:$0xff]
        %v451 = vld [vmem:[%s285 + $0x290] sm:$0xf]
        %v452 = vld [vmem:[%s285 + $0x294] sm:$0xff]
        %v453 = vld [vmem:[%s285 + $0x29c] sm:$0xf]
        %v454 = vld [vmem:[%s285 + $0x2a0] sm:$0xff]
        %v455 = vld [vmem:[%s285 + $0x2a8] sm:$0xf]
        %v456 = vld [vmem:[%s285 + $0x2ac] sm:$0xff]
        %v457 = vld [vmem:[%s285 + $0x2b4] sm:$0xf]
        %v458 = vld [vmem:[%s285 + $0x2b8] sm:$0xff]
        %v459 = vld [vmem:[%s285 + $0x2c0] sm:$0xf]
        %v460 = vld [vmem:[%s285 + $0x2c4] sm:$0xff]
        %v461 = vld [vmem:[%s285 + $0x2cc] sm:$0xf]
        %v462 = vld [vmem:[%s285 + $0x2d0] sm:$0xff]
        %v463 = vld [vmem:[%s285 + $0x2d8] sm:$0xf]
        %v464 = vld [vmem:[%s285 + $0x2dc] sm:$0xff]
        %v465 = vld [vmem:[%s285 + $0x2e4] sm:$0xf]
        %v466 = vld [vmem:[%s285 + $0x2e8] sm:$0xff]
        %v467 = vld [vmem:[%s285 + $0x2f0] sm:$0xf]
        %v468 = vld [vmem:[%s285 + $0x2f4] sm:$0xff]
        %v469 = vld [vmem:[%s285 + $0x2fc] sm:$0xf]
        %v478 = vunpack.c.l.b16 %v334
        %v479 = vunpack.c.h.b16 %v334
        %v480 = vunpack.c.l.b16 %v335
        %v481 = vunpack.c.h.b16 %v335
        %v482 = vunpack.c.l.b16 %v336
        %v483 = vunpack.c.h.b16 %v336
        %v484 = vunpack.c.l.b16 %v337
        %v485 = vunpack.c.h.b16 %v337
        %v486 = vunpack.c.l.b16 %v338
        %v487 = vunpack.c.h.b16 %v338
        %v488 = vunpack.c.l.b16 %v339
        %v489 = vunpack.c.h.b16 %v339
        %v490 = vunpack.c.l.b16 %v340
        %v491 = vunpack.c.h.b16 %v340
        %v492 = vunpack.c.l.b16 %v341
        %v493 = vunpack.c.h.b16 %v341
        %v494 = vpack.c.b16 %v482, %v478
        %v495 = vpack.c.b16 %v483, %v479
        %v496 = vpack.c.b16 %v484, %v480
        %v497 = vpack.c.b16 %v485, %v481
        %v498 = vpack.c.b16 %v490, %v486
        %v499 = vpack.c.b16 %v491, %v487
        %v500 = vpack.c.b16 %v492, %v488
        %v501 = vpack.c.b16 %v493, %v489
        %v638 = vunpack.c.l.b16 %v342
        %v639 = vunpack.c.h.b16 %v342
        %v640 = vunpack.c.l.b16 %v343
        %v641 = vunpack.c.l.b16 %v344
        %v642 = vunpack.c.h.b16 %v344
        %v643 = vunpack.c.l.b16 %v345
        %v644 = vunpack.c.l.b16 %v346
        %v645 = vunpack.c.h.b16 %v346
        %v646 = vunpack.c.l.b16 %v347
        %v647 = vunpack.c.l.b16 %v348
        %v648 = vunpack.c.h.b16 %v348
        %v649 = vunpack.c.l.b16 %v349
        %v650 = vunpack.c.l.b16 %v350
        %v651 = vunpack.c.h.b16 %v350
        %v652 = vunpack.c.l.b16 %v351
        %v653 = vunpack.c.l.b16 %v352
        %v654 = vunpack.c.h.b16 %v352
        %v655 = vunpack.c.l.b16 %v353
        %v656 = vunpack.c.l.b16 %v354
        %v657 = vunpack.c.h.b16 %v354
        %v658 = vunpack.c.l.b16 %v355
        %v659 = vunpack.c.l.b16 %v356
        %v660 = vunpack.c.h.b16 %v356
        %v661 = vunpack.c.l.b16 %v357
        %v662 = vunpack.c.l.b16 %v358
        %v663 = vunpack.c.h.b16 %v358
        %v664 = vunpack.c.l.b16 %v359
        %v665 = vunpack.c.l.b16 %v360
        %v666 = vunpack.c.h.b16 %v360
        %v667 = vunpack.c.l.b16 %v361
        %v668 = vunpack.c.l.b16 %v362
        %v669 = vunpack.c.h.b16 %v362
        %v670 = vunpack.c.l.b16 %v363
        %v671 = vunpack.c.l.b16 %v364
        %v672 = vunpack.c.h.b16 %v364
        %v673 = vunpack.c.l.b16 %v365
        %v674 = vunpack.c.l.b16 %v366
        %v675 = vunpack.c.h.b16 %v366
        %v676 = vunpack.c.l.b16 %v367
        %v677 = vunpack.c.l.b16 %v368
        %v678 = vunpack.c.h.b16 %v368
        %v679 = vunpack.c.l.b16 %v369
        %v680 = vunpack.c.l.b16 %v370
        %v681 = vunpack.c.h.b16 %v370
        %v682 = vunpack.c.l.b16 %v371
        %v683 = vunpack.c.l.b16 %v372
        %v684 = vunpack.c.h.b16 %v372
        %v685 = vunpack.c.l.b16 %v373
        %v686 = vunpack.c.l.b16 %v374
        %v687 = vunpack.c.h.b16 %v374
        %v688 = vunpack.c.l.b16 %v375
        %v689 = vunpack.c.l.b16 %v376
        %v690 = vunpack.c.h.b16 %v376
        %v691 = vunpack.c.l.b16 %v377
        %v692 = vunpack.c.l.b16 %v378
        %v693 = vunpack.c.h.b16 %v378
        %v694 = vunpack.c.l.b16 %v379
        %v695 = vunpack.c.l.b16 %v380
        %v696 = vunpack.c.h.b16 %v380
        %v697 = vunpack.c.l.b16 %v381
        %v698 = vunpack.c.l.b16 %v382
        %v699 = vunpack.c.h.b16 %v382
        %v700 = vunpack.c.l.b16 %v383
        %v701 = vunpack.c.l.b16 %v384
        %v702 = vunpack.c.h.b16 %v384
        %v703 = vunpack.c.l.b16 %v385
        %v704 = vunpack.c.l.b16 %v386
        %v705 = vunpack.c.h.b16 %v386
        %v706 = vunpack.c.l.b16 %v387
        %v707 = vunpack.c.l.b16 %v388
        %v708 = vunpack.c.h.b16 %v388
        %v709 = vunpack.c.l.b16 %v389
        %v710 = vunpack.c.l.b16 %v390
        %v711 = vunpack.c.h.b16 %v390
        %v712 = vunpack.c.l.b16 %v391
        %v713 = vunpack.c.l.b16 %v392
        %v714 = vunpack.c.h.b16 %v392
        %v715 = vunpack.c.l.b16 %v393
        %v716 = vunpack.c.l.b16 %v394
        %v717 = vunpack.c.h.b16 %v394
        %v718 = vunpack.c.l.b16 %v395
        %v719 = vunpack.c.l.b16 %v396
        %v720 = vunpack.c.h.b16 %v396
        %v721 = vunpack.c.l.b16 %v397
        %v722 = vunpack.c.l.b16 %v398
        %v723 = vunpack.c.h.b16 %v398
        %v724 = vunpack.c.l.b16 %v399
        %v725 = vunpack.c.l.b16 %v400
        %v726 = vunpack.c.h.b16 %v400
        %v727 = vunpack.c.l.b16 %v401
        %v728 = vunpack.c.l.b16 %v402
        %v729 = vunpack.c.h.b16 %v402
        %v730 = vunpack.c.l.b16 %v403
        %v731 = vunpack.c.l.b16 %v404
        %v732 = vunpack.c.h.b16 %v404
        %v733 = vunpack.c.l.b16 %v405
        %v734 = vunpack.c.l.b16 %v406
        %v735 = vunpack.c.h.b16 %v406
        %v736 = vunpack.c.l.b16 %v407
        %v737 = vunpack.c.l.b16 %v408
        %v738 = vunpack.c.h.b16 %v408
        %v739 = vunpack.c.l.b16 %v409
        %v740 = vunpack.c.l.b16 %v410
        %v741 = vunpack.c.h.b16 %v410
        %v742 = vunpack.c.l.b16 %v411
        %v743 = vunpack.c.l.b16 %v412
        %v744 = vunpack.c.h.b16 %v412
        %v745 = vunpack.c.l.b16 %v413
        %v746 = vunpack.c.l.b16 %v414
        %v747 = vunpack.c.h.b16 %v414
        %v748 = vunpack.c.l.b16 %v415
        %v749 = vunpack.c.l.b16 %v416
        %v750 = vunpack.c.h.b16 %v416
        %v751 = vunpack.c.l.b16 %v417
        %v752 = vunpack.c.l.b16 %v418
        %v753 = vunpack.c.h.b16 %v418
        %v754 = vunpack.c.l.b16 %v419
        %v755 = vunpack.c.l.b16 %v420
        %v756 = vunpack.c.h.b16 %v420
        %v757 = vunpack.c.l.b16 %v421
        %v758 = vunpack.c.l.b16 %v422
        %v759 = vunpack.c.h.b16 %v422
        %v760 = vunpack.c.l.b16 %v423
        %v761 = vunpack.c.l.b16 %v424
        %v762 = vunpack.c.h.b16 %v424
        %v763 = vunpack.c.l.b16 %v425
        %v764 = vunpack.c.l.b16 %v426
        %v765 = vunpack.c.h.b16 %v426
        %v766 = vunpack.c.l.b16 %v427
        %v767 = vunpack.c.l.b16 %v428
        %v768 = vunpack.c.h.b16 %v428
        %v769 = vunpack.c.l.b16 %v429
        %v770 = vunpack.c.l.b16 %v430
        %v771 = vunpack.c.h.b16 %v430
        %v772 = vunpack.c.l.b16 %v431
        %v773 = vunpack.c.l.b16 %v432
        %v774 = vunpack.c.h.b16 %v432
        %v775 = vunpack.c.l.b16 %v433
        %v776 = vunpack.c.l.b16 %v434
        %v777 = vunpack.c.h.b16 %v434
        %v778 = vunpack.c.l.b16 %v435
        %v779 = vunpack.c.l.b16 %v436
        %v780 = vunpack.c.h.b16 %v436
        %v781 = vunpack.c.l.b16 %v437
        %v782 = vunpack.c.l.b16 %v438
        %v783 = vunpack.c.h.b16 %v438
        %v784 = vunpack.c.l.b16 %v439
        %v785 = vunpack.c.l.b16 %v440
        %v786 = vunpack.c.h.b16 %v440
        %v787 = vunpack.c.l.b16 %v441
        %v788 = vunpack.c.l.b16 %v442
        %v789 = vunpack.c.h.b16 %v442
        %v790 = vunpack.c.l.b16 %v443
        %v791 = vunpack.c.l.b16 %v444
        %v792 = vunpack.c.h.b16 %v444
        %v793 = vunpack.c.l.b16 %v445
        %v794 = vunpack.c.l.b16 %v446
        %v795 = vunpack.c.h.b16 %v446
        %v796 = vunpack.c.l.b16 %v447
        %v797 = vunpack.c.l.b16 %v448
        %v798 = vunpack.c.h.b16 %v448
        %v799 = vunpack.c.l.b16 %v449
        %v800 = vunpack.c.l.b16 %v450
        %v801 = vunpack.c.h.b16 %v450
        %v802 = vunpack.c.l.b16 %v451
        %v803 = vunpack.c.l.b16 %v452
        %v804 = vunpack.c.h.b16 %v452
        %v805 = vunpack.c.l.b16 %v453
        %v806 = vunpack.c.l.b16 %v454
        %v807 = vunpack.c.h.b16 %v454
        %v808 = vunpack.c.l.b16 %v455
        %v809 = vunpack.c.l.b16 %v456
        %v810 = vunpack.c.h.b16 %v456
        %v811 = vunpack.c.l.b16 %v457
        %v812 = vunpack.c.l.b16 %v458
        %v813 = vunpack.c.h.b16 %v458
        %v814 = vunpack.c.l.b16 %v459
        %v815 = vunpack.c.l.b16 %v460
        %v816 = vunpack.c.h.b16 %v460
        %v817 = vunpack.c.l.b16 %v461
        %v818 = vunpack.c.l.b16 %v462
        %v819 = vunpack.c.h.b16 %v462
        %v820 = vunpack.c.l.b16 %v463
        %v821 = vunpack.c.l.b16 %v464
        %v822 = vunpack.c.h.b16 %v464
        %v823 = vunpack.c.l.b16 %v465
        %v824 = vunpack.c.l.b16 %v466
        %v825 = vunpack.c.h.b16 %v466
        %v826 = vunpack.c.l.b16 %v467
        %v827 = vunpack.c.l.b16 %v468
        %v828 = vunpack.c.h.b16 %v468
        %v829 = vunpack.c.l.b16 %v469
        %v830 = vpack.c.b16 %v641, %v638
        %v831 = vpack.c.b16 %v642, %v639
        %v832 = vpack.c.b16 %v643, %v640
        %v833 = vpack.c.b16 %v647, %v644
        %v834 = vpack.c.b16 %v648, %v645
        %v835 = vpack.c.b16 %v649, %v646
        %v836 = vpack.c.b16 %v653, %v650
        %v837 = vpack.c.b16 %v654, %v651
        %v838 = vpack.c.b16 %v655, %v652
        %v839 = vpack.c.b16 %v659, %v656
        %v840 = vpack.c.b16 %v660, %v657
        %v841 = vpack.c.b16 %v661, %v658
        %v842 = vpack.c.b16 %v665, %v662
        %v843 = vpack.c.b16 %v666, %v663
        %v844 = vpack.c.b16 %v667, %v664
        %v845 = vpack.c.b16 %v671, %v668
        %v846 = vpack.c.b16 %v672, %v669
        %v847 = vpack.c.b16 %v673, %v670
        %v848 = vpack.c.b16 %v677, %v674
        %v849 = vpack.c.b16 %v678, %v675
        %v850 = vpack.c.b16 %v679, %v676
        %v851 = vpack.c.b16 %v683, %v680
        %v852 = vpack.c.b16 %v684, %v681
        %v853 = vpack.c.b16 %v685, %v682
        %v854 = vpack.c.b16 %v689, %v686
        %v855 = vpack.c.b16 %v690, %v687
        %v856 = vpack.c.b16 %v691, %v688
        %v857 = vpack.c.b16 %v695, %v692
        %v858 = vpack.c.b16 %v696, %v693
        %v859 = vpack.c.b16 %v697, %v694
        %v860 = vpack.c.b16 %v701, %v698
        %v861 = vpack.c.b16 %v702, %v699
        %v862 = vpack.c.b16 %v703, %v700
        %v863 = vpack.c.b16 %v707, %v704
        %v864 = vpack.c.b16 %v708, %v705
        %v865 = vpack.c.b16 %v709, %v706
        %v866 = vpack.c.b16 %v713, %v710
        %v867 = vpack.c.b16 %v714, %v711
        %v868 = vpack.c.b16 %v715, %v712
        %v869 = vpack.c.b16 %v719, %v716
        %v870 = vpack.c.b16 %v720, %v717
        %v871 = vpack.c.b16 %v721, %v718
        %v872 = vpack.c.b16 %v725, %v722
        %v873 = vpack.c.b16 %v726, %v723
        %v874 = vpack.c.b16 %v727, %v724
        %v875 = vpack.c.b16 %v731, %v728
        %v876 = vpack.c.b16 %v732, %v729
        %v877 = vpack.c.b16 %v733, %v730
        %v878 = vpack.c.b16 %v737, %v734
        %v879 = vpack.c.b16 %v738, %v735
        %v880 = vpack.c.b16 %v739, %v736
        %v881 = vpack.c.b16 %v743, %v740
        %v882 = vpack.c.b16 %v744, %v741
        %v883 = vpack.c.b16 %v745, %v742
        %v884 = vpack.c.b16 %v749, %v746
        %v885 = vpack.c.b16 %v750, %v747
        %v886 = vpack.c.b16 %v751, %v748
        %v887 = vpack.c.b16 %v755, %v752
        %v888 = vpack.c.b16 %v756, %v753
        %v889 = vpack.c.b16 %v757, %v754
        %v890 = vpack.c.b16 %v761, %v758
        %v891 = vpack.c.b16 %v762, %v759
        %v892 = vpack.c.b16 %v763, %v760
        %v893 = vpack.c.b16 %v767, %v764
        %v894 = vpack.c.b16 %v768, %v765
        %v895 = vpack.c.b16 %v769, %v766
        %v896 = vpack.c.b16 %v773, %v770
        %v897 = vpack.c.b16 %v774, %v771
        %v898 = vpack.c.b16 %v775, %v772
        %v899 = vpack.c.b16 %v779, %v776
        %v900 = vpack.c.b16 %v780, %v777
        %v901 = vpack.c.b16 %v781, %v778
        %v902 = vpack.c.b16 %v785, %v782
        %v903 = vpack.c.b16 %v786, %v783
        %v904 = vpack.c.b16 %v787, %v784
        %v905 = vpack.c.b16 %v791, %v788
        %v906 = vpack.c.b16 %v792, %v789
        %v907 = vpack.c.b16 %v793, %v790
        %v908 = vpack.c.b16 %v797, %v794
        %v909 = vpack.c.b16 %v798, %v795
        %v910 = vpack.c.b16 %v799, %v796
        %v911 = vpack.c.b16 %v803, %v800
        %v912 = vpack.c.b16 %v804, %v801
        %v913 = vpack.c.b16 %v805, %v802
        %v914 = vpack.c.b16 %v809, %v806
        %v915 = vpack.c.b16 %v810, %v807
        %v916 = vpack.c.b16 %v811, %v808
        %v917 = vpack.c.b16 %v815, %v812
        %v918 = vpack.c.b16 %v816, %v813
        %v919 = vpack.c.b16 %v817, %v814
        %v920 = vpack.c.b16 %v821, %v818
        %v921 = vpack.c.b16 %v822, %v819
        %v922 = vpack.c.b16 %v823, %v820
        %v923 = vpack.c.b16 %v827, %v824
        %v924 = vpack.c.b16 %v828, %v825
        %v925 = vpack.c.b16 %v829, %v826
        %1022 = vmatprep.subr.bf16.mxu0 %v852
        %1023 = vmatpush1.bf16.msra.mxu0 %v851
        %1024 = vmatprep.subr.bf16.mxu0 %v849
        %1025 = vmatpush1.bf16.msra.mxu0 %v848
        %1026 = vmatprep.subr.bf16.mxu0 %v846
        %1027 = vmatpush1.bf16.msra.mxu0 %v845
        %1028 = vmatprep.subr.bf16.mxu0 %v843
        %1029 = vmatpush1.bf16.msra.mxu0 %v842
        %1030 = vmatprep.subr.bf16.mxu0 %v840
        %1031 = vmatpush1.bf16.msra.mxu0 %v839
        %1032 = vmatprep.subr.bf16.mxu0 %v837
        %1033 = vmatpush1.bf16.msra.mxu0 %v836
        %1034 = vmatprep.subr.bf16.mxu0 %v834
        %1035 = vmatpush1.bf16.msra.mxu0 %v833
        %1036 = vmatprep.subr.bf16.mxu0 %v831
        %1037 = vmatpush1.bf16.msra.mxu0 %v830
        %1038 = vmatprep.subr.bf16.mxu0 %v876
        %1039 = vmatpush2.bf16.msra.mxu0 %v875
        %1040 = vmatprep.subr.bf16.mxu0 %v873
        %1041 = vmatpush2.bf16.msra.mxu0 %v872
        %1042 = vmatprep.subr.bf16.mxu0 %v870
        %1043 = vmatpush2.bf16.msra.mxu0 %v869
        %1044 = vmatprep.subr.bf16.mxu0 %v867
        %1045 = vmatpush2.bf16.msra.mxu0 %v866
        %1046 = vmatprep.subr.bf16.mxu0 %v864
        %1047 = vmatpush2.bf16.msra.mxu0 %v863
        %1048 = vmatprep.subr.bf16.mxu0 %v861
        %1049 = vmatpush2.bf16.msra.mxu0 %v860
        %1050 = vmatprep.subr.bf16.mxu0 %v858
        %1051 = vmatpush2.bf16.msra.mxu0 %v857
        %1052 = vmatprep.subr.bf16.mxu0 %v855
        %1053 = vmatpush2.bf16.msra.mxu0 %v854
        %1054 = vmatprep.mubr.bf16.mxu0 %v495
        %1055 = vmatmul.mubr.bf16.gmra.mxu0 %v494
        %v1056 = vpop.f32.mrf.mxu0
        %v1057 = vadd.f32 0.0, %v1056
        %v1058 = vpop.f32.mrf.mxu0
        %v1059 = vadd.f32 0.0, %v1058
        %v1060 = vpop.f32.mrf.mxu0
        %v1061 = vadd.f32 0.0, %v1060
        %v1062 = vpop.f32.mrf.mxu0
        %v1063 = vadd.f32 0.0, %v1062
        %1064 = vmatprep.mubr.bf16.mxu0 %v499
        %1065 = vmatmul.mubr.bf16.gmra.mxu0 %v498
        %v1066 = vpop.f32.mrf.mxu0
        %v1067 = vadd.f32 0.0, %v1066
        %v1068 = vpop.f32.mrf.mxu0
        %v1069 = vadd.f32 0.0, %v1068
        %v1070 = vpop.f32.mrf.mxu0
        %v1071 = vadd.f32 0.0, %v1070
        %v1072 = vpop.f32.mrf.mxu0
        %v1073 = vadd.f32 0.0, %v1072
        %1074 = vdwg.mxu0
        %1075 = vmatprep.subr.bf16.mxu0 %v900
        %1076 = vmatpush1.bf16.msra.mxu0 %v899
        %1077 = vmatprep.subr.bf16.mxu0 %v897
        %1078 = vmatpush1.bf16.msra.mxu0 %v896
        %1079 = vmatprep.subr.bf16.mxu0 %v894
        %1080 = vmatpush1.bf16.msra.mxu0 %v893
        %1081 = vmatprep.subr.bf16.mxu0 %v891
        %1082 = vmatpush1.bf16.msra.mxu0 %v890
        %1083 = vmatprep.subr.bf16.mxu0 %v888
        %1084 = vmatpush1.bf16.msra.mxu0 %v887
        %1085 = vmatprep.subr.bf16.mxu0 %v885
        %1086 = vmatpush1.bf16.msra.mxu0 %v884
        %1087 = vmatprep.subr.bf16.mxu0 %v882
        %1088 = vmatpush1.bf16.msra.mxu0 %v881
        %1089 = vmatprep.subr.bf16.mxu0 %v879
        %1090 = vmatpush1.bf16.msra.mxu0 %v878
        %1091 = vmatprep.subr.bf16.mxu0 %v924
        %1092 = vmatpush2.bf16.msra.mxu0 %v923
        %1093 = vmatprep.subr.bf16.mxu0 %v921
        %1094 = vmatpush2.bf16.msra.mxu0 %v920
        %1095 = vmatprep.subr.bf16.mxu0 %v918
        %1096 = vmatpush2.bf16.msra.mxu0 %v917
        %1097 = vmatprep.subr.bf16.mxu0 %v915
        %1098 = vmatpush2.bf16.msra.mxu0 %v914
        %1099 = vmatprep.subr.bf16.mxu0 %v912
        %1100 = vmatpush2.bf16.msra.mxu0 %v911
        %1101 = vmatprep.subr.bf16.mxu0 %v909
        %1102 = vmatpush2.bf16.msra.mxu0 %v908
        %1103 = vmatprep.subr.bf16.mxu0 %v906
        %1104 = vmatpush2.bf16.msra.mxu0 %v905
        %1105 = vmatprep.subr.bf16.mxu0 %v903
        %1106 = vmatpush2.bf16.msra.mxu0 %v902
        %1107 = vmatprep.mubr.bf16.mxu0 %v497
        %1108 = vmatmul.mubr.bf16.gmra.mxu0 %v496
        %v1109 = vpop.f32.mrf.mxu0
        %v1110 = vadd.f32 %v1057, %v1109
        %v1111 = vpop.f32.mrf.mxu0
        %v1112 = vadd.f32 %v1059, %v1111
        %v1113 = vpop.f32.mrf.mxu0
        %v1114 = vadd.f32 %v1061, %v1113
        %v1115 = vpop.f32.mrf.mxu0
        %v1116 = vadd.f32 %v1063, %v1115
        %1117 = vmatprep.mubr.bf16.mxu0 %v501
        %1118 = vmatmul.mubr.bf16.gmra.mxu0 %v500
        %v1119 = vpop.f32.mrf.mxu0
        %v1120 = vadd.f32 %v1067, %v1119
        %v1121 = vpop.f32.mrf.mxu0
        %v1122 = vadd.f32 %v1069, %v1121
        %v1123 = vpop.f32.mrf.mxu0
        %v1124 = vadd.f32 %v1071, %v1123
        %v1125 = vpop.f32.mrf.mxu0
        %v1126 = vadd.f32 %v1073, %v1125
        %1127 = vdwg.mxu0
        %1128 = vmatprep.subr.bf16.mxu0 0
        %1129 = vmatpush1.bf16.msra.mxu0 %v853
        %1130 = vmatprep.subr.bf16.mxu0 0
        %1131 = vmatpush1.bf16.msra.mxu0 %v850
        %1132 = vmatprep.subr.bf16.mxu0 0
        %1133 = vmatpush1.bf16.msra.mxu0 %v847
        %1134 = vmatprep.subr.bf16.mxu0 0
        %1135 = vmatpush1.bf16.msra.mxu0 %v844
        %1136 = vmatprep.subr.bf16.mxu0 0
        %1137 = vmatpush1.bf16.msra.mxu0 %v841
        %1138 = vmatprep.subr.bf16.mxu0 0
        %1139 = vmatpush1.bf16.msra.mxu0 %v838
        %1140 = vmatprep.subr.bf16.mxu0 0
        %1141 = vmatpush1.bf16.msra.mxu0 %v835
        %1142 = vmatprep.subr.bf16.mxu0 0
        %1143 = vmatpush1.bf16.msra.mxu0 %v832
        %1144 = vmatprep.subr.bf16.mxu0 0
        %1145 = vmatpush2.bf16.msra.mxu0 %v877
        %1146 = vmatprep.subr.bf16.mxu0 0
        %1147 = vmatpush2.bf16.msra.mxu0 %v874
        %1148 = vmatprep.subr.bf16.mxu0 0
        %1149 = vmatpush2.bf16.msra.mxu0 %v871
        %1150 = vmatprep.subr.bf16.mxu0 0
        %1151 = vmatpush2.bf16.msra.mxu0 %v868
        %1152 = vmatprep.subr.bf16.mxu0 0
        %1153 = vmatpush2.bf16.msra.mxu0 %v865
        %1154 = vmatprep.subr.bf16.mxu0 0
        %1155 = vmatpush2.bf16.msra.mxu0 %v862
        %1156 = vmatprep.subr.bf16.mxu0 0
        %1157 = vmatpush2.bf16.msra.mxu0 %v859
        %1158 = vmatprep.subr.bf16.mxu0 0
        %1159 = vmatpush2.bf16.msra.mxu0 %v856
        %1160 = vmatprep.mubr.bf16.mxu0 %v495
        %1161 = vmatmul.mubr.bf16.gmra.mxu0 %v494
        %v1162 = vpop.f32.mrf.mxu0
        %v1163 = vadd.f32 0.0, %v1162
        %v1164 = vpop.f32.mrf.mxu0
        %v1165 = vpop.f32.mrf.mxu0
        %v1166 = vadd.f32 0.0, %v1165
        %v1167 = vpop.f32.mrf.mxu0
        %1168 = vmatprep.mubr.bf16.mxu0 %v499
        %1169 = vmatmul.mubr.bf16.gmra.mxu0 %v498
        %v1170 = vpop.f32.mrf.mxu0
        %v1171 = vadd.f32 0.0, %v1170
        %v1172 = vpop.f32.mrf.mxu0
        %v1173 = vpop.f32.mrf.mxu0
        %v1174 = vadd.f32 0.0, %v1173
        %v1175 = vpop.f32.mrf.mxu0
        %1176 = vdwg.mxu0
        %1177 = vmatprep.subr.bf16.mxu0 0
        %1178 = vmatpush1.bf16.msra.mxu0 %v901
        %1179 = vmatprep.subr.bf16.mxu0 0
        %1180 = vmatpush1.bf16.msra.mxu0 %v898
        %1181 = vmatprep.subr.bf16.mxu0 0
        %1182 = vmatpush1.bf16.msra.mxu0 %v895
        %1183 = vmatprep.subr.bf16.mxu0 0
        %1184 = vmatpush1.bf16.msra.mxu0 %v892
        %1185 = vmatprep.subr.bf16.mxu0 0
        %1186 = vmatpush1.bf16.msra.mxu0 %v889
        %1187 = vmatprep.subr.bf16.mxu0 0
        %1188 = vmatpush1.bf16.msra.mxu0 %v886
        %1189 = vmatprep.subr.bf16.mxu0 0
        %1190 = vmatpush1.bf16.msra.mxu0 %v883
        %1191 = vmatprep.subr.bf16.mxu0 0
        %1192 = vmatpush1.bf16.msra.mxu0 %v880
        %1193 = vmatprep.subr.bf16.mxu0 0
        %1194 = vmatpush2.bf16.msra.mxu0 %v925
        %1195 = vmatprep.subr.bf16.mxu0 0
        %1196 = vmatpush2.bf16.msra.mxu0 %v922
        %1197 = vmatprep.subr.bf16.mxu0 0
        %1198 = vmatpush2.bf16.msra.mxu0 %v919
        %1199 = vmatprep.subr.bf16.mxu0 0
        %1200 = vmatpush2.bf16.msra.mxu0 %v916
        %1201 = vmatprep.subr.bf16.mxu0 0
        %1202 = vmatpush2.bf16.msra.mxu0 %v913
        %1203 = vmatprep.subr.bf16.mxu0 0
        %1204 = vmatpush2.bf16.msra.mxu0 %v910
        %1205 = vmatprep.subr.bf16.mxu0 0
        %1206 = vmatpush2.bf16.msra.mxu0 %v907
        %1207 = vmatprep.subr.bf16.mxu0 0
        %1208 = vmatpush2.bf16.msra.mxu0 %v904
        %1209 = vmatprep.mubr.bf16.mxu0 %v497
        %1210 = vmatmul.mubr.bf16.gmra.mxu0 %v496
        %v1211 = vpop.f32.mrf.mxu0
        %v1212 = vadd.f32 %v1163, %v1211
        %v1213 = vpop.f32.mrf.mxu0
        %v1214 = vpop.f32.mrf.mxu0
        %v1215 = vadd.f32 %v1166, %v1214
        %v1216 = vpop.f32.mrf.mxu0
        %1217 = vmatprep.mubr.bf16.mxu0 %v501
        %1218 = vmatmul.mubr.bf16.gmra.mxu0 %v500
        %v1219 = vpop.f32.mrf.mxu0
        %v1220 = vadd.f32 %v1171, %v1219
        %v1221 = vpop.f32.mrf.mxu0
        %v1222 = vpop.f32.mrf.mxu0
        %v1223 = vadd.f32 %v1174, %v1222
        %v1224 = vpop.f32.mrf.mxu0
        %1225 = vdwg.mxu0
        %v1226 = vadd.f32 %v322, %v1110
        %v1227 = vadd.f32 %v323, %v1112
        %v1228 = vadd.f32 %v324, %v1212
        %v1229 = vadd.f32 %v325, %v1114
        %v1230 = vadd.f32 %v326, %v1116
        %v1231 = vadd.f32 %v327, %v1215
        %v1232 = vadd.f32 %v328, %v1120
        %v1233 = vadd.f32 %v329, %v1122
        %v1234 = vadd.f32 %v330, %v1220
        %v1235 = vadd.f32 %v331, %v1124
        %v1236 = vadd.f32 %v332, %v1126
        %v1237 = vadd.f32 %v333, %v1223
        %1238 = vst [vmem:[#allocation2] sm:$0xff] %v1226
        %1239 = vst [vmem:[#allocation2 + $0x8] sm:$0xff] %v1227
        %1240 = vst [vmem:[#allocation2 + $0x10] sm:$0xff] %v1228
        %1241 = vst [vmem:[#allocation2 + $0x18] sm:$0xff] %v1229
        %1242 = vst [vmem:[#allocation2 + $0x20] sm:$0xff] %v1230
        %1243 = vst [vmem:[#allocation2 + $0x28] sm:$0xff] %v1231
        %1244 = vst [vmem:[#allocation2 + $0x30] sm:$0xff] %v1232
        %1245 = vst [vmem:[#allocation2 + $0x38] sm:$0xff] %v1233
        %1246 = vst [vmem:[#allocation2 + $0x40] sm:$0xff] %v1234
        %1247 = vst [vmem:[#allocation2 + $0x48] sm:$0xff] %v1235
        %1248 = vst [vmem:[#allocation2 + $0x50] sm:$0xff] %v1236
        %1249 = vst [vmem:[#allocation2 + $0x58] sm:$0xff] %v1237
        %p1250 = scmp.eq.s32.totalorder %s21, 3
        // Predicated region
        $region60: #{forward.10} parent=50 // pred_check
          %p1251 = pneg %p1250
        $region61: #{forward.10} parent=50 // pred_check_branch
          %1253 = sbr.rel (%p1251) target = $region63
        $region62: #{forward.10} parent=50 // pred_region
          %v1254 = vld [vmem:[#allocation2] sm:$0xff]
          %v1255 = vld [vmem:[#allocation2 + $0x8] sm:$0xff]
          %v1256 = vld [vmem:[#allocation2 + $0x10] sm:$0xff]
          %v1257 = vld [vmem:[#allocation2 + $0x18] sm:$0xff]
          %v1258 = vld [vmem:[#allocation2 + $0x20] sm:$0xff]
          %v1259 = vld [vmem:[#allocation2 + $0x28] sm:$0xff]
          %v1260 = vld [vmem:[#allocation2 + $0x30] sm:$0xff]
          %v1261 = vld [vmem:[#allocation2 + $0x38] sm:$0xff]
          %v1262 = vld [vmem:[#allocation2 + $0x40] sm:$0xff]
          %v1263 = vld [vmem:[#allocation2 + $0x48] sm:$0xff]
          %v1264 = vld [vmem:[#allocation2 + $0x50] sm:$0xff]
          %v1265 = vld [vmem:[#allocation2 + $0x58] sm:$0xff]
          %v1266 = vld [vmem:[%s291] sm:$0x7]
          %v1268 = vlaneseq
          %v1269 = vshrl.u32 %v1268, 7
          %v1270 = vsub.s32 0, %v1269
          %v1271 = vrot.slane %v1266, %v1270
          %v1272 = vlaneseq
          %v1273 = vshrl.u32 %v1272, 7
          %v1274 = vsub.s32 1, %v1273
          %v1275 = vrot.slane %v1266, %v1274
          %v1276 = vlaneseq
          %v1277 = vshrl.u32 %v1276, 7
          %v1278 = vsub.s32 2, %v1277
          %v1279 = vrot.slane %v1266, %v1278
          %v1283 = vadd.f32 %v1254, %v1271
          %v1284 = vadd.f32 %v1255, %v1275
          %v1285 = vadd.f32 %v1256, %v1279
          %v1286 = vadd.f32 %v1257, %v1271
          %v1287 = vadd.f32 %v1258, %v1275
          %v1288 = vadd.f32 %v1259, %v1279
          %v1289 = vadd.f32 %v1260, %v1271
          %v1290 = vadd.f32 %v1261, %v1275
          %v1291 = vadd.f32 %v1262, %v1279
          %v1292 = vadd.f32 %v1263, %v1271
          %v1293 = vadd.f32 %v1264, %v1275
          %v1294 = vadd.f32 %v1265, %v1279
          %v1295 = vmax.f32 %v1283, 0.0
          %v1296 = vmax.f32 %v1284, 0.0
          %v1297 = vmax.f32 %v1285, 0.0
          %v1298 = vmax.f32 %v1286, 0.0
          %v1299 = vmax.f32 %v1287, 0.0
          %v1300 = vmax.f32 %v1288, 0.0
          %v1301 = vmax.f32 %v1289, 0.0
          %v1302 = vmax.f32 %v1290, 0.0
          %v1303 = vmax.f32 %v1291, 0.0
          %v1304 = vmax.f32 %v1292, 0.0
          %v1305 = vmax.f32 %v1293, 0.0
          %v1306 = vmax.f32 %v1294, 0.0
          %v1307 = vpack.c.bf16 %v1298, %v1295
          %v1308 = vpack.c.bf16 %v1299, %v1296
          %v1309 = vpack.c.bf16 %v1300, %v1297
          %v1310 = vpack.c.bf16 %v1304, %v1301
          %v1311 = vpack.c.bf16 %v1305, %v1302
          %v1312 = vpack.c.bf16 %v1306, %v1303
          %v1319 = vunpack.c.l.b16 %v1307
          %v1320 = vunpack.c.l.b16 %v1308
          %v1321 = vunpack.c.l.b16 %v1309
          %v1322 = vunpack.c.h.b16 %v1307
          %v1323 = vunpack.c.h.b16 %v1308
          %v1324 = vunpack.c.h.b16 %v1309
          %v1325 = vunpack.c.l.b16 %v1310
          %v1326 = vunpack.c.l.b16 %v1311
          %v1327 = vunpack.c.l.b16 %v1312
          %v1328 = vunpack.c.h.b16 %v1310
          %v1329 = vunpack.c.h.b16 %v1311
          %v1330 = vunpack.c.h.b16 %v1312
          %v1331 = vpack.c.b16 %v1320, %v1319
          %v1332 = vpack.c.b16 %v1321, %v1321
          %v1333 = vpack.c.b16 %v1323, %v1322
          %v1334 = vpack.c.b16 %v1324, %v1324
          %v1335 = vpack.c.b16 %v1326, %v1325
          %v1336 = vpack.c.b16 %v1327, %v1327
          %v1337 = vpack.c.b16 %v1329, %v1328
          %v1338 = vpack.c.b16 %v1330, %v1330
          %1347 = vst [vmem:[%s302] sm:$0xff] %v1331
          %1348 = vst [vmem:[%s302 + $0x8] sm:$0xf] %v1332
          %1349 = vst [vmem:[%s302 + $0xc] sm:$0xff] %v1333
          %1350 = vst [vmem:[%s302 + $0x14] sm:$0xf] %v1334
          %1351 = vst [vmem:[%s302 + $0x18] sm:$0xff] %v1335
          %1352 = vst [vmem:[%s302 + $0x20] sm:$0xf] %v1336
          %1353 = vst [vmem:[%s302 + $0x24] sm:$0xff] %v1337
          %1354 = vst [vmem:[%s302 + $0x2c] sm:$0xf] %v1338
        $region63: #{forward.10} parent=50 // pred_fallthru
          _
        %s1355 = smul.u32 4, %s19
        %s1356 = smul.u32 3, %s20
        %p1357 = scmp.lt.s32.totalorder %s1355, 3
        %s1358 = scalar_select %p1357, %s1355, 3
        %p1359 = scmp.lt.s32.totalorder %s1356, 2
        %s1360 = scalar_select %p1359, %s1356, 2
        %s1361 = smul.addr %s1358, 3
        %s1362 = sadd.s32 %s1360, %s1361
        %s1363 = smul.addr %s1362, 4
        %s1364 = scalar_lea.vmem %s3, %s1363
        // Predicated region
        $region64: #{forward.10} parent=50 // pred_check
          %p1365 = pneg %p135
        $region65: #{forward.10} parent=50 // pred_check_branch
          %1367 = sbr.rel (%p1365) target = $region67
        $region66: #{forward.10} parent=50 // pred_region
          %s1368 = smul.u32 4, %s19
          %s1369 = smul.u32 3, %s20
        $region67: #{forward.10} parent=50 // pred_fallthru
          _
        // Predicated region
        $region68: #{forward.10} parent=50 // pred_check
          %p1370 = pneg %p135
        $region69: #{forward.10} parent=50 // pred_check_branch
          %1372 = sbr.rel (%p1370) target = $region71
        $region70: #{forward.10} parent=50 // pred_region
          %s1373 = smul.u32 4, %s19
          %s1374 = smul.u32 3, %s20
          %p1375 = scmp.lt.s32.totalorder %s1373, 3
          %s1376 = scalar_select %p1375, %s1373, 3
          %p1377 = scmp.lt.s32.totalorder %s1374, 2
          %s1378 = scalar_select %p1377, %s1374, 2
          %s1379 = smul.addr %s1376, 3
          %s1380 = sadd.s32 %s1378, %s1379
          %s1381 = smul.addr %s1380, 4
          %s1382 = scalar_lea.vmem %s3, %s1381
        $region71: #{forward.10} parent=50 // pred_fallthru
          _
      $region51: #{forward.10} parent=5 // pred_fallthru
        _
      %p1383 = scmp.le.s32.totalorder 2, %s9
      // Predicated region
      $region72: #{forward.10} parent=5 // pred_check
        %p1384 = pneg %p1383
      $region73: #{forward.10} parent=5 // pred_check_branch
        %1386 = sbr.rel (%p1384) target = $region75
      $region74: #{forward.10} parent=5 // pred_region
        %s1387 = ssub.s32 %s9, 2
      $region75: #{forward.10} parent=5 // pred_fallthru
        _
    $region6: #{forward.10} parent=1 // loop_footer
      %s13 = sadd.s32 1, %s9
    $region7: #{forward.10} parent=1 // loop_footer_branch
      %8 = sbr.rel target = $region3
    $region8: #{forward.10} parent=1 // loop_exit
      _

// kernel: forward.11
$region0: #{forward.11}
  #allocation0 [shape = 'u32[]', space=smem, size = 0x4, offset = 0x4, fixed_abs, tag = 'smem constant byte address 0x4 - core index']
  #allocation1 [shape = 'u32[144,128]{1,0:T(1,128)}', space=vmem, size = 0x12000, scoped, tag = 'internal scratch']
  #allocation2 [shape = 'f32[32,256]{1,0:T(8,128)}', space=vmem, size = 0x8000, scoped, tag = 'scratch operand']
  %s0 = inlined_call_operand.vmem [shape: bf16[32,3584], index: 0, kind: input, shape index: {}]
  %s1 = inlined_call_operand.vmem [shape: bf16[3584,256], index: 1, kind: input, shape index: {}]
  %s2 = inlined_call_operand.vmem [shape: f32[1,256], index: 2, kind: input, shape index: {}]
  %s3 = inlined_call_operand.vmem [shape: bf16[32,256], index: 3, kind: output, shape index: {}]
  %s4 = sld [smem:[#allocation0]]
  $region76: #{forward.11} parent=0
    _
  %s6 = ssub.s32 1, %s4
  %s7 = scalar_select 0, %s6, %s4
  $region1: #{forward.11} parent=0
    #allocation3 [shape = 'u8[65536]{0}', space=vmem, size = 0x10000, scoped, tag = 'input window, operand 0']
    loop: start=0, step=1, limit=9
    $region2: #{forward.11} parent=1 // loop_pre_header
      _
    $region3: #{forward.11} parent=1 // loop_header
      %s9 = sphi 0, %s13
      %p10 = scmp.ge.s32.totalorder %s9, 9
      %s16 = sphi 0, %s35
      %s17 = sphi 0, %s31
      %s18 = sphi 0, %s27
      %s19 = sphi 0, %s16
      %s20 = sphi 0, %s17
      %s21 = sphi 0, %s18
      %s22 = sphi 0, %s19
      %s23 = sphi 0, %s20
      %s24 = sphi 0, %s21
      %s40 = sphi 0, %s42
      %s43 = sphi 0, %s40
      %s44 = sphi 0, %s43
      %s60 = sphi 0, %s44
      %s68 = sphi 0, %s70
      %s71 = sphi 0, %s68
      %s72 = sphi 0, %s71
      %s88 = sphi 0, %s72
      %s94 = sphi 0, %s96
      %s97 = sphi 0, %s94
      %s98 = sphi 0, %s97
      %s114 = sphi 0, %s98
      %s122 = sphi 0, %s124
      %s125 = sphi 0, %s122
      %s126 = sphi 0, %s125
      %s142 = sphi 0, %s126
    $region4: #{forward.11} parent=1 // loop_header_branch
      %12 = sbr.rel (%p10) target = $region8
    $region5: #{forward.11} parent=1 // loop_body
      %s14 = ssub.s32 %s9, 1
      %s15 = ssub.s32 %s9, 2
      %s25 = sadd.s32 1, %s18
      %p26 = scmp.ge.s32.totalorder %s25, 7
      %s27 = scalar_select %p26, 0, %s25
      %s28 = sadd.s32 1, %s17
      %s29 = scalar_select %p26, %s28, %s17
      %p30 = scmp.ge.s32.totalorder %s29, 1
      %s31 = scalar_select %p30, 0, %s29
      %s32 = sadd.s32 1, %s16
      %s33 = scalar_select %p30, %s32, %s16
      %p34 = scmp.ge.s32.totalorder %s33, 1
      %s35 = scalar_select %p34, 0, %s33
      %s36 = ssub.s32 %s16, %s35
      %s37 = ssub.s32 %s18, %s27
      %s38 = sor.u32 %s36, %s37
      %p39 = scmp.eq.s32.totalorder %s38, 0
      %s41 = sadd.s32 %s40, 1
      %s42 = scalar_select %p39, %s40, %s41
      %p45 = pneg %p39
      %p46 = scmp.eq.s32.totalorder %s9, 6
      %p47 = por %p45, %p46
      %p48 = scmp.ne.s32.totalorder %s40, %s43
      %p49 = scmp.eq.s32.totalorder %s9, 0
      %p50 = por %p48, %p49
      %p51 = scmp.ne.s32.totalorder %s40, %s43
      %p52 = scmp.eq.s32.totalorder %s14, 6
      %p53 = por %p51, %p52
      %p54 = scmp.ne.s32.totalorder %s43, %s44
      %p55 = scmp.eq.s32.totalorder %s14, 0
      %p56 = por %p54, %p55
      %p57 = scmp.ne.s32.totalorder %s43, %s44
      %p58 = scmp.eq.s32.totalorder %s15, 6
      %p59 = por %p57, %p58
      %p61 = scmp.ne.s32.totalorder %s44, %s60
      %p62 = scmp.eq.s32.totalorder %s15, 0
      %p63 = por %p61, %p62
      %s64 = ssub.s32 %s18, %s27
      %s65 = ssub.s32 %s17, %s31
      %s66 = sor.u32 %s64, %s65
      %p67 = scmp.eq.s32.totalorder %s66, 0
      %s69 = sadd.s32 %s68, 1
      %s70 = scalar_select %p67, %s68, %s69
      %p73 = pneg %p67
      %p74 = scmp.eq.s32.totalorder %s9, 6
      %p75 = por %p73, %p74
      %p76 = scmp.ne.s32.totalorder %s68, %s71
      %p77 = scmp.eq.s32.totalorder %s9, 0
      %p78 = por %p76, %p77
      %p79 = scmp.ne.s32.totalorder %s68, %s71
      %p80 = scmp.eq.s32.totalorder %s14, 6
      %p81 = por %p79, %p80
      %p82 = scmp.ne.s32.totalorder %s71, %s72
      %p83 = scmp.eq.s32.totalorder %s14, 0
      %p84 = por %p82, %p83
      %p85 = scmp.ne.s32.totalorder %s71, %s72
      %p86 = scmp.eq.s32.totalorder %s15, 6
      %p87 = por %p85, %p86
      %p89 = scmp.ne.s32.totalorder %s72, %s88
      %p90 = scmp.eq.s32.totalorder %s15, 0
      %p91 = por %p89, %p90
      %s92 = ssub.s32 %s17, %s31
      %p93 = scmp.eq.s32.totalorder %s92, 0
      %s95 = sadd.s32 %s94, 1
      %s96 = scalar_select %p93, %s94, %s95
      %p99 = pneg %p93
      %p100 = scmp.eq.s32.totalorder %s9, 6
      %p101 = por %p99, %p100
      %p102 = scmp.ne.s32.totalorder %s94, %s97
      %p103 = scmp.eq.s32.totalorder %s9, 0
      %p104 = por %p102, %p103
      %p105 = scmp.ne.s32.totalorder %s94, %s97
      %p106 = scmp.eq.s32.totalorder %s14, 6
      %p107 = por %p105, %p106
      %p108 = scmp.ne.s32.totalorder %s97, %s98
      %p109 = scmp.eq.s32.totalorder %s14, 0
      %p110 = por %p108, %p109
      %p111 = scmp.ne.s32.totalorder %s97, %s98
      %p112 = scmp.eq.s32.totalorder %s15, 6
      %p113 = por %p111, %p112
      %p115 = scmp.ne.s32.totalorder %s98, %s114
      %p116 = scmp.eq.s32.totalorder %s15, 0
      %p117 = por %p115, %p116
      %s118 = ssub.s32 %s16, %s35
      %s119 = ssub.s32 %s17, %s31
      %s120 = sor.u32 %s118, %s119
      %p121 = scmp.eq.s32.totalorder %s120, 0
      %s123 = sadd.s32 %s122, 1
      %s124 = scalar_select %p121, %s122, %s123
      %p127 = pneg %p121
      %p128 = scmp.eq.s32.totalorder %s9, 6
      %p129 = por %p127, %p128
      %p130 = scmp.ne.s32.totalorder %s122, %s125
      %p131 = scmp.eq.s32.totalorder %s9, 0
      %p132 = por %p130, %p131
      %p133 = scmp.ne.s32.totalorder %s122, %s125
      %p134 = scmp.eq.s32.totalorder %s14, 6
      %p135 = por %p133, %p134
      %p136 = scmp.ne.s32.totalorder %s125, %s126
      %p137 = scmp.eq.s32.totalorder %s14, 0
      %p138 = por %p136, %p137
      %p139 = scmp.ne.s32.totalorder %s125, %s126
      %p140 = scmp.eq.s32.totalorder %s15, 6
      %p141 = por %p139, %p140
      %p143 = scmp.ne.s32.totalorder %s126, %s142
      %p144 = scmp.eq.s32.totalorder %s15, 0
      %p145 = por %p143, %p144
      %p146 = scmp.le.s32.totalorder 1, %s9
      %p147 = scmp.lt.s32.totalorder %s9, 8
      %p148 = pnand %p146, %p147
      %p149 = pneg %p148
      // Predicated region
      $region9: #{forward.11} parent=5 // pred_check
        _
      $region10: #{forward.11} parent=5 // pred_check_branch
        %151 = sbr.rel (%p148) target = $region12
      $region11: #{forward.11} parent=5 // pred_region
        %s152 = ssub.s32 %s9, 1
        // Predicated region
        $region13: #{forward.11} parent=11 // pred_check
          %p153 = pneg %p110
        $region14: #{forward.11} parent=11 // pred_check_branch
          %155 = sbr.rel (%p153) target = $region16
        $region15: #{forward.11} parent=11 // pred_region
          %s156 = smul.u32 2, %s20
          %p157 = scmp.lt.s32.totalorder %s156, 1
          %s158 = scalar_select %p157, %s156, 1
          %s159 = scalar_lea.vmem %s2, %s158
          %s160 = smul.u32 2, %s20
        $region16: #{forward.11} parent=11 // pred_fallthru
          _
      $region12: #{forward.11} parent=5 // pred_fallthru
        _
      %p161 = scmp.lt.s32.totalorder %s9, 7
      // Predicated region
      $region17: #{forward.11} parent=5 // pred_check
        %p162 = pneg %p161
      $region18: #{forward.11} parent=5 // pred_check_branch
        %164 = sbr.rel (%p162) target = $region20
      $region19: #{forward.11} parent=5 // pred_region
        // Predicated region
        $region21: #{forward.11} parent=19 // pred_check
          %p165 = pneg %p50
        $region22: #{forward.11} parent=19 // pred_check_branch
          %167 = sbr.rel (%p165) target = $region24
        $region23: #{forward.11} parent=19 // pred_region
          %s168 = sand.u32 %s40, 1
          %s169 = sand.u32 %s40, 1
          %s170 = smul.addr %s169, 64
          %s171 = scalar_lea.vmem [#allocation3], %s170
          %s172 = smul.u32 4, %s16
          %s173 = smul.u32 4, %s18
          %s174 = smul.addr %s172, 28
          %s175 = sadd.s32 %s173, %s174
          %s176 = smul.addr %s175, 4
          %s177 = scalar_lea.vmem %s0, %s176
          // Predicated region
          $region25: #{forward.11} parent=23 // pred_check
            _
          $region26: #{forward.11} parent=23 // pred_check_branch
            %179 = sbr.rel (0) target = $region28
          $region27: #{forward.11} parent=23 // pred_region
            // Predicated region
            $region29: #{forward.11} parent=27 // pred_check
              _
            $region30: #{forward.11} parent=27 // pred_check_branch
              %181 = sbr.rel (0) target = $region32
            $region31: #{forward.11} parent=27 // pred_region
              loop: start=0, step=1, limit=1
              $region33: #{forward.11} parent=31 // loop_pre_header
                _
              $region34: #{forward.11} parent=31 // loop_header
                %s183 = sphi 0, %s187
                %p184 = scmp.ge.s32.totalorder %s183, 1
                %s188 = sphi %s177, %s177
                %s189 = sphi %s171, %s171
              $region35: #{forward.11} parent=31 // loop_header_branch
                %186 = sbr.rel (%p184) target = $region39
              $region36: #{forward.11} parent=31 // loop_body
                %v190 = vld [vmem:[%s188] sm:$0xff]
                %191 = vst [vmem:[%s189] sm:$0xff] %v190
                %v192 = vld [vmem:[%s188 + $0x8] sm:$0xff]
                %193 = vst [vmem:[%s189 + $0x8] sm:$0xff] %v192
                %v194 = vld [vmem:[%s188 + $0x70] sm:$0xff]
                %195 = vst [vmem:[%s189 + $0x10] sm:$0xff] %v194
                %v196 = vld [vmem:[%s188 + $0x78] sm:$0xff]
                %197 = vst [vmem:[%s189 + $0x18] sm:$0xff] %v196
                %v198 = vld [vmem:[%s188 + $0xe0] sm:$0xff]
                %199 = vst [vmem:[%s189 + $0x20] sm:$0xff] %v198
                %v200 = vld [vmem:[%s188 + $0xe8] sm:$0xff]
                %201 = vst [vmem:[%s189 + $0x28] sm:$0xff] %v200
                %v202 = vld [vmem:[%s188 + $0x150] sm:$0xff]
                %203 = vst [vmem:[%s189 + $0x30] sm:$0xff] %v202
                %v204 = vld [vmem:[%s188 + $0x158] sm:$0xff]
                %205 = vst [vmem:[%s189 + $0x38] sm:$0xff] %v204
              $region37: #{forward.11} parent=31 // loop_footer
                %s187 = sadd.s32 1, %s183
              $region38: #{forward.11} parent=31 // loop_footer_branch
                %182 = sbr.rel target = $region34
              $region39: #{forward.11} parent=31 // loop_exit
                _
            $region32: #{forward.11} parent=27 // pred_fallthru
              _
            // Predicated region
            $region40: #{forward.11} parent=27 // pred_check
              _
            $region41: #{forward.11} parent=27 // pred_check_branch
              %207 = sbr.rel target = $region43
            $region42: #{forward.11} parent=27 // pred_region
              _
            $region43: #{forward.11} parent=27 // pred_fallthru
              _
          $region28: #{forward.11} parent=23 // pred_fallthru
            _
          %208 = vnop
        $region24: #{forward.11} parent=19 // pred_fallthru
          _
        // Predicated region
        $region44: #{forward.11} parent=19 // pred_check
          %p209 = pneg %p78
        $region45: #{forward.11} parent=19 // pred_check_branch
          %211 = sbr.rel (%p209) target = $region47
        $region46: #{forward.11} parent=19 // pred_region
          %s212 = smul.u32 64, %s18
          %s213 = smul.u32 2, %s17
          %p214 = scmp.lt.s32.totalorder %s212, 447
          %s215 = scalar_select %p214, %s212, 447
          %p216 = scmp.lt.s32.totalorder %s213, 1
          %s217 = scalar_select %p216, %s213, 1
          %s218 = smul.addr %s215, 2
          %s219 = sadd.s32 %s217, %s218
          %s220 = smul.addr %s219, 4
          %s221 = scalar_lea.vmem %s1, %s220
          %s222 = smul.u32 64, %s18
          %s223 = smul.u32 2, %s17
        $region47: #{forward.11} parent=19 // pred_fallthru
          _
      $region20: #{forward.11} parent=5 // pred_fallthru
        _
      %p224 = scmp.le.s32.totalorder 1, %s9
      %p225 = scmp.lt.s32.totalorder %s9, 8
      %p226 = pnand %p224, %p225
      %p227 = pneg %p226
      // Predicated region
      $region48: #{forward.11} parent=5 // pred_check
        _
      $region49: #{forward.11} parent=5 // pred_check_branch
        %229 = sbr.rel (%p226) target = $region51
      $region50: #{forward.11} parent=5 // pred_region
        %s230 = ssub.s32 %s9, 1
        %s231 = sand.u32 %s43, 1
        %s232 = sand.u32 %s43, 1
        %s233 = smul.addr %s232, 64
        %s234 = scalar_lea.vmem [#allocation3], %s233
        // Predicated region
        $region52: #{forward.11} parent=50 // pred_check
          %p235 = pneg %p56
        $region53: #{forward.11} parent=50 // pred_check_branch
          %237 = sbr.rel (%p235) target = $region55
        $region54: #{forward.11} parent=50 // pred_region
          _
        $region55: #{forward.11} parent=50 // pred_fallthru
          _
        %s238 = sand.u32 %s43, 1
        %s239 = sand.u32 %s43, 1
        %s240 = smul.addr %s239, 64
        %s241 = scalar_lea.vmem [#allocation3], %s240
        %p242 = pneg %p56
        %p243 = pneg %p53
        %s244 = smul.u32 64, %s21
        %s245 = smul.u32 2, %s20
        %p246 = scmp.lt.s32.totalorder %s244, 447
        %s247 = scalar_select %p246, %s244, 447
        %p248 = scmp.lt.s32.totalorder %s245, 1
        %s249 = scalar_select %p248, %s245, 1
        %s250 = smul.addr %s247, 2
        %s251 = sadd.s32 %s249, %s250
        %s252 = smul.addr %s251, 4
        %s253 = scalar_lea.vmem %s1, %s252
        %p254 = pneg %p84
        %p255 = pneg %p81
        %s256 = smul.u32 2, %s20
        %p257 = scmp.lt.s32.totalorder %s256, 1
        %s258 = scalar_select %p257, %s256, 1
        %s259 = scalar_lea.vmem %s2, %s258
        %p260 = pneg %p110
        %p261 = pneg %p107
        %p262 = pneg %p138
        %p263 = pneg %p135
        %s264 = smul.u32 4, %s19
        %s265 = smul.u32 2, %s20
        %p266 = scmp.lt.s32.totalorder %s264, 3
        %s267 = scalar_select %p266, %s264, 3
        %p268 = scmp.lt.s32.totalorder %s265, 1
        %s269 = scalar_select %p268, %s265, 1
        %s270 = smul.addr %s267, 2
        %s271 = sadd.s32 %s269, %s270
        %s272 = smul.addr %s271, 4
        %s273 = scalar_lea.vmem %s3, %s272
        %s274 = smul.u32 4, %s19
        %s275 = smul.u32 4, %s21
        %s276 = smul.u32 64, %s21
        %s277 = smul.u32 2, %s20
        %p278 = scmp.lt.s32.totalorder %s276, 447
        %s279 = scalar_select %p278, %s276, 447
        %p280 = scmp.lt.s32.totalorder %s277, 1
        %s281 = scalar_select %p280, %s277, 1
        %s282 = smul.addr %s279, 2
        %s283 = sadd.s32 %s281, %s282
        %s284 = smul.addr %s283, 4
        %s285 = scalar_lea.vmem %s1, %s284
        %s286 = smul.u32 64, %s21
        %s287 = smul.u32 2, %s20
        %s288 = smul.u32 2, %s20
        %p289 = scmp.lt.s32.totalorder %s288, 1
        %s290 = scalar_select %p289, %s288, 1
        %s291 = scalar_lea.vmem %s2, %s290
        %s292 = smul.u32 2, %s20
        %s293 = smul.u32 4, %s19
        %s294 = smul.u32 2, %s20
        %p295 = scmp.lt.s32.totalorder %s293, 3
        %s296 = scalar_select %p295, %s293, 3
        %p297 = scmp.lt.s32.totalorder %s294, 1
        %s298 = scalar_select %p297, %s294, 1
        %s299 = smul.addr %s296, 2
        %s300 = sadd.s32 %s298, %s299
        %s301 = smul.addr %s300, 4
        %s302 = scalar_lea.vmem %s3, %s301
        %s303 = smul.u32 4, %s19
        %s304 = smul.u32 2, %s20
        %p305 = scmp.eq.s32.totalorder %s21, 0
        // Predicated region
        $region56: #{forward.11} parent=50 // pred_check
          %p306 = pneg %p305
        $region57: #{forward.11} parent=50 // pred_check_branch
          %308 = sbr.rel (%p306) target = $region59
        $region58: #{forward.11} parent=50 // pred_region
          %309 = vst [vmem:[#allocation2] sm:$0xff] 0.0
          %310 = vst [vmem:[#allocation2 + $0x8] sm:$0xff] 0.0
          %311 = vst [vmem:[#allocation2 + $0x10] sm:$0xff] 0.0
          %312 = vst [vmem:[#allocation2 + $0x18] sm:$0xff] 0.0
          %313 = vst [vmem:[#allocation2 + $0x20] sm:$0xff] 0.0
          %314 = vst [vmem:[#allocation2 + $0x28] sm:$0xff] 0.0
          %315 = vst [vmem:[#allocation2 + $0x30] sm:$0xff] 0.0
          %316 = vst [vmem:[#allocation2 + $0x38] sm:$0xff] 0.0
        $region59: #{forward.11} parent=50 // pred_fallthru
          _
        %v317 = vld [vmem:[#allocation2] sm:$0xff]
        %v318 = vld [vmem:[#allocation2 + $0x8] sm:$0xff]
        %v319 = vld [vmem:[#allocation2 + $0x10] sm:$0xff]
        %v320 = vld [vmem:[#allocation2 + $0x18] sm:$0xff]
        %v321 = vld [vmem:[#allocation2 + $0x20] sm:$0xff]
        %v322 = vld [vmem:[#allocation2 + $0x28] sm:$0xff]
        %v323 = vld [vmem:[#allocation2 + $0x30] sm:$0xff]
        %v324 = vld [vmem:[#allocation2 + $0x38] sm:$0xff]
        %v325 = vld [vmem:[%s234] sm:$0xff]
        %v326 = vld [vmem:[%s234 + $0x8] sm:$0xff]
        %v327 = vld [vmem:[%s234 + $0x10] sm:$0xff]
        %v328 = vld [vmem:[%s234 + $0x18] sm:$0xff]
        %v329 = vld [vmem:[%s234 + $0x20] sm:$0xff]
        %v330 = vld [vmem:[%s234 + $0x28] sm:$0xff]
        %v331 = vld [vmem:[%s234 + $0x30] sm:$0xff]
        %v332 = vld [vmem:[%s234 + $0x38] sm:$0xff]
        %v333 = vld [vmem:[%s285] sm:$0xff]
        %v334 = vld [vmem:[%s285 + $0x8] sm:$0xff]
        %v335 = vld [vmem:[%s285 + $0x10] sm:$0xff]
        %v336 = vld [vmem:[%s285 + $0x18] sm:$0xff]
        %v337 = vld [vmem:[%s285 + $0x20] sm:$0xff]
        %v338 = vld [vmem:[%s285 + $0x28] sm:$0xff]
        %v339 = vld [vmem:[%s285 + $0x30] sm:$0xff]
        %v340 = vld [vmem:[%s285 + $0x38] sm:$0xff]
        %v341 = vld [vmem:[%s285 + $0x40] sm:$0xff]
        %v342 = vld [vmem:[%s285 + $0x48] sm:$0xff]
        %v343 = vld [vmem:[%s285 + $0x50] sm:$0xff]
        %v344 = vld [vmem:[%s285 + $0x58] sm:$0xff]
        %v345 = vld [vmem:[%s285 + $0x60] sm:$0xff]
        %v346 = vld [vmem:[%s285 + $0x68] sm:$0xff]
        %v347 = vld [vmem:[%s285 + $0x70] sm:$0xff]
        %v348 = vld [vmem:[%s285 + $0x78] sm:$0xff]
        %v349 = vld [vmem:[%s285 + $0x80] sm:$0xff]
        %v350 = vld [vmem:[%s285 + $0x88] sm:$0xff]
        %v351 = vld [vmem:[%s285 + $0x90] sm:$0xff]
        %v352 = vld [vmem:[%s285 + $0x98] sm:$0xff]
        %v353 = vld [vmem:[%s285 + $0xa0] sm:$0xff]
        %v354 = vld [vmem:[%s285 + $0xa8] sm:$0xff]
        %v355 = vld [vmem:[%s285 + $0xb0] sm:$0xff]
        %v356 = vld [vmem:[%s285 + $0xb8] sm:$0xff]
        %v357 = vld [vmem:[%s285 + $0xc0] sm:$0xff]
        %v358 = vld [vmem:[%s285 + $0xc8] sm:$0xff]
        %v359 = vld [vmem:[%s285 + $0xd0] sm:$0xff]
        %v360 = vld [vmem:[%s285 + $0xd8] sm:$0xff]
        %v361 = vld [vmem:[%s285 + $0xe0] sm:$0xff]
        %v362 = vld [vmem:[%s285 + $0xe8] sm:$0xff]
        %v363 = vld [vmem:[%s285 + $0xf0] sm:$0xff]
        %v364 = vld [vmem:[%s285 + $0xf8] sm:$0xff]
        %v365 = vld [vmem:[%s285 + $0x100] sm:$0xff]
        %v366 = vld [vmem:[%s285 + $0x108] sm:$0xff]
        %v367 = vld [vmem:[%s285 + $0x110] sm:$0xff]
        %v368 = vld [vmem:[%s285 + $0x118] sm:$0xff]
        %v369 = vld [vmem:[%s285 + $0x120] sm:$0xff]
        %v370 = vld [vmem:[%s285 + $0x128] sm:$0xff]
        %v371 = vld [vmem:[%s285 + $0x130] sm:$0xff]
        %v372 = vld [vmem:[%s285 + $0x138] sm:$0xff]
        %v373 = vld [vmem:[%s285 + $0x140] sm:$0xff]
        %v374 = vld [vmem:[%s285 + $0x148] sm:$0xff]
        %v375 = vld [vmem:[%s285 + $0x150] sm:$0xff]
        %v376 = vld [vmem:[%s285 + $0x158] sm:$0xff]
        %v377 = vld [vmem:[%s285 + $0x160] sm:$0xff]
        %v378 = vld [vmem:[%s285 + $0x168] sm:$0xff]
        %v379 = vld [vmem:[%s285 + $0x170] sm:$0xff]
        %v380 = vld [vmem:[%s285 + $0x178] sm:$0xff]
        %v381 = vld [vmem:[%s285 + $0x180] sm:$0xff]
        %v382 = vld [vmem:[%s285 + $0x188] sm:$0xff]
        %v383 = vld [vmem:[%s285 + $0x190] sm:$0xff]
        %v384 = vld [vmem:[%s285 + $0x198] sm:$0xff]
        %v385 = vld [vmem:[%s285 + $0x1a0] sm:$0xff]
        %v386 = vld [vmem:[%s285 + $0x1a8] sm:$0xff]
        %v387 = vld [vmem:[%s285 + $0x1b0] sm:$0xff]
        %v388 = vld [vmem:[%s285 + $0x1b8] sm:$0xff]
        %v389 = vld [vmem:[%s285 + $0x1c0] sm:$0xff]
        %v390 = vld [vmem:[%s285 + $0x1c8] sm:$0xff]
        %v391 = vld [vmem:[%s285 + $0x1d0] sm:$0xff]
        %v392 = vld [vmem:[%s285 + $0x1d8] sm:$0xff]
        %v393 = vld [vmem:[%s285 + $0x1e0] sm:$0xff]
        %v394 = vld [vmem:[%s285 + $0x1e8] sm:$0xff]
        %v395 = vld [vmem:[%s285 + $0x1f0] sm:$0xff]
        %v396 = vld [vmem:[%s285 + $0x1f8] sm:$0xff]
        %v405 = vunpack.c.l.b16 %v325
        %v406 = vunpack.c.h.b16 %v325
        %v407 = vunpack.c.l.b16 %v326
        %v408 = vunpack.c.h.b16 %v326
        %v409 = vunpack.c.l.b16 %v327
        %v410 = vunpack.c.h.b16 %v327
        %v411 = vunpack.c.l.b16 %v328
        %v412 = vunpack.c.h.b16 %v328
        %v413 = vunpack.c.l.b16 %v329
        %v414 = vunpack.c.h.b16 %v329
        %v415 = vunpack.c.l.b16 %v330
        %v416 = vunpack.c.h.b16 %v330
        %v417 = vunpack.c.l.b16 %v331
        %v418 = vunpack.c.h.b16 %v331
        %v419 = vunpack.c.l.b16 %v332
        %v420 = vunpack.c.h.b16 %v332
        %v421 = vpack.c.b16 %v409, %v405
        %v422 = vpack.c.b16 %v410, %v406
        %v423 = vpack.c.b16 %v411, %v407
        %v424 = vpack.c.b16 %v412, %v408
        %v425 = vpack.c.b16 %v417, %v413
        %v426 = vpack.c.b16 %v418, %v414
        %v427 = vpack.c.b16 %v419, %v415
        %v428 = vpack.c.b16 %v420, %v416
        %v501 = vunpack.c.l.b16 %v333
        %v502 = vunpack.c.h.b16 %v333
        %v503 = vunpack.c.l.b16 %v334
        %v504 = vunpack.c.h.b16 %v334
        %v505 = vunpack.c.l.b16 %v335
        %v506 = vunpack.c.h.b16 %v335
        %v507 = vunpack.c.l.b16 %v336
        %v508 = vunpack.c.h.b16 %v336
        %v509 = vunpack.c.l.b16 %v337
        %v510 = vunpack.c.h.b16 %v337
        %v511 = vunpack.c.l.b16 %v338
        %v512 = vunpack.c.h.b16 %v338
        %v513 = vunpack.c.l.b16 %v339
        %v514 = vunpack.c.h.b16 %v339
        %v515 = vunpack.c.l.b16 %v340
        %v516 = vunpack.c.h.b16 %v340
        %v517 = vunpack.c.l.b16 %v341
        %v518 = vunpack.c.h.b16 %v341
        %v519 = vunpack.c.l.b16 %v342
        %v520 = vunpack.c.h.b16 %v342
        %v521 = vunpack.c.l.b16 %v343
        %v522 = vunpack.c.h.b16 %v343
        %v523 = vunpack.c.l.b16 %v344
        %v524 = vunpack.c.h.b16 %v344
        %v525 = vunpack.c.l.b16 %v345
        %v526 = vunpack.c.h.b16 %v345
        %v527 = vunpack.c.l.b16 %v346
        %v528 = vunpack.c.h.b16 %v346
        %v529 = vunpack.c.l.b16 %v347
        %v530 = vunpack.c.h.b16 %v347
        %v531 = vunpack.c.l.b16 %v348
        %v532 = vunpack.c.h.b16 %v348
        %v533 = vunpack.c.l.b16 %v349
        %v534 = vunpack.c.h.b16 %v349
        %v535 = vunpack.c.l.b16 %v350
        %v536 = vunpack.c.h.b16 %v350
        %v537 = vunpack.c.l.b16 %v351
        %v538 = vunpack.c.h.b16 %v351
        %v539 = vunpack.c.l.b16 %v352
        %v540 = vunpack.c.h.b16 %v352
        %v541 = vunpack.c.l.b16 %v353
        %v542 = vunpack.c.h.b16 %v353
        %v543 = vunpack.c.l.b16 %v354
        %v544 = vunpack.c.h.b16 %v354
        %v545 = vunpack.c.l.b16 %v355
        %v546 = vunpack.c.h.b16 %v355
        %v547 = vunpack.c.l.b16 %v356
        %v548 = vunpack.c.h.b16 %v356
        %v549 = vunpack.c.l.b16 %v357
        %v550 = vunpack.c.h.b16 %v357
        %v551 = vunpack.c.l.b16 %v358
        %v552 = vunpack.c.h.b16 %v358
        %v553 = vunpack.c.l.b16 %v359
        %v554 = vunpack.c.h.b16 %v359
        %v555 = vunpack.c.l.b16 %v360
        %v556 = vunpack.c.h.b16 %v360
        %v557 = vunpack.c.l.b16 %v361
        %v558 = vunpack.c.h.b16 %v361
        %v559 = vunpack.c.l.b16 %v362
        %v560 = vunpack.c.h.b16 %v362
        %v561 = vunpack.c.l.b16 %v363
        %v562 = vunpack.c.h.b16 %v363
        %v563 = vunpack.c.l.b16 %v364
        %v564 = vunpack.c.h.b16 %v364
        %v565 = vunpack.c.l.b16 %v365
        %v566 = vunpack.c.h.b16 %v365
        %v567 = vunpack.c.l.b16 %v366
        %v568 = vunpack.c.h.b16 %v366
        %v569 = vunpack.c.l.b16 %v367
        %v570 = vunpack.c.h.b16 %v367
        %v571 = vunpack.c.l.b16 %v368
        %v572 = vunpack.c.h.b16 %v368
        %v573 = vunpack.c.l.b16 %v369
        %v574 = vunpack.c.h.b16 %v369
        %v575 = vunpack.c.l.b16 %v370
        %v576 = vunpack.c.h.b16 %v370
        %v577 = vunpack.c.l.b16 %v371
        %v578 = vunpack.c.h.b16 %v371
        %v579 = vunpack.c.l.b16 %v372
        %v580 = vunpack.c.h.b16 %v372
        %v581 = vunpack.c.l.b16 %v373
        %v582 = vunpack.c.h.b16 %v373
        %v583 = vunpack.c.l.b16 %v374
        %v584 = vunpack.c.h.b16 %v374
        %v585 = vunpack.c.l.b16 %v375
        %v586 = vunpack.c.h.b16 %v375
        %v587 = vunpack.c.l.b16 %v376
        %v588 = vunpack.c.h.b16 %v376
        %v589 = vunpack.c.l.b16 %v377
        %v590 = vunpack.c.h.b16 %v377
        %v591 = vunpack.c.l.b16 %v378
        %v592 = vunpack.c.h.b16 %v378
        %v593 = vunpack.c.l.b16 %v379
        %v594 = vunpack.c.h.b16 %v379
        %v595 = vunpack.c.l.b16 %v380
        %v596 = vunpack.c.h.b16 %v380
        %v597 = vunpack.c.l.b16 %v381
        %v598 = vunpack.c.h.b16 %v381
        %v599 = vunpack.c.l.b16 %v382
        %v600 = vunpack.c.h.b16 %v382
        %v601 = vunpack.c.l.b16 %v383
        %v602 = vunpack.c.h.b16 %v383
        %v603 = vunpack.c.l.b16 %v384
        %v604 = vunpack.c.h.b16 %v384
        %v605 = vunpack.c.l.b16 %v385
        %v606 = vunpack.c.h.b16 %v385
        %v607 = vunpack.c.l.b16 %v386
        %v608 = vunpack.c.h.b16 %v386
        %v609 = vunpack.c.l.b16 %v387
        %v610 = vunpack.c.h.b16 %v387
        %v611 = vunpack.c.l.b16 %v388
        %v612 = vunpack.c.h.b16 %v388
        %v613 = vunpack.c.l.b16 %v389
        %v614 = vunpack.c.h.b16 %v389
        %v615 = vunpack.c.l.b16 %v390
        %v616 = vunpack.c.h.b16 %v390
        %v617 = vunpack.c.l.b16 %v391
        %v618 = vunpack.c.h.b16 %v391
        %v619 = vunpack.c.l.b16 %v392
        %v620 = vunpack.c.h.b16 %v392
        %v621 = vunpack.c.l.b16 %v393
        %v622 = vunpack.c.h.b16 %v393
        %v623 = vunpack.c.l.b16 %v394
        %v624 = vunpack.c.h.b16 %v394
        %v625 = vunpack.c.l.b16 %v395
        %v626 = vunpack.c.h.b16 %v395
        %v627 = vunpack.c.l.b16 %v396
        %v628 = vunpack.c.h.b16 %v396
        %v629 = vpack.c.b16 %v503, %v501
        %v630 = vpack.c.b16 %v504, %v502
        %v631 = vpack.c.b16 %v507, %v505
        %v632 = vpack.c.b16 %v508, %v506
        %v633 = vpack.c.b16 %v511, %v509
        %v634 = vpack.c.b16 %v512, %v510
        %v635 = vpack.c.b16 %v515, %v513
        %v636 = vpack.c.b16 %v516, %v514
        %v637 = vpack.c.b16 %v519, %v517
        %v638 = vpack.c.b16 %v520, %v518
        %v639 = vpack.c.b16 %v523, %v521
        %v640 = vpack.c.b16 %v524, %v522
        %v641 = vpack.c.b16 %v527, %v525
        %v642 = vpack.c.b16 %v528, %v526
        %v643 = vpack.c.b16 %v531, %v529
        %v644 = vpack.c.b16 %v532, %v530
        %v645 = vpack.c.b16 %v535, %v533
        %v646 = vpack.c.b16 %v536, %v534
        %v647 = vpack.c.b16 %v539, %v537
        %v648 = vpack.c.b16 %v540, %v538
        %v649 = vpack.c.b16 %v543, %v541
        %v650 = vpack.c.b16 %v544, %v542
        %v651 = vpack.c.b16 %v547, %v545
        %v652 = vpack.c.b16 %v548, %v546
        %v653 = vpack.c.b16 %v551, %v549
        %v654 = vpack.c.b16 %v552, %v550
        %v655 = vpack.c.b16 %v555, %v553
        %v656 = vpack.c.b16 %v556, %v554
        %v657 = vpack.c.b16 %v559, %v557
        %v658 = vpack.c.b16 %v560, %v558
        %v659 = vpack.c.b16 %v563, %v561
        %v660 = vpack.c.b16 %v564, %v562
        %v661 = vpack.c.b16 %v567, %v565
        %v662 = vpack.c.b16 %v568, %v566
        %v663 = vpack.c.b16 %v571, %v569
        %v664 = vpack.c.b16 %v572, %v570
        %v665 = vpack.c.b16 %v575, %v573
        %v666 = vpack.c.b16 %v576, %v574
        %v667 = vpack.c.b16 %v579, %v577
        %v668 = vpack.c.b16 %v580, %v578
        %v669 = vpack.c.b16 %v583, %v581
        %v670 = vpack.c.b16 %v584, %v582
        %v671 = vpack.c.b16 %v587, %v585
        %v672 = vpack.c.b16 %v588, %v586
        %v673 = vpack.c.b16 %v591, %v589
        %v674 = vpack.c.b16 %v592, %v590
        %v675 = vpack.c.b16 %v595, %v593
        %v676 = vpack.c.b16 %v596, %v594
        %v677 = vpack.c.b16 %v599, %v597
        %v678 = vpack.c.b16 %v600, %v598
        %v679 = vpack.c.b16 %v603, %v601
        %v680 = vpack.c.b16 %v604, %v602
        %v681 = vpack.c.b16 %v607, %v605
        %v682 = vpack.c.b16 %v608, %v606
        %v683 = vpack.c.b16 %v611, %v609
        %v684 = vpack.c.b16 %v612, %v610
        %v685 = vpack.c.b16 %v615, %v613
        %v686 = vpack.c.b16 %v616, %v614
        %v687 = vpack.c.b16 %v619, %v617
        %v688 = vpack.c.b16 %v620, %v618
        %v689 = vpack.c.b16 %v623, %v621
        %v690 = vpack.c.b16 %v624, %v622
        %v691 = vpack.c.b16 %v627, %v625
        %v692 = vpack.c.b16 %v628, %v626
        %757 = vmatprep.subr.bf16.mxu0 %v644
        %758 = vmatpush1.bf16.msra.mxu0 %v643
        %759 = vmatprep.subr.bf16.mxu0 %v642
        %760 = vmatpush1.bf16.msra.mxu0 %v641
        %761 = vmatprep.subr.bf16.mxu0 %v640
        %762 = vmatpush1.bf16.msra.mxu0 %v639
        %763 = vmatprep.subr.bf16.mxu0 %v638
        %764 = vmatpush1.bf16.msra.mxu0 %v637
        %765 = vmatprep.subr.bf16.mxu0 %v636
        %766 = vmatpush1.bf16.msra.mxu0 %v635
        %767 = vmatprep.subr.bf16.mxu0 %v634
        %768 = vmatpush1.bf16.msra.mxu0 %v633
        %769 = vmatprep.subr.bf16.mxu0 %v632
        %770 = vmatpush1.bf16.msra.mxu0 %v631
        %771 = vmatprep.subr.bf16.mxu0 %v630
        %772 = vmatpush1.bf16.msra.mxu0 %v629
        %773 = vmatprep.subr.bf16.mxu0 %v660
        %774 = vmatpush2.bf16.msra.mxu0 %v659
        %775 = vmatprep.subr.bf16.mxu0 %v658
        %776 = vmatpush2.bf16.msra.mxu0 %v657
        %777 = vmatprep.subr.bf16.mxu0 %v656
        %778 = vmatpush2.bf16.msra.mxu0 %v655
        %779 = vmatprep.subr.bf16.mxu0 %v654
        %780 = vmatpush2.bf16.msra.mxu0 %v653
        %781 = vmatprep.subr.bf16.mxu0 %v652
        %782 = vmatpush2.bf16.msra.mxu0 %v651
        %783 = vmatprep.subr.bf16.mxu0 %v650
        %784 = vmatpush2.bf16.msra.mxu0 %v649
        %785 = vmatprep.subr.bf16.mxu0 %v648
        %786 = vmatpush2.bf16.msra.mxu0 %v647
        %787 = vmatprep.subr.bf16.mxu0 %v646
        %788 = vmatpush2.bf16.msra.mxu0 %v645
        %789 = vmatprep.mubr.bf16.mxu0 %v422
        %790 = vmatmul.mubr.bf16.gmra.mxu0 %v421
        %v791 = vpop.f32.mrf.mxu0
        %v792 = vadd.f32 0.0, %v791
        %v793 = vpop.f32.mrf.mxu0
        %v794 = vadd.f32 0.0, %v793
        %v795 = vpop.f32.mrf.mxu0
        %v796 = vadd.f32 0.0, %v795
        %v797 = vpop.f32.mrf.mxu0
        %v798 = vadd.f32 0.0, %v797
        %799 = vmatprep.mubr.bf16.mxu0 %v426
        %800 = vmatmul.mubr.bf16.gmra.mxu0 %v425
        %v801 = vpop.f32.mrf.mxu0
        %v802 = vadd.f32 0.0, %v801
        %v803 = vpop.f32.mrf.mxu0
        %v804 = vadd.f32 0.0, %v803
        %v805 = vpop.f32.mrf.mxu0
        %v806 = vadd.f32 0.0, %v805
        %v807 = vpop.f32.mrf.mxu0
        %v808 = vadd.f32 0.0, %v807
        %809 = vdwg.mxu0
        %810 = vmatprep.subr.bf16.mxu0 %v676
        %811 = vmatpush1.bf16.msra.mxu0 %v675
        %812 = vmatprep.subr.bf16.mxu0 %v674
        %813 = vmatpush1.bf16.msra.mxu0 %v673
        %814 = vmatprep.subr.bf16.mxu0 %v672
        %815 = vmatpush1.bf16.msra.mxu0 %v671
        %816 = vmatprep.subr.bf16.mxu0 %v670
        %817 = vmatpush1.bf16.msra.mxu0 %v669
        %818 = vmatprep.subr.bf16.mxu0 %v668
        %819 = vmatpush1.bf16.msra.mxu0 %v667
        %820 = vmatprep.subr.bf16.mxu0 %v666
        %821 = vmatpush1.bf16.msra.mxu0 %v665
        %822 = vmatprep.subr.bf16.mxu0 %v664
        %823 = vmatpush1.bf16.msra.mxu0 %v663
        %824 = vmatprep.subr.bf16.mxu0 %v662
        %825 = vmatpush1.bf16.msra.mxu0 %v661
        %826 = vmatprep.subr.bf16.mxu0 %v692
        %827 = vmatpush2.bf16.msra.mxu0 %v691
        %828 = vmatprep.subr.bf16.mxu0 %v690
        %829 = vmatpush2.bf16.msra.mxu0 %v689
        %830 = vmatprep.subr.bf16.mxu0 %v688
        %831 = vmatpush2.bf16.msra.mxu0 %v687
        %832 = vmatprep.subr.bf16.mxu0 %v686
        %833 = vmatpush2.bf16.msra.mxu0 %v685
        %834 = vmatprep.subr.bf16.mxu0 %v684
        %835 = vmatpush2.bf16.msra.mxu0 %v683
        %836 = vmatprep.subr.bf16.mxu0 %v682
        %837 = vmatpush2.bf16.msra.mxu0 %v681
        %838 = vmatprep.subr.bf16.mxu0 %v680
        %839 = vmatpush2.bf16.msra.mxu0 %v679
        %840 = vmatprep.subr.bf16.mxu0 %v678
        %841 = vmatpush2.bf16.msra.mxu0 %v677
        %842 = vmatprep.mubr.bf16.mxu0 %v424
        %843 = vmatmul.mubr.bf16.gmra.mxu0 %v423
        %v844 = vpop.f32.mrf.mxu0
        %v845 = vadd.f32 %v792, %v844
        %v846 = vpop.f32.mrf.mxu0
        %v847 = vadd.f32 %v794, %v846
        %v848 = vpop.f32.mrf.mxu0
        %v849 = vadd.f32 %v796, %v848
        %v850 = vpop.f32.mrf.mxu0
        %v851 = vadd.f32 %v798, %v850
        %852 = vmatprep.mubr.bf16.mxu0 %v428
        %853 = vmatmul.mubr.bf16.gmra.mxu0 %v427
        %v854 = vpop.f32.mrf.mxu0
        %v855 = vadd.f32 %v802, %v854
        %v856 = vpop.f32.mrf.mxu0
        %v857 = vadd.f32 %v804, %v856
        %v858 = vpop.f32.mrf.mxu0
        %v859 = vadd.f32 %v806, %v858
        %v860 = vpop.f32.mrf.mxu0
        %v861 = vadd.f32 %v808, %v860
        %862 = vdwg.mxu0
        %v863 = vadd.f32 %v317, %v845
        %v864 = vadd.f32 %v318, %v847
        %v865 = vadd.f32 %v319, %v849
        %v866 = vadd.f32 %v320, %v851
        %v867 = vadd.f32 %v321, %v855
        %v868 = vadd.f32 %v322, %v857
        %v869 = vadd.f32 %v323, %v859
        %v870 = vadd.f32 %v324, %v861
        %871 = vst [vmem:[#allocation2] sm:$0xff] %v863
        %872 = vst [vmem:[#allocation2 + $0x8] sm:$0xff] %v864
        %873 = vst [vmem:[#allocation2 + $0x10] sm:$0xff] %v865
        %874 = vst [vmem:[#allocation2 + $0x18] sm:$0xff] %v866
        %875 = vst [vmem:[#allocation2 + $0x20] sm:$0xff] %v867
        %876 = vst [vmem:[#allocation2 + $0x28] sm:$0xff] %v868
        %877 = vst [vmem:[#allocation2 + $0x30] sm:$0xff] %v869
        %878 = vst [vmem:[#allocation2 + $0x38] sm:$0xff] %v870
        %p879 = scmp.eq.s32.totalorder %s21, 6
        // Predicated region
        $region60: #{forward.11} parent=50 // pred_check
          %p880 = pneg %p879
        $region61: #{forward.11} parent=50 // pred_check_branch
          %882 = sbr.rel (%p880) target = $region63
        $region62: #{forward.11} parent=50 // pred_region
          %v883 = vld [vmem:[#allocation2] sm:$0xff]
          %v884 = vld [vmem:[#allocation2 + $0x8] sm:$0xff]
          %v885 = vld [vmem:[#allocation2 + $0x10] sm:$0xff]
          %v886 = vld [vmem:[#allocation2 + $0x18] sm:$0xff]
          %v887 = vld [vmem:[#allocation2 + $0x20] sm:$0xff]
          %v888 = vld [vmem:[#allocation2 + $0x28] sm:$0xff]
          %v889 = vld [vmem:[#allocation2 + $0x30] sm:$0xff]
          %v890 = vld [vmem:[#allocation2 + $0x38] sm:$0xff]
          %v891 = vld [vmem:[%s291] sm:$0x3]
          %v893 = vlaneseq
          %v894 = vshrl.u32 %v893, 7
          %v895 = vsub.s32 0, %v894
          %v896 = vrot.slane %v891, %v895
          %v897 = vlaneseq
          %v898 = vshrl.u32 %v897, 7
          %v899 = vsub.s32 1, %v898
          %v900 = vrot.slane %v891, %v899
          %v903 = vadd.f32 %v883, %v896
          %v904 = vadd.f32 %v884, %v900
          %v905 = vadd.f32 %v885, %v896
          %v906 = vadd.f32 %v886, %v900
          %v907 = vadd.f32 %v887, %v896
          %v908 = vadd.f32 %v888, %v900
          %v909 = vadd.f32 %v889, %v896
          %v910 = vadd.f32 %v890, %v900
          %v911 = vmax.f32 %v903, 0.0
          %v912 = vmax.f32 %v904, 0.0
          %v913 = vmax.f32 %v905, 0.0
          %v914 = vmax.f32 %v906, 0.0
          %v915 = vmax.f32 %v907, 0.0
          %v916 = vmax.f32 %v908, 0.0
          %v917 = vmax.f32 %v909, 0.0
          %v918 = vmax.f32 %v910, 0.0
          %v919 = vpack.c.bf16 %v913, %v911
          %v920 = vpack.c.bf16 %v914, %v912
          %v921 = vpack.c.bf16 %v917, %v915
          %v922 = vpack.c.bf16 %v918, %v916
          %v927 = vunpack.c.l.b16 %v919
          %v928 = vunpack.c.l.b16 %v920
          %v929 = vunpack.c.h.b16 %v919
          %v930 = vunpack.c.h.b16 %v920
          %v931 = vunpack.c.l.b16 %v921
          %v932 = vunpack.c.l.b16 %v922
          %v933 = vunpack.c.h.b16 %v921
          %v934 = vunpack.c.h.b16 %v922
          %v935 = vpack.c.b16 %v928, %v927
          %v936 = vpack.c.b16 %v930, %v929
          %v937 = vpack.c.b16 %v932, %v931
          %v938 = vpack.c.b16 %v934, %v933
          %943 = vst [vmem:[%s302] sm:$0xff] %v935
          %944 = vst [vmem:[%s302 + $0x8] sm:$0xff] %v936
          %945 = vst [vmem:[%s302 + $0x10] sm:$0xff] %v937
          %946 = vst [vmem:[%s302 + $0x18] sm:$0xff] %v938
        $region63: #{forward.11} parent=50 // pred_fallthru
          _
        %s947 = smul.u32 4, %s19
        %s948 = smul.u32 2, %s20
        %p949 = scmp.lt.s32.totalorder %s947, 3
        %s950 = scalar_select %p949, %s947, 3
        %p951 = scmp.lt.s32.totalorder %s948, 1
        %s952 = scalar_select %p951, %s948, 1
        %s953 = smul.addr %s950, 2
        %s954 = sadd.s32 %s952, %s953
        %s955 = smul.addr %s954, 4
        %s956 = scalar_lea.vmem %s3, %s955
        // Predicated region
        $region64: #{forward.11} parent=50 // pred_check
          %p957 = pneg %p135
        $region65: #{forward.11} parent=50 // pred_check_branch
          %959 = sbr.rel (%p957) target = $region67
        $region66: #{forward.11} parent=50 // pred_region
          %s960 = smul.u32 4, %s19
          %s961 = smul.u32 2, %s20
        $region67: #{forward.11} parent=50 // pred_fallthru
          _
        // Predicated region
        $region68: #{forward.11} parent=50 // pred_check
          %p962 = pneg %p135
        $region69: #{forward.11} parent=50 // pred_check_branch
          %964 = sbr.rel (%p962) target = $region71
        $region70: #{forward.11} parent=50 // pred_region
          %s965 = smul.u32 4, %s19
          %s966 = smul.u32 2, %s20
          %p967 = scmp.lt.s32.totalorder %s965, 3
          %s968 = scalar_select %p967, %s965, 3
          %p969 = scmp.lt.s32.totalorder %s966, 1
          %s970 = scalar_select %p969, %s966, 1
          %s971 = smul.addr %s968, 2
          %s972 = sadd.s32 %s970, %s971
          %s973 = smul.addr %s972, 4
          %s974 = scalar_lea.vmem %s3, %s973
        $region71: #{forward.11} parent=50 // pred_fallthru
          _
      $region51: #{forward.11} parent=5 // pred_fallthru
        _
      %p975 = scmp.le.s32.totalorder 2, %s9
      // Predicated region
      $region72: #{forward.11} parent=5 // pred_check
        %p976 = pneg %p975
      $region73: #{forward.11} parent=5 // pred_check_branch
        %978 = sbr.rel (%p976) target = $region75
      $region74: #{forward.11} parent=5 // pred_region
        %s979 = ssub.s32 %s9, 2
      $region75: #{forward.11} parent=5 // pred_fallthru
        _
    $region6: #{forward.11} parent=1 // loop_footer
      %s13 = sadd.s32 1, %s9
    $region7: #{forward.11} parent=1 // loop_footer_branch
      %8 = sbr.rel target = $region3
    $region8: #{forward.11} parent=1 // loop_exit
      _

// kernel: forward.12
$region0: #{forward.12}
  #allocation0 [shape = 'u32[]', space=smem, size = 0x4, offset = 0x4, fixed_abs, tag = 'smem constant byte address 0x4 - core index']
  #allocation1 [shape = 'u32[144,128]{1,0:T(1,128)}', space=vmem, size = 0x12000, scoped, tag = 'internal scratch']
  #allocation2 [shape = 'f32[32,256]{1,0:T(8,128)}', space=vmem, size = 0x8000, scoped, tag = 'scratch operand']
  %s0 = inlined_call_operand.vmem [shape: bf16[32,2560], index: 0, kind: input, shape index: {}]
  %s1 = inlined_call_operand.vmem [shape: bf16[2560,256], index: 1, kind: input, shape index: {}]
  %s2 = inlined_call_operand.vmem [shape: f32[1,256], index: 2, kind: input, shape index: {}]
  %s3 = inlined_call_operand.vmem [shape: bf16[32,256], index: 3, kind: output, shape index: {}]
  %s4 = sld [smem:[#allocation0]]
  $region76: #{forward.12} parent=0
    _
  %s6 = ssub.s32 1, %s4
  %s7 = scalar_select 0, %s6, %s4
  $region1: #{forward.12} parent=0
    #allocation3 [shape = 'u8[65536]{0}', space=vmem, size = 0x10000, scoped, tag = 'input window, operand 0']
    loop: start=0, step=1, limit=7
    $region2: #{forward.12} parent=1 // loop_pre_header
      _
    $region3: #{forward.12} parent=1 // loop_header
      %s9 = sphi 0, %s13
      %p10 = scmp.ge.s32.totalorder %s9, 7
      %s16 = sphi 0, %s35
      %s17 = sphi 0, %s31
      %s18 = sphi 0, %s27
      %s19 = sphi 0, %s16
      %s20 = sphi 0, %s17
      %s21 = sphi 0, %s18
      %s22 = sphi 0, %s19
      %s23 = sphi 0, %s20
      %s24 = sphi 0, %s21
      %s40 = sphi 0, %s42
      %s43 = sphi 0, %s40
      %s44 = sphi 0, %s43
      %s60 = sphi 0, %s44
      %s68 = sphi 0, %s70
      %s71 = sphi 0, %s68
      %s72 = sphi 0, %s71
      %s88 = sphi 0, %s72
      %s94 = sphi 0, %s96
      %s97 = sphi 0, %s94
      %s98 = sphi 0, %s97
      %s114 = sphi 0, %s98
      %s122 = sphi 0, %s124
      %s125 = sphi 0, %s122
      %s126 = sphi 0, %s125
      %s142 = sphi 0, %s126
    $region4: #{forward.12} parent=1 // loop_header_branch
      %12 = sbr.rel (%p10) target = $region8
    $region5: #{forward.12} parent=1 // loop_body
      %s14 = ssub.s32 %s9, 1
      %s15 = ssub.s32 %s9, 2
      %s25 = sadd.s32 1, %s18
      %p26 = scmp.ge.s32.totalorder %s25, 5
      %s27 = scalar_select %p26, 0, %s25
      %s28 = sadd.s32 1, %s17
      %s29 = scalar_select %p26, %s28, %s17
      %p30 = scmp.ge.s32.totalorder %s29, 1
      %s31 = scalar_select %p30, 0, %s29
      %s32 = sadd.s32 1, %s16
      %s33 = scalar_select %p30, %s32, %s16
      %p34 = scmp.ge.s32.totalorder %s33, 1
      %s35 = scalar_select %p34, 0, %s33
      %s36 = ssub.s32 %s16, %s35
      %s37 = ssub.s32 %s18, %s27
      %s38 = sor.u32 %s36, %s37
      %p39 = scmp.eq.s32.totalorder %s38, 0
      %s41 = sadd.s32 %s40, 1
      %s42 = scalar_select %p39, %s40, %s41
      %p45 = pneg %p39
      %p46 = scmp.eq.s32.totalorder %s9, 4
      %p47 = por %p45, %p46
      %p48 = scmp.ne.s32.totalorder %s40, %s43
      %p49 = scmp.eq.s32.totalorder %s9, 0
      %p50 = por %p48, %p49
      %p51 = scmp.ne.s32.totalorder %s40, %s43
      %p52 = scmp.eq.s32.totalorder %s14, 4
      %p53 = por %p51, %p52
      %p54 = scmp.ne.s32.totalorder %s43, %s44
      %p55 = scmp.eq.s32.totalorder %s14, 0
      %p56 = por %p54, %p55
      %p57 = scmp.ne.s32.totalorder %s43, %s44
      %p58 = scmp.eq.s32.totalorder %s15, 4
      %p59 = por %p57, %p58
      %p61 = scmp.ne.s32.totalorder %s44, %s60
      %p62 = scmp.eq.s32.totalorder %s15, 0
      %p63 = por %p61, %p62
      %s64 = ssub.s32 %s18, %s27
      %s65 = ssub.s32 %s17, %s31
      %s66 = sor.u32 %s64, %s65
      %p67 = scmp.eq.s32.totalorder %s66, 0
      %s69 = sadd.s32 %s68, 1
      %s70 = scalar_select %p67, %s68, %s69
      %p73 = pneg %p67
      %p74 = scmp.eq.s32.totalorder %s9, 4
      %p75 = por %p73, %p74
      %p76 = scmp.ne.s32.totalorder %s68, %s71
      %p77 = scmp.eq.s32.totalorder %s9, 0
      %p78 = por %p76, %p77
      %p79 = scmp.ne.s32.totalorder %s68, %s71
      %p80 = scmp.eq.s32.totalorder %s14, 4
      %p81 = por %p79, %p80
      %p82 = scmp.ne.s32.totalorder %s71, %s72
      %p83 = scmp.eq.s32.totalorder %s14, 0
      %p84 = por %p82, %p83
      %p85 = scmp.ne.s32.totalorder %s71, %s72
      %p86 = scmp.eq.s32.totalorder %s15, 4
      %p87 = por %p85, %p86
      %p89 = scmp.ne.s32.totalorder %s72, %s88
      %p90 = scmp.eq.s32.totalorder %s15, 0
      %p91 = por %p89, %p90
      %s92 = ssub.s32 %s17, %s31
      %p93 = scmp.eq.s32.totalorder %s92, 0
      %s95 = sadd.s32 %s94, 1
      %s96 = scalar_select %p93, %s94, %s95
      %p99 = pneg %p93
      %p100 = scmp.eq.s32.totalorder %s9, 4
      %p101 = por %p99, %p100
      %p102 = scmp.ne.s32.totalorder %s94, %s97
      %p103 = scmp.eq.s32.totalorder %s9, 0
      %p104 = por %p102, %p103
      %p105 = scmp.ne.s32.totalorder %s94, %s97
      %p106 = scmp.eq.s32.totalorder %s14, 4
      %p107 = por %p105, %p106
      %p108 = scmp.ne.s32.totalorder %s97, %s98
      %p109 = scmp.eq.s32.totalorder %s14, 0
      %p110 = por %p108, %p109
      %p111 = scmp.ne.s32.totalorder %s97, %s98
      %p112 = scmp.eq.s32.totalorder %s15, 4
      %p113 = por %p111, %p112
      %p115 = scmp.ne.s32.totalorder %s98, %s114
      %p116 = scmp.eq.s32.totalorder %s15, 0
      %p117 = por %p115, %p116
      %s118 = ssub.s32 %s16, %s35
      %s119 = ssub.s32 %s17, %s31
      %s120 = sor.u32 %s118, %s119
      %p121 = scmp.eq.s32.totalorder %s120, 0
      %s123 = sadd.s32 %s122, 1
      %s124 = scalar_select %p121, %s122, %s123
      %p127 = pneg %p121
      %p128 = scmp.eq.s32.totalorder %s9, 4
      %p129 = por %p127, %p128
      %p130 = scmp.ne.s32.totalorder %s122, %s125
      %p131 = scmp.eq.s32.totalorder %s9, 0
      %p132 = por %p130, %p131
      %p133 = scmp.ne.s32.totalorder %s122, %s125
      %p134 = scmp.eq.s32.totalorder %s14, 4
      %p135 = por %p133, %p134
      %p136 = scmp.ne.s32.totalorder %s125, %s126
      %p137 = scmp.eq.s32.totalorder %s14, 0
      %p138 = por %p136, %p137
      %p139 = scmp.ne.s32.totalorder %s125, %s126
      %p140 = scmp.eq.s32.totalorder %s15, 4
      %p141 = por %p139, %p140
      %p143 = scmp.ne.s32.totalorder %s126, %s142
      %p144 = scmp.eq.s32.totalorder %s15, 0
      %p145 = por %p143, %p144
      %p146 = scmp.le.s32.totalorder 1, %s9
      %p147 = scmp.lt.s32.totalorder %s9, 6
      %p148 = pnand %p146, %p147
      %p149 = pneg %p148
      // Predicated region
      $region9: #{forward.12} parent=5 // pred_check
        _
      $region10: #{forward.12} parent=5 // pred_check_branch
        %151 = sbr.rel (%p148) target = $region12
      $region11: #{forward.12} parent=5 // pred_region
        %s152 = ssub.s32 %s9, 1
        // Predicated region
        $region13: #{forward.12} parent=11 // pred_check
          %p153 = pneg %p110
        $region14: #{forward.12} parent=11 // pred_check_branch
          %155 = sbr.rel (%p153) target = $region16
        $region15: #{forward.12} parent=11 // pred_region
          %s156 = smul.u32 2, %s20
          %p157 = scmp.lt.s32.totalorder %s156, 1
          %s158 = scalar_select %p157, %s156, 1
          %s159 = scalar_lea.vmem %s2, %s158
          %s160 = smul.u32 2, %s20
        $region16: #{forward.12} parent=11 // pred_fallthru
          _
      $region12: #{forward.12} parent=5 // pred_fallthru
        _
      %p161 = scmp.lt.s32.totalorder %s9, 5
      // Predicated region
      $region17: #{forward.12} parent=5 // pred_check
        %p162 = pneg %p161
      $region18: #{forward.12} parent=5 // pred_check_branch
        %164 = sbr.rel (%p162) target = $region20
      $region19: #{forward.12} parent=5 // pred_region
        // Predicated region
        $region21: #{forward.12} parent=19 // pred_check
          %p165 = pneg %p50
        $region22: #{forward.12} parent=19 // pred_check_branch
          %167 = sbr.rel (%p165) target = $region24
        $region23: #{forward.12} parent=19 // pred_region
          %s168 = sand.u32 %s40, 1
          %s169 = sand.u32 %s40, 1
          %s170 = smul.addr %s169, 64
          %s171 = scalar_lea.vmem [#allocation3], %s170
          %s172 = smul.u32 4, %s16
          %s173 = smul.u32 4, %s18
          %s174 = smul.addr %s172, 20
          %s175 = sadd.s32 %s173, %s174
          %s176 = smul.addr %s175, 4
          %s177 = scalar_lea.vmem %s0, %s176
          // Predicated region
          $region25: #{forward.12} parent=23 // pred_check
            _
          $region26: #{forward.12} parent=23 // pred_check_branch
            %179 = sbr.rel (0) target = $region28
          $region27: #{forward.12} parent=23 // pred_region
            // Predicated region
            $region29: #{forward.12} parent=27 // pred_check
              _
            $region30: #{forward.12} parent=27 // pred_check_branch
              %181 = sbr.rel (0) target = $region32
            $region31: #{forward.12} parent=27 // pred_region
              loop: start=0, step=1, limit=1
              $region33: #{forward.12} parent=31 // loop_pre_header
                _
              $region34: #{forward.12} parent=31 // loop_header
                %s183 = sphi 0, %s187
                %p184 = scmp.ge.s32.totalorder %s183, 1
                %s188 = sphi %s177, %s177
                %s189 = sphi %s171, %s171
              $region35: #{forward.12} parent=31 // loop_header_branch
                %186 = sbr.rel (%p184) target = $region39
              $region36: #{forward.12} parent=31 // loop_body
                %v190 = vld [vmem:[%s188] sm:$0xff]
                %191 = vst [vmem:[%s189] sm:$0xff] %v190
                %v192 = vld [vmem:[%s188 + $0x8] sm:$0xff]
                %193 = vst [vmem:[%s189 + $0x8] sm:$0xff] %v192
                %v194 = vld [vmem:[%s188 + $0x50] sm:$0xff]
                %195 = vst [vmem:[%s189 + $0x10] sm:$0xff] %v194
                %v196 = vld [vmem:[%s188 + $0x58] sm:$0xff]
                %197 = vst [vmem:[%s189 + $0x18] sm:$0xff] %v196
                %v198 = vld [vmem:[%s188 + $0xa0] sm:$0xff]
                %199 = vst [vmem:[%s189 + $0x20] sm:$0xff] %v198
                %v200 = vld [vmem:[%s188 + $0xa8] sm:$0xff]
                %201 = vst [vmem:[%s189 + $0x28] sm:$0xff] %v200
                %v202 = vld [vmem:[%s188 + $0xf0] sm:$0xff]
                %203 = vst [vmem:[%s189 + $0x30] sm:$0xff] %v202
                %v204 = vld [vmem:[%s188 + $0xf8] sm:$0xff]
                %205 = vst [vmem:[%s189 + $0x38] sm:$0xff] %v204
              $region37: #{forward.12} parent=31 // loop_footer
                %s187 = sadd.s32 1, %s183
              $region38: #{forward.12} parent=31 // loop_footer_branch
                %182 = sbr.rel target = $region34
              $region39: #{forward.12} parent=31 // loop_exit
                _
            $region32: #{forward.12} parent=27 // pred_fallthru
              _
            // Predicated region
            $region40: #{forward.12} parent=27 // pred_check
              _
            $region41: #{forward.12} parent=27 // pred_check_branch
              %207 = sbr.rel target = $region43
            $region42: #{forward.12} parent=27 // pred_region
              _
            $region43: #{forward.12} parent=27 // pred_fallthru
              _
          $region28: #{forward.12} parent=23 // pred_fallthru
            _
          %208 = vnop
        $region24: #{forward.12} parent=19 // pred_fallthru
          _
        // Predicated region
        $region44: #{forward.12} parent=19 // pred_check
          %p209 = pneg %p78
        $region45: #{forward.12} parent=19 // pred_check_branch
          %211 = sbr.rel (%p209) target = $region47
        $region46: #{forward.12} parent=19 // pred_region
          %s212 = smul.u32 64, %s18
          %s213 = smul.u32 2, %s17
          %p214 = scmp.lt.s32.totalorder %s212, 319
          %s215 = scalar_select %p214, %s212, 319
          %p216 = scmp.lt.s32.totalorder %s213, 1
          %s217 = scalar_select %p216, %s213, 1
          %s218 = smul.addr %s215, 2
          %s219 = sadd.s32 %s217, %s218
          %s220 = smul.addr %s219, 4
          %s221 = scalar_lea.vmem %s1, %s220
          %s222 = smul.u32 64, %s18
          %s223 = smul.u32 2, %s17
        $region47: #{forward.12} parent=19 // pred_fallthru
          _
      $region20: #{forward.12} parent=5 // pred_fallthru
        _
      %p224 = scmp.le.s32.totalorder 1, %s9
      %p225 = scmp.lt.s32.totalorder %s9, 6
      %p226 = pnand %p224, %p225
      %p227 = pneg %p226
      // Predicated region
      $region48: #{forward.12} parent=5 // pred_check
        _
      $region49: #{forward.12} parent=5 // pred_check_branch
        %229 = sbr.rel (%p226) target = $region51
      $region50: #{forward.12} parent=5 // pred_region
        %s230 = ssub.s32 %s9, 1
        %s231 = sand.u32 %s43, 1
        %s232 = sand.u32 %s43, 1
        %s233 = smul.addr %s232, 64
        %s234 = scalar_lea.vmem [#allocation3], %s233
        // Predicated region
        $region52: #{forward.12} parent=50 // pred_check
          %p235 = pneg %p56
        $region53: #{forward.12} parent=50 // pred_check_branch
          %237 = sbr.rel (%p235) target = $region55
        $region54: #{forward.12} parent=50 // pred_region
          _
        $region55: #{forward.12} parent=50 // pred_fallthru
          _
        %s238 = sand.u32 %s43, 1
        %s239 = sand.u32 %s43, 1
        %s240 = smul.addr %s239, 64
        %s241 = scalar_lea.vmem [#allocation3], %s240
        %p242 = pneg %p56
        %p243 = pneg %p53
        %s244 = smul.u32 64, %s21
        %s245 = smul.u32 2, %s20
        %p246 = scmp.lt.s32.totalorder %s244, 319
        %s247 = scalar_select %p246, %s244, 319
        %p248 = scmp.lt.s32.totalorder %s245, 1
        %s249 = scalar_select %p248, %s245, 1
        %s250 = smul.addr %s247, 2
        %s251 = sadd.s32 %s249, %s250
        %s252 = smul.addr %s251, 4
        %s253 = scalar_lea.vmem %s1, %s252
        %p254 = pneg %p84
        %p255 = pneg %p81
        %s256 = smul.u32 2, %s20
        %p257 = scmp.lt.s32.totalorder %s256, 1
        %s258 = scalar_select %p257, %s256, 1
        %s259 = scalar_lea.vmem %s2, %s258
        %p260 = pneg %p110
        %p261 = pneg %p107
        %p262 = pneg %p138
        %p263 = pneg %p135
        %s264 = smul.u32 4, %s19
        %s265 = smul.u32 2, %s20
        %p266 = scmp.lt.s32.totalorder %s264, 3
        %s267 = scalar_select %p266, %s264, 3
        %p268 = scmp.lt.s32.totalorder %s265, 1
        %s269 = scalar_select %p268, %s265, 1
        %s270 = smul.addr %s267, 2
        %s271 = sadd.s32 %s269, %s270
        %s272 = smul.addr %s271, 4
        %s273 = scalar_lea.vmem %s3, %s272
        %s274 = smul.u32 4, %s19
        %s275 = smul.u32 4, %s21
        %s276 = smul.u32 64, %s21
        %s277 = smul.u32 2, %s20
        %p278 = scmp.lt.s32.totalorder %s276, 319
        %s279 = scalar_select %p278, %s276, 319
        %p280 = scmp.lt.s32.totalorder %s277, 1
        %s281 = scalar_select %p280, %s277, 1
        %s282 = smul.addr %s279, 2
        %s283 = sadd.s32 %s281, %s282
        %s284 = smul.addr %s283, 4
        %s285 = scalar_lea.vmem %s1, %s284
        %s286 = smul.u32 64, %s21
        %s287 = smul.u32 2, %s20
        %s288 = smul.u32 2, %s20
        %p289 = scmp.lt.s32.totalorder %s288, 1
        %s290 = scalar_select %p289, %s288, 1
        %s291 = scalar_lea.vmem %s2, %s290
        %s292 = smul.u32 2, %s20
        %s293 = smul.u32 4, %s19
        %s294 = smul.u32 2, %s20
        %p295 = scmp.lt.s32.totalorder %s293, 3
        %s296 = scalar_select %p295, %s293, 3
        %p297 = scmp.lt.s32.totalorder %s294, 1
        %s298 = scalar_select %p297, %s294, 1
        %s299 = smul.addr %s296, 2
        %s300 = sadd.s32 %s298, %s299
        %s301 = smul.addr %s300, 4
        %s302 = scalar_lea.vmem %s3, %s301
        %s303 = smul.u32 4, %s19
        %s304 = smul.u32 2, %s20
        %p305 = scmp.eq.s32.totalorder %s21, 0
        // Predicated region
        $region56: #{forward.12} parent=50 // pred_check
          %p306 = pneg %p305
        $region57: #{forward.12} parent=50 // pred_check_branch
          %308 = sbr.rel (%p306) target = $region59
        $region58: #{forward.12} parent=50 // pred_region
          %309 = vst [vmem:[#allocation2] sm:$0xff] 0.0
          %310 = vst [vmem:[#allocation2 + $0x8] sm:$0xff] 0.0
          %311 = vst [vmem:[#allocation2 + $0x10] sm:$0xff] 0.0
          %312 = vst [vmem:[#allocation2 + $0x18] sm:$0xff] 0.0
          %313 = vst [vmem:[#allocation2 + $0x20] sm:$0xff] 0.0
          %314 = vst [vmem:[#allocation2 + $0x28] sm:$0xff] 0.0
          %315 = vst [vmem:[#allocation2 + $0x30] sm:$0xff] 0.0
          %316 = vst [vmem:[#allocation2 + $0x38] sm:$0xff] 0.0
        $region59: #{forward.12} parent=50 // pred_fallthru
          _
        %v317 = vld [vmem:[#allocation2] sm:$0xff]
        %v318 = vld [vmem:[#allocation2 + $0x8] sm:$0xff]
        %v319 = vld [vmem:[#allocation2 + $0x10] sm:$0xff]
        %v320 = vld [vmem:[#allocation2 + $0x18] sm:$0xff]
        %v321 = vld [vmem:[#allocation2 + $0x20] sm:$0xff]
        %v322 = vld [vmem:[#allocation2 + $0x28] sm:$0xff]
        %v323 = vld [vmem:[#allocation2 + $0x30] sm:$0xff]
        %v324 = vld [vmem:[#allocation2 + $0x38] sm:$0xff]
        %v325 = vld [vmem:[%s234] sm:$0xff]
        %v326 = vld [vmem:[%s234 + $0x8] sm:$0xff]
        %v327 = vld [vmem:[%s234 + $0x10] sm:$0xff]
        %v328 = vld [vmem:[%s234 + $0x18] sm:$0xff]
        %v329 = vld [vmem:[%s234 + $0x20] sm:$0xff]
        %v330 = vld [vmem:[%s234 + $0x28] sm:$0xff]
        %v331 = vld [vmem:[%s234 + $0x30] sm:$0xff]
        %v332 = vld [vmem:[%s234 + $0x38] sm:$0xff]
        %v333 = vld [vmem:[%s285] sm:$0xff]
        %v334 = vld [vmem:[%s285 + $0x8] sm:$0xff]
        %v335 = vld [vmem:[%s285 + $0x10] sm:$0xff]
        %v336 = vld [vmem:[%s285 + $0x18] sm:$0xff]
        %v337 = vld [vmem:[%s285 + $0x20] sm:$0xff]
        %v338 = vld [vmem:[%s285 + $0x28] sm:$0xff]
        %v339 = vld [vmem:[%s285 + $0x30] sm:$0xff]
        %v340 = vld [vmem:[%s285 + $0x38] sm:$0xff]
        %v341 = vld [vmem:[%s285 + $0x40] sm:$0xff]
        %v342 = vld [vmem:[%s285 + $0x48] sm:$0xff]
        %v343 = vld [vmem:[%s285 + $0x50] sm:$0xff]
        %v344 = vld [vmem:[%s285 + $0x58] sm:$0xff]
        %v345 = vld [vmem:[%s285 + $0x60] sm:$0xff]
        %v346 = vld [vmem:[%s285 + $0x68] sm:$0xff]
        %v347 = vld [vmem:[%s285 + $0x70] sm:$0xff]
        %v348 = vld [vmem:[%s285 + $0x78] sm:$0xff]
        %v349 = vld [vmem:[%s285 + $0x80] sm:$0xff]
        %v350 = vld [vmem:[%s285 + $0x88] sm:$0xff]
        %v351 = vld [vmem:[%s285 + $0x90] sm:$0xff]
        %v352 = vld [vmem:[%s285 + $0x98] sm:$0xff]
        %v353 = vld [vmem:[%s285 + $0xa0] sm:$0xff]
        %v354 = vld [vmem:[%s285 + $0xa8] sm:$0xff]
        %v355 = vld [vmem:[%s285 + $0xb0] sm:$0xff]
        %v356 = vld [vmem:[%s285 + $0xb8] sm:$0xff]
        %v357 = vld [vmem:[%s285 + $0xc0] sm:$0xff]
        %v358 = vld [vmem:[%s285 + $0xc8] sm:$0xff]
        %v359 = vld [vmem:[%s285 + $0xd0] sm:$0xff]
        %v360 = vld [vmem:[%s285 + $0xd8] sm:$0xff]
        %v361 = vld [vmem:[%s285 + $0xe0] sm:$0xff]
        %v362 = vld [vmem:[%s285 + $0xe8] sm:$0xff]
        %v363 = vld [vmem:[%s285 + $0xf0] sm:$0xff]
        %v364 = vld [vmem:[%s285 + $0xf8] sm:$0xff]
        %v365 = vld [vmem:[%s285 + $0x100] sm:$0xff]
        %v366 = vld [vmem:[%s285 + $0x108] sm:$0xff]
        %v367 = vld [vmem:[%s285 + $0x110] sm:$0xff]
        %v368 = vld [vmem:[%s285 + $0x118] sm:$0xff]
        %v369 = vld [vmem:[%s285 + $0x120] sm:$0xff]
        %v370 = vld [vmem:[%s285 + $0x128] sm:$0xff]
        %v371 = vld [vmem:[%s285 + $0x130] sm:$0xff]
        %v372 = vld [vmem:[%s285 + $0x138] sm:$0xff]
        %v373 = vld [vmem:[%s285 + $0x140] sm:$0xff]
        %v374 = vld [vmem:[%s285 + $0x148] sm:$0xff]
        %v375 = vld [vmem:[%s285 + $0x150] sm:$0xff]
        %v376 = vld [vmem:[%s285 + $0x158] sm:$0xff]
        %v377 = vld [vmem:[%s285 + $0x160] sm:$0xff]
        %v378 = vld [vmem:[%s285 + $0x168] sm:$0xff]
        %v379 = vld [vmem:[%s285 + $0x170] sm:$0xff]
        %v380 = vld [vmem:[%s285 + $0x178] sm:$0xff]
        %v381 = vld [vmem:[%s285 + $0x180] sm:$0xff]
        %v382 = vld [vmem:[%s285 + $0x188] sm:$0xff]
        %v383 = vld [vmem:[%s285 + $0x190] sm:$0xff]
        %v384 = vld [vmem:[%s285 + $0x198] sm:$0xff]
        %v385 = vld [vmem:[%s285 + $0x1a0] sm:$0xff]
        %v386 = vld [vmem:[%s285 + $0x1a8] sm:$0xff]
        %v387 = vld [vmem:[%s285 + $0x1b0] sm:$0xff]
        %v388 = vld [vmem:[%s285 + $0x1b8] sm:$0xff]
        %v389 = vld [vmem:[%s285 + $0x1c0] sm:$0xff]
        %v390 = vld [vmem:[%s285 + $0x1c8] sm:$0xff]
        %v391 = vld [vmem:[%s285 + $0x1d0] sm:$0xff]
        %v392 = vld [vmem:[%s285 + $0x1d8] sm:$0xff]
        %v393 = vld [vmem:[%s285 + $0x1e0] sm:$0xff]
        %v394 = vld [vmem:[%s285 + $0x1e8] sm:$0xff]
        %v395 = vld [vmem:[%s285 + $0x1f0] sm:$0xff]
        %v396 = vld [vmem:[%s285 + $0x1f8] sm:$0xff]
        %v405 = vunpack.c.l.b16 %v325
        %v406 = vunpack.c.h.b16 %v325
        %v407 = vunpack.c.l.b16 %v326
        %v408 = vunpack.c.h.b16 %v326
        %v409 = vunpack.c.l.b16 %v327
        %v410 = vunpack.c.h.b16 %v327
        %v411 = vunpack.c.l.b16 %v328
        %v412 = vunpack.c.h.b16 %v328
        %v413 = vunpack.c.l.b16 %v329
        %v414 = vunpack.c.h.b16 %v329
        %v415 = vunpack.c.l.b16 %v330
        %v416 = vunpack.c.h.b16 %v330
        %v417 = vunpack.c.l.b16 %v331
        %v418 = vunpack.c.h.b16 %v331
        %v419 = vunpack.c.l.b16 %v332
        %v420 = vunpack.c.h.b16 %v332
        %v421 = vpack.c.b16 %v409, %v405
        %v422 = vpack.c.b16 %v410, %v406
        %v423 = vpack.c.b16 %v411, %v407
        %v424 = vpack.c.b16 %v412, %v408
        %v425 = vpack.c.b16 %v417, %v413
        %v426 = vpack.c.b16 %v418, %v414
        %v427 = vpack.c.b16 %v419, %v415
        %v428 = vpack.c.b16 %v420, %v416
        %v501 = vunpack.c.l.b16 %v333
        %v502 = vunpack.c.h.b16 %v333
        %v503 = vunpack.c.l.b16 %v334
        %v504 = vunpack.c.h.b16 %v334
        %v505 = vunpack.c.l.b16 %v335
        %v506 = vunpack.c.h.b16 %v335
        %v507 = vunpack.c.l.b16 %v336
        %v508 = vunpack.c.h.b16 %v336
        %v509 = vunpack.c.l.b16 %v337
        %v510 = vunpack.c.h.b16 %v337
        %v511 = vunpack.c.l.b16 %v338
        %v512 = vunpack.c.h.b16 %v338
        %v513 = vunpack.c.l.b16 %v339
        %v514 = vunpack.c.h.b16 %v339
        %v515 = vunpack.c.l.b16 %v340
        %v516 = vunpack.c.h.b16 %v340
        %v517 = vunpack.c.l.b16 %v341
        %v518 = vunpack.c.h.b16 %v341
        %v519 = vunpack.c.l.b16 %v342
        %v520 = vunpack.c.h.b16 %v342
        %v521 = vunpack.c.l.b16 %v343
        %v522 = vunpack.c.h.b16 %v343
        %v523 = vunpack.c.l.b16 %v344
        %v524 = vunpack.c.h.b16 %v344
        %v525 = vunpack.c.l.b16 %v345
        %v526 = vunpack.c.h.b16 %v345
        %v527 = vunpack.c.l.b16 %v346
        %v528 = vunpack.c.h.b16 %v346
        %v529 = vunpack.c.l.b16 %v347
        %v530 = vunpack.c.h.b16 %v347
        %v531 = vunpack.c.l.b16 %v348
        %v532 = vunpack.c.h.b16 %v348
        %v533 = vunpack.c.l.b16 %v349
        %v534 = vunpack.c.h.b16 %v349
        %v535 = vunpack.c.l.b16 %v350
        %v536 = vunpack.c.h.b16 %v350
        %v537 = vunpack.c.l.b16 %v351
        %v538 = vunpack.c.h.b16 %v351
        %v539 = vunpack.c.l.b16 %v352
        %v540 = vunpack.c.h.b16 %v352
        %v541 = vunpack.c.l.b16 %v353
        %v542 = vunpack.c.h.b16 %v353
        %v543 = vunpack.c.l.b16 %v354
        %v544 = vunpack.c.h.b16 %v354
        %v545 = vunpack.c.l.b16 %v355
        %v546 = vunpack.c.h.b16 %v355
        %v547 = vunpack.c.l.b16 %v356
        %v548 = vunpack.c.h.b16 %v356
        %v549 = vunpack.c.l.b16 %v357
        %v550 = vunpack.c.h.b16 %v357
        %v551 = vunpack.c.l.b16 %v358
        %v552 = vunpack.c.h.b16 %v358
        %v553 = vunpack.c.l.b16 %v359
        %v554 = vunpack.c.h.b16 %v359
        %v555 = vunpack.c.l.b16 %v360
        %v556 = vunpack.c.h.b16 %v360
        %v557 = vunpack.c.l.b16 %v361
        %v558 = vunpack.c.h.b16 %v361
        %v559 = vunpack.c.l.b16 %v362
        %v560 = vunpack.c.h.b16 %v362
        %v561 = vunpack.c.l.b16 %v363
        %v562 = vunpack.c.h.b16 %v363
        %v563 = vunpack.c.l.b16 %v364
        %v564 = vunpack.c.h.b16 %v364
        %v565 = vunpack.c.l.b16 %v365
        %v566 = vunpack.c.h.b16 %v365
        %v567 = vunpack.c.l.b16 %v366
        %v568 = vunpack.c.h.b16 %v366
        %v569 = vunpack.c.l.b16 %v367
        %v570 = vunpack.c.h.b16 %v367
        %v571 = vunpack.c.l.b16 %v368
        %v572 = vunpack.c.h.b16 %v368
        %v573 = vunpack.c.l.b16 %v369
        %v574 = vunpack.c.h.b16 %v369
        %v575 = vunpack.c.l.b16 %v370
        %v576 = vunpack.c.h.b16 %v370
        %v577 = vunpack.c.l.b16 %v371
        %v578 = vunpack.c.h.b16 %v371
        %v579 = vunpack.c.l.b16 %v372
        %v580 = vunpack.c.h.b16 %v372
        %v581 = vunpack.c.l.b16 %v373
        %v582 = vunpack.c.h.b16 %v373
        %v583 = vunpack.c.l.b16 %v374
        %v584 = vunpack.c.h.b16 %v374
        %v585 = vunpack.c.l.b16 %v375
        %v586 = vunpack.c.h.b16 %v375
        %v587 = vunpack.c.l.b16 %v376
        %v588 = vunpack.c.h.b16 %v376
        %v589 = vunpack.c.l.b16 %v377
        %v590 = vunpack.c.h.b16 %v377
        %v591 = vunpack.c.l.b16 %v378
        %v592 = vunpack.c.h.b16 %v378
        %v593 = vunpack.c.l.b16 %v379
        %v594 = vunpack.c.h.b16 %v379
        %v595 = vunpack.c.l.b16 %v380
        %v596 = vunpack.c.h.b16 %v380
        %v597 = vunpack.c.l.b16 %v381
        %v598 = vunpack.c.h.b16 %v381
        %v599 = vunpack.c.l.b16 %v382
        %v600 = vunpack.c.h.b16 %v382
        %v601 = vunpack.c.l.b16 %v383
        %v602 = vunpack.c.h.b16 %v383
        %v603 = vunpack.c.l.b16 %v384
        %v604 = vunpack.c.h.b16 %v384
        %v605 = vunpack.c.l.b16 %v385
        %v606 = vunpack.c.h.b16 %v385
        %v607 = vunpack.c.l.b16 %v386
        %v608 = vunpack.c.h.b16 %v386
        %v609 = vunpack.c.l.b16 %v387
        %v610 = vunpack.c.h.b16 %v387
        %v611 = vunpack.c.l.b16 %v388
        %v612 = vunpack.c.h.b16 %v388
        %v613 = vunpack.c.l.b16 %v389
        %v614 = vunpack.c.h.b16 %v389
        %v615 = vunpack.c.l.b16 %v390
        %v616 = vunpack.c.h.b16 %v390
        %v617 = vunpack.c.l.b16 %v391
        %v618 = vunpack.c.h.b16 %v391
        %v619 = vunpack.c.l.b16 %v392
        %v620 = vunpack.c.h.b16 %v392
        %v621 = vunpack.c.l.b16 %v393
        %v622 = vunpack.c.h.b16 %v393
        %v623 = vunpack.c.l.b16 %v394
        %v624 = vunpack.c.h.b16 %v394
        %v625 = vunpack.c.l.b16 %v395
        %v626 = vunpack.c.h.b16 %v395
        %v627 = vunpack.c.l.b16 %v396
        %v628 = vunpack.c.h.b16 %v396
        %v629 = vpack.c.b16 %v503, %v501
        %v630 = vpack.c.b16 %v504, %v502
        %v631 = vpack.c.b16 %v507, %v505
        %v632 = vpack.c.b16 %v508, %v506
        %v633 = vpack.c.b16 %v511, %v509
        %v634 = vpack.c.b16 %v512, %v510
        %v635 = vpack.c.b16 %v515, %v513
        %v636 = vpack.c.b16 %v516, %v514
        %v637 = vpack.c.b16 %v519, %v517
        %v638 = vpack.c.b16 %v520, %v518
        %v639 = vpack.c.b16 %v523, %v521
        %v640 = vpack.c.b16 %v524, %v522
        %v641 = vpack.c.b16 %v527, %v525
        %v642 = vpack.c.b16 %v528, %v526
        %v643 = vpack.c.b16 %v531, %v529
        %v644 = vpack.c.b16 %v532, %v530
        %v645 = vpack.c.b16 %v535, %v533
        %v646 = vpack.c.b16 %v536, %v534
        %v647 = vpack.c.b16 %v539, %v537
        %v648 = vpack.c.b16 %v540, %v538
        %v649 = vpack.c.b16 %v543, %v541
        %v650 = vpack.c.b16 %v544, %v542
        %v651 = vpack.c.b16 %v547, %v545
        %v652 = vpack.c.b16 %v548, %v546
        %v653 = vpack.c.b16 %v551, %v549
        %v654 = vpack.c.b16 %v552, %v550
        %v655 = vpack.c.b16 %v555, %v553
        %v656 = vpack.c.b16 %v556, %v554
        %v657 = vpack.c.b16 %v559, %v557
        %v658 = vpack.c.b16 %v560, %v558
        %v659 = vpack.c.b16 %v563, %v561
        %v660 = vpack.c.b16 %v564, %v562
        %v661 = vpack.c.b16 %v567, %v565
        %v662 = vpack.c.b16 %v568, %v566
        %v663 = vpack.c.b16 %v571, %v569
        %v664 = vpack.c.b16 %v572, %v570
        %v665 = vpack.c.b16 %v575, %v573
        %v666 = vpack.c.b16 %v576, %v574
        %v667 = vpack.c.b16 %v579, %v577
        %v668 = vpack.c.b16 %v580, %v578
        %v669 = vpack.c.b16 %v583, %v581
        %v670 = vpack.c.b16 %v584, %v582
        %v671 = vpack.c.b16 %v587, %v585
        %v672 = vpack.c.b16 %v588, %v586
        %v673 = vpack.c.b16 %v591, %v589
        %v674 = vpack.c.b16 %v592, %v590
        %v675 = vpack.c.b16 %v595, %v593
        %v676 = vpack.c.b16 %v596, %v594
        %v677 = vpack.c.b16 %v599, %v597
        %v678 = vpack.c.b16 %v600, %v598
        %v679 = vpack.c.b16 %v603, %v601
        %v680 = vpack.c.b16 %v604, %v602
        %v681 = vpack.c.b16 %v607, %v605
        %v682 = vpack.c.b16 %v608, %v606
        %v683 = vpack.c.b16 %v611, %v609
        %v684 = vpack.c.b16 %v612, %v610
        %v685 = vpack.c.b16 %v615, %v613
        %v686 = vpack.c.b16 %v616, %v614
        %v687 = vpack.c.b16 %v619, %v617
        %v688 = vpack.c.b16 %v620, %v618
        %v689 = vpack.c.b16 %v623, %v621
        %v690 = vpack.c.b16 %v624, %v622
        %v691 = vpack.c.b16 %v627, %v625
        %v692 = vpack.c.b16 %v628, %v626
        %757 = vmatprep.subr.bf16.mxu0 %v644
        %758 = vmatpush1.bf16.msra.mxu0 %v643
        %759 = vmatprep.subr.bf16.mxu0 %v642
        %760 = vmatpush1.bf16.msra.mxu0 %v641
        %761 = vmatprep.subr.bf16.mxu0 %v640
        %762 = vmatpush1.bf16.msra.mxu0 %v639
        %763 = vmatprep.subr.bf16.mxu0 %v638
        %764 = vmatpush1.bf16.msra.mxu0 %v637
        %765 = vmatprep.subr.bf16.mxu0 %v636
        %766 = vmatpush1.bf16.msra.mxu0 %v635
        %767 = vmatprep.subr.bf16.mxu0 %v634
        %768 = vmatpush1.bf16.msra.mxu0 %v633
        %769 = vmatprep.subr.bf16.mxu0 %v632
        %770 = vmatpush1.bf16.msra.mxu0 %v631
        %771 = vmatprep.subr.bf16.mxu0 %v630
        %772 = vmatpush1.bf16.msra.mxu0 %v629
        %773 = vmatprep.subr.bf16.mxu0 %v660
        %774 = vmatpush2.bf16.msra.mxu0 %v659
        %775 = vmatprep.subr.bf16.mxu0 %v658
        %776 = vmatpush2.bf16.msra.mxu0 %v657
        %777 = vmatprep.subr.bf16.mxu0 %v656
        %778 = vmatpush2.bf16.msra.mxu0 %v655
        %779 = vmatprep.subr.bf16.mxu0 %v654
        %780 = vmatpush2.bf16.msra.mxu0 %v653
        %781 = vmatprep.subr.bf16.mxu0 %v652
        %782 = vmatpush2.bf16.msra.mxu0 %v651
        %783 = vmatprep.subr.bf16.mxu0 %v650
        %784 = vmatpush2.bf16.msra.mxu0 %v649
        %785 = vmatprep.subr.bf16.mxu0 %v648
        %786 = vmatpush2.bf16.msra.mxu0 %v647
        %787 = vmatprep.subr.bf16.mxu0 %v646
        %788 = vmatpush2.bf16.msra.mxu0 %v645
        %789 = vmatprep.mubr.bf16.mxu0 %v422
        %790 = vmatmul.mubr.bf16.gmra.mxu0 %v421
        %v791 = vpop.f32.mrf.mxu0
        %v792 = vadd.f32 0.0, %v791
        %v793 = vpop.f32.mrf.mxu0
        %v794 = vadd.f32 0.0, %v793
        %v795 = vpop.f32.mrf.mxu0
        %v796 = vadd.f32 0.0, %v795
        %v797 = vpop.f32.mrf.mxu0
        %v798 = vadd.f32 0.0, %v797
        %799 = vmatprep.mubr.bf16.mxu0 %v426
        %800 = vmatmul.mubr.bf16.gmra.mxu0 %v425
        %v801 = vpop.f32.mrf.mxu0
        %v802 = vadd.f32 0.0, %v801
        %v803 = vpop.f32.mrf.mxu0
        %v804 = vadd.f32 0.0, %v803
        %v805 = vpop.f32.mrf.mxu0
        %v806 = vadd.f32 0.0, %v805
        %v807 = vpop.f32.mrf.mxu0
        %v808 = vadd.f32 0.0, %v807
        %809 = vdwg.mxu0
        %810 = vmatprep.subr.bf16.mxu0 %v676
        %811 = vmatpush1.bf16.msra.mxu0 %v675
        %812 = vmatprep.subr.bf16.mxu0 %v674
        %813 = vmatpush1.bf16.msra.mxu0 %v673
        %814 = vmatprep.subr.bf16.mxu0 %v672
        %815 = vmatpush1.bf16.msra.mxu0 %v671
        %816 = vmatprep.subr.bf16.mxu0 %v670
        %817 = vmatpush1.bf16.msra.mxu0 %v669
        %818 = vmatprep.subr.bf16.mxu0 %v668
        %819 = vmatpush1.bf16.msra.mxu0 %v667
        %820 = vmatprep.subr.bf16.mxu0 %v666
        %821 = vmatpush1.bf16.msra.mxu0 %v665
        %822 = vmatprep.subr.bf16.mxu0 %v664
        %823 = vmatpush1.bf16.msra.mxu0 %v663
        %824 = vmatprep.subr.bf16.mxu0 %v662
        %825 = vmatpush1.bf16.msra.mxu0 %v661
        %826 = vmatprep.subr.bf16.mxu0 %v692
        %827 = vmatpush2.bf16.msra.mxu0 %v691
        %828 = vmatprep.subr.bf16.mxu0 %v690
        %829 = vmatpush2.bf16.msra.mxu0 %v689
        %830 = vmatprep.subr.bf16.mxu0 %v688
        %831 = vmatpush2.bf16.msra.mxu0 %v687
        %832 = vmatprep.subr.bf16.mxu0 %v686
        %833 = vmatpush2.bf16.msra.mxu0 %v685
        %834 = vmatprep.subr.bf16.mxu0 %v684
        %835 = vmatpush2.bf16.msra.mxu0 %v683
        %836 = vmatprep.subr.bf16.mxu0 %v682
        %837 = vmatpush2.bf16.msra.mxu0 %v681
        %838 = vmatprep.subr.bf16.mxu0 %v680
        %839 = vmatpush2.bf16.msra.mxu0 %v679
        %840 = vmatprep.subr.bf16.mxu0 %v678
        %841 = vmatpush2.bf16.msra.mxu0 %v677
        %842 = vmatprep.mubr.bf16.mxu0 %v424
        %843 = vmatmul.mubr.bf16.gmra.mxu0 %v423
        %v844 = vpop.f32.mrf.mxu0
        %v845 = vadd.f32 %v792, %v844
        %v846 = vpop.f32.mrf.mxu0
        %v847 = vadd.f32 %v794, %v846
        %v848 = vpop.f32.mrf.mxu0
        %v849 = vadd.f32 %v796, %v848
        %v850 = vpop.f32.mrf.mxu0
        %v851 = vadd.f32 %v798, %v850
        %852 = vmatprep.mubr.bf16.mxu0 %v428
        %853 = vmatmul.mubr.bf16.gmra.mxu0 %v427
        %v854 = vpop.f32.mrf.mxu0
        %v855 = vadd.f32 %v802, %v854
        %v856 = vpop.f32.mrf.mxu0
        %v857 = vadd.f32 %v804, %v856
        %v858 = vpop.f32.mrf.mxu0
        %v859 = vadd.f32 %v806, %v858
        %v860 = vpop.f32.mrf.mxu0
        %v861 = vadd.f32 %v808, %v860
        %862 = vdwg.mxu0
        %v863 = vadd.f32 %v317, %v845
        %v864 = vadd.f32 %v318, %v847
        %v865 = vadd.f32 %v319, %v849
        %v866 = vadd.f32 %v320, %v851
        %v867 = vadd.f32 %v321, %v855
        %v868 = vadd.f32 %v322, %v857
        %v869 = vadd.f32 %v323, %v859
        %v870 = vadd.f32 %v324, %v861
        %871 = vst [vmem:[#allocation2] sm:$0xff] %v863
        %872 = vst [vmem:[#allocation2 + $0x8] sm:$0xff] %v864
        %873 = vst [vmem:[#allocation2 + $0x10] sm:$0xff] %v865
        %874 = vst [vmem:[#allocation2 + $0x18] sm:$0xff] %v866
        %875 = vst [vmem:[#allocation2 + $0x20] sm:$0xff] %v867
        %876 = vst [vmem:[#allocation2 + $0x28] sm:$0xff] %v868
        %877 = vst [vmem:[#allocation2 + $0x30] sm:$0xff] %v869
        %878 = vst [vmem:[#allocation2 + $0x38] sm:$0xff] %v870
        %p879 = scmp.eq.s32.totalorder %s21, 4
        // Predicated region
        $region60: #{forward.12} parent=50 // pred_check
          %p880 = pneg %p879
        $region61: #{forward.12} parent=50 // pred_check_branch
          %882 = sbr.rel (%p880) target = $region63
        $region62: #{forward.12} parent=50 // pred_region
          %v883 = vld [vmem:[#allocation2] sm:$0xff]
          %v884 = vld [vmem:[#allocation2 + $0x8] sm:$0xff]
          %v885 = vld [vmem:[#allocation2 + $0x10] sm:$0xff]
          %v886 = vld [vmem:[#allocation2 + $0x18] sm:$0xff]
          %v887 = vld [vmem:[#allocation2 + $0x20] sm:$0xff]
          %v888 = vld [vmem:[#allocation2 + $0x28] sm:$0xff]
          %v889 = vld [vmem:[#allocation2 + $0x30] sm:$0xff]
          %v890 = vld [vmem:[#allocation2 + $0x38] sm:$0xff]
          %v891 = vld [vmem:[%s291] sm:$0x3]
          %v893 = vlaneseq
          %v894 = vshrl.u32 %v893, 7
          %v895 = vsub.s32 0, %v894
          %v896 = vrot.slane %v891, %v895
          %v897 = vlaneseq
          %v898 = vshrl.u32 %v897, 7
          %v899 = vsub.s32 1, %v898
          %v900 = vrot.slane %v891, %v899
          %v903 = vadd.f32 %v883, %v896
          %v904 = vadd.f32 %v884, %v900
          %v905 = vadd.f32 %v885, %v896
          %v906 = vadd.f32 %v886, %v900
          %v907 = vadd.f32 %v887, %v896
          %v908 = vadd.f32 %v888, %v900
          %v909 = vadd.f32 %v889, %v896
          %v910 = vadd.f32 %v890, %v900
          %v911 = vmax.f32 %v903, 0.0
          %v912 = vmax.f32 %v904, 0.0
          %v913 = vmax.f32 %v905, 0.0
          %v914 = vmax.f32 %v906, 0.0
          %v915 = vmax.f32 %v907, 0.0
          %v916 = vmax.f32 %v908, 0.0
          %v917 = vmax.f32 %v909, 0.0
          %v918 = vmax.f32 %v910, 0.0
          %v919 = vpack.c.bf16 %v913, %v911
          %v920 = vpack.c.bf16 %v914, %v912
          %v921 = vpack.c.bf16 %v917, %v915
          %v922 = vpack.c.bf16 %v918, %v916
          %v927 = vunpack.c.l.b16 %v919
          %v928 = vunpack.c.l.b16 %v920
          %v929 = vunpack.c.h.b16 %v919
          %v930 = vunpack.c.h.b16 %v920
          %v931 = vunpack.c.l.b16 %v921
          %v932 = vunpack.c.l.b16 %v922
          %v933 = vunpack.c.h.b16 %v921
          %v934 = vunpack.c.h.b16 %v922
          %v935 = vpack.c.b16 %v928, %v927
          %v936 = vpack.c.b16 %v930, %v929
          %v937 = vpack.c.b16 %v932, %v931
          %v938 = vpack.c.b16 %v934, %v933
          %943 = vst [vmem:[%s302] sm:$0xff] %v935
          %944 = vst [vmem:[%s302 + $0x8] sm:$0xff] %v936
          %945 = vst [vmem:[%s302 + $0x10] sm:$0xff] %v937
          %946 = vst [vmem:[%s302 + $0x18] sm:$0xff] %v938
        $region63: #{forward.12} parent=50 // pred_fallthru
          _
        %s947 = smul.u32 4, %s19
        %s948 = smul.u32 2, %s20
        %p949 = scmp.lt.s32.totalorder %s947, 3
        %s950 = scalar_select %p949, %s947, 3
        %p951 = scmp.lt.s32.totalorder %s948, 1
        %s952 = scalar_select %p951, %s948, 1
        %s953 = smul.addr %s950, 2
        %s954 = sadd.s32 %s952, %s953
        %s955 = smul.addr %s954, 4
        %s956 = scalar_lea.vmem %s3, %s955
        // Predicated region
        $region64: #{forward.12} parent=50 // pred_check
          %p957 = pneg %p135
        $region65: #{forward.12} parent=50 // pred_check_branch
          %959 = sbr.rel (%p957) target = $region67
        $region66: #{forward.12} parent=50 // pred_region
          %s960 = smul.u32 4, %s19
          %s961 = smul.u32 2, %s20
        $region67: #{forward.12} parent=50 // pred_fallthru
          _
        // Predicated region
        $region68: #{forward.12} parent=50 // pred_check
          %p962 = pneg %p135
        $region69: #{forward.12} parent=50 // pred_check_branch
          %964 = sbr.rel (%p962) target = $region71
        $region70: #{forward.12} parent=50 // pred_region
          %s965 = smul.u32 4, %s19
          %s966 = smul.u32 2, %s20
          %p967 = scmp.lt.s32.totalorder %s965, 3
          %s968 = scalar_select %p967, %s965, 3
          %p969 = scmp.lt.s32.totalorder %s966, 1
          %s970 = scalar_select %p969, %s966, 1
          %s971 = smul.addr %s968, 2
          %s972 = sadd.s32 %s970, %s971
          %s973 = smul.addr %s972, 4
          %s974 = scalar_lea.vmem %s3, %s973
        $region71: #{forward.12} parent=50 // pred_fallthru
          _
      $region51: #{forward.12} parent=5 // pred_fallthru
        _
      %p975 = scmp.le.s32.totalorder 2, %s9
      // Predicated region
      $region72: #{forward.12} parent=5 // pred_check
        %p976 = pneg %p975
      $region73: #{forward.12} parent=5 // pred_check_branch
        %978 = sbr.rel (%p976) target = $region75
      $region74: #{forward.12} parent=5 // pred_region
        %s979 = ssub.s32 %s9, 2
      $region75: #{forward.12} parent=5 // pred_fallthru
        _
    $region6: #{forward.12} parent=1 // loop_footer
      %s13 = sadd.s32 1, %s9
    $region7: #{forward.12} parent=1 // loop_footer_branch
      %8 = sbr.rel target = $region3
    $region8: #{forward.12} parent=1 // loop_exit
      _

// kernel: forward.13
$region0: #{forward.13}
  #allocation0 [shape = 'u32[]', space=smem, size = 0x4, offset = 0x4, fixed_abs, tag = 'smem constant byte address 0x4 - core index']
  #allocation1 [shape = 'u32[144,128]{1,0:T(1,128)}', space=vmem, size = 0x12000, scoped, tag = 'internal scratch']
  #allocation2 [shape = 'f32[16,512]{1,0:T(8,128)}', space=vmem, size = 0x8000, scoped, tag = 'scratch operand']
  %s0 = inlined_call_operand.vmem [shape: bf16[16,9216], index: 0, kind: input, shape index: {}]
  %s1 = inlined_call_operand.hbm [shape: bf16[9216,4096], index: 1, kind: input, shape index: {}]
  %s2 = inlined_call_operand.vmem [shape: f32[1,4096], index: 2, kind: input, shape index: {}]
  %s3 = inlined_call_operand.vmem [shape: bf16[16,4096], index: 3, kind: output, shape index: {}]
  %s4 = sld [smem:[#allocation0]]
  $region99: #{forward.13} parent=0
    _
  %s6 = ssub.s32 1, %s4
  %s7 = scalar_select 0, %s6, %s4
  $region1: #{forward.13} parent=0
    #allocation3 [shape = 'u8[32768]{0}', space=vmem, size = 0x8000, scoped, tag = 'input window, operand 0']
    #allocation4 [shape = 'u8[1048576]{0}', space=vmem, size = 0x100000, scoped, tag = 'input window, operand 1']
    #allocation5 [shape = 's32[2]{0}', space=sflag, size = 0x8, scoped, tag = 'scoped memory for forward.13']
    #allocation6 [shape = 'u8[32768]{0}', space=vmem, size = 0x8000, scoped, tag = 'output window, operand 0']
    %8 = vsyncpa [#allocation5], 0
    %s9 = scalar_lea.sflag [#allocation5], 1
    %10 = vsyncpa %s9, 0
    loop: start=0, step=1, limit=146
    $region2: #{forward.13} parent=1 // loop_pre_header
      _
    $region3: #{forward.13} parent=1 // loop_header
      %s12 = sphi 0, %s16
      %p13 = scmp.ge.s32.totalorder %s12, 146
      %s19 = sphi 0, %s38
      %s20 = sphi 0, %s34
      %s21 = sphi 0, %s30
      %s22 = sphi 0, %s19
      %s23 = sphi 0, %s20
      %s24 = sphi 0, %s21
      %s25 = sphi 0, %s22
      %s26 = sphi 0, %s23
      %s27 = sphi 0, %s24
      %s43 = sphi 0, %s45
      %s46 = sphi 0, %s43
      %s47 = sphi 0, %s46
      %s63 = sphi 0, %s47
      %s71 = sphi 0, %s73
      %s74 = sphi 0, %s71
      %s75 = sphi 0, %s74
      %s91 = sphi 0, %s75
      %s97 = sphi 0, %s99
      %s100 = sphi 0, %s97
      %s101 = sphi 0, %s100
      %s117 = sphi 0, %s101
      %s125 = sphi 0, %s127
      %s128 = sphi 0, %s125
      %s129 = sphi 0, %s128
      %s145 = sphi 0, %s129
    $region4: #{forward.13} parent=1 // loop_header_branch
      %15 = sbr.rel (%p13) target = $region8
    $region5: #{forward.13} parent=1 // loop_body
      %s17 = ssub.s32 %s12, 1
      %s18 = ssub.s32 %s12, 2
      %s28 = sadd.s32 1, %s21
      %p29 = scmp.ge.s32.totalorder %s28, 18
      %s30 = scalar_select %p29, 0, %s28
      %s31 = sadd.s32 1, %s20
      %s32 = scalar_select %p29, %s31, %s20
      %p33 = scmp.ge.s32.totalorder %s32, 8
      %s34 = scalar_select %p33, 0, %s32
      %s35 = sadd.s32 1, %s19
      %s36 = scalar_select %p33, %s35, %s19
      %p37 = scmp.ge.s32.totalorder %s36, 1
      %s38 = scalar_select %p37, 0, %s36
      %s39 = ssub.s32 %s19, %s38
      %s40 = ssub.s32 %s21, %s30
      %s41 = sor.u32 %s39, %s40
      %p42 = scmp.eq.s32.totalorder %s41, 0
      %s44 = sadd.s32 %s43, 1
      %s45 = scalar_select %p42, %s43, %s44
      %p48 = pneg %p42
      %p49 = scmp.eq.s32.totalorder %s12, 143
      %p50 = por %p48, %p49
      %p51 = scmp.ne.s32.totalorder %s43, %s46
      %p52 = scmp.eq.s32.totalorder %s12, 0
      %p53 = por %p51, %p52
      %p54 = scmp.ne.s32.totalorder %s43, %s46
      %p55 = scmp.eq.s32.totalorder %s17, 143
      %p56 = por %p54, %p55
      %p57 = scmp.ne.s32.totalorder %s46, %s47
      %p58 = scmp.eq.s32.totalorder %s17, 0
      %p59 = por %p57, %p58
      %p60 = scmp.ne.s32.totalorder %s46, %s47
      %p61 = scmp.eq.s32.totalorder %s18, 143
      %p62 = por %p60, %p61
      %p64 = scmp.ne.s32.totalorder %s47, %s63
      %p65 = scmp.eq.s32.totalorder %s18, 0
      %p66 = por %p64, %p65
      %s67 = ssub.s32 %s21, %s30
      %s68 = ssub.s32 %s20, %s34
      %s69 = sor.u32 %s67, %s68
      %p70 = scmp.eq.s32.totalorder %s69, 0
      %s72 = sadd.s32 %s71, 1
      %s73 = scalar_select %p70, %s71, %s72
      %p76 = pneg %p70
      %p77 = scmp.eq.s32.totalorder %s12, 143
      %p78 = por %p76, %p77
      %p79 = scmp.ne.s32.totalorder %s71, %s74
      %p80 = scmp.eq.s32.totalorder %s12, 0
      %p81 = por %p79, %p80
      %p82 = scmp.ne.s32.totalorder %s71, %s74
      %p83 = scmp.eq.s32.totalorder %s17, 143
      %p84 = por %p82, %p83
      %p85 = scmp.ne.s32.totalorder %s74, %s75
      %p86 = scmp.eq.s32.totalorder %s17, 0
      %p87 = por %p85, %p86
      %p88 = scmp.ne.s32.totalorder %s74, %s75
      %p89 = scmp.eq.s32.totalorder %s18, 143
      %p90 = por %p88, %p89
      %p92 = scmp.ne.s32.totalorder %s75, %s91
      %p93 = scmp.eq.s32.totalorder %s18, 0
      %p94 = por %p92, %p93
      %s95 = ssub.s32 %s20, %s34
      %p96 = scmp.eq.s32.totalorder %s95, 0
      %s98 = sadd.s32 %s97, 1
      %s99 = scalar_select %p96, %s97, %s98
      %p102 = pneg %p96
      %p103 = scmp.eq.s32.totalorder %s12, 143
      %p104 = por %p102, %p103
      %p105 = scmp.ne.s32.totalorder %s97, %s100
      %p106 = scmp.eq.s32.totalorder %s12, 0
      %p107 = por %p105, %p106
      %p108 = scmp.ne.s32.totalorder %s97, %s100
      %p109 = scmp.eq.s32.totalorder %s17, 143
      %p110 = por %p108, %p109
      %p111 = scmp.ne.s32.totalorder %s100, %s101
      %p112 = scmp.eq.s32.totalorder %s17, 0
      %p113 = por %p111, %p112
      %p114 = scmp.ne.s32.totalorder %s100, %s101
      %p115 = scmp.eq.s32.totalorder %s18, 143
      %p116 = por %p114, %p115
      %p118 = scmp.ne.s32.totalorder %s101, %s117
      %p119 = scmp.eq.s32.totalorder %s18, 0
      %p120 = por %p118, %p119
      %s121 = ssub.s32 %s19, %s38
      %s122 = ssub.s32 %s20, %s34
      %s123 = sor.u32 %s121, %s122
      %p124 = scmp.eq.s32.totalorder %s123, 0
      %s126 = sadd.s32 %s125, 1
      %s127 = scalar_select %p124, %s125, %s126
      %p130 = pneg %p124
      %p131 = scmp.eq.s32.totalorder %s12, 143
      %p132 = por %p130, %p131
      %p133 = scmp.ne.s32.totalorder %s125, %s128
      %p134 = scmp.eq.s32.totalorder %s12, 0
      %p135 = por %p133, %p134
      %p136 = scmp.ne.s32.totalorder %s125, %s128
      %p137 = scmp.eq.s32.totalorder %s17, 143
      %p138 = por %p136, %p137
      %p139 = scmp.ne.s32.totalorder %s128, %s129
      %p140 = scmp.eq.s32.totalorder %s17, 0
      %p141 = por %p139, %p140
      %p142 = scmp.ne.s32.totalorder %s128, %s129
      %p143 = scmp.eq.s32.totalorder %s18, 143
      %p144 = por %p142, %p143
      %p146 = scmp.ne.s32.totalorder %s129, %s145
      %p147 = scmp.eq.s32.totalorder %s18, 0
      %p148 = por %p146, %p147
      %p149 = scmp.le.s32.totalorder 1, %s12
      %p150 = scmp.lt.s32.totalorder %s12, 145
      %p151 = pnand %p149, %p150
      %p152 = pneg %p151
      // Predicated region
      $region9: #{forward.13} parent=5 // pred_check
        _
      $region10: #{forward.13} parent=5 // pred_check_branch
        %154 = sbr.rel (%p151) target = $region12
      $region11: #{forward.13} parent=5 // pred_region
        %s155 = ssub.s32 %s12, 1
      $region12: #{forward.13} parent=5 // pred_fallthru
        _
      %p156 = scmp.lt.s32.totalorder %s12, 144
      // Predicated region
      $region13: #{forward.13} parent=5 // pred_check
        %p157 = pneg %p156
      $region14: #{forward.13} parent=5 // pred_check_branch
        %159 = sbr.rel (%p157) target = $region16
      $region15: #{forward.13} parent=5 // pred_region
        // Predicated region
        $region17: #{forward.13} parent=15 // pred_check
          %p160 = pneg %p53
        $region18: #{forward.13} parent=15 // pred_check_branch
          %162 = sbr.rel (%p160) target = $region20
        $region19: #{forward.13} parent=15 // pred_region
          %s163 = sand.u32 %s43, 1
          %s164 = sand.u32 %s43, 1
          %s165 = smul.addr %s164, 32
          %s166 = scalar_lea.vmem [#allocation3], %s165
          %s167 = smul.u32 2, %s19
          %s168 = smul.u32 4, %s21
          %s169 = smul.addr %s167, 72
          %s170 = sadd.s32 %s168, %s169
          %s171 = smul.addr %s170, 4
          %s172 = scalar_lea.vmem %s0, %s171
          // Predicated region
          $region21: #{forward.13} parent=19 // pred_check
            _
          $region22: #{forward.13} parent=19 // pred_check_branch
            %174 = sbr.rel (0) target = $region24
          $region23: #{forward.13} parent=19 // pred_region
            // Predicated region
            $region25: #{forward.13} parent=23 // pred_check
              _
            $region26: #{forward.13} parent=23 // pred_check_branch
              %176 = sbr.rel (0) target = $region28
            $region27: #{forward.13} parent=23 // pred_region
              loop: start=0, step=1, limit=1
              $region29: #{forward.13} parent=27 // loop_pre_header
                _
              $region30: #{forward.13} parent=27 // loop_header
                %s178 = sphi 0, %s182
                %p179 = scmp.ge.s32.totalorder %s178, 1
                %s183 = sphi %s172, %s172
                %s184 = sphi %s166, %s166
              $region31: #{forward.13} parent=27 // loop_header_branch
                %181 = sbr.rel (%p179) target = $region35
              $region32: #{forward.13} parent=27 // loop_body
                %v185 = vld [vmem:[%s183] sm:$0xff]
                %186 = vst [vmem:[%s184] sm:$0xff] %v185
                %v187 = vld [vmem:[%s183 + $0x8] sm:$0xff]
                %188 = vst [vmem:[%s184 + $0x8] sm:$0xff] %v187
                %v189 = vld [vmem:[%s183 + $0x120] sm:$0xff]
                %190 = vst [vmem:[%s184 + $0x10] sm:$0xff] %v189
                %v191 = vld [vmem:[%s183 + $0x128] sm:$0xff]
                %192 = vst [vmem:[%s184 + $0x18] sm:$0xff] %v191
              $region33: #{forward.13} parent=27 // loop_footer
                %s182 = sadd.s32 1, %s178
              $region34: #{forward.13} parent=27 // loop_footer_branch
                %177 = sbr.rel target = $region30
              $region35: #{forward.13} parent=27 // loop_exit
                _
            $region28: #{forward.13} parent=23 // pred_fallthru
              _
            // Predicated region
            $region36: #{forward.13} parent=23 // pred_check
              _
            $region37: #{forward.13} parent=23 // pred_check_branch
              %194 = sbr.rel target = $region39
            $region38: #{forward.13} parent=23 // pred_region
              _
            $region39: #{forward.13} parent=23 // pred_fallthru
              _
          $region24: #{forward.13} parent=19 // pred_fallthru
            _
          %195 = vnop
        $region20: #{forward.13} parent=15 // pred_fallthru
          _
        // Predicated region
        $region40: #{forward.13} parent=15 // pred_check
          %p196 = pneg %p81
        $region41: #{forward.13} parent=15 // pred_check_branch
          %198 = sbr.rel (%p196) target = $region43
        $region42: #{forward.13} parent=15 // pred_region
          %s199 = sand.u32 %s71, 1
          %s200 = scalar_lea.sflag [#allocation5], %s199
          %s201 = sand.u32 %s71, 1
          %s202 = smul.addr %s201, 1024
          %s203 = scalar_lea.vmem [#allocation4], %s202
          %s204 = smul.u32 64, %s21
          %s205 = smul.u32 4, %s20
          %s207 = ssub.s32 16384, 16384
          %208 = vsyncadd %s200, %s207
          %s209 = smul.addr %s204, 32
          %s210 = sadd.s32 %s205, %s209
          %s211 = smul.addr %s210, 64
          %s212 = scalar_lea.hbm %s1, %s211
          %s213 = sshll.u32 %s203, 4
          %s214 = int_to_ptr.vmem [resolvable:$true] %s213
          %219 = dma.hbm_to_vmem [thread:$0]  %s212, 16384, %s214, %s200, 2048, 256, 16
        $region43: #{forward.13} parent=15 // pred_fallthru
          _
        // Predicated region
        $region44: #{forward.13} parent=15 // pred_check
          %p220 = pneg %p107
        $region45: #{forward.13} parent=15 // pred_check_branch
          %222 = sbr.rel (%p220) target = $region47
        $region46: #{forward.13} parent=15 // pred_region
          %s223 = smul.u32 4, %s20
          %p224 = scmp.lt.s32.totalorder %s223, 31
          %s225 = scalar_select %p224, %s223, 31
          %s226 = scalar_lea.vmem %s2, %s225
          %s227 = smul.u32 4, %s20
        $region47: #{forward.13} parent=15 // pred_fallthru
          _
      $region16: #{forward.13} parent=5 // pred_fallthru
        _
      %p228 = scmp.le.s32.totalorder 1, %s12
      %p229 = scmp.lt.s32.totalorder %s12, 145
      %p230 = pnand %p228, %p229
      %p231 = pneg %p230
      // Predicated region
      $region48: #{forward.13} parent=5 // pred_check
        _
      $region49: #{forward.13} parent=5 // pred_check_branch
        %233 = sbr.rel (%p230) target = $region51
      $region50: #{forward.13} parent=5 // pred_region
        %s234 = ssub.s32 %s12, 1
        %s235 = sand.u32 %s46, 1
        %s236 = sand.u32 %s46, 1
        %s237 = smul.addr %s236, 32
        %s238 = scalar_lea.vmem [#allocation3], %s237
        // Predicated region
        $region52: #{forward.13} parent=50 // pred_check
          %p239 = pneg %p59
        $region53: #{forward.13} parent=50 // pred_check_branch
          %241 = sbr.rel (%p239) target = $region55
        $region54: #{forward.13} parent=50 // pred_region
          _
        $region55: #{forward.13} parent=50 // pred_fallthru
          _
        %s242 = sand.u32 %s74, 1
        %s243 = scalar_lea.sflag [#allocation5], %s242
        %s244 = sand.u32 %s74, 1
        %s245 = smul.addr %s244, 1024
        %s246 = scalar_lea.vmem [#allocation4], %s245
        // Predicated region
        $region56: #{forward.13} parent=50 // pred_check
          %p247 = pneg %p87
        $region57: #{forward.13} parent=50 // pred_check_branch
          %249 = sbr.rel (%p247) target = $region59
        $region58: #{forward.13} parent=50 // pred_region
          %250 = dma.done %s243, 16384
        $region59: #{forward.13} parent=50 // pred_fallthru
          _
        %s251 = sand.u32 %s46, 1
        %s252 = sand.u32 %s46, 1
        %s253 = smul.addr %s252, 32
        %s254 = scalar_lea.vmem [#allocation3], %s253
        %p255 = pneg %p59
        %p256 = pneg %p56
        %s257 = sand.u32 %s74, 1
        %s258 = scalar_lea.sflag [#allocation5], %s257
        %s259 = sand.u32 %s74, 1
        %s260 = smul.addr %s259, 1024
        %s261 = scalar_lea.vmem [#allocation4], %s260
        %p262 = pneg %p87
        %p263 = pneg %p84
        %s264 = smul.u32 4, %s23
        %p265 = scmp.lt.s32.totalorder %s264, 31
        %s266 = scalar_select %p265, %s264, 31
        %s267 = scalar_lea.vmem %s2, %s266
        %p268 = pneg %p113
        %p269 = pneg %p110
        %p270 = pneg %p141
        %p271 = pneg %p138
        %s272 = sand.u32 %s128, 1
        %s273 = sand.u32 %s128, 1
        %s274 = smul.addr %s273, 32
        %s275 = scalar_lea.vmem [#allocation6], %s274
        %s276 = smul.u32 2, %s22
        %s277 = smul.u32 4, %s24
        %s278 = smul.u32 64, %s24
        %s279 = smul.u32 4, %s23
        %s280 = smul.u32 4, %s23
        %p281 = scmp.lt.s32.totalorder %s280, 31
        %s282 = scalar_select %p281, %s280, 31
        %s283 = scalar_lea.vmem %s2, %s282
        %s284 = smul.u32 4, %s23
        %s285 = smul.u32 2, %s22
        %s286 = smul.u32 4, %s23
        %p287 = scmp.eq.s32.totalorder %s24, 0
        // Predicated region
        $region60: #{forward.13} parent=50 // pred_check
          %p288 = pneg %p287
        $region61: #{forward.13} parent=50 // pred_check_branch
          %290 = sbr.rel (%p288) target = $region63
        $region62: #{forward.13} parent=50 // pred_region
          %291 = vst [vmem:[#allocation2] sm:$0xff] 0.0
          %292 = vst [vmem:[#allocation2 + $0x8] sm:$0xff] 0.0
          %293 = vst [vmem:[#allocation2 + $0x10] sm:$0xff] 0.0
          %294 = vst [vmem:[#allocation2 + $0x18] sm:$0xff] 0.0
          %295 = vst [vmem:[#allocation2 + $0x20] sm:$0xff] 0.0
          %296 = vst [vmem:[#allocation2 + $0x28] sm:$0xff] 0.0
          %297 = vst [vmem:[#allocation2 + $0x30] sm:$0xff] 0.0
          %298 = vst [vmem:[#allocation2 + $0x38] sm:$0xff] 0.0
        $region63: #{forward.13} parent=50 // pred_fallthru
          _
        %v299 = vld [vmem:[#allocation2] sm:$0xff]
        %v300 = vld [vmem:[#allocation2 + $0x8] sm:$0xff]
        %v301 = vld [vmem:[#allocation2 + $0x10] sm:$0xff]
        %v302 = vld [vmem:[#allocation2 + $0x18] sm:$0xff]
        %v303 = vld [vmem:[#allocation2 + $0x20] sm:$0xff]
        %v304 = vld [vmem:[#allocation2 + $0x28] sm:$0xff]
        %v305 = vld [vmem:[#allocation2 + $0x30] sm:$0xff]
        %v306 = vld [vmem:[#allocation2 + $0x38] sm:$0xff]
        %v307 = vld [vmem:[%s238] sm:$0xff]
        %v308 = vld [vmem:[%s238 + $0x8] sm:$0xff]
        %v309 = vld [vmem:[%s238 + $0x10] sm:$0xff]
        %v310 = vld [vmem:[%s238 + $0x18] sm:$0xff]
        %v311 = vld [vmem:[%s246] sm:$0xff]
        %v312 = vld [vmem:[%s246 + $0x8] sm:$0xff]
        %v313 = vld [vmem:[%s246 + $0x10] sm:$0xff]
        %v314 = vld [vmem:[%s246 + $0x18] sm:$0xff]
        %v315 = vld [vmem:[%s246 + $0x20] sm:$0xff]
        %v316 = vld [vmem:[%s246 + $0x28] sm:$0xff]
        %v317 = vld [vmem:[%s246 + $0x30] sm:$0xff]
        %v318 = vld [vmem:[%s246 + $0x38] sm:$0xff]
        %v319 = vld [vmem:[%s246 + $0x40] sm:$0xff]
        %v320 = vld [vmem:[%s246 + $0x48] sm:$0xff]
        %v321 = vld [vmem:[%s246 + $0x50] sm:$0xff]
        %v322 = vld [vmem:[%s246 + $0x58] sm:$0xff]
        %v323 = vld [vmem:[%s246 + $0x60] sm:$0xff]
        %v324 = vld [vmem:[%s246 + $0x68] sm:$0xff]
        %v325 = vld [vmem:[%s246 + $0x70] sm:$0xff]
        %v326 = vld [vmem:[%s246 + $0x78] sm:$0xff]
        %v327 = vld [vmem:[%s246 + $0x80] sm:$0xff]
        %v328 = vld [vmem:[%s246 + $0x88] sm:$0xff]
        %v329 = vld [vmem:[%s246 + $0x90] sm:$0xff]
        %v330 = vld [vmem:[%s246 + $0x98] sm:$0xff]
        %v331 = vld [vmem:[%s246 + $0xa0] sm:$0xff]
        %v332 = vld [vmem:[%s246 + $0xa8] sm:$0xff]
        %v333 = vld [vmem:[%s246 + $0xb0] sm:$0xff]
        %v334 = vld [vmem:[%s246 + $0xb8] sm:$0xff]
        %v335 = vld [vmem:[%s246 + $0xc0] sm:$0xff]
        %v336 = vld [vmem:[%s246 + $0xc8] sm:$0xff]
        %v337 = vld [vmem:[%s246 + $0xd0] sm:$0xff]
        %v338 = vld [vmem:[%s246 + $0xd8] sm:$0xff]
        %v339 = vld [vmem:[%s246 + $0xe0] sm:$0xff]
        %v340 = vld [vmem:[%s246 + $0xe8] sm:$0xff]
        %v341 = vld [vmem:[%s246 + $0xf0] sm:$0xff]
        %v342 = vld [vmem:[%s246 + $0xf8] sm:$0xff]
        %v343 = vld [vmem:[%s246 + $0x100] sm:$0xff]
        %v344 = vld [vmem:[%s246 + $0x108] sm:$0xff]
        %v345 = vld [vmem:[%s246 + $0x110] sm:$0xff]
        %v346 = vld [vmem:[%s246 + $0x118] sm:$0xff]
        %v347 = vld [vmem:[%s246 + $0x120] sm:$0xff]
        %v348 = vld [vmem:[%s246 + $0x128] sm:$0xff]
        %v349 = vld [vmem:[%s246 + $0x130] sm:$0xff]
        %v350 = vld [vmem:[%s246 + $0x138] sm:$0xff]
        %v351 = vld [vmem:[%s246 + $0x140] sm:$0xff]
        %v352 = vld [vmem:[%s246 + $0x148] sm:$0xff]
        %v353 = vld [vmem:[%s246 + $0x150] sm:$0xff]
        %v354 = vld [vmem:[%s246 + $0x158] sm:$0xff]
        %v355 = vld [vmem:[%s246 + $0x160] sm:$0xff]
        %v356 = vld [vmem:[%s246 + $0x168] sm:$0xff]
        %v357 = vld [vmem:[%s246 + $0x170] sm:$0xff]
        %v358 = vld [vmem:[%s246 + $0x178] sm:$0xff]
        %v359 = vld [vmem:[%s246 + $0x180] sm:$0xff]
        %v360 = vld [vmem:[%s246 + $0x188] sm:$0xff]
        %v361 = vld [vmem:[%s246 + $0x190] sm:$0xff]
        %v362 = vld [vmem:[%s246 + $0x198] sm:$0xff]
        %v363 = vld [vmem:[%s246 + $0x1a0] sm:$0xff]
        %v364 = vld [vmem:[%s246 + $0x1a8] sm:$0xff]
        %v365 = vld [vmem:[%s246 + $0x1b0] sm:$0xff]
        %v366 = vld [vmem:[%s246 + $0x1b8] sm:$0xff]
        %v367 = vld [vmem:[%s246 + $0x1c0] sm:$0xff]
        %v368 = vld [vmem:[%s246 + $0x1c8] sm:$0xff]
        %v369 = vld [vmem:[%s246 + $0x1d0] sm:$0xff]
        %v370 = vld [vmem:[%s246 + $0x1d8] sm:$0xff]
        %v371 = vld [vmem:[%s246 + $0x1e0] sm:$0xff]
        %v372 = vld [vmem:[%s246 + $0x1e8] sm:$0xff]
        %v373 = vld [vmem:[%s246 + $0x1f0] sm:$0xff]
        %v374 = vld [vmem:[%s246 + $0x1f8] sm:$0xff]
        %v375 = vld [vmem:[%s246 + $0x200] sm:$0xff]
        %v376 = vld [vmem:[%s246 + $0x208] sm:$0xff]
        %v377 = vld [vmem:[%s246 + $0x210] sm:$0xff]
        %v378 = vld [vmem:[%s246 + $0x218] sm:$0xff]
        %v379 = vld [vmem:[%s246 + $0x220] sm:$0xff]
        %v380 = vld [vmem:[%s246 + $0x228] sm:$0xff]
        %v381 = vld [vmem:[%s246 + $0x230] sm:$0xff]
        %v382 = vld [vmem:[%s246 + $0x238] sm:$0xff]
        %v383 = vld [vmem:[%s246 + $0x240] sm:$0xff]
        %v384 = vld [vmem:[%s246 + $0x248] sm:$0xff]
        %v385 = vld [vmem:[%s246 + $0x250] sm:$0xff]
        %v386 = vld [vmem:[%s246 + $0x258] sm:$0xff]
        %v387 = vld [vmem:[%s246 + $0x260] sm:$0xff]
        %v388 = vld [vmem:[%s246 + $0x268] sm:$0xff]
        %v389 = vld [vmem:[%s246 + $0x270] sm:$0xff]
        %v390 = vld [vmem:[%s246 + $0x278] sm:$0xff]
        %v391 = vld [vmem:[%s246 + $0x280] sm:$0xff]
        %v392 = vld [vmem:[%s246 + $0x288] sm:$0xff]
        %v393 = vld [vmem:[%s246 + $0x290] sm:$0xff]
        %v394 = vld [vmem:[%s246 + $0x298] sm:$0xff]
        %v395 = vld [vmem:[%s246 + $0x2a0] sm:$0xff]
        %v396 = vld [vmem:[%s246 + $0x2a8] sm:$0xff]
        %v397 = vld [vmem:[%s246 + $0x2b0] sm:$0xff]
        %v398 = vld [vmem:[%s246 + $0x2b8] sm:$0xff]
        %v399 = vld [vmem:[%s246 + $0x2c0] sm:$0xff]
        %v400 = vld [vmem:[%s246 + $0x2c8] sm:$0xff]
        %v401 = vld [vmem:[%s246 + $0x2d0] sm:$0xff]
        %v402 = vld [vmem:[%s246 + $0x2d8] sm:$0xff]
        %v403 = vld [vmem:[%s246 + $0x2e0] sm:$0xff]
        %v404 = vld [vmem:[%s246 + $0x2e8] sm:$0xff]
        %v405 = vld [vmem:[%s246 + $0x2f0] sm:$0xff]
        %v406 = vld [vmem:[%s246 + $0x2f8] sm:$0xff]
        %v407 = vld [vmem:[%s246 + $0x300] sm:$0xff]
        %v408 = vld [vmem:[%s246 + $0x308] sm:$0xff]
        %v409 = vld [vmem:[%s246 + $0x310] sm:$0xff]
        %v410 = vld [vmem:[%s246 + $0x318] sm:$0xff]
        %v411 = vld [vmem:[%s246 + $0x320] sm:$0xff]
        %v412 = vld [vmem:[%s246 + $0x328] sm:$0xff]
        %v413 = vld [vmem:[%s246 + $0x330] sm:$0xff]
        %v414 = vld [vmem:[%s246 + $0x338] sm:$0xff]
        %v415 = vld [vmem:[%s246 + $0x340] sm:$0xff]
        %v416 = vld [vmem:[%s246 + $0x348] sm:$0xff]
        %v417 = vld [vmem:[%s246 + $0x350] sm:$0xff]
        %v418 = vld [vmem:[%s246 + $0x358] sm:$0xff]
        %v419 = vld [vmem:[%s246 + $0x360] sm:$0xff]
        %v420 = vld [vmem:[%s246 + $0x368] sm:$0xff]
        %v421 = vld [vmem:[%s246 + $0x370] sm:$0xff]
        %v422 = vld [vmem:[%s246 + $0x378] sm:$0xff]
        %v423 = vld [vmem:[%s246 + $0x380] sm:$0xff]
        %v424 = vld [vmem:[%s246 + $0x388] sm:$0xff]
        %v425 = vld [vmem:[%s246 + $0x390] sm:$0xff]
        %v426 = vld [vmem:[%s246 + $0x398] sm:$0xff]
        %v427 = vld [vmem:[%s246 + $0x3a0] sm:$0xff]
        %v428 = vld [vmem:[%s246 + $0x3a8] sm:$0xff]
        %v429 = vld [vmem:[%s246 + $0x3b0] sm:$0xff]
        %v430 = vld [vmem:[%s246 + $0x3b8] sm:$0xff]
        %v431 = vld [vmem:[%s246 + $0x3c0] sm:$0xff]
        %v432 = vld [vmem:[%s246 + $0x3c8] sm:$0xff]
        %v433 = vld [vmem:[%s246 + $0x3d0] sm:$0xff]
        %v434 = vld [vmem:[%s246 + $0x3d8] sm:$0xff]
        %v435 = vld [vmem:[%s246 + $0x3e0] sm:$0xff]
        %v436 = vld [vmem:[%s246 + $0x3e8] sm:$0xff]
        %v437 = vld [vmem:[%s246 + $0x3f0] sm:$0xff]
        %v438 = vld [vmem:[%s246 + $0x3f8] sm:$0xff]
        %v443 = vunpack.c.l.b16 %v307
        %v444 = vunpack.c.h.b16 %v307
        %v445 = vunpack.c.l.b16 %v308
        %v446 = vunpack.c.h.b16 %v308
        %v447 = vunpack.c.l.b16 %v309
        %v448 = vunpack.c.h.b16 %v309
        %v449 = vunpack.c.l.b16 %v310
        %v450 = vunpack.c.h.b16 %v310
        %v451 = vpack.c.b16 %v447, %v443
        %v452 = vpack.c.b16 %v448, %v444
        %v453 = vpack.c.b16 %v449, %v445
        %v454 = vpack.c.b16 %v450, %v446
        %v587 = vunpack.c.l.b16 %v311
        %v588 = vunpack.c.h.b16 %v311
        %v589 = vunpack.c.l.b16 %v312
        %v590 = vunpack.c.h.b16 %v312
        %v591 = vunpack.c.l.b16 %v313
        %v592 = vunpack.c.h.b16 %v313
        %v593 = vunpack.c.l.b16 %v314
        %v594 = vunpack.c.h.b16 %v314
        %v595 = vunpack.c.l.b16 %v315
        %v596 = vunpack.c.h.b16 %v315
        %v597 = vunpack.c.l.b16 %v316
        %v598 = vunpack.c.h.b16 %v316
        %v599 = vunpack.c.l.b16 %v317
        %v600 = vunpack.c.h.b16 %v317
        %v601 = vunpack.c.l.b16 %v318
        %v602 = vunpack.c.h.b16 %v318
        %v603 = vunpack.c.l.b16 %v319
        %v604 = vunpack.c.h.b16 %v319
        %v605 = vunpack.c.l.b16 %v320
        %v606 = vunpack.c.h.b16 %v320
        %v607 = vunpack.c.l.b16 %v321
        %v608 = vunpack.c.h.b16 %v321
        %v609 = vunpack.c.l.b16 %v322
        %v610 = vunpack.c.h.b16 %v322
        %v611 = vunpack.c.l.b16 %v323
        %v612 = vunpack.c.h.b16 %v323
        %v613 = vunpack.c.l.b16 %v324
        %v614 = vunpack.c.h.b16 %v324
        %v615 = vunpack.c.l.b16 %v325
        %v616 = vunpack.c.h.b16 %v325
        %v617 = vunpack.c.l.b16 %v326
        %v618 = vunpack.c.h.b16 %v326
        %v619 = vunpack.c.l.b16 %v327
        %v620 = vunpack.c.h.b16 %v327
        %v621 = vunpack.c.l.b16 %v328
        %v622 = vunpack.c.h.b16 %v328
        %v623 = vunpack.c.l.b16 %v329
        %v624 = vunpack.c.h.b16 %v329
        %v625 = vunpack.c.l.b16 %v330
        %v626 = vunpack.c.h.b16 %v330
        %v627 = vunpack.c.l.b16 %v331
        %v628 = vunpack.c.h.b16 %v331
        %v629 = vunpack.c.l.b16 %v332
        %v630 = vunpack.c.h.b16 %v332
        %v631 = vunpack.c.l.b16 %v333
        %v632 = vunpack.c.h.b16 %v333
        %v633 = vunpack.c.l.b16 %v334
        %v634 = vunpack.c.h.b16 %v334
        %v635 = vunpack.c.l.b16 %v335
        %v636 = vunpack.c.h.b16 %v335
        %v637 = vunpack.c.l.b16 %v336
        %v638 = vunpack.c.h.b16 %v336
        %v639 = vunpack.c.l.b16 %v337
        %v640 = vunpack.c.h.b16 %v337
        %v641 = vunpack.c.l.b16 %v338
        %v642 = vunpack.c.h.b16 %v338
        %v643 = vunpack.c.l.b16 %v339
        %v644 = vunpack.c.h.b16 %v339
        %v645 = vunpack.c.l.b16 %v340
        %v646 = vunpack.c.h.b16 %v340
        %v647 = vunpack.c.l.b16 %v341
        %v648 = vunpack.c.h.b16 %v341
        %v649 = vunpack.c.l.b16 %v342
        %v650 = vunpack.c.h.b16 %v342
        %v651 = vunpack.c.l.b16 %v343
        %v652 = vunpack.c.h.b16 %v343
        %v653 = vunpack.c.l.b16 %v344
        %v654 = vunpack.c.h.b16 %v344
        %v655 = vunpack.c.l.b16 %v345
        %v656 = vunpack.c.h.b16 %v345
        %v657 = vunpack.c.l.b16 %v346
        %v658 = vunpack.c.h.b16 %v346
        %v659 = vunpack.c.l.b16 %v347
        %v660 = vunpack.c.h.b16 %v347
        %v661 = vunpack.c.l.b16 %v348
        %v662 = vunpack.c.h.b16 %v348
        %v663 = vunpack.c.l.b16 %v349
        %v664 = vunpack.c.h.b16 %v349
        %v665 = vunpack.c.l.b16 %v350
        %v666 = vunpack.c.h.b16 %v350
        %v667 = vunpack.c.l.b16 %v351
        %v668 = vunpack.c.h.b16 %v351
        %v669 = vunpack.c.l.b16 %v352
        %v670 = vunpack.c.h.b16 %v352
        %v671 = vunpack.c.l.b16 %v353
        %v672 = vunpack.c.h.b16 %v353
        %v673 = vunpack.c.l.b16 %v354
        %v674 = vunpack.c.h.b16 %v354
        %v675 = vunpack.c.l.b16 %v355
        %v676 = vunpack.c.h.b16 %v355
        %v677 = vunpack.c.l.b16 %v356
        %v678 = vunpack.c.h.b16 %v356
        %v679 = vunpack.c.l.b16 %v357
        %v680 = vunpack.c.h.b16 %v357
        %v681 = vunpack.c.l.b16 %v358
        %v682 = vunpack.c.h.b16 %v358
        %v683 = vunpack.c.l.b16 %v359
        %v684 = vunpack.c.h.b16 %v359
        %v685 = vunpack.c.l.b16 %v360
        %v686 = vunpack.c.h.b16 %v360
        %v687 = vunpack.c.l.b16 %v361
        %v688 = vunpack.c.h.b16 %v361
        %v689 = vunpack.c.l.b16 %v362
        %v690 = vunpack.c.h.b16 %v362
        %v691 = vunpack.c.l.b16 %v363
        %v692 = vunpack.c.h.b16 %v363
        %v693 = vunpack.c.l.b16 %v364
        %v694 = vunpack.c.h.b16 %v364
        %v695 = vunpack.c.l.b16 %v365
        %v696 = vunpack.c.h.b16 %v365
        %v697 = vunpack.c.l.b16 %v366
        %v698 = vunpack.c.h.b16 %v366
        %v699 = vunpack.c.l.b16 %v367
        %v700 = vunpack.c.h.b16 %v367
        %v701 = vunpack.c.l.b16 %v368
        %v702 = vunpack.c.h.b16 %v368
        %v703 = vunpack.c.l.b16 %v369
        %v704 = vunpack.c.h.b16 %v369
        %v705 = vunpack.c.l.b16 %v370
        %v706 = vunpack.c.h.b16 %v370
        %v707 = vunpack.c.l.b16 %v371
        %v708 = vunpack.c.h.b16 %v371
        %v709 = vunpack.c.l.b16 %v372
        %v710 = vunpack.c.h.b16 %v372
        %v711 = vunpack.c.l.b16 %v373
        %v712 = vunpack.c.h.b16 %v373
        %v713 = vunpack.c.l.b16 %v374
        %v714 = vunpack.c.h.b16 %v374
        %v715 = vunpack.c.l.b16 %v375
        %v716 = vunpack.c.h.b16 %v375
        %v717 = vunpack.c.l.b16 %v376
        %v718 = vunpack.c.h.b16 %v376
        %v719 = vunpack.c.l.b16 %v377
        %v720 = vunpack.c.h.b16 %v377
        %v721 = vunpack.c.l.b16 %v378
        %v722 = vunpack.c.h.b16 %v378
        %v723 = vunpack.c.l.b16 %v379
        %v724 = vunpack.c.h.b16 %v379
        %v725 = vunpack.c.l.b16 %v380
        %v726 = vunpack.c.h.b16 %v380
        %v727 = vunpack.c.l.b16 %v381
        %v728 = vunpack.c.h.b16 %v381
        %v729 = vunpack.c.l.b16 %v382
        %v730 = vunpack.c.h.b16 %v382
        %v731 = vunpack.c.l.b16 %v383
        %v732 = vunpack.c.h.b16 %v383
        %v733 = vunpack.c.l.b16 %v384
        %v734 = vunpack.c.h.b16 %v384
        %v735 = vunpack.c.l.b16 %v385
        %v736 = vunpack.c.h.b16 %v385
        %v737 = vunpack.c.l.b16 %v386
        %v738 = vunpack.c.h.b16 %v386
        %v739 = vunpack.c.l.b16 %v387
        %v740 = vunpack.c.h.b16 %v387
        %v741 = vunpack.c.l.b16 %v388
        %v742 = vunpack.c.h.b16 %v388
        %v743 = vunpack.c.l.b16 %v389
        %v744 = vunpack.c.h.b16 %v389
        %v745 = vunpack.c.l.b16 %v390
        %v746 = vunpack.c.h.b16 %v390
        %v747 = vunpack.c.l.b16 %v391
        %v748 = vunpack.c.h.b16 %v391
        %v749 = vunpack.c.l.b16 %v392
        %v750 = vunpack.c.h.b16 %v392
        %v751 = vunpack.c.l.b16 %v393
        %v752 = vunpack.c.h.b16 %v393
        %v753 = vunpack.c.l.b16 %v394
        %v754 = vunpack.c.h.b16 %v394
        %v755 = vunpack.c.l.b16 %v395
        %v756 = vunpack.c.h.b16 %v395
        %v757 = vunpack.c.l.b16 %v396
        %v758 = vunpack.c.h.b16 %v396
        %v759 = vunpack.c.l.b16 %v397
        %v760 = vunpack.c.h.b16 %v397
        %v761 = vunpack.c.l.b16 %v398
        %v762 = vunpack.c.h.b16 %v398
        %v763 = vunpack.c.l.b16 %v399
        %v764 = vunpack.c.h.b16 %v399
        %v765 = vunpack.c.l.b16 %v400
        %v766 = vunpack.c.h.b16 %v400
        %v767 = vunpack.c.l.b16 %v401
        %v768 = vunpack.c.h.b16 %v401
        %v769 = vunpack.c.l.b16 %v402
        %v770 = vunpack.c.h.b16 %v402
        %v771 = vunpack.c.l.b16 %v403
        %v772 = vunpack.c.h.b16 %v403
        %v773 = vunpack.c.l.b16 %v404
        %v774 = vunpack.c.h.b16 %v404
        %v775 = vunpack.c.l.b16 %v405
        %v776 = vunpack.c.h.b16 %v405
        %v777 = vunpack.c.l.b16 %v406
        %v778 = vunpack.c.h.b16 %v406
        %v779 = vunpack.c.l.b16 %v407
        %v780 = vunpack.c.h.b16 %v407
        %v781 = vunpack.c.l.b16 %v408
        %v782 = vunpack.c.h.b16 %v408
        %v783 = vunpack.c.l.b16 %v409
        %v784 = vunpack.c.h.b16 %v409
        %v785 = vunpack.c.l.b16 %v410
        %v786 = vunpack.c.h.b16 %v410
        %v787 = vunpack.c.l.b16 %v411
        %v788 = vunpack.c.h.b16 %v411
        %v789 = vunpack.c.l.b16 %v412
        %v790 = vunpack.c.h.b16 %v412
        %v791 = vunpack.c.l.b16 %v413
        %v792 = vunpack.c.h.b16 %v413
        %v793 = vunpack.c.l.b16 %v414
        %v794 = vunpack.c.h.b16 %v414
        %v795 = vunpack.c.l.b16 %v415
        %v796 = vunpack.c.h.b16 %v415
        %v797 = vunpack.c.l.b16 %v416
        %v798 = vunpack.c.h.b16 %v416
        %v799 = vunpack.c.l.b16 %v417
        %v800 = vunpack.c.h.b16 %v417
        %v801 = vunpack.c.l.b16 %v418
        %v802 = vunpack.c.h.b16 %v418
        %v803 = vunpack.c.l.b16 %v419
        %v804 = vunpack.c.h.b16 %v419
        %v805 = vunpack.c.l.b16 %v420
        %v806 = vunpack.c.h.b16 %v420
        %v807 = vunpack.c.l.b16 %v421
        %v808 = vunpack.c.h.b16 %v421
        %v809 = vunpack.c.l.b16 %v422
        %v810 = vunpack.c.h.b16 %v422
        %v811 = vunpack.c.l.b16 %v423
        %v812 = vunpack.c.h.b16 %v423
        %v813 = vunpack.c.l.b16 %v424
        %v814 = vunpack.c.h.b16 %v424
        %v815 = vunpack.c.l.b16 %v425
        %v816 = vunpack.c.h.b16 %v425
        %v817 = vunpack.c.l.b16 %v426
        %v818 = vunpack.c.h.b16 %v426
        %v819 = vunpack.c.l.b16 %v427
        %v820 = vunpack.c.h.b16 %v427
        %v821 = vunpack.c.l.b16 %v428
        %v822 = vunpack.c.h.b16 %v428
        %v823 = vunpack.c.l.b16 %v429
        %v824 = vunpack.c.h.b16 %v429
        %v825 = vunpack.c.l.b16 %v430
        %v826 = vunpack.c.h.b16 %v430
        %v827 = vunpack.c.l.b16 %v431
        %v828 = vunpack.c.h.b16 %v431
        %v829 = vunpack.c.l.b16 %v432
        %v830 = vunpack.c.h.b16 %v432
        %v831 = vunpack.c.l.b16 %v433
        %v832 = vunpack.c.h.b16 %v433
        %v833 = vunpack.c.l.b16 %v434
        %v834 = vunpack.c.h.b16 %v434
        %v835 = vunpack.c.l.b16 %v435
        %v836 = vunpack.c.h.b16 %v435
        %v837 = vunpack.c.l.b16 %v436
        %v838 = vunpack.c.h.b16 %v436
        %v839 = vunpack.c.l.b16 %v437
        %v840 = vunpack.c.h.b16 %v437
        %v841 = vunpack.c.l.b16 %v438
        %v842 = vunpack.c.h.b16 %v438
        %v843 = vpack.c.b16 %v591, %v587
        %v844 = vpack.c.b16 %v592, %v588
        %v845 = vpack.c.b16 %v593, %v589
        %v846 = vpack.c.b16 %v594, %v590
        %v847 = vpack.c.b16 %v599, %v595
        %v848 = vpack.c.b16 %v600, %v596
        %v849 = vpack.c.b16 %v601, %v597
        %v850 = vpack.c.b16 %v602, %v598
        %v851 = vpack.c.b16 %v607, %v603
        %v852 = vpack.c.b16 %v608, %v604
        %v853 = vpack.c.b16 %v609, %v605
        %v854 = vpack.c.b16 %v610, %v606
        %v855 = vpack.c.b16 %v615, %v611
        %v856 = vpack.c.b16 %v616, %v612
        %v857 = vpack.c.b16 %v617, %v613
        %v858 = vpack.c.b16 %v618, %v614
        %v859 = vpack.c.b16 %v623, %v619
        %v860 = vpack.c.b16 %v624, %v620
        %v861 = vpack.c.b16 %v625, %v621
        %v862 = vpack.c.b16 %v626, %v622
        %v863 = vpack.c.b16 %v631, %v627
        %v864 = vpack.c.b16 %v632, %v628
        %v865 = vpack.c.b16 %v633, %v629
        %v866 = vpack.c.b16 %v634, %v630
        %v867 = vpack.c.b16 %v639, %v635
        %v868 = vpack.c.b16 %v640, %v636
        %v869 = vpack.c.b16 %v641, %v637
        %v870 = vpack.c.b16 %v642, %v638
        %v871 = vpack.c.b16 %v647, %v643
        %v872 = vpack.c.b16 %v648, %v644
        %v873 = vpack.c.b16 %v649, %v645
        %v874 = vpack.c.b16 %v650, %v646
        %v875 = vpack.c.b16 %v655, %v651
        %v876 = vpack.c.b16 %v656, %v652
        %v877 = vpack.c.b16 %v657, %v653
        %v878 = vpack.c.b16 %v658, %v654
        %v879 = vpack.c.b16 %v663, %v659
        %v880 = vpack.c.b16 %v664, %v660
        %v881 = vpack.c.b16 %v665, %v661
        %v882 = vpack.c.b16 %v666, %v662
        %v883 = vpack.c.b16 %v671, %v667
        %v884 = vpack.c.b16 %v672, %v668
        %v885 = vpack.c.b16 %v673, %v669
        %v886 = vpack.c.b16 %v674, %v670
        %v887 = vpack.c.b16 %v679, %v675
        %v888 = vpack.c.b16 %v680, %v676
        %v889 = vpack.c.b16 %v681, %v677
        %v890 = vpack.c.b16 %v682, %v678
        %v891 = vpack.c.b16 %v687, %v683
        %v892 = vpack.c.b16 %v688, %v684
        %v893 = vpack.c.b16 %v689, %v685
        %v894 = vpack.c.b16 %v690, %v686
        %v895 = vpack.c.b16 %v695, %v691
        %v896 = vpack.c.b16 %v696, %v692
        %v897 = vpack.c.b16 %v697, %v693
        %v898 = vpack.c.b16 %v698, %v694
        %v899 = vpack.c.b16 %v703, %v699
        %v900 = vpack.c.b16 %v704, %v700
        %v901 = vpack.c.b16 %v705, %v701
        %v902 = vpack.c.b16 %v706, %v702
        %v903 = vpack.c.b16 %v711, %v707
        %v904 = vpack.c.b16 %v712, %v708
        %v905 = vpack.c.b16 %v713, %v709
        %v906 = vpack.c.b16 %v714, %v710
        %v907 = vpack.c.b16 %v719, %v715
        %v908 = vpack.c.b16 %v720, %v716
        %v909 = vpack.c.b16 %v721, %v717
        %v910 = vpack.c.b16 %v722, %v718
        %v911 = vpack.c.b16 %v727, %v723
        %v912 = vpack.c.b16 %v728, %v724
        %v913 = vpack.c.b16 %v729, %v725
        %v914 = vpack.c.b16 %v730, %v726
        %v915 = vpack.c.b16 %v735, %v731
        %v916 = vpack.c.b16 %v736, %v732
        %v917 = vpack.c.b16 %v737, %v733
        %v918 = vpack.c.b16 %v738, %v734
        %v919 = vpack.c.b16 %v743, %v739
        %v920 = vpack.c.b16 %v744, %v740
        %v921 = vpack.c.b16 %v745, %v741
        %v922 = vpack.c.b16 %v746, %v742
        %v923 = vpack.c.b16 %v751, %v747
        %v924 = vpack.c.b16 %v752, %v748
        %v925 = vpack.c.b16 %v753, %v749
        %v926 = vpack.c.b16 %v754, %v750
        %v927 = vpack.c.b16 %v759, %v755
        %v928 = vpack.c.b16 %v760, %v756
        %v929 = vpack.c.b16 %v761, %v757
        %v930 = vpack.c.b16 %v762, %v758
        %v931 = vpack.c.b16 %v767, %v763
        %v932 = vpack.c.b16 %v768, %v764
        %v933 = vpack.c.b16 %v769, %v765
        %v934 = vpack.c.b16 %v770, %v766
        %v935 = vpack.c.b16 %v775, %v771
        %v936 = vpack.c.b16 %v776, %v772
        %v937 = vpack.c.b16 %v777, %v773
        %v938 = vpack.c.b16 %v778, %v774
        %v939 = vpack.c.b16 %v783, %v779
        %v940 = vpack.c.b16 %v784, %v780
        %v941 = vpack.c.b16 %v785, %v781
        %v942 = vpack.c.b16 %v786, %v782
        %v943 = vpack.c.b16 %v791, %v787
        %v944 = vpack.c.b16 %v792, %v788
        %v945 = vpack.c.b16 %v793, %v789
        %v946 = vpack.c.b16 %v794, %v790
        %v947 = vpack.c.b16 %v799, %v795
        %v948 = vpack.c.b16 %v800, %v796
        %v949 = vpack.c.b16 %v801, %v797
        %v950 = vpack.c.b16 %v802, %v798
        %v951 = vpack.c.b16 %v807, %v803
        %v952 = vpack.c.b16 %v808, %v804
        %v953 = vpack.c.b16 %v809, %v805
        %v954 = vpack.c.b16 %v810, %v806
        %v955 = vpack.c.b16 %v815, %v811
        %v956 = vpack.c.b16 %v816, %v812
        %v957 = vpack.c.b16 %v817, %v813
        %v958 = vpack.c.b16 %v818, %v814
        %v959 = vpack.c.b16 %v823, %v819
        %v960 = vpack.c.b16 %v824, %v820
        %v961 = vpack.c.b16 %v825, %v821
        %v962 = vpack.c.b16 %v826, %v822
        %v963 = vpack.c.b16 %v831, %v827
        %v964 = vpack.c.b16 %v832, %v828
        %v965 = vpack.c.b16 %v833, %v829
        %v966 = vpack.c.b16 %v834, %v830
        %v967 = vpack.c.b16 %v839, %v835
        %v968 = vpack.c.b16 %v840, %v836
        %v969 = vpack.c.b16 %v841, %v837
        %v970 = vpack.c.b16 %v842, %v838
        %1099 = vmatprep.subr.bf16.mxu0 %v872
        %1100 = vmatpush1.bf16.msra.mxu0 %v871
        %1101 = vmatprep.subr.bf16.mxu0 %v868
        %1102 = vmatpush1.bf16.msra.mxu0 %v867
        %1103 = vmatprep.subr.bf16.mxu0 %v864
        %1104 = vmatpush1.bf16.msra.mxu0 %v863
        %1105 = vmatprep.subr.bf16.mxu0 %v860
        %1106 = vmatpush1.bf16.msra.mxu0 %v859
        %1107 = vmatprep.subr.bf16.mxu0 %v856
        %1108 = vmatpush1.bf16.msra.mxu0 %v855
        %1109 = vmatprep.subr.bf16.mxu0 %v852
        %1110 = vmatpush1.bf16.msra.mxu0 %v851
        %1111 = vmatprep.subr.bf16.mxu0 %v848
        %1112 = vmatpush1.bf16.msra.mxu0 %v847
        %1113 = vmatprep.subr.bf16.mxu0 %v844
        %1114 = vmatpush1.bf16.msra.mxu0 %v843
        %1115 = vmatprep.subr.bf16.mxu0 %v904
        %1116 = vmatpush2.bf16.msra.mxu0 %v903
        %1117 = vmatprep.subr.bf16.mxu0 %v900
        %1118 = vmatpush2.bf16.msra.mxu0 %v899
        %1119 = vmatprep.subr.bf16.mxu0 %v896
        %1120 = vmatpush2.bf16.msra.mxu0 %v895
        %1121 = vmatprep.subr.bf16.mxu0 %v892
        %1122 = vmatpush2.bf16.msra.mxu0 %v891
        %1123 = vmatprep.subr.bf16.mxu0 %v888
        %1124 = vmatpush2.bf16.msra.mxu0 %v887
        %1125 = vmatprep.subr.bf16.mxu0 %v884
        %1126 = vmatpush2.bf16.msra.mxu0 %v883
        %1127 = vmatprep.subr.bf16.mxu0 %v880
        %1128 = vmatpush2.bf16.msra.mxu0 %v879
        %1129 = vmatprep.subr.bf16.mxu0 %v876
        %1130 = vmatpush2.bf16.msra.mxu0 %v875
        %1131 = vmatprep.mubr.bf16.mxu0 %v452
        %1132 = vmatmul.mubr.bf16.gmra.mxu0 %v451
        %v1133 = vpop.f32.mrf.mxu0
        %v1134 = vadd.f32 0.0, %v1133
        %v1135 = vpop.f32.mrf.mxu0
        %v1136 = vadd.f32 0.0, %v1135
        %v1137 = vpop.f32.mrf.mxu0
        %v1138 = vadd.f32 0.0, %v1137
        %v1139 = vpop.f32.mrf.mxu0
        %v1140 = vadd.f32 0.0, %v1139
        %1141 = vdwg.mxu0
        %1142 = vmatprep.subr.bf16.mxu0 %v936
        %1143 = vmatpush1.bf16.msra.mxu0 %v935
        %1144 = vmatprep.subr.bf16.mxu0 %v932
        %1145 = vmatpush1.bf16.msra.mxu0 %v931
        %1146 = vmatprep.subr.bf16.mxu0 %v928
        %1147 = vmatpush1.bf16.msra.mxu0 %v927
        %1148 = vmatprep.subr.bf16.mxu0 %v924
        %1149 = vmatpush1.bf16.msra.mxu0 %v923
        %1150 = vmatprep.subr.bf16.mxu0 %v920
        %1151 = vmatpush1.bf16.msra.mxu0 %v919
        %1152 = vmatprep.subr.bf16.mxu0 %v916
        %1153 = vmatpush1.bf16.msra.mxu0 %v915
        %1154 = vmatprep.subr.bf16.mxu0 %v912
        %1155 = vmatpush1.bf16.msra.mxu0 %v911
        %1156 = vmatprep.subr.bf16.mxu0 %v908
        %1157 = vmatpush1.bf16.msra.mxu0 %v907
        %1158 = vmatprep.subr.bf16.mxu0 %v968
        %1159 = vmatpush2.bf16.msra.mxu0 %v967
        %1160 = vmatprep.subr.bf16.mxu0 %v964
        %1161 = vmatpush2.bf16.msra.mxu0 %v963
        %1162 = vmatprep.subr.bf16.mxu0 %v960
        %1163 = vmatpush2.bf16.msra.mxu0 %v959
        %1164 = vmatprep.subr.bf16.mxu0 %v956
        %1165 = vmatpush2.bf16.msra.mxu0 %v955
        %1166 = vmatprep.subr.bf16.mxu0 %v952
        %1167 = vmatpush2.bf16.msra.mxu0 %v951
        %1168 = vmatprep.subr.bf16.mxu0 %v948
        %1169 = vmatpush2.bf16.msra.mxu0 %v947
        %1170 = vmatprep.subr.bf16.mxu0 %v944
        %1171 = vmatpush2.bf16.msra.mxu0 %v943
        %1172 = vmatprep.subr.bf16.mxu0 %v940
        %1173 = vmatpush2.bf16.msra.mxu0 %v939
        %1174 = vmatprep.mubr.bf16.mxu0 %v454
        %1175 = vmatmul.mubr.bf16.gmra.mxu0 %v453
        %v1176 = vpop.f32.mrf.mxu0
        %v1177 = vadd.f32 %v1134, %v1176
        %v1178 = vpop.f32.mrf.mxu0
        %v1179 = vadd.f32 %v1136, %v1178
        %v1180 = vpop.f32.mrf.mxu0
        %v1181 = vadd.f32 %v1138, %v1180
        %v1182 = vpop.f32.mrf.mxu0
        %v1183 = vadd.f32 %v1140, %v1182
        %1184 = vdwg.mxu0
        %1185 = vmatprep.subr.bf16.mxu0 %v874
        %1186 = vmatpush1.bf16.msra.mxu0 %v873
        %1187 = vmatprep.subr.bf16.mxu0 %v870
        %1188 = vmatpush1.bf16.msra.mxu0 %v869
        %1189 = vmatprep.subr.bf16.mxu0 %v866
        %1190 = vmatpush1.bf16.msra.mxu0 %v865
        %1191 = vmatprep.subr.bf16.mxu0 %v862
        %1192 = vmatpush1.bf16.msra.mxu0 %v861
        %1193 = vmatprep.subr.bf16.mxu0 %v858
        %1194 = vmatpush1.bf16.msra.mxu0 %v857
        %1195 = vmatprep.subr.bf16.mxu0 %v854
        %1196 = vmatpush1.bf16.msra.mxu0 %v853
        %1197 = vmatprep.subr.bf16.mxu0 %v850
        %1198 = vmatpush1.bf16.msra.mxu0 %v849
        %1199 = vmatprep.subr.bf16.mxu0 %v846
        %1200 = vmatpush1.bf16.msra.mxu0 %v845
        %1201 = vmatprep.subr.bf16.mxu0 %v906
        %1202 = vmatpush2.bf16.msra.mxu0 %v905
        %1203 = vmatprep.subr.bf16.mxu0 %v902
        %1204 = vmatpush2.bf16.msra.mxu0 %v901
        %1205 = vmatprep.subr.bf16.mxu0 %v898
        %1206 = vmatpush2.bf16.msra.mxu0 %v897
        %1207 = vmatprep.subr.bf16.mxu0 %v894
        %1208 = vmatpush2.bf16.msra.mxu0 %v893
        %1209 = vmatprep.subr.bf16.mxu0 %v890
        %1210 = vmatpush2.bf16.msra.mxu0 %v889
        %1211 = vmatprep.subr.bf16.mxu0 %v886
        %1212 = vmatpush2.bf16.msra.mxu0 %v885
        %1213 = vmatprep.subr.bf16.mxu0 %v882
        %1214 = vmatpush2.bf16.msra.mxu0 %v881
        %1215 = vmatprep.subr.bf16.mxu0 %v878
        %1216 = vmatpush2.bf16.msra.mxu0 %v877
        %1217 = vmatprep.mubr.bf16.mxu0 %v452
        %1218 = vmatmul.mubr.bf16.gmra.mxu0 %v451
        %v1219 = vpop.f32.mrf.mxu0
        %v1220 = vadd.f32 0.0, %v1219
        %v1221 = vpop.f32.mrf.mxu0
        %v1222 = vadd.f32 0.0, %v1221
        %v1223 = vpop.f32.mrf.mxu0
        %v1224 = vadd.f32 0.0, %v1223
        %v1225 = vpop.f32.mrf.mxu0
        %v1226 = vadd.f32 0.0, %v1225
        %1227 = vdwg.mxu0
        %1228 = vmatprep.subr.bf16.mxu0 %v938
        %1229 = vmatpush1.bf16.msra.mxu0 %v937
        %1230 = vmatprep.subr.bf16.mxu0 %v934
        %1231 = vmatpush1.bf16.msra.mxu0 %v933
        %1232 = vmatprep.subr.bf16.mxu0 %v930
        %1233 = vmatpush1.bf16.msra.mxu0 %v929
        %1234 = vmatprep.subr.bf16.mxu0 %v926
        %1235 = vmatpush1.bf16.msra.mxu0 %v925
        %1236 = vmatprep.subr.bf16.mxu0 %v922
        %1237 = vmatpush1.bf16.msra.mxu0 %v921
        %1238 = vmatprep.subr.bf16.mxu0 %v918
        %1239 = vmatpush1.bf16.msra.mxu0 %v917
        %1240 = vmatprep.subr.bf16.mxu0 %v914
        %1241 = vmatpush1.bf16.msra.mxu0 %v913
        %1242 = vmatprep.subr.bf16.mxu0 %v910
        %1243 = vmatpush1.bf16.msra.mxu0 %v909
        %1244 = vmatprep.subr.bf16.mxu0 %v970
        %1245 = vmatpush2.bf16.msra.mxu0 %v969
        %1246 = vmatprep.subr.bf16.mxu0 %v966
        %1247 = vmatpush2.bf16.msra.mxu0 %v965
        %1248 = vmatprep.subr.bf16.mxu0 %v962
        %1249 = vmatpush2.bf16.msra.mxu0 %v961
        %1250 = vmatprep.subr.bf16.mxu0 %v958
        %1251 = vmatpush2.bf16.msra.mxu0 %v957
        %1252 = vmatprep.subr.bf16.mxu0 %v954
        %1253 = vmatpush2.bf16.msra.mxu0 %v953
        %1254 = vmatprep.subr.bf16.mxu0 %v950
        %1255 = vmatpush2.bf16.msra.mxu0 %v949
        %1256 = vmatprep.subr.bf16.mxu0 %v946
        %1257 = vmatpush2.bf16.msra.mxu0 %v945
        %1258 = vmatprep.subr.bf16.mxu0 %v942
        %1259 = vmatpush2.bf16.msra.mxu0 %v941
        %1260 = vmatprep.mubr.bf16.mxu0 %v454
        %1261 = vmatmul.mubr.bf16.gmra.mxu0 %v453
        %v1262 = vpop.f32.mrf.mxu0
        %v1263 = vadd.f32 %v1220, %v1262
        %v1264 = vpop.f32.mrf.mxu0
        %v1265 = vadd.f32 %v1222, %v1264
        %v1266 = vpop.f32.mrf.mxu0
        %v1267 = vadd.f32 %v1224, %v1266
        %v1268 = vpop.f32.mrf.mxu0
        %v1269 = vadd.f32 %v1226, %v1268
        %1270 = vdwg.mxu0
        %v1271 = vadd.f32 %v299, %v1177
        %v1272 = vadd.f32 %v300, %v1179
        %v1273 = vadd.f32 %v301, %v1263
        %v1274 = vadd.f32 %v302, %v1265
        %v1275 = vadd.f32 %v303, %v1181
        %v1276 = vadd.f32 %v304, %v1183
        %v1277 = vadd.f32 %v305, %v1267
        %v1278 = vadd.f32 %v306, %v1269
        %1279 = vst [vmem:[#allocation2] sm:$0xff] %v1271
        %1280 = vst [vmem:[#allocation2 + $0x8] sm:$0xff] %v1272
        %1281 = vst [vmem:[#allocation2 + $0x10] sm:$0xff] %v1273
        %1282 = vst [vmem:[#allocation2 + $0x18] sm:$0xff] %v1274
        %1283 = vst [vmem:[#allocation2 + $0x20] sm:$0xff] %v1275
        %1284 = vst [vmem:[#allocation2 + $0x28] sm:$0xff] %v1276
        %1285 = vst [vmem:[#allocation2 + $0x30] sm:$0xff] %v1277
        %1286 = vst [vmem:[#allocation2 + $0x38] sm:$0xff] %v1278
        %p1287 = scmp.eq.s32.totalorder %s24, 17
        // Predicated region
        $region64: #{forward.13} parent=50 // pred_check
          %p1288 = pneg %p1287
        $region65: #{forward.13} parent=50 // pred_check_branch
          %1290 = sbr.rel (%p1288) target = $region67
        $region66: #{forward.13} parent=50 // pred_region
          %v1291 = vld [vmem:[#allocation2] sm:$0xff]
          %v1292 = vld [vmem:[#allocation2 + $0x8] sm:$0xff]
          %v1293 = vld [vmem:[#allocation2 + $0x10] sm:$0xff]
          %v1294 = vld [vmem:[#allocation2 + $0x18] sm:$0xff]
          %v1295 = vld [vmem:[#allocation2 + $0x20] sm:$0xff]
          %v1296 = vld [vmem:[#allocation2 + $0x28] sm:$0xff]
          %v1297 = vld [vmem:[#allocation2 + $0x30] sm:$0xff]
          %v1298 = vld [vmem:[#allocation2 + $0x38] sm:$0xff]
          %v1299 = vld [vmem:[%s283] sm:$0xf]
          %v1301 = vlaneseq
          %v1302 = vshrl.u32 %v1301, 7
          %v1303 = vsub.s32 0, %v1302
          %v1304 = vrot.slane %v1299, %v1303
          %v1305 = vlaneseq
          %v1306 = vshrl.u32 %v1305, 7
          %v1307 = vsub.s32 1, %v1306
          %v1308 = vrot.slane %v1299, %v1307
          %v1309 = vlaneseq
          %v1310 = vshrl.u32 %v1309, 7
          %v1311 = vsub.s32 2, %v1310
          %v1312 = vrot.slane %v1299, %v1311
          %v1313 = vlaneseq
          %v1314 = vshrl.u32 %v1313, 7
          %v1315 = vsub.s32 3, %v1314
          %v1316 = vrot.slane %v1299, %v1315
          %v1321 = vadd.f32 %v1291, %v1304
          %v1322 = vadd.f32 %v1292, %v1308
          %v1323 = vadd.f32 %v1293, %v1312
          %v1324 = vadd.f32 %v1294, %v1316
          %v1325 = vadd.f32 %v1295, %v1304
          %v1326 = vadd.f32 %v1296, %v1308
          %v1327 = vadd.f32 %v1297, %v1312
          %v1328 = vadd.f32 %v1298, %v1316
          %v1329 = vmax.f32 %v1321, 0.0
          %v1330 = vmax.f32 %v1322, 0.0
          %v1331 = vmax.f32 %v1323, 0.0
          %v1332 = vmax.f32 %v1324, 0.0
          %v1333 = vmax.f32 %v1325, 0.0
          %v1334 = vmax.f32 %v1326, 0.0
          %v1335 = vmax.f32 %v1327, 0.0
          %v1336 = vmax.f32 %v1328, 0.0
          %v1337 = vpack.c.bf16 %v1333, %v1329
          %v1338 = vpack.c.bf16 %v1334, %v1330
          %v1339 = vpack.c.bf16 %v1335, %v1331
          %v1340 = vpack.c.bf16 %v1336, %v1332
          %v1345 = vunpack.c.l.b16 %v1337
          %v1346 = vunpack.c.l.b16 %v1338
          %v1347 = vunpack.c.l.b16 %v1339
          %v1348 = vunpack.c.l.b16 %v1340
          %v1349 = vunpack.c.h.b16 %v1337
          %v1350 = vunpack.c.h.b16 %v1338
          %v1351 = vunpack.c.h.b16 %v1339
          %v1352 = vunpack.c.h.b16 %v1340
          %v1353 = vpack.c.b16 %v1346, %v1345
          %v1354 = vpack.c.b16 %v1348, %v1347
          %v1355 = vpack.c.b16 %v1350, %v1349
          %v1356 = vpack.c.b16 %v1352, %v1351
          %1361 = vst [vmem:[%s275] sm:$0xff] %v1353
          %1362 = vst [vmem:[%s275 + $0x8] sm:$0xff] %v1354
          %1363 = vst [vmem:[%s275 + $0x10] sm:$0xff] %v1355
          %1364 = vst [vmem:[%s275 + $0x18] sm:$0xff] %v1356
        $region67: #{forward.13} parent=50 // pred_fallthru
          _
        %s1365 = sand.u32 %s128, 1
        %s1366 = sand.u32 %s128, 1
        %s1367 = smul.addr %s1366, 32
        %s1368 = scalar_lea.vmem [#allocation6], %s1367
        // Predicated region
        $region68: #{forward.13} parent=50 // pred_check
          %p1369 = pneg %p138
        $region69: #{forward.13} parent=50 // pred_check_branch
          %1371 = sbr.rel (%p1369) target = $region71
        $region70: #{forward.13} parent=50 // pred_region
          %s1372 = smul.u32 2, %s22
          %s1373 = smul.u32 4, %s23
          %s1374 = smul.addr %s1372, 32
          %s1375 = sadd.s32 %s1373, %s1374
          %s1376 = smul.addr %s1375, 4
          %s1377 = scalar_lea.vmem %s3, %s1376
          // Predicated region
          $region72: #{forward.13} parent=70 // pred_check
            _
          $region73: #{forward.13} parent=70 // pred_check_branch
            %1379 = sbr.rel (0) target = $region75
          $region74: #{forward.13} parent=70 // pred_region
            // Predicated region
            $region76: #{forward.13} parent=74 // pred_check
              _
            $region77: #{forward.13} parent=74 // pred_check_branch
              %1381 = sbr.rel (0) target = $region79
            $region78: #{forward.13} parent=74 // pred_region
              loop: start=0, step=1, limit=1
              $region80: #{forward.13} parent=78 // loop_pre_header
                _
              $region81: #{forward.13} parent=78 // loop_header
                %s1383 = sphi 0, %s1387
                %p1384 = scmp.ge.s32.totalorder %s1383, 1
                %s1388 = sphi %s1368, %s1368
                %s1389 = sphi %s1377, %s1377
              $region82: #{forward.13} parent=78 // loop_header_branch
                %1386 = sbr.rel (%p1384) target = $region86
              $region83: #{forward.13} parent=78 // loop_body
                %v1390 = vld [vmem:[%s1388] sm:$0xff]
                %1391 = vst [vmem:[%s1389] sm:$0xff] %v1390
                %v1392 = vld [vmem:[%s1388 + $0x8] sm:$0xff]
                %1393 = vst [vmem:[%s1389 + $0x8] sm:$0xff] %v1392
                %v1394 = vld [vmem:[%s1388 + $0x10] sm:$0xff]
                %1395 = vst [vmem:[%s1389 + $0x80] sm:$0xff] %v1394
                %v1396 = vld [vmem:[%s1388 + $0x18] sm:$0xff]
                %1397 = vst [vmem:[%s1389 + $0x88] sm:$0xff] %v1396
              $region84: #{forward.13} parent=78 // loop_footer
                %s1387 = sadd.s32 1, %s1383
              $region85: #{forward.13} parent=78 // loop_footer_branch
                %1382 = sbr.rel target = $region81
              $region86: #{forward.13} parent=78 // loop_exit
                _
            $region79: #{forward.13} parent=74 // pred_fallthru
              _
            // Predicated region
            $region87: #{forward.13} parent=74 // pred_check
              _
            $region88: #{forward.13} parent=74 // pred_check_branch
              %1399 = sbr.rel target = $region90
            $region89: #{forward.13} parent=74 // pred_region
              _
            $region90: #{forward.13} parent=74 // pred_fallthru
              _
          $region75: #{forward.13} parent=70 // pred_fallthru
            _
          %1400 = vnop
        $region71: #{forward.13} parent=50 // pred_fallthru
          _
      $region51: #{forward.13} parent=5 // pred_fallthru
        _
      %p1401 = scmp.le.s32.totalorder 2, %s12
      // Predicated region
      $region91: #{forward.13} parent=5 // pred_check
        %p1402 = pneg %p1401
      $region92: #{forward.13} parent=5 // pred_check_branch
        %1404 = sbr.rel (%p1402) target = $region94
      $region93: #{forward.13} parent=5 // pred_region
        %s1405 = ssub.s32 %s12, 2
        // Predicated region
        $region95: #{forward.13} parent=93 // pred_check
          %p1406 = pneg %p144
        $region96: #{forward.13} parent=93 // pred_check_branch
          %1408 = sbr.rel (%p1406) target = $region98
        $region97: #{forward.13} parent=93 // pred_region
          %s1409 = sand.u32 %s129, 1
          %s1410 = sand.u32 %s129, 1
          %s1411 = smul.addr %s1410, 32
          %s1412 = scalar_lea.vmem [#allocation6], %s1411
        $region98: #{forward.13} parent=93 // pred_fallthru
          _
      $region94: #{forward.13} parent=5 // pred_fallthru
        _
    $region6: #{forward.13} parent=1 // loop_footer
      %s16 = sadd.s32 1, %s12
    $region7: #{forward.13} parent=1 // loop_footer_branch
      %11 = sbr.rel target = $region3
    $region8: #{forward.13} parent=1 // loop_exit
      _
    %1413 = vsyncpa [#allocation5], 1
    %s1414 = scalar_lea.sflag [#allocation5], 1
    %1415 = vsyncpa %s1414, 1

// kernel: forward.14
$region0: #{forward.14}
  #allocation0 [shape = 'u32[]', space=smem, size = 0x4, offset = 0x4, fixed_abs, tag = 'smem constant byte address 0x4 - core index']
  #allocation1 [shape = 'u32[144,128]{1,0:T(1,128)}', space=vmem, size = 0x12000, scoped, tag = 'internal scratch']
  #allocation2 [shape = 'f32[16,512]{1,0:T(8,128)}', space=vmem, size = 0x8000, scoped, tag = 'scratch operand']
  %s0 = inlined_call_operand.vmem [shape: bf16[16,4096], index: 0, kind: input, shape index: {}]
  %s1 = inlined_call_operand.vmem [shape: bf16[4096,4096], index: 1, kind: input, shape index: {}]
  %s2 = inlined_call_operand.vmem [shape: f32[1,4096], index: 2, kind: input, shape index: {}]
  %s3 = inlined_call_operand.vmem [shape: bf16[16,4096], index: 3, kind: output, shape index: {}]
  %s4 = sld [smem:[#allocation0]]
  $region118: #{forward.14} parent=0
    _
  %s6 = ssub.s32 1, %s4
  %s7 = scalar_select 0, %s6, %s4
  $region1: #{forward.14} parent=0
    #allocation3 [shape = 'u8[32768]{0}', space=vmem, size = 0x8000, scoped, tag = 'input window, operand 0']
    #allocation4 [shape = 'u8[1048576]{0}', space=vmem, size = 0x100000, scoped, tag = 'input window, operand 1']
    #allocation5 [shape = 'u8[32768]{0}', space=vmem, size = 0x8000, scoped, tag = 'output window, operand 0']
    loop: start=0, step=1, limit=66
    $region2: #{forward.14} parent=1 // loop_pre_header
      _
    $region3: #{forward.14} parent=1 // loop_header
      %s9 = sphi 0, %s13
      %p10 = scmp.ge.s32.totalorder %s9, 66
      %s16 = sphi 0, %s35
      %s17 = sphi 0, %s31
      %s18 = sphi 0, %s27
      %s19 = sphi 0, %s16
      %s20 = sphi 0, %s17
      %s21 = sphi 0, %s18
      %s22 = sphi 0, %s19
      %s23 = sphi 0, %s20
      %s24 = sphi 0, %s21
      %s40 = sphi 0, %s42
      %s43 = sphi 0, %s40
      %s44 = sphi 0, %s43
      %s60 = sphi 0, %s44
      %s68 = sphi 0, %s70
      %s71 = sphi 0, %s68
      %s72 = sphi 0, %s71
      %s88 = sphi 0, %s72
      %s94 = sphi 0, %s96
      %s97 = sphi 0, %s94
      %s98 = sphi 0, %s97
      %s114 = sphi 0, %s98
      %s122 = sphi 0, %s124
      %s125 = sphi 0, %s122
      %s126 = sphi 0, %s125
      %s142 = sphi 0, %s126
    $region4: #{forward.14} parent=1 // loop_header_branch
      %12 = sbr.rel (%p10) target = $region8
    $region5: #{forward.14} parent=1 // loop_body
      %s14 = ssub.s32 %s9, 1
      %s15 = ssub.s32 %s9, 2
      %s25 = sadd.s32 1, %s18
      %p26 = scmp.ge.s32.totalorder %s25, 8
      %s27 = scalar_select %p26, 0, %s25
      %s28 = sadd.s32 1, %s17
      %s29 = scalar_select %p26, %s28, %s17
      %p30 = scmp.ge.s32.totalorder %s29, 8
      %s31 = scalar_select %p30, 0, %s29
      %s32 = sadd.s32 1, %s16
      %s33 = scalar_select %p30, %s32, %s16
      %p34 = scmp.ge.s32.totalorder %s33, 1
      %s35 = scalar_select %p34, 0, %s33
      %s36 = ssub.s32 %s16, %s35
      %s37 = ssub.s32 %s18, %s27
      %s38 = sor.u32 %s36, %s37
      %p39 = scmp.eq.s32.totalorder %s38, 0
      %s41 = sadd.s32 %s40, 1
      %s42 = scalar_select %p39, %s40, %s41
      %p45 = pneg %p39
      %p46 = scmp.eq.s32.totalorder %s9, 63
      %p47 = por %p45, %p46
      %p48 = scmp.ne.s32.totalorder %s40, %s43
      %p49 = scmp.eq.s32.totalorder %s9, 0
      %p50 = por %p48, %p49
      %p51 = scmp.ne.s32.totalorder %s40, %s43
      %p52 = scmp.eq.s32.totalorder %s14, 63
      %p53 = por %p51, %p52
      %p54 = scmp.ne.s32.totalorder %s43, %s44
      %p55 = scmp.eq.s32.totalorder %s14, 0
      %p56 = por %p54, %p55
      %p57 = scmp.ne.s32.totalorder %s43, %s44
      %p58 = scmp.eq.s32.totalorder %s15, 63
      %p59 = por %p57, %p58
      %p61 = scmp.ne.s32.totalorder %s44, %s60
      %p62 = scmp.eq.s32.totalorder %s15, 0
      %p63 = por %p61, %p62
      %s64 = ssub.s32 %s18, %s27
      %s65 = ssub.s32 %s17, %s31
      %s66 = sor.u32 %s64, %s65
      %p67 = scmp.eq.s32.totalorder %s66, 0
      %s69 = sadd.s32 %s68, 1
      %s70 = scalar_select %p67, %s68, %s69
      %p73 = pneg %p67
      %p74 = scmp.eq.s32.totalorder %s9, 63
      %p75 = por %p73, %p74
      %p76 = scmp.ne.s32.totalorder %s68, %s71
      %p77 = scmp.eq.s32.totalorder %s9, 0
      %p78 = por %p76, %p77
      %p79 = scmp.ne.s32.totalorder %s68, %s71
      %p80 = scmp.eq.s32.totalorder %s14, 63
      %p81 = por %p79, %p80
      %p82 = scmp.ne.s32.totalorder %s71, %s72
      %p83 = scmp.eq.s32.totalorder %s14, 0
      %p84 = por %p82, %p83
      %p85 = scmp.ne.s32.totalorder %s71, %s72
      %p86 = scmp.eq.s32.totalorder %s15, 63
      %p87 = por %p85, %p86
      %p89 = scmp.ne.s32.totalorder %s72, %s88
      %p90 = scmp.eq.s32.totalorder %s15, 0
      %p91 = por %p89, %p90
      %s92 = ssub.s32 %s17, %s31
      %p93 = scmp.eq.s32.totalorder %s92, 0
      %s95 = sadd.s32 %s94, 1
      %s96 = scalar_select %p93, %s94, %s95
      %p99 = pneg %p93
      %p100 = scmp.eq.s32.totalorder %s9, 63
      %p101 = por %p99, %p100
      %p102 = scmp.ne.s32.totalorder %s94, %s97
      %p103 = scmp.eq.s32.totalorder %s9, 0
      %p104 = por %p102, %p103
      %p105 = scmp.ne.s32.totalorder %s94, %s97
      %p106 = scmp.eq.s32.totalorder %s14, 63
      %p107 = por %p105, %p106
      %p108 = scmp.ne.s32.totalorder %s97, %s98
      %p109 = scmp.eq.s32.totalorder %s14, 0
      %p110 = por %p108, %p109
      %p111 = scmp.ne.s32.totalorder %s97, %s98
      %p112 = scmp.eq.s32.totalorder %s15, 63
      %p113 = por %p111, %p112
      %p115 = scmp.ne.s32.totalorder %s98, %s114
      %p116 = scmp.eq.s32.totalorder %s15, 0
      %p117 = por %p115, %p116
      %s118 = ssub.s32 %s16, %s35
      %s119 = ssub.s32 %s17, %s31
      %s120 = sor.u32 %s118, %s119
      %p121 = scmp.eq.s32.totalorder %s120, 0
      %s123 = sadd.s32 %s122, 1
      %s124 = scalar_select %p121, %s122, %s123
      %p127 = pneg %p121
      %p128 = scmp.eq.s32.totalorder %s9, 63
      %p129 = por %p127, %p128
      %p130 = scmp.ne.s32.totalorder %s122, %s125
      %p131 = scmp.eq.s32.totalorder %s9, 0
      %p132 = por %p130, %p131
      %p133 = scmp.ne.s32.totalorder %s122, %s125
      %p134 = scmp.eq.s32.totalorder %s14, 63
      %p135 = por %p133, %p134
      %p136 = scmp.ne.s32.totalorder %s125, %s126
      %p137 = scmp.eq.s32.totalorder %s14, 0
      %p138 = por %p136, %p137
      %p139 = scmp.ne.s32.totalorder %s125, %s126
      %p140 = scmp.eq.s32.totalorder %s15, 63
      %p141 = por %p139, %p140
      %p143 = scmp.ne.s32.totalorder %s126, %s142
      %p144 = scmp.eq.s32.totalorder %s15, 0
      %p145 = por %p143, %p144
      %p146 = scmp.le.s32.totalorder 1, %s9
      %p147 = scmp.lt.s32.totalorder %s9, 65
      %p148 = pnand %p146, %p147
      %p149 = pneg %p148
      // Predicated region
      $region9: #{forward.14} parent=5 // pred_check
        _
      $region10: #{forward.14} parent=5 // pred_check_branch
        %151 = sbr.rel (%p148) target = $region12
      $region11: #{forward.14} parent=5 // pred_region
        %s152 = ssub.s32 %s9, 1
      $region12: #{forward.14} parent=5 // pred_fallthru
        _
      %p153 = scmp.lt.s32.totalorder %s9, 64
      // Predicated region
      $region13: #{forward.14} parent=5 // pred_check
        %p154 = pneg %p153
      $region14: #{forward.14} parent=5 // pred_check_branch
        %156 = sbr.rel (%p154) target = $region16
      $region15: #{forward.14} parent=5 // pred_region
        // Predicated region
        $region17: #{forward.14} parent=15 // pred_check
          %p157 = pneg %p50
        $region18: #{forward.14} parent=15 // pred_check_branch
          %159 = sbr.rel (%p157) target = $region20
        $region19: #{forward.14} parent=15 // pred_region
          %s160 = sand.u32 %s40, 1
          %s161 = sand.u32 %s40, 1
          %s162 = smul.addr %s161, 32
          %s163 = scalar_lea.vmem [#allocation3], %s162
          %s164 = smul.u32 2, %s16
          %s165 = smul.u32 4, %s18
          %s166 = smul.addr %s164, 32
          %s167 = sadd.s32 %s165, %s166
          %s168 = smul.addr %s167, 4
          %s169 = scalar_lea.vmem %s0, %s168
          // Predicated region
          $region21: #{forward.14} parent=19 // pred_check
            _
          $region22: #{forward.14} parent=19 // pred_check_branch
            %171 = sbr.rel (0) target = $region24
          $region23: #{forward.14} parent=19 // pred_region
            // Predicated region
            $region25: #{forward.14} parent=23 // pred_check
              _
            $region26: #{forward.14} parent=23 // pred_check_branch
              %173 = sbr.rel (0) target = $region28
            $region27: #{forward.14} parent=23 // pred_region
              loop: start=0, step=1, limit=1
              $region29: #{forward.14} parent=27 // loop_pre_header
                _
              $region30: #{forward.14} parent=27 // loop_header
                %s175 = sphi 0, %s179
                %p176 = scmp.ge.s32.totalorder %s175, 1
                %s180 = sphi %s169, %s169
                %s181 = sphi %s163, %s163
              $region31: #{forward.14} parent=27 // loop_header_branch
                %178 = sbr.rel (%p176) target = $region35
              $region32: #{forward.14} parent=27 // loop_body
                %v182 = vld [vmem:[%s180] sm:$0xff]
                %183 = vst [vmem:[%s181] sm:$0xff] %v182
                %v184 = vld [vmem:[%s180 + $0x8] sm:$0xff]
                %185 = vst [vmem:[%s181 + $0x8] sm:$0xff] %v184
                %v186 = vld [vmem:[%s180 + $0x80] sm:$0xff]
                %187 = vst [vmem:[%s181 + $0x10] sm:$0xff] %v186
                %v188 = vld [vmem:[%s180 + $0x88] sm:$0xff]
                %189 = vst [vmem:[%s181 + $0x18] sm:$0xff] %v188
              $region33: #{forward.14} parent=27 // loop_footer
                %s179 = sadd.s32 1, %s175
              $region34: #{forward.14} parent=27 // loop_footer_branch
                %174 = sbr.rel target = $region30
              $region35: #{forward.14} parent=27 // loop_exit
                _
            $region28: #{forward.14} parent=23 // pred_fallthru
              _
            // Predicated region
            $region36: #{forward.14} parent=23 // pred_check
              _
            $region37: #{forward.14} parent=23 // pred_check_branch
              %191 = sbr.rel target = $region39
            $region38: #{forward.14} parent=23 // pred_region
              _
            $region39: #{forward.14} parent=23 // pred_fallthru
              _
          $region24: #{forward.14} parent=19 // pred_fallthru
            _
          %192 = vnop
        $region20: #{forward.14} parent=15 // pred_fallthru
          _
        // Predicated region
        $region40: #{forward.14} parent=15 // pred_check
          %p193 = pneg %p78
        $region41: #{forward.14} parent=15 // pred_check_branch
          %195 = sbr.rel (%p193) target = $region43
        $region42: #{forward.14} parent=15 // pred_region
          %s196 = sand.u32 %s68, 1
          %s197 = sand.u32 %s68, 1
          %s198 = smul.addr %s197, 1024
          %s199 = scalar_lea.vmem [#allocation4], %s198
          %s200 = smul.u32 64, %s18
          %s201 = smul.u32 4, %s17
          %s202 = smul.addr %s200, 32
          %s203 = sadd.s32 %s201, %s202
          %s204 = smul.addr %s203, 4
          %s205 = scalar_lea.vmem %s1, %s204
          // Predicated region
          $region44: #{forward.14} parent=42 // pred_check
            _
          $region45: #{forward.14} parent=42 // pred_check_branch
            %207 = sbr.rel (0) target = $region47
          $region46: #{forward.14} parent=42 // pred_region
            // Predicated region
            $region48: #{forward.14} parent=46 // pred_check
              _
            $region49: #{forward.14} parent=46 // pred_check_branch
              %209 = sbr.rel (0) target = $region51
            $region50: #{forward.14} parent=46 // pred_region
              loop: start=0, step=1, limit=1
              $region52: #{forward.14} parent=50 // loop_pre_header
                _
              $region53: #{forward.14} parent=50 // loop_header
                %s211 = sphi 0, %s215
                %p212 = scmp.ge.s32.totalorder %s211, 1
                %s216 = sphi %s205, %s205
                %s217 = sphi %s199, %s199
              $region54: #{forward.14} parent=50 // loop_header_branch
                %214 = sbr.rel (%p212) target = $region58
              $region55: #{forward.14} parent=50 // loop_body
                %v218 = vld [vmem:[%s216] sm:$0xff]
                %219 = vst [vmem:[%s217] sm:$0xff] %v218
                %v220 = vld [vmem:[%s216 + $0x8] sm:$0xff]
                %221 = vst [vmem:[%s217 + $0x8] sm:$0xff] %v220
                %v222 = vld [vmem:[%s216 + $0x80] sm:$0xff]
                %223 = vst [vmem:[%s217 + $0x10] sm:$0xff] %v222
                %v224 = vld [vmem:[%s216 + $0x88] sm:$0xff]
                %225 = vst [vmem:[%s217 + $0x18] sm:$0xff] %v224
                %v226 = vld [vmem:[%s216 + $0x100] sm:$0xff]
                %227 = vst [vmem:[%s217 + $0x20] sm:$0xff] %v226
                %v228 = vld [vmem:[%s216 + $0x108] sm:$0xff]
                %229 = vst [vmem:[%s217 + $0x28] sm:$0xff] %v228
                %v230 = vld [vmem:[%s216 + $0x180] sm:$0xff]
                %231 = vst [vmem:[%s217 + $0x30] sm:$0xff] %v230
                %v232 = vld [vmem:[%s216 + $0x188] sm:$0xff]
                %233 = vst [vmem:[%s217 + $0x38] sm:$0xff] %v232
                %v234 = vld [vmem:[%s216 + $0x200] sm:$0xff]
                %235 = vst [vmem:[%s217 + $0x40] sm:$0xff] %v234
                %v236 = vld [vmem:[%s216 + $0x208] sm:$0xff]
                %237 = vst [vmem:[%s217 + $0x48] sm:$0xff] %v236
                %v238 = vld [vmem:[%s216 + $0x280] sm:$0xff]
                %239 = vst [vmem:[%s217 + $0x50] sm:$0xff] %v238
                %v240 = vld [vmem:[%s216 + $0x288] sm:$0xff]
                %241 = vst [vmem:[%s217 + $0x58] sm:$0xff] %v240
                %v242 = vld [vmem:[%s216 + $0x300] sm:$0xff]
                %243 = vst [vmem:[%s217 + $0x60] sm:$0xff] %v242
                %v244 = vld [vmem:[%s216 + $0x308] sm:$0xff]
                %245 = vst [vmem:[%s217 + $0x68] sm:$0xff] %v244
                %v246 = vld [vmem:[%s216 + $0x380] sm:$0xff]
                %247 = vst [vmem:[%s217 + $0x70] sm:$0xff] %v246
                %v248 = vld [vmem:[%s216 + $0x388] sm:$0xff]
                %249 = vst [vmem:[%s217 + $0x78] sm:$0xff] %v248
                %v250 = vld [vmem:[%s216 + $0x400] sm:$0xff]
                %251 = vst [vmem:[%s217 + $0x80] sm:$0xff] %v250
                %v252 = vld [vmem:[%s216 + $0x408] sm:$0xff]
                %253 = vst [vmem:[%s217 + $0x88] sm:$0xff] %v252
                %v254 = vld [vmem:[%s216 + $0x480] sm:$0xff]
                %255 = vst [vmem:[%s217 + $0x90] sm:$0xff] %v254
                %v256 = vld [vmem:[%s216 + $0x488] sm:$0xff]
                %257 = vst [vmem:[%s217 + $0x98] sm:$0xff] %v256
                %v258 = vld [vmem:[%s216 + $0x500] sm:$0xff]
                %259 = vst [vmem:[%s217 + $0xa0] sm:$0xff] %v258
                %v260 = vld [vmem:[%s216 + $0x508] sm:$0xff]
                %261 = vst [vmem:[%s217 + $0xa8] sm:$0xff] %v260
                %v262 = vld [vmem:[%s216 + $0x580] sm:$0xff]
                %263 = vst [vmem:[%s217 + $0xb0] sm:$0xff] %v262
                %v264 = vld [vmem:[%s216 + $0x588] sm:$0xff]
                %265 = vst [vmem:[%s217 + $0xb8] sm:$0xff] %v264
                %v266 = vld [vmem:[%s216 + $0x600] sm:$0xff]
                %267 = vst [vmem:[%s217 + $0xc0] sm:$0xff] %v266
                %v268 = vld [vmem:[%s216 + $0x608] sm:$0xff]
                %269 = vst [vmem:[%s217 + $0xc8] sm:$0xff] %v268
                %v270 = vld [vmem:[%s216 + $0x680] sm:$0xff]
                %271 = vst [vmem:[%s217 + $0xd0] sm:$0xff] %v270
                %v272 = vld [vmem:[%s216 + $0x688] sm:$0xff]
                %273 = vst [vmem:[%s217 + $0xd8] sm:$0xff] %v272
                %v274 = vld [vmem:[%s216 + $0x700] sm:$0xff]
                %275 = vst [vmem:[%s217 + $0xe0] sm:$0xff] %v274
                %v276 = vld [vmem:[%s216 + $0x708] sm:$0xff]
                %277 = vst [vmem:[%s217 + $0xe8] sm:$0xff] %v276
                %v278 = vld [vmem:[%s216 + $0x780] sm:$0xff]
                %279 = vst [vmem:[%s217 + $0xf0] sm:$0xff] %v278
                %v280 = vld [vmem:[%s216 + $0x788] sm:$0xff]
                %281 = vst [vmem:[%s217 + $0xf8] sm:$0xff] %v280
                %v282 = vld [vmem:[%s216 + $0x800] sm:$0xff]
                %283 = vst [vmem:[%s217 + $0x100] sm:$0xff] %v282
                %v284 = vld [vmem:[%s216 + $0x808] sm:$0xff]
                %285 = vst [vmem:[%s217 + $0x108] sm:$0xff] %v284
                %v286 = vld [vmem:[%s216 + $0x880] sm:$0xff]
                %287 = vst [vmem:[%s217 + $0x110] sm:$0xff] %v286
                %v288 = vld [vmem:[%s216 + $0x888] sm:$0xff]
                %289 = vst [vmem:[%s217 + $0x118] sm:$0xff] %v288
                %v290 = vld [vmem:[%s216 + $0x900] sm:$0xff]
                %291 = vst [vmem:[%s217 + $0x120] sm:$0xff] %v290
                %v292 = vld [vmem:[%s216 + $0x908] sm:$0xff]
                %293 = vst [vmem:[%s217 + $0x128] sm:$0xff] %v292
                %v294 = vld [vmem:[%s216 + $0x980] sm:$0xff]
                %295 = vst [vmem:[%s217 + $0x130] sm:$0xff] %v294
                %v296 = vld [vmem:[%s216 + $0x988] sm:$0xff]
                %297 = vst [vmem:[%s217 + $0x138] sm:$0xff] %v296
                %v298 = vld [vmem:[%s216 + $0xa00] sm:$0xff]
                %299 = vst [vmem:[%s217 + $0x140] sm:$0xff] %v298
                %v300 = vld [vmem:[%s216 + $0xa08] sm:$0xff]
                %301 = vst [vmem:[%s217 + $0x148] sm:$0xff] %v300
                %v302 = vld [vmem:[%s216 + $0xa80] sm:$0xff]
                %303 = vst [vmem:[%s217 + $0x150] sm:$0xff] %v302
                %v304 = vld [vmem:[%s216 + $0xa88] sm:$0xff]
                %305 = vst [vmem:[%s217 + $0x158] sm:$0xff] %v304
                %v306 = vld [vmem:[%s216 + $0xb00] sm:$0xff]
                %307 = vst [vmem:[%s217 + $0x160] sm:$0xff] %v306
                %v308 = vld [vmem:[%s216 + $0xb08] sm:$0xff]
                %309 = vst [vmem:[%s217 + $0x168] sm:$0xff] %v308
                %v310 = vld [vmem:[%s216 + $0xb80] sm:$0xff]
                %311 = vst [vmem:[%s217 + $0x170] sm:$0xff] %v310
                %v312 = vld [vmem:[%s216 + $0xb88] sm:$0xff]
                %313 = vst [vmem:[%s217 + $0x178] sm:$0xff] %v312
                %v314 = vld [vmem:[%s216 + $0xc00] sm:$0xff]
                %315 = vst [vmem:[%s217 + $0x180] sm:$0xff] %v314
                %v316 = vld [vmem:[%s216 + $0xc08] sm:$0xff]
                %317 = vst [vmem:[%s217 + $0x188] sm:$0xff] %v316
                %v318 = vld [vmem:[%s216 + $0xc80] sm:$0xff]
                %319 = vst [vmem:[%s217 + $0x190] sm:$0xff] %v318
                %v320 = vld [vmem:[%s216 + $0xc88] sm:$0xff]
                %321 = vst [vmem:[%s217 + $0x198] sm:$0xff] %v320
                %v322 = vld [vmem:[%s216 + $0xd00] sm:$0xff]
                %323 = vst [vmem:[%s217 + $0x1a0] sm:$0xff] %v322
                %v324 = vld [vmem:[%s216 + $0xd08] sm:$0xff]
                %325 = vst [vmem:[%s217 + $0x1a8] sm:$0xff] %v324
                %v326 = vld [vmem:[%s216 + $0xd80] sm:$0xff]
                %327 = vst [vmem:[%s217 + $0x1b0] sm:$0xff] %v326
                %v328 = vld [vmem:[%s216 + $0xd88] sm:$0xff]
                %329 = vst [vmem:[%s217 + $0x1b8] sm:$0xff] %v328
                %v330 = vld [vmem:[%s216 + $0xe00] sm:$0xff]
                %331 = vst [vmem:[%s217 + $0x1c0] sm:$0xff] %v330
                %v332 = vld [vmem:[%s216 + $0xe08] sm:$0xff]
                %333 = vst [vmem:[%s217 + $0x1c8] sm:$0xff] %v332
                %v334 = vld [vmem:[%s216 + $0xe80] sm:$0xff]
                %335 = vst [vmem:[%s217 + $0x1d0] sm:$0xff] %v334
                %v336 = vld [vmem:[%s216 + $0xe88] sm:$0xff]
                %337 = vst [vmem:[%s217 + $0x1d8] sm:$0xff] %v336
                %v338 = vld [vmem:[%s216 + $0xf00] sm:$0xff]
                %339 = vst [vmem:[%s217 + $0x1e0] sm:$0xff] %v338
                %v340 = vld [vmem:[%s216 + $0xf08] sm:$0xff]
                %341 = vst [vmem:[%s217 + $0x1e8] sm:$0xff] %v340
                %v342 = vld [vmem:[%s216 + $0xf80] sm:$0xff]
                %343 = vst [vmem:[%s217 + $0x1f0] sm:$0xff] %v342
                %v344 = vld [vmem:[%s216 + $0xf88] sm:$0xff]
                %345 = vst [vmem:[%s217 + $0x1f8] sm:$0xff] %v344
                %v346 = vld [vmem:[%s216 + $0x1000] sm:$0xff]
                %347 = vst [vmem:[%s217 + $0x200] sm:$0xff] %v346
                %v348 = vld [vmem:[%s216 + $0x1008] sm:$0xff]
                %349 = vst [vmem:[%s217 + $0x208] sm:$0xff] %v348
                %v350 = vld [vmem:[%s216 + $0x1080] sm:$0xff]
                %351 = vst [vmem:[%s217 + $0x210] sm:$0xff] %v350
                %v352 = vld [vmem:[%s216 + $0x1088] sm:$0xff]
                %353 = vst [vmem:[%s217 + $0x218] sm:$0xff] %v352
                %v354 = vld [vmem:[%s216 + $0x1100] sm:$0xff]
                %355 = vst [vmem:[%s217 + $0x220] sm:$0xff] %v354
                %v356 = vld [vmem:[%s216 + $0x1108] sm:$0xff]
                %357 = vst [vmem:[%s217 + $0x228] sm:$0xff] %v356
                %v358 = vld [vmem:[%s216 + $0x1180] sm:$0xff]
                %359 = vst [vmem:[%s217 + $0x230] sm:$0xff] %v358
                %v360 = vld [vmem:[%s216 + $0x1188] sm:$0xff]
                %361 = vst [vmem:[%s217 + $0x238] sm:$0xff] %v360
                %v362 = vld [vmem:[%s216 + $0x1200] sm:$0xff]
                %363 = vst [vmem:[%s217 + $0x240] sm:$0xff] %v362
                %v364 = vld [vmem:[%s216 + $0x1208] sm:$0xff]
                %365 = vst [vmem:[%s217 + $0x248] sm:$0xff] %v364
                %v366 = vld [vmem:[%s216 + $0x1280] sm:$0xff]
                %367 = vst [vmem:[%s217 + $0x250] sm:$0xff] %v366
                %v368 = vld [vmem:[%s216 + $0x1288] sm:$0xff]
                %369 = vst [vmem:[%s217 + $0x258] sm:$0xff] %v368
                %v370 = vld [vmem:[%s216 + $0x1300] sm:$0xff]
                %371 = vst [vmem:[%s217 + $0x260] sm:$0xff] %v370
                %v372 = vld [vmem:[%s216 + $0x1308] sm:$0xff]
                %373 = vst [vmem:[%s217 + $0x268] sm:$0xff] %v372
                %v374 = vld [vmem:[%s216 + $0x1380] sm:$0xff]
                %375 = vst [vmem:[%s217 + $0x270] sm:$0xff] %v374
                %v376 = vld [vmem:[%s216 + $0x1388] sm:$0xff]
                %377 = vst [vmem:[%s217 + $0x278] sm:$0xff] %v376
                %v378 = vld [vmem:[%s216 + $0x1400] sm:$0xff]
                %379 = vst [vmem:[%s217 + $0x280] sm:$0xff] %v378
                %v380 = vld [vmem:[%s216 + $0x1408] sm:$0xff]
                %381 = vst [vmem:[%s217 + $0x288] sm:$0xff] %v380
                %v382 = vld [vmem:[%s216 + $0x1480] sm:$0xff]
                %383 = vst [vmem:[%s217 + $0x290] sm:$0xff] %v382
                %v384 = vld [vmem:[%s216 + $0x1488] sm:$0xff]
                %385 = vst [vmem:[%s217 + $0x298] sm:$0xff] %v384
                %v386 = vld [vmem:[%s216 + $0x1500] sm:$0xff]
                %387 = vst [vmem:[%s217 + $0x2a0] sm:$0xff] %v386
                %v388 = vld [vmem:[%s216 + $0x1508] sm:$0xff]
                %389 = vst [vmem:[%s217 + $0x2a8] sm:$0xff] %v388
                %v390 = vld [vmem:[%s216 + $0x1580] sm:$0xff]
                %391 = vst [vmem:[%s217 + $0x2b0] sm:$0xff] %v390
                %v392 = vld [vmem:[%s216 + $0x1588] sm:$0xff]
                %393 = vst [vmem:[%s217 + $0x2b8] sm:$0xff] %v392
                %v394 = vld [vmem:[%s216 + $0x1600] sm:$0xff]
                %395 = vst [vmem:[%s217 + $0x2c0] sm:$0xff] %v394
                %v396 = vld [vmem:[%s216 + $0x1608] sm:$0xff]
                %397 = vst [vmem:[%s217 + $0x2c8] sm:$0xff] %v396
                %v398 = vld [vmem:[%s216 + $0x1680] sm:$0xff]
                %399 = vst [vmem:[%s217 + $0x2d0] sm:$0xff] %v398
                %v400 = vld [vmem:[%s216 + $0x1688] sm:$0xff]
                %401 = vst [vmem:[%s217 + $0x2d8] sm:$0xff] %v400
                %v402 = vld [vmem:[%s216 + $0x1700] sm:$0xff]
                %403 = vst [vmem:[%s217 + $0x2e0] sm:$0xff] %v402
                %v404 = vld [vmem:[%s216 + $0x1708] sm:$0xff]
                %405 = vst [vmem:[%s217 + $0x2e8] sm:$0xff] %v404
                %v406 = vld [vmem:[%s216 + $0x1780] sm:$0xff]
                %407 = vst [vmem:[%s217 + $0x2f0] sm:$0xff] %v406
                %v408 = vld [vmem:[%s216 + $0x1788] sm:$0xff]
                %409 = vst [vmem:[%s217 + $0x2f8] sm:$0xff] %v408
                %v410 = vld [vmem:[%s216 + $0x1800] sm:$0xff]
                %411 = vst [vmem:[%s217 + $0x300] sm:$0xff] %v410
                %v412 = vld [vmem:[%s216 + $0x1808] sm:$0xff]
                %413 = vst [vmem:[%s217 + $0x308] sm:$0xff] %v412
                %v414 = vld [vmem:[%s216 + $0x1880] sm:$0xff]
                %415 = vst [vmem:[%s217 + $0x310] sm:$0xff] %v414
                %v416 = vld [vmem:[%s216 + $0x1888] sm:$0xff]
                %417 = vst [vmem:[%s217 + $0x318] sm:$0xff] %v416
                %v418 = vld [vmem:[%s216 + $0x1900] sm:$0xff]
                %419 = vst [vmem:[%s217 + $0x320] sm:$0xff] %v418
                %v420 = vld [vmem:[%s216 + $0x1908] sm:$0xff]
                %421 = vst [vmem:[%s217 + $0x328] sm:$0xff] %v420
                %v422 = vld [vmem:[%s216 + $0x1980] sm:$0xff]
                %423 = vst [vmem:[%s217 + $0x330] sm:$0xff] %v422
                %v424 = vld [vmem:[%s216 + $0x1988] sm:$0xff]
                %425 = vst [vmem:[%s217 + $0x338] sm:$0xff] %v424
                %v426 = vld [vmem:[%s216 + $0x1a00] sm:$0xff]
                %427 = vst [vmem:[%s217 + $0x340] sm:$0xff] %v426
                %v428 = vld [vmem:[%s216 + $0x1a08] sm:$0xff]
                %429 = vst [vmem:[%s217 + $0x348] sm:$0xff] %v428
                %v430 = vld [vmem:[%s216 + $0x1a80] sm:$0xff]
                %431 = vst [vmem:[%s217 + $0x350] sm:$0xff] %v430
                %v432 = vld [vmem:[%s216 + $0x1a88] sm:$0xff]
                %433 = vst [vmem:[%s217 + $0x358] sm:$0xff] %v432
                %v434 = vld [vmem:[%s216 + $0x1b00] sm:$0xff]
                %435 = vst [vmem:[%s217 + $0x360] sm:$0xff] %v434
                %v436 = vld [vmem:[%s216 + $0x1b08] sm:$0xff]
                %437 = vst [vmem:[%s217 + $0x368] sm:$0xff] %v436
                %v438 = vld [vmem:[%s216 + $0x1b80] sm:$0xff]
                %439 = vst [vmem:[%s217 + $0x370] sm:$0xff] %v438
                %v440 = vld [vmem:[%s216 + $0x1b88] sm:$0xff]
                %441 = vst [vmem:[%s217 + $0x378] sm:$0xff] %v440
                %v442 = vld [vmem:[%s216 + $0x1c00] sm:$0xff]
                %443 = vst [vmem:[%s217 + $0x380] sm:$0xff] %v442
                %v444 = vld [vmem:[%s216 + $0x1c08] sm:$0xff]
                %445 = vst [vmem:[%s217 + $0x388] sm:$0xff] %v444
                %v446 = vld [vmem:[%s216 + $0x1c80] sm:$0xff]
                %447 = vst [vmem:[%s217 + $0x390] sm:$0xff] %v446
                %v448 = vld [vmem:[%s216 + $0x1c88] sm:$0xff]
                %449 = vst [vmem:[%s217 + $0x398] sm:$0xff] %v448
                %v450 = vld [vmem:[%s216 + $0x1d00] sm:$0xff]
                %451 = vst [vmem:[%s217 + $0x3a0] sm:$0xff] %v450
                %v452 = vld [vmem:[%s216 + $0x1d08] sm:$0xff]
                %453 = vst [vmem:[%s217 + $0x3a8] sm:$0xff] %v452
                %v454 = vld [vmem:[%s216 + $0x1d80] sm:$0xff]
                %455 = vst [vmem:[%s217 + $0x3b0] sm:$0xff] %v454
                %v456 = vld [vmem:[%s216 + $0x1d88] sm:$0xff]
                %457 = vst [vmem:[%s217 + $0x3b8] sm:$0xff] %v456
                %v458 = vld [vmem:[%s216 + $0x1e00] sm:$0xff]
                %459 = vst [vmem:[%s217 + $0x3c0] sm:$0xff] %v458
                %v460 = vld [vmem:[%s216 + $0x1e08] sm:$0xff]
                %461 = vst [vmem:[%s217 + $0x3c8] sm:$0xff] %v460
                %v462 = vld [vmem:[%s216 + $0x1e80] sm:$0xff]
                %463 = vst [vmem:[%s217 + $0x3d0] sm:$0xff] %v462
                %v464 = vld [vmem:[%s216 + $0x1e88] sm:$0xff]
                %465 = vst [vmem:[%s217 + $0x3d8] sm:$0xff] %v464
                %v466 = vld [vmem:[%s216 + $0x1f00] sm:$0xff]
                %467 = vst [vmem:[%s217 + $0x3e0] sm:$0xff] %v466
                %v468 = vld [vmem:[%s216 + $0x1f08] sm:$0xff]
                %469 = vst [vmem:[%s217 + $0x3e8] sm:$0xff] %v468
                %v470 = vld [vmem:[%s216 + $0x1f80] sm:$0xff]
                %471 = vst [vmem:[%s217 + $0x3f0] sm:$0xff] %v470
                %v472 = vld [vmem:[%s216 + $0x1f88] sm:$0xff]
                %473 = vst [vmem:[%s217 + $0x3f8] sm:$0xff] %v472
              $region56: #{forward.14} parent=50 // loop_footer
                %s215 = sadd.s32 1, %s211
              $region57: #{forward.14} parent=50 // loop_footer_branch
                %210 = sbr.rel target = $region53
              $region58: #{forward.14} parent=50 // loop_exit
                _
            $region51: #{forward.14} parent=46 // pred_fallthru
              _
            // Predicated region
            $region59: #{forward.14} parent=46 // pred_check
              _
            $region60: #{forward.14} parent=46 // pred_check_branch
              %475 = sbr.rel target = $region62
            $region61: #{forward.14} parent=46 // pred_region
              _
            $region62: #{forward.14} parent=46 // pred_fallthru
              _
          $region47: #{forward.14} parent=42 // pred_fallthru
            _
          %476 = vnop
        $region43: #{forward.14} parent=15 // pred_fallthru
          _
        // Predicated region
        $region63: #{forward.14} parent=15 // pred_check
          %p477 = pneg %p104
        $region64: #{forward.14} parent=15 // pred_check_branch
          %479 = sbr.rel (%p477) target = $region66
        $region65: #{forward.14} parent=15 // pred_region
          %s480 = smul.u32 4, %s17
          %p481 = scmp.lt.s32.totalorder %s480, 31
          %s482 = scalar_select %p481, %s480, 31
          %s483 = scalar_lea.vmem %s2, %s482
          %s484 = smul.u32 4, %s17
        $region66: #{forward.14} parent=15 // pred_fallthru
          _
      $region16: #{forward.14} parent=5 // pred_fallthru
        _
      %p485 = scmp.le.s32.totalorder 1, %s9
      %p486 = scmp.lt.s32.totalorder %s9, 65
      %p487 = pnand %p485, %p486
      %p488 = pneg %p487
      // Predicated region
      $region67: #{forward.14} parent=5 // pred_check
        _
      $region68: #{forward.14} parent=5 // pred_check_branch
        %490 = sbr.rel (%p487) target = $region70
      $region69: #{forward.14} parent=5 // pred_region
        %s491 = ssub.s32 %s9, 1
        %s492 = sand.u32 %s43, 1
        %s493 = sand.u32 %s43, 1
        %s494 = smul.addr %s493, 32
        %s495 = scalar_lea.vmem [#allocation3], %s494
        // Predicated region
        $region71: #{forward.14} parent=69 // pred_check
          %p496 = pneg %p56
        $region72: #{forward.14} parent=69 // pred_check_branch
          %498 = sbr.rel (%p496) target = $region74
        $region73: #{forward.14} parent=69 // pred_region
          _
        $region74: #{forward.14} parent=69 // pred_fallthru
          _
        %s499 = sand.u32 %s71, 1
        %s500 = sand.u32 %s71, 1
        %s501 = smul.addr %s500, 1024
        %s502 = scalar_lea.vmem [#allocation4], %s501
        // Predicated region
        $region75: #{forward.14} parent=69 // pred_check
          %p503 = pneg %p84
        $region76: #{forward.14} parent=69 // pred_check_branch
          %505 = sbr.rel (%p503) target = $region78
        $region77: #{forward.14} parent=69 // pred_region
          _
        $region78: #{forward.14} parent=69 // pred_fallthru
          _
        %s506 = sand.u32 %s43, 1
        %s507 = sand.u32 %s43, 1
        %s508 = smul.addr %s507, 32
        %s509 = scalar_lea.vmem [#allocation3], %s508
        %p510 = pneg %p56
        %p511 = pneg %p53
        %s512 = sand.u32 %s71, 1
        %s513 = sand.u32 %s71, 1
        %s514 = smul.addr %s513, 1024
        %s515 = scalar_lea.vmem [#allocation4], %s514
        %p516 = pneg %p84
        %p517 = pneg %p81
        %s518 = smul.u32 4, %s20
        %p519 = scmp.lt.s32.totalorder %s518, 31
        %s520 = scalar_select %p519, %s518, 31
        %s521 = scalar_lea.vmem %s2, %s520
        %p522 = pneg %p110
        %p523 = pneg %p107
        %p524 = pneg %p138
        %p525 = pneg %p135
        %s526 = sand.u32 %s125, 1
        %s527 = sand.u32 %s125, 1
        %s528 = smul.addr %s527, 32
        %s529 = scalar_lea.vmem [#allocation5], %s528
        %s530 = smul.u32 2, %s19
        %s531 = smul.u32 4, %s21
        %s532 = smul.u32 64, %s21
        %s533 = smul.u32 4, %s20
        %s534 = smul.u32 4, %s20
        %p535 = scmp.lt.s32.totalorder %s534, 31
        %s536 = scalar_select %p535, %s534, 31
        %s537 = scalar_lea.vmem %s2, %s536
        %s538 = smul.u32 4, %s20
        %s539 = smul.u32 2, %s19
        %s540 = smul.u32 4, %s20
        %p541 = scmp.eq.s32.totalorder %s21, 0
        // Predicated region
        $region79: #{forward.14} parent=69 // pred_check
          %p542 = pneg %p541
        $region80: #{forward.14} parent=69 // pred_check_branch
          %544 = sbr.rel (%p542) target = $region82
        $region81: #{forward.14} parent=69 // pred_region
          %545 = vst [vmem:[#allocation2] sm:$0xff] 0.0
          %546 = vst [vmem:[#allocation2 + $0x8] sm:$0xff] 0.0
          %547 = vst [vmem:[#allocation2 + $0x10] sm:$0xff] 0.0
          %548 = vst [vmem:[#allocation2 + $0x18] sm:$0xff] 0.0
          %549 = vst [vmem:[#allocation2 + $0x20] sm:$0xff] 0.0
          %550 = vst [vmem:[#allocation2 + $0x28] sm:$0xff] 0.0
          %551 = vst [vmem:[#allocation2 + $0x30] sm:$0xff] 0.0
          %552 = vst [vmem:[#allocation2 + $0x38] sm:$0xff] 0.0
        $region82: #{forward.14} parent=69 // pred_fallthru
          _
        %v553 = vld [vmem:[#allocation2] sm:$0xff]
        %v554 = vld [vmem:[#allocation2 + $0x8] sm:$0xff]
        %v555 = vld [vmem:[#allocation2 + $0x10] sm:$0xff]
        %v556 = vld [vmem:[#allocation2 + $0x18] sm:$0xff]
        %v557 = vld [vmem:[#allocation2 + $0x20] sm:$0xff]
        %v558 = vld [vmem:[#allocation2 + $0x28] sm:$0xff]
        %v559 = vld [vmem:[#allocation2 + $0x30] sm:$0xff]
        %v560 = vld [vmem:[#allocation2 + $0x38] sm:$0xff]
        %v561 = vld [vmem:[%s495] sm:$0xff]
        %v562 = vld [vmem:[%s495 + $0x8] sm:$0xff]
        %v563 = vld [vmem:[%s495 + $0x10] sm:$0xff]
        %v564 = vld [vmem:[%s495 + $0x18] sm:$0xff]
        %v565 = vld [vmem:[%s502] sm:$0xff]
        %v566 = vld [vmem:[%s502 + $0x8] sm:$0xff]
        %v567 = vld [vmem:[%s502 + $0x10] sm:$0xff]
        %v568 = vld [vmem:[%s502 + $0x18] sm:$0xff]
        %v569 = vld [vmem:[%s502 + $0x20] sm:$0xff]
        %v570 = vld [vmem:[%s502 + $0x28] sm:$0xff]
        %v571 = vld [vmem:[%s502 + $0x30] sm:$0xff]
        %v572 = vld [vmem:[%s502 + $0x38] sm:$0xff]
        %v573 = vld [vmem:[%s502 + $0x40] sm:$0xff]
        %v574 = vld [vmem:[%s502 + $0x48] sm:$0xff]
        %v575 = vld [vmem:[%s502 + $0x50] sm:$0xff]
        %v576 = vld [vmem:[%s502 + $0x58] sm:$0xff]
        %v577 = vld [vmem:[%s502 + $0x60] sm:$0xff]
        %v578 = vld [vmem:[%s502 + $0x68] sm:$0xff]
        %v579 = vld [vmem:[%s502 + $0x70] sm:$0xff]
        %v580 = vld [vmem:[%s502 + $0x78] sm:$0xff]
        %v581 = vld [vmem:[%s502 + $0x80] sm:$0xff]
        %v582 = vld [vmem:[%s502 + $0x88] sm:$0xff]
        %v583 = vld [vmem:[%s502 + $0x90] sm:$0xff]
        %v584 = vld [vmem:[%s502 + $0x98] sm:$0xff]
        %v585 = vld [vmem:[%s502 + $0xa0] sm:$0xff]
        %v586 = vld [vmem:[%s502 + $0xa8] sm:$0xff]
        %v587 = vld [vmem:[%s502 + $0xb0] sm:$0xff]
        %v588 = vld [vmem:[%s502 + $0xb8] sm:$0xff]
        %v589 = vld [vmem:[%s502 + $0xc0] sm:$0xff]
        %v590 = vld [vmem:[%s502 + $0xc8] sm:$0xff]
        %v591 = vld [vmem:[%s502 + $0xd0] sm:$0xff]
        %v592 = vld [vmem:[%s502 + $0xd8] sm:$0xff]
        %v593 = vld [vmem:[%s502 + $0xe0] sm:$0xff]
        %v594 = vld [vmem:[%s502 + $0xe8] sm:$0xff]
        %v595 = vld [vmem:[%s502 + $0xf0] sm:$0xff]
        %v596 = vld [vmem:[%s502 + $0xf8] sm:$0xff]
        %v597 = vld [vmem:[%s502 + $0x100] sm:$0xff]
        %v598 = vld [vmem:[%s502 + $0x108] sm:$0xff]
        %v599 = vld [vmem:[%s502 + $0x110] sm:$0xff]
        %v600 = vld [vmem:[%s502 + $0x118] sm:$0xff]
        %v601 = vld [vmem:[%s502 + $0x120] sm:$0xff]
        %v602 = vld [vmem:[%s502 + $0x128] sm:$0xff]
        %v603 = vld [vmem:[%s502 + $0x130] sm:$0xff]
        %v604 = vld [vmem:[%s502 + $0x138] sm:$0xff]
        %v605 = vld [vmem:[%s502 + $0x140] sm:$0xff]
        %v606 = vld [vmem:[%s502 + $0x148] sm:$0xff]
        %v607 = vld [vmem:[%s502 + $0x150] sm:$0xff]
        %v608 = vld [vmem:[%s502 + $0x158] sm:$0xff]
        %v609 = vld [vmem:[%s502 + $0x160] sm:$0xff]
        %v610 = vld [vmem:[%s502 + $0x168] sm:$0xff]
        %v611 = vld [vmem:[%s502 + $0x170] sm:$0xff]
        %v612 = vld [vmem:[%s502 + $0x178] sm:$0xff]
        %v613 = vld [vmem:[%s502 + $0x180] sm:$0xff]
        %v614 = vld [vmem:[%s502 + $0x188] sm:$0xff]
        %v615 = vld [vmem:[%s502 + $0x190] sm:$0xff]
        %v616 = vld [vmem:[%s502 + $0x198] sm:$0xff]
        %v617 = vld [vmem:[%s502 + $0x1a0] sm:$0xff]
        %v618 = vld [vmem:[%s502 + $0x1a8] sm:$0xff]
        %v619 = vld [vmem:[%s502 + $0x1b0] sm:$0xff]
        %v620 = vld [vmem:[%s502 + $0x1b8] sm:$0xff]
        %v621 = vld [vmem:[%s502 + $0x1c0] sm:$0xff]
        %v622 = vld [vmem:[%s502 + $0x1c8] sm:$0xff]
        %v623 = vld [vmem:[%s502 + $0x1d0] sm:$0xff]
        %v624 = vld [vmem:[%s502 + $0x1d8] sm:$0xff]
        %v625 = vld [vmem:[%s502 + $0x1e0] sm:$0xff]
        %v626 = vld [vmem:[%s502 + $0x1e8] sm:$0xff]
        %v627 = vld [vmem:[%s502 + $0x1f0] sm:$0xff]
        %v628 = vld [vmem:[%s502 + $0x1f8] sm:$0xff]
        %v629 = vld [vmem:[%s502 + $0x200] sm:$0xff]
        %v630 = vld [vmem:[%s502 + $0x208] sm:$0xff]
        %v631 = vld [vmem:[%s502 + $0x210] sm:$0xff]
        %v632 = vld [vmem:[%s502 + $0x218] sm:$0xff]
        %v633 = vld [vmem:[%s502 + $0x220] sm:$0xff]
        %v634 = vld [vmem:[%s502 + $0x228] sm:$0xff]
        %v635 = vld [vmem:[%s502 + $0x230] sm:$0xff]
        %v636 = vld [vmem:[%s502 + $0x238] sm:$0xff]
        %v637 = vld [vmem:[%s502 + $0x240] sm:$0xff]
        %v638 = vld [vmem:[%s502 + $0x248] sm:$0xff]
        %v639 = vld [vmem:[%s502 + $0x250] sm:$0xff]
        %v640 = vld [vmem:[%s502 + $0x258] sm:$0xff]
        %v641 = vld [vmem:[%s502 + $0x260] sm:$0xff]
        %v642 = vld [vmem:[%s502 + $0x268] sm:$0xff]
        %v643 = vld [vmem:[%s502 + $0x270] sm:$0xff]
        %v644 = vld [vmem:[%s502 + $0x278] sm:$0xff]
        %v645 = vld [vmem:[%s502 + $0x280] sm:$0xff]
        %v646 = vld [vmem:[%s502 + $0x288] sm:$0xff]
        %v647 = vld [vmem:[%s502 + $0x290] sm:$0xff]
        %v648 = vld [vmem:[%s502 + $0x298] sm:$0xff]
        %v649 = vld [vmem:[%s502 + $0x2a0] sm:$0xff]
        %v650 = vld [vmem:[%s502 + $0x2a8] sm:$0xff]
        %v651 = vld [vmem:[%s502 + $0x2b0] sm:$0xff]
        %v652 = vld [vmem:[%s502 + $0x2b8] sm:$0xff]
        %v653 = vld [vmem:[%s502 + $0x2c0] sm:$0xff]
        %v654 = vld [vmem:[%s502 + $0x2c8] sm:$0xff]
        %v655 = vld [vmem:[%s502 + $0x2d0] sm:$0xff]
        %v656 = vld [vmem:[%s502 + $0x2d8] sm:$0xff]
        %v657 = vld [vmem:[%s502 + $0x2e0] sm:$0xff]
        %v658 = vld [vmem:[%s502 + $0x2e8] sm:$0xff]
        %v659 = vld [vmem:[%s502 + $0x2f0] sm:$0xff]
        %v660 = vld [vmem:[%s502 + $0x2f8] sm:$0xff]
        %v661 = vld [vmem:[%s502 + $0x300] sm:$0xff]
        %v662 = vld [vmem:[%s502 + $0x308] sm:$0xff]
        %v663 = vld [vmem:[%s502 + $0x310] sm:$0xff]
        %v664 = vld [vmem:[%s502 + $0x318] sm:$0xff]
        %v665 = vld [vmem:[%s502 + $0x320] sm:$0xff]
        %v666 = vld [vmem:[%s502 + $0x328] sm:$0xff]
        %v667 = vld [vmem:[%s502 + $0x330] sm:$0xff]
        %v668 = vld [vmem:[%s502 + $0x338] sm:$0xff]
        %v669 = vld [vmem:[%s502 + $0x340] sm:$0xff]
        %v670 = vld [vmem:[%s502 + $0x348] sm:$0xff]
        %v671 = vld [vmem:[%s502 + $0x350] sm:$0xff]
        %v672 = vld [vmem:[%s502 + $0x358] sm:$0xff]
        %v673 = vld [vmem:[%s502 + $0x360] sm:$0xff]
        %v674 = vld [vmem:[%s502 + $0x368] sm:$0xff]
        %v675 = vld [vmem:[%s502 + $0x370] sm:$0xff]
        %v676 = vld [vmem:[%s502 + $0x378] sm:$0xff]
        %v677 = vld [vmem:[%s502 + $0x380] sm:$0xff]
        %v678 = vld [vmem:[%s502 + $0x388] sm:$0xff]
        %v679 = vld [vmem:[%s502 + $0x390] sm:$0xff]
        %v680 = vld [vmem:[%s502 + $0x398] sm:$0xff]
        %v681 = vld [vmem:[%s502 + $0x3a0] sm:$0xff]
        %v682 = vld [vmem:[%s502 + $0x3a8] sm:$0xff]
        %v683 = vld [vmem:[%s502 + $0x3b0] sm:$0xff]
        %v684 = vld [vmem:[%s502 + $0x3b8] sm:$0xff]
        %v685 = vld [vmem:[%s502 + $0x3c0] sm:$0xff]
        %v686 = vld [vmem:[%s502 + $0x3c8] sm:$0xff]
        %v687 = vld [vmem:[%s502 + $0x3d0] sm:$0xff]
        %v688 = vld [vmem:[%s502 + $0x3d8] sm:$0xff]
        %v689 = vld [vmem:[%s502 + $0x3e0] sm:$0xff]
        %v690 = vld [vmem:[%s502 + $0x3e8] sm:$0xff]
        %v691 = vld [vmem:[%s502 + $0x3f0] sm:$0xff]
        %v692 = vld [vmem:[%s502 + $0x3f8] sm:$0xff]
        %v697 = vunpack.c.l.b16 %v561
        %v698 = vunpack.c.h.b16 %v561
        %v699 = vunpack.c.l.b16 %v562
        %v700 = vunpack.c.h.b16 %v562
        %v701 = vunpack.c.l.b16 %v563
        %v702 = vunpack.c.h.b16 %v563
        %v703 = vunpack.c.l.b16 %v564
        %v704 = vunpack.c.h.b16 %v564
        %v705 = vpack.c.b16 %v701, %v697
        %v706 = vpack.c.b16 %v702, %v698
        %v707 = vpack.c.b16 %v703, %v699
        %v708 = vpack.c.b16 %v704, %v700
        %v841 = vunpack.c.l.b16 %v565
        %v842 = vunpack.c.h.b16 %v565
        %v843 = vunpack.c.l.b16 %v566
        %v844 = vunpack.c.h.b16 %v566
        %v845 = vunpack.c.l.b16 %v567
        %v846 = vunpack.c.h.b16 %v567
        %v847 = vunpack.c.l.b16 %v568
        %v848 = vunpack.c.h.b16 %v568
        %v849 = vunpack.c.l.b16 %v569
        %v850 = vunpack.c.h.b16 %v569
        %v851 = vunpack.c.l.b16 %v570
        %v852 = vunpack.c.h.b16 %v570
        %v853 = vunpack.c.l.b16 %v571
        %v854 = vunpack.c.h.b16 %v571
        %v855 = vunpack.c.l.b16 %v572
        %v856 = vunpack.c.h.b16 %v572
        %v857 = vunpack.c.l.b16 %v573
        %v858 = vunpack.c.h.b16 %v573
        %v859 = vunpack.c.l.b16 %v574
        %v860 = vunpack.c.h.b16 %v574
        %v861 = vunpack.c.l.b16 %v575
        %v862 = vunpack.c.h.b16 %v575
        %v863 = vunpack.c.l.b16 %v576
        %v864 = vunpack.c.h.b16 %v576
        %v865 = vunpack.c.l.b16 %v577
        %v866 = vunpack.c.h.b16 %v577
        %v867 = vunpack.c.l.b16 %v578
        %v868 = vunpack.c.h.b16 %v578
        %v869 = vunpack.c.l.b16 %v579
        %v870 = vunpack.c.h.b16 %v579
        %v871 = vunpack.c.l.b16 %v580
        %v872 = vunpack.c.h.b16 %v580
        %v873 = vunpack.c.l.b16 %v581
        %v874 = vunpack.c.h.b16 %v581
        %v875 = vunpack.c.l.b16 %v582
        %v876 = vunpack.c.h.b16 %v582
        %v877 = vunpack.c.l.b16 %v583
        %v878 = vunpack.c.h.b16 %v583
        %v879 = vunpack.c.l.b16 %v584
        %v880 = vunpack.c.h.b16 %v584
        %v881 = vunpack.c.l.b16 %v585
        %v882 = vunpack.c.h.b16 %v585
        %v883 = vunpack.c.l.b16 %v586
        %v884 = vunpack.c.h.b16 %v586
        %v885 = vunpack.c.l.b16 %v587
        %v886 = vunpack.c.h.b16 %v587
        %v887 = vunpack.c.l.b16 %v588
        %v888 = vunpack.c.h.b16 %v588
        %v889 = vunpack.c.l.b16 %v589
        %v890 = vunpack.c.h.b16 %v589
        %v891 = vunpack.c.l.b16 %v590
        %v892 = vunpack.c.h.b16 %v590
        %v893 = vunpack.c.l.b16 %v591
        %v894 = vunpack.c.h.b16 %v591
        %v895 = vunpack.c.l.b16 %v592
        %v896 = vunpack.c.h.b16 %v592
        %v897 = vunpack.c.l.b16 %v593
        %v898 = vunpack.c.h.b16 %v593
        %v899 = vunpack.c.l.b16 %v594
        %v900 = vunpack.c.h.b16 %v594
        %v901 = vunpack.c.l.b16 %v595
        %v902 = vunpack.c.h.b16 %v595
        %v903 = vunpack.c.l.b16 %v596
        %v904 = vunpack.c.h.b16 %v596
        %v905 = vunpack.c.l.b16 %v597
        %v906 = vunpack.c.h.b16 %v597
        %v907 = vunpack.c.l.b16 %v598
        %v908 = vunpack.c.h.b16 %v598
        %v909 = vunpack.c.l.b16 %v599
        %v910 = vunpack.c.h.b16 %v599
        %v911 = vunpack.c.l.b16 %v600
        %v912 = vunpack.c.h.b16 %v600
        %v913 = vunpack.c.l.b16 %v601
        %v914 = vunpack.c.h.b16 %v601
        %v915 = vunpack.c.l.b16 %v602
        %v916 = vunpack.c.h.b16 %v602
        %v917 = vunpack.c.l.b16 %v603
        %v918 = vunpack.c.h.b16 %v603
        %v919 = vunpack.c.l.b16 %v604
        %v920 = vunpack.c.h.b16 %v604
        %v921 = vunpack.c.l.b16 %v605
        %v922 = vunpack.c.h.b16 %v605
        %v923 = vunpack.c.l.b16 %v606
        %v924 = vunpack.c.h.b16 %v606
        %v925 = vunpack.c.l.b16 %v607
        %v926 = vunpack.c.h.b16 %v607
        %v927 = vunpack.c.l.b16 %v608
        %v928 = vunpack.c.h.b16 %v608
        %v929 = vunpack.c.l.b16 %v609
        %v930 = vunpack.c.h.b16 %v609
        %v931 = vunpack.c.l.b16 %v610
        %v932 = vunpack.c.h.b16 %v610
        %v933 = vunpack.c.l.b16 %v611
        %v934 = vunpack.c.h.b16 %v611
        %v935 = vunpack.c.l.b16 %v612
        %v936 = vunpack.c.h.b16 %v612
        %v937 = vunpack.c.l.b16 %v613
        %v938 = vunpack.c.h.b16 %v613
        %v939 = vunpack.c.l.b16 %v614
        %v940 = vunpack.c.h.b16 %v614
        %v941 = vunpack.c.l.b16 %v615
        %v942 = vunpack.c.h.b16 %v615
        %v943 = vunpack.c.l.b16 %v616
        %v944 = vunpack.c.h.b16 %v616
        %v945 = vunpack.c.l.b16 %v617
        %v946 = vunpack.c.h.b16 %v617
        %v947 = vunpack.c.l.b16 %v618
        %v948 = vunpack.c.h.b16 %v618
        %v949 = vunpack.c.l.b16 %v619
        %v950 = vunpack.c.h.b16 %v619
        %v951 = vunpack.c.l.b16 %v620
        %v952 = vunpack.c.h.b16 %v620
        %v953 = vunpack.c.l.b16 %v621
        %v954 = vunpack.c.h.b16 %v621
        %v955 = vunpack.c.l.b16 %v622
        %v956 = vunpack.c.h.b16 %v622
        %v957 = vunpack.c.l.b16 %v623
        %v958 = vunpack.c.h.b16 %v623
        %v959 = vunpack.c.l.b16 %v624
        %v960 = vunpack.c.h.b16 %v624
        %v961 = vunpack.c.l.b16 %v625
        %v962 = vunpack.c.h.b16 %v625
        %v963 = vunpack.c.l.b16 %v626
        %v964 = vunpack.c.h.b16 %v626
        %v965 = vunpack.c.l.b16 %v627
        %v966 = vunpack.c.h.b16 %v627
        %v967 = vunpack.c.l.b16 %v628
        %v968 = vunpack.c.h.b16 %v628
        %v969 = vunpack.c.l.b16 %v629
        %v970 = vunpack.c.h.b16 %v629
        %v971 = vunpack.c.l.b16 %v630
        %v972 = vunpack.c.h.b16 %v630
        %v973 = vunpack.c.l.b16 %v631
        %v974 = vunpack.c.h.b16 %v631
        %v975 = vunpack.c.l.b16 %v632
        %v976 = vunpack.c.h.b16 %v632
        %v977 = vunpack.c.l.b16 %v633
        %v978 = vunpack.c.h.b16 %v633
        %v979 = vunpack.c.l.b16 %v634
        %v980 = vunpack.c.h.b16 %v634
        %v981 = vunpack.c.l.b16 %v635
        %v982 = vunpack.c.h.b16 %v635
        %v983 = vunpack.c.l.b16 %v636
        %v984 = vunpack.c.h.b16 %v636
        %v985 = vunpack.c.l.b16 %v637
        %v986 = vunpack.c.h.b16 %v637
        %v987 = vunpack.c.l.b16 %v638
        %v988 = vunpack.c.h.b16 %v638
        %v989 = vunpack.c.l.b16 %v639
        %v990 = vunpack.c.h.b16 %v639
        %v991 = vunpack.c.l.b16 %v640
        %v992 = vunpack.c.h.b16 %v640
        %v993 = vunpack.c.l.b16 %v641
        %v994 = vunpack.c.h.b16 %v641
        %v995 = vunpack.c.l.b16 %v642
        %v996 = vunpack.c.h.b16 %v642
        %v997 = vunpack.c.l.b16 %v643
        %v998 = vunpack.c.h.b16 %v643
        %v999 = vunpack.c.l.b16 %v644
        %v1000 = vunpack.c.h.b16 %v644
        %v1001 = vunpack.c.l.b16 %v645
        %v1002 = vunpack.c.h.b16 %v645
        %v1003 = vunpack.c.l.b16 %v646
        %v1004 = vunpack.c.h.b16 %v646
        %v1005 = vunpack.c.l.b16 %v647
        %v1006 = vunpack.c.h.b16 %v647
        %v1007 = vunpack.c.l.b16 %v648
        %v1008 = vunpack.c.h.b16 %v648
        %v1009 = vunpack.c.l.b16 %v649
        %v1010 = vunpack.c.h.b16 %v649
        %v1011 = vunpack.c.l.b16 %v650
        %v1012 = vunpack.c.h.b16 %v650
        %v1013 = vunpack.c.l.b16 %v651
        %v1014 = vunpack.c.h.b16 %v651
        %v1015 = vunpack.c.l.b16 %v652
        %v1016 = vunpack.c.h.b16 %v652
        %v1017 = vunpack.c.l.b16 %v653
        %v1018 = vunpack.c.h.b16 %v653
        %v1019 = vunpack.c.l.b16 %v654
        %v1020 = vunpack.c.h.b16 %v654
        %v1021 = vunpack.c.l.b16 %v655
        %v1022 = vunpack.c.h.b16 %v655
        %v1023 = vunpack.c.l.b16 %v656
        %v1024 = vunpack.c.h.b16 %v656
        %v1025 = vunpack.c.l.b16 %v657
        %v1026 = vunpack.c.h.b16 %v657
        %v1027 = vunpack.c.l.b16 %v658
        %v1028 = vunpack.c.h.b16 %v658
        %v1029 = vunpack.c.l.b16 %v659
        %v1030 = vunpack.c.h.b16 %v659
        %v1031 = vunpack.c.l.b16 %v660
        %v1032 = vunpack.c.h.b16 %v660
        %v1033 = vunpack.c.l.b16 %v661
        %v1034 = vunpack.c.h.b16 %v661
        %v1035 = vunpack.c.l.b16 %v662
        %v1036 = vunpack.c.h.b16 %v662
        %v1037 = vunpack.c.l.b16 %v663
        %v1038 = vunpack.c.h.b16 %v663
        %v1039 = vunpack.c.l.b16 %v664
        %v1040 = vunpack.c.h.b16 %v664
        %v1041 = vunpack.c.l.b16 %v665
        %v1042 = vunpack.c.h.b16 %v665
        %v1043 = vunpack.c.l.b16 %v666
        %v1044 = vunpack.c.h.b16 %v666
        %v1045 = vunpack.c.l.b16 %v667
        %v1046 = vunpack.c.h.b16 %v667
        %v1047 = vunpack.c.l.b16 %v668
        %v1048 = vunpack.c.h.b16 %v668
        %v1049 = vunpack.c.l.b16 %v669
        %v1050 = vunpack.c.h.b16 %v669
        %v1051 = vunpack.c.l.b16 %v670
        %v1052 = vunpack.c.h.b16 %v670
        %v1053 = vunpack.c.l.b16 %v671
        %v1054 = vunpack.c.h.b16 %v671
        %v1055 = vunpack.c.l.b16 %v672
        %v1056 = vunpack.c.h.b16 %v672
        %v1057 = vunpack.c.l.b16 %v673
        %v1058 = vunpack.c.h.b16 %v673
        %v1059 = vunpack.c.l.b16 %v674
        %v1060 = vunpack.c.h.b16 %v674
        %v1061 = vunpack.c.l.b16 %v675
        %v1062 = vunpack.c.h.b16 %v675
        %v1063 = vunpack.c.l.b16 %v676
        %v1064 = vunpack.c.h.b16 %v676
        %v1065 = vunpack.c.l.b16 %v677
        %v1066 = vunpack.c.h.b16 %v677
        %v1067 = vunpack.c.l.b16 %v678
        %v1068 = vunpack.c.h.b16 %v678
        %v1069 = vunpack.c.l.b16 %v679
        %v1070 = vunpack.c.h.b16 %v679
        %v1071 = vunpack.c.l.b16 %v680
        %v1072 = vunpack.c.h.b16 %v680
        %v1073 = vunpack.c.l.b16 %v681
        %v1074 = vunpack.c.h.b16 %v681
        %v1075 = vunpack.c.l.b16 %v682
        %v1076 = vunpack.c.h.b16 %v682
        %v1077 = vunpack.c.l.b16 %v683
        %v1078 = vunpack.c.h.b16 %v683
        %v1079 = vunpack.c.l.b16 %v684
        %v1080 = vunpack.c.h.b16 %v684
        %v1081 = vunpack.c.l.b16 %v685
        %v1082 = vunpack.c.h.b16 %v685
        %v1083 = vunpack.c.l.b16 %v686
        %v1084 = vunpack.c.h.b16 %v686
        %v1085 = vunpack.c.l.b16 %v687
        %v1086 = vunpack.c.h.b16 %v687
        %v1087 = vunpack.c.l.b16 %v688
        %v1088 = vunpack.c.h.b16 %v688
        %v1089 = vunpack.c.l.b16 %v689
        %v1090 = vunpack.c.h.b16 %v689
        %v1091 = vunpack.c.l.b16 %v690
        %v1092 = vunpack.c.h.b16 %v690
        %v1093 = vunpack.c.l.b16 %v691
        %v1094 = vunpack.c.h.b16 %v691
        %v1095 = vunpack.c.l.b16 %v692
        %v1096 = vunpack.c.h.b16 %v692
        %v1097 = vpack.c.b16 %v845, %v841
        %v1098 = vpack.c.b16 %v846, %v842
        %v1099 = vpack.c.b16 %v847, %v843
        %v1100 = vpack.c.b16 %v848, %v844
        %v1101 = vpack.c.b16 %v853, %v849
        %v1102 = vpack.c.b16 %v854, %v850
        %v1103 = vpack.c.b16 %v855, %v851
        %v1104 = vpack.c.b16 %v856, %v852
        %v1105 = vpack.c.b16 %v861, %v857
        %v1106 = vpack.c.b16 %v862, %v858
        %v1107 = vpack.c.b16 %v863, %v859
        %v1108 = vpack.c.b16 %v864, %v860
        %v1109 = vpack.c.b16 %v869, %v865
        %v1110 = vpack.c.b16 %v870, %v866
        %v1111 = vpack.c.b16 %v871, %v867
        %v1112 = vpack.c.b16 %v872, %v868
        %v1113 = vpack.c.b16 %v877, %v873
        %v1114 = vpack.c.b16 %v878, %v874
        %v1115 = vpack.c.b16 %v879, %v875
        %v1116 = vpack.c.b16 %v880, %v876
        %v1117 = vpack.c.b16 %v885, %v881
        %v1118 = vpack.c.b16 %v886, %v882
        %v1119 = vpack.c.b16 %v887, %v883
        %v1120 = vpack.c.b16 %v888, %v884
        %v1121 = vpack.c.b16 %v893, %v889
        %v1122 = vpack.c.b16 %v894, %v890
        %v1123 = vpack.c.b16 %v895, %v891
        %v1124 = vpack.c.b16 %v896, %v892
        %v1125 = vpack.c.b16 %v901, %v897
        %v1126 = vpack.c.b16 %v902, %v898
        %v1127 = vpack.c.b16 %v903, %v899
        %v1128 = vpack.c.b16 %v904, %v900
        %v1129 = vpack.c.b16 %v909, %v905
        %v1130 = vpack.c.b16 %v910, %v906
        %v1131 = vpack.c.b16 %v911, %v907
        %v1132 = vpack.c.b16 %v912, %v908
        %v1133 = vpack.c.b16 %v917, %v913
        %v1134 = vpack.c.b16 %v918, %v914
        %v1135 = vpack.c.b16 %v919, %v915
        %v1136 = vpack.c.b16 %v920, %v916
        %v1137 = vpack.c.b16 %v925, %v921
        %v1138 = vpack.c.b16 %v926, %v922
        %v1139 = vpack.c.b16 %v927, %v923
        %v1140 = vpack.c.b16 %v928, %v924
        %v1141 = vpack.c.b16 %v933, %v929
        %v1142 = vpack.c.b16 %v934, %v930
        %v1143 = vpack.c.b16 %v935, %v931
        %v1144 = vpack.c.b16 %v936, %v932
        %v1145 = vpack.c.b16 %v941, %v937
        %v1146 = vpack.c.b16 %v942, %v938
        %v1147 = vpack.c.b16 %v943, %v939
        %v1148 = vpack.c.b16 %v944, %v940
        %v1149 = vpack.c.b16 %v949, %v945
        %v1150 = vpack.c.b16 %v950, %v946
        %v1151 = vpack.c.b16 %v951, %v947
        %v1152 = vpack.c.b16 %v952, %v948
        %v1153 = vpack.c.b16 %v957, %v953
        %v1154 = vpack.c.b16 %v958, %v954
        %v1155 = vpack.c.b16 %v959, %v955
        %v1156 = vpack.c.b16 %v960, %v956
        %v1157 = vpack.c.b16 %v965, %v961
        %v1158 = vpack.c.b16 %v966, %v962
        %v1159 = vpack.c.b16 %v967, %v963
        %v1160 = vpack.c.b16 %v968, %v964
        %v1161 = vpack.c.b16 %v973, %v969
        %v1162 = vpack.c.b16 %v974, %v970
        %v1163 = vpack.c.b16 %v975, %v971
        %v1164 = vpack.c.b16 %v976, %v972
        %v1165 = vpack.c.b16 %v981, %v977
        %v1166 = vpack.c.b16 %v982, %v978
        %v1167 = vpack.c.b16 %v983, %v979
        %v1168 = vpack.c.b16 %v984, %v980
        %v1169 = vpack.c.b16 %v989, %v985
        %v1170 = vpack.c.b16 %v990, %v986
        %v1171 = vpack.c.b16 %v991, %v987
        %v1172 = vpack.c.b16 %v992, %v988
        %v1173 = vpack.c.b16 %v997, %v993
        %v1174 = vpack.c.b16 %v998, %v994
        %v1175 = vpack.c.b16 %v999, %v995
        %v1176 = vpack.c.b16 %v1000, %v996
        %v1177 = vpack.c.b16 %v1005, %v1001
        %v1178 = vpack.c.b16 %v1006, %v1002
        %v1179 = vpack.c.b16 %v1007, %v1003
        %v1180 = vpack.c.b16 %v1008, %v1004
        %v1181 = vpack.c.b16 %v1013, %v1009
        %v1182 = vpack.c.b16 %v1014, %v1010
        %v1183 = vpack.c.b16 %v1015, %v1011
        %v1184 = vpack.c.b16 %v1016, %v1012
        %v1185 = vpack.c.b16 %v1021, %v1017
        %v1186 = vpack.c.b16 %v1022, %v1018
        %v1187 = vpack.c.b16 %v1023, %v1019
        %v1188 = vpack.c.b16 %v1024, %v1020
        %v1189 = vpack.c.b16 %v1029, %v1025
        %v1190 = vpack.c.b16 %v1030, %v1026
        %v1191 = vpack.c.b16 %v1031, %v1027
        %v1192 = vpack.c.b16 %v1032, %v1028
        %v1193 = vpack.c.b16 %v1037, %v1033
        %v1194 = vpack.c.b16 %v1038, %v1034
        %v1195 = vpack.c.b16 %v1039, %v1035
        %v1196 = vpack.c.b16 %v1040, %v1036
        %v1197 = vpack.c.b16 %v1045, %v1041
        %v1198 = vpack.c.b16 %v1046, %v1042
        %v1199 = vpack.c.b16 %v1047, %v1043
        %v1200 = vpack.c.b16 %v1048, %v1044
        %v1201 = vpack.c.b16 %v1053, %v1049
        %v1202 = vpack.c.b16 %v1054, %v1050
        %v1203 = vpack.c.b16 %v1055, %v1051
        %v1204 = vpack.c.b16 %v1056, %v1052
        %v1205 = vpack.c.b16 %v1061, %v1057
        %v1206 = vpack.c.b16 %v1062, %v1058
        %v1207 = vpack.c.b16 %v1063, %v1059
        %v1208 = vpack.c.b16 %v1064, %v1060
        %v1209 = vpack.c.b16 %v1069, %v1065
        %v1210 = vpack.c.b16 %v1070, %v1066
        %v1211 = vpack.c.b16 %v1071, %v1067
        %v1212 = vpack.c.b16 %v1072, %v1068
        %v1213 = vpack.c.b16 %v1077, %v1073
        %v1214 = vpack.c.b16 %v1078, %v1074
        %v1215 = vpack.c.b16 %v1079, %v1075
        %v1216 = vpack.c.b16 %v1080, %v1076
        %v1217 = vpack.c.b16 %v1085, %v1081
        %v1218 = vpack.c.b16 %v1086, %v1082
        %v1219 = vpack.c.b16 %v1087, %v1083
        %v1220 = vpack.c.b16 %v1088, %v1084
        %v1221 = vpack.c.b16 %v1093, %v1089
        %v1222 = vpack.c.b16 %v1094, %v1090
        %v1223 = vpack.c.b16 %v1095, %v1091
        %v1224 = vpack.c.b16 %v1096, %v1092
        %1353 = vmatprep.subr.bf16.mxu0 %v1126
        %1354 = vmatpush1.bf16.msra.mxu0 %v1125
        %1355 = vmatprep.subr.bf16.mxu0 %v1122
        %1356 = vmatpush1.bf16.msra.mxu0 %v1121
        %1357 = vmatprep.subr.bf16.mxu0 %v1118
        %1358 = vmatpush1.bf16.msra.mxu0 %v1117
        %1359 = vmatprep.subr.bf16.mxu0 %v1114
        %1360 = vmatpush1.bf16.msra.mxu0 %v1113
        %1361 = vmatprep.subr.bf16.mxu0 %v1110
        %1362 = vmatpush1.bf16.msra.mxu0 %v1109
        %1363 = vmatprep.subr.bf16.mxu0 %v1106
        %1364 = vmatpush1.bf16.msra.mxu0 %v1105
        %1365 = vmatprep.subr.bf16.mxu0 %v1102
        %1366 = vmatpush1.bf16.msra.mxu0 %v1101
        %1367 = vmatprep.subr.bf16.mxu0 %v1098
        %1368 = vmatpush1.bf16.msra.mxu0 %v1097
        %1369 = vmatprep.subr.bf16.mxu0 %v1158
        %1370 = vmatpush2.bf16.msra.mxu0 %v1157
        %1371 = vmatprep.subr.bf16.mxu0 %v1154
        %1372 = vmatpush2.bf16.msra.mxu0 %v1153
        %1373 = vmatprep.subr.bf16.mxu0 %v1150
        %1374 = vmatpush2.bf16.msra.mxu0 %v1149
        %1375 = vmatprep.subr.bf16.mxu0 %v1146
        %1376 = vmatpush2.bf16.msra.mxu0 %v1145
        %1377 = vmatprep.subr.bf16.mxu0 %v1142
        %1378 = vmatpush2.bf16.msra.mxu0 %v1141
        %1379 = vmatprep.subr.bf16.mxu0 %v1138
        %1380 = vmatpush2.bf16.msra.mxu0 %v1137
        %1381 = vmatprep.subr.bf16.mxu0 %v1134
        %1382 = vmatpush2.bf16.msra.mxu0 %v1133
        %1383 = vmatprep.subr.bf16.mxu0 %v1130
        %1384 = vmatpush2.bf16.msra.mxu0 %v1129
        %1385 = vmatprep.mubr.bf16.mxu0 %v706
        %1386 = vmatmul.mubr.bf16.gmra.mxu0 %v705
        %v1387 = vpop.f32.mrf.mxu0
        %v1388 = vadd.f32 0.0, %v1387
        %v1389 = vpop.f32.mrf.mxu0
        %v1390 = vadd.f32 0.0, %v1389
        %v1391 = vpop.f32.mrf.mxu0
        %v1392 = vadd.f32 0.0, %v1391
        %v1393 = vpop.f32.mrf.mxu0
        %v1394 = vadd.f32 0.0, %v1393
        %1395 = vdwg.mxu0
        %1396 = vmatprep.subr.bf16.mxu0 %v1190
        %1397 = vmatpush1.bf16.msra.mxu0 %v1189
        %1398 = vmatprep.subr.bf16.mxu0 %v1186
        %1399 = vmatpush1.bf16.msra.mxu0 %v1185
        %1400 = vmatprep.subr.bf16.mxu0 %v1182
        %1401 = vmatpush1.bf16.msra.mxu0 %v1181
        %1402 = vmatprep.subr.bf16.mxu0 %v1178
        %1403 = vmatpush1.bf16.msra.mxu0 %v1177
        %1404 = vmatprep.subr.bf16.mxu0 %v1174
        %1405 = vmatpush1.bf16.msra.mxu0 %v1173
        %1406 = vmatprep.subr.bf16.mxu0 %v1170
        %1407 = vmatpush1.bf16.msra.mxu0 %v1169
        %1408 = vmatprep.subr.bf16.mxu0 %v1166
        %1409 = vmatpush1.bf16.msra.mxu0 %v1165
        %1410 = vmatprep.subr.bf16.mxu0 %v1162
        %1411 = vmatpush1.bf16.msra.mxu0 %v1161
        %1412 = vmatprep.subr.bf16.mxu0 %v1222
        %1413 = vmatpush2.bf16.msra.mxu0 %v1221
        %1414 = vmatprep.subr.bf16.mxu0 %v1218
        %1415 = vmatpush2.bf16.msra.mxu0 %v1217
        %1416 = vmatprep.subr.bf16.mxu0 %v1214
        %1417 = vmatpush2.bf16.msra.mxu0 %v1213
        %1418 = vmatprep.subr.bf16.mxu0 %v1210
        %1419 = vmatpush2.bf16.msra.mxu0 %v1209
        %1420 = vmatprep.subr.bf16.mxu0 %v1206
        %1421 = vmatpush2.bf16.msra.mxu0 %v1205
        %1422 = vmatprep.subr.bf16.mxu0 %v1202
        %1423 = vmatpush2.bf16.msra.mxu0 %v1201
        %1424 = vmatprep.subr.bf16.mxu0 %v1198
        %1425 = vmatpush2.bf16.msra.mxu0 %v1197
        %1426 = vmatprep.subr.bf16.mxu0 %v1194
        %1427 = vmatpush2.bf16.msra.mxu0 %v1193
        %1428 = vmatprep.mubr.bf16.mxu0 %v708
        %1429 = vmatmul.mubr.bf16.gmra.mxu0 %v707
        %v1430 = vpop.f32.mrf.mxu0
        %v1431 = vadd.f32 %v1388, %v1430
        %v1432 = vpop.f32.mrf.mxu0
        %v1433 = vadd.f32 %v1390, %v1432
        %v1434 = vpop.f32.mrf.mxu0
        %v1435 = vadd.f32 %v1392, %v1434
        %v1436 = vpop.f32.mrf.mxu0
        %v1437 = vadd.f32 %v1394, %v1436
        %1438 = vdwg.mxu0
        %1439 = vmatprep.subr.bf16.mxu0 %v1128
        %1440 = vmatpush1.bf16.msra.mxu0 %v1127
        %1441 = vmatprep.subr.bf16.mxu0 %v1124
        %1442 = vmatpush1.bf16.msra.mxu0 %v1123
        %1443 = vmatprep.subr.bf16.mxu0 %v1120
        %1444 = vmatpush1.bf16.msra.mxu0 %v1119
        %1445 = vmatprep.subr.bf16.mxu0 %v1116
        %1446 = vmatpush1.bf16.msra.mxu0 %v1115
        %1447 = vmatprep.subr.bf16.mxu0 %v1112
        %1448 = vmatpush1.bf16.msra.mxu0 %v1111
        %1449 = vmatprep.subr.bf16.mxu0 %v1108
        %1450 = vmatpush1.bf16.msra.mxu0 %v1107
        %1451 = vmatprep.subr.bf16.mxu0 %v1104
        %1452 = vmatpush1.bf16.msra.mxu0 %v1103
        %1453 = vmatprep.subr.bf16.mxu0 %v1100
        %1454 = vmatpush1.bf16.msra.mxu0 %v1099
        %1455 = vmatprep.subr.bf16.mxu0 %v1160
        %1456 = vmatpush2.bf16.msra.mxu0 %v1159
        %1457 = vmatprep.subr.bf16.mxu0 %v1156
        %1458 = vmatpush2.bf16.msra.mxu0 %v1155
        %1459 = vmatprep.subr.bf16.mxu0 %v1152
        %1460 = vmatpush2.bf16.msra.mxu0 %v1151
        %1461 = vmatprep.subr.bf16.mxu0 %v1148
        %1462 = vmatpush2.bf16.msra.mxu0 %v1147
        %1463 = vmatprep.subr.bf16.mxu0 %v1144
        %1464 = vmatpush2.bf16.msra.mxu0 %v1143
        %1465 = vmatprep.subr.bf16.mxu0 %v1140
        %1466 = vmatpush2.bf16.msra.mxu0 %v1139
        %1467 = vmatprep.subr.bf16.mxu0 %v1136
        %1468 = vmatpush2.bf16.msra.mxu0 %v1135
        %1469 = vmatprep.subr.bf16.mxu0 %v1132
        %1470 = vmatpush2.bf16.msra.mxu0 %v1131
        %1471 = vmatprep.mubr.bf16.mxu0 %v706
        %1472 = vmatmul.mubr.bf16.gmra.mxu0 %v705
        %v1473 = vpop.f32.mrf.mxu0
        %v1474 = vadd.f32 0.0, %v1473
        %v1475 = vpop.f32.mrf.mxu0
        %v1476 = vadd.f32 0.0, %v1475
        %v1477 = vpop.f32.mrf.mxu0
        %v1478 = vadd.f32 0.0, %v1477
        %v1479 = vpop.f32.mrf.mxu0
        %v1480 = vadd.f32 0.0, %v1479
        %1481 = vdwg.mxu0
        %1482 = vmatprep.subr.bf16.mxu0 %v1192
        %1483 = vmatpush1.bf16.msra.mxu0 %v1191
        %1484 = vmatprep.subr.bf16.mxu0 %v1188
        %1485 = vmatpush1.bf16.msra.mxu0 %v1187
        %1486 = vmatprep.subr.bf16.mxu0 %v1184
        %1487 = vmatpush1.bf16.msra.mxu0 %v1183
        %1488 = vmatprep.subr.bf16.mxu0 %v1180
        %1489 = vmatpush1.bf16.msra.mxu0 %v1179
        %1490 = vmatprep.subr.bf16.mxu0 %v1176
        %1491 = vmatpush1.bf16.msra.mxu0 %v1175
        %1492 = vmatprep.subr.bf16.mxu0 %v1172
        %1493 = vmatpush1.bf16.msra.mxu0 %v1171
        %1494 = vmatprep.subr.bf16.mxu0 %v1168
        %1495 = vmatpush1.bf16.msra.mxu0 %v1167
        %1496 = vmatprep.subr.bf16.mxu0 %v1164
        %1497 = vmatpush1.bf16.msra.mxu0 %v1163
        %1498 = vmatprep.subr.bf16.mxu0 %v1224
        %1499 = vmatpush2.bf16.msra.mxu0 %v1223
        %1500 = vmatprep.subr.bf16.mxu0 %v1220
        %1501 = vmatpush2.bf16.msra.mxu0 %v1219
        %1502 = vmatprep.subr.bf16.mxu0 %v1216
        %1503 = vmatpush2.bf16.msra.mxu0 %v1215
        %1504 = vmatprep.subr.bf16.mxu0 %v1212
        %1505 = vmatpush2.bf16.msra.mxu0 %v1211
        %1506 = vmatprep.subr.bf16.mxu0 %v1208
        %1507 = vmatpush2.bf16.msra.mxu0 %v1207
        %1508 = vmatprep.subr.bf16.mxu0 %v1204
        %1509 = vmatpush2.bf16.msra.mxu0 %v1203
        %1510 = vmatprep.subr.bf16.mxu0 %v1200
        %1511 = vmatpush2.bf16.msra.mxu0 %v1199
        %1512 = vmatprep.subr.bf16.mxu0 %v1196
        %1513 = vmatpush2.bf16.msra.mxu0 %v1195
        %1514 = vmatprep.mubr.bf16.mxu0 %v708
        %1515 = vmatmul.mubr.bf16.gmra.mxu0 %v707
        %v1516 = vpop.f32.mrf.mxu0
        %v1517 = vadd.f32 %v1474, %v1516
        %v1518 = vpop.f32.mrf.mxu0
        %v1519 = vadd.f32 %v1476, %v1518
        %v1520 = vpop.f32.mrf.mxu0
        %v1521 = vadd.f32 %v1478, %v1520
        %v1522 = vpop.f32.mrf.mxu0
        %v1523 = vadd.f32 %v1480, %v1522
        %1524 = vdwg.mxu0
        %v1525 = vadd.f32 %v553, %v1431
        %v1526 = vadd.f32 %v554, %v1433
        %v1527 = vadd.f32 %v555, %v1517
        %v1528 = vadd.f32 %v556, %v1519
        %v1529 = vadd.f32 %v557, %v1435
        %v1530 = vadd.f32 %v558, %v1437
        %v1531 = vadd.f32 %v559, %v1521
        %v1532 = vadd.f32 %v560, %v1523
        %1533 = vst [vmem:[#allocation2] sm:$0xff] %v1525
        %1534 = vst [vmem:[#allocation2 + $0x8] sm:$0xff] %v1526
        %1535 = vst [vmem:[#allocation2 + $0x10] sm:$0xff] %v1527
        %1536 = vst [vmem:[#allocation2 + $0x18] sm:$0xff] %v1528
        %1537 = vst [vmem:[#allocation2 + $0x20] sm:$0xff] %v1529
        %1538 = vst [vmem:[#allocation2 + $0x28] sm:$0xff] %v1530
        %1539 = vst [vmem:[#allocation2 + $0x30] sm:$0xff] %v1531
        %1540 = vst [vmem:[#allocation2 + $0x38] sm:$0xff] %v1532
        %p1541 = scmp.eq.s32.totalorder %s21, 7
        // Predicated region
        $region83: #{forward.14} parent=69 // pred_check
          %p1542 = pneg %p1541
        $region84: #{forward.14} parent=69 // pred_check_branch
          %1544 = sbr.rel (%p1542) target = $region86
        $region85: #{forward.14} parent=69 // pred_region
          %v1545 = vld [vmem:[#allocation2] sm:$0xff]
          %v1546 = vld [vmem:[#allocation2 + $0x8] sm:$0xff]
          %v1547 = vld [vmem:[#allocation2 + $0x10] sm:$0xff]
          %v1548 = vld [vmem:[#allocation2 + $0x18] sm:$0xff]
          %v1549 = vld [vmem:[#allocation2 + $0x20] sm:$0xff]
          %v1550 = vld [vmem:[#allocation2 + $0x28] sm:$0xff]
          %v1551 = vld [vmem:[#allocation2 + $0x30] sm:$0xff]
          %v1552 = vld [vmem:[#allocation2 + $0x38] sm:$0xff]
          %v1553 = vld [vmem:[%s537] sm:$0xf]
          %v1555 = vlaneseq
          %v1556 = vshrl.u32 %v1555, 7
          %v1557 = vsub.s32 0, %v1556
          %v1558 = vrot.slane %v1553, %v1557
          %v1559 = vlaneseq
          %v1560 = vshrl.u32 %v1559, 7
          %v1561 = vsub.s32 1, %v1560
          %v1562 = vrot.slane %v1553, %v1561
          %v1563 = vlaneseq
          %v1564 = vshrl.u32 %v1563, 7
          %v1565 = vsub.s32 2, %v1564
          %v1566 = vrot.slane %v1553, %v1565
          %v1567 = vlaneseq
          %v1568 = vshrl.u32 %v1567, 7
          %v1569 = vsub.s32 3, %v1568
          %v1570 = vrot.slane %v1553, %v1569
          %v1575 = vadd.f32 %v1545, %v1558
          %v1576 = vadd.f32 %v1546, %v1562
          %v1577 = vadd.f32 %v1547, %v1566
          %v1578 = vadd.f32 %v1548, %v1570
          %v1579 = vadd.f32 %v1549, %v1558
          %v1580 = vadd.f32 %v1550, %v1562
          %v1581 = vadd.f32 %v1551, %v1566
          %v1582 = vadd.f32 %v1552, %v1570
          %v1583 = vmax.f32 %v1575, 0.0
          %v1584 = vmax.f32 %v1576, 0.0
          %v1585 = vmax.f32 %v1577, 0.0
          %v1586 = vmax.f32 %v1578, 0.0
          %v1587 = vmax.f32 %v1579, 0.0
          %v1588 = vmax.f32 %v1580, 0.0
          %v1589 = vmax.f32 %v1581, 0.0
          %v1590 = vmax.f32 %v1582, 0.0
          %v1591 = vpack.c.bf16 %v1587, %v1583
          %v1592 = vpack.c.bf16 %v1588, %v1584
          %v1593 = vpack.c.bf16 %v1589, %v1585
          %v1594 = vpack.c.bf16 %v1590, %v1586
          %v1599 = vunpack.c.l.b16 %v1591
          %v1600 = vunpack.c.l.b16 %v1592
          %v1601 = vunpack.c.l.b16 %v1593
          %v1602 = vunpack.c.l.b16 %v1594
          %v1603 = vunpack.c.h.b16 %v1591
          %v1604 = vunpack.c.h.b16 %v1592
          %v1605 = vunpack.c.h.b16 %v1593
          %v1606 = vunpack.c.h.b16 %v1594
          %v1607 = vpack.c.b16 %v1600, %v1599
          %v1608 = vpack.c.b16 %v1602, %v1601
          %v1609 = vpack.c.b16 %v1604, %v1603
          %v1610 = vpack.c.b16 %v1606, %v1605
          %1615 = vst [vmem:[%s529] sm:$0xff] %v1607
          %1616 = vst [vmem:[%s529 + $0x8] sm:$0xff] %v1608
          %1617 = vst [vmem:[%s529 + $0x10] sm:$0xff] %v1609
          %1618 = vst [vmem:[%s529 + $0x18] sm:$0xff] %v1610
        $region86: #{forward.14} parent=69 // pred_fallthru
          _
        %s1619 = sand.u32 %s125, 1
        %s1620 = sand.u32 %s125, 1
        %s1621 = smul.addr %s1620, 32
        %s1622 = scalar_lea.vmem [#allocation5], %s1621
        // Predicated region
        $region87: #{forward.14} parent=69 // pred_check
          %p1623 = pneg %p135
        $region88: #{forward.14} parent=69 // pred_check_branch
          %1625 = sbr.rel (%p1623) target = $region90
        $region89: #{forward.14} parent=69 // pred_region
          %s1626 = smul.u32 2, %s19
          %s1627 = smul.u32 4, %s20
          %s1628 = smul.addr %s1626, 32
          %s1629 = sadd.s32 %s1627, %s1628
          %s1630 = smul.addr %s1629, 4
          %s1631 = scalar_lea.vmem %s3, %s1630
          // Predicated region
          $region91: #{forward.14} parent=89 // pred_check
            _
          $region92: #{forward.14} parent=89 // pred_check_branch
            %1633 = sbr.rel (0) target = $region94
          $region93: #{forward.14} parent=89 // pred_region
            // Predicated region
            $region95: #{forward.14} parent=93 // pred_check
              _
            $region96: #{forward.14} parent=93 // pred_check_branch
              %1635 = sbr.rel (0) target = $region98
            $region97: #{forward.14} parent=93 // pred_region
              loop: start=0, step=1, limit=1
              $region99: #{forward.14} parent=97 // loop_pre_header
                _
              $region100: #{forward.14} parent=97 // loop_header
                %s1637 = sphi 0, %s1641
                %p1638 = scmp.ge.s32.totalorder %s1637, 1
                %s1642 = sphi %s1622, %s1622
                %s1643 = sphi %s1631, %s1631
              $region101: #{forward.14} parent=97 // loop_header_branch
                %1640 = sbr.rel (%p1638) target = $region105
              $region102: #{forward.14} parent=97 // loop_body
                %v1644 = vld [vmem:[%s1642] sm:$0xff]
                %1645 = vst [vmem:[%s1643] sm:$0xff] %v1644
                %v1646 = vld [vmem:[%s1642 + $0x8] sm:$0xff]
                %1647 = vst [vmem:[%s1643 + $0x8] sm:$0xff] %v1646
                %v1648 = vld [vmem:[%s1642 + $0x10] sm:$0xff]
                %1649 = vst [vmem:[%s1643 + $0x80] sm:$0xff] %v1648
                %v1650 = vld [vmem:[%s1642 + $0x18] sm:$0xff]
                %1651 = vst [vmem:[%s1643 + $0x88] sm:$0xff] %v1650
              $region103: #{forward.14} parent=97 // loop_footer
                %s1641 = sadd.s32 1, %s1637
              $region104: #{forward.14} parent=97 // loop_footer_branch
                %1636 = sbr.rel target = $region100
              $region105: #{forward.14} parent=97 // loop_exit
                _
            $region98: #{forward.14} parent=93 // pred_fallthru
              _
            // Predicated region
            $region106: #{forward.14} parent=93 // pred_check
              _
            $region107: #{forward.14} parent=93 // pred_check_branch
              %1653 = sbr.rel target = $region109
            $region108: #{forward.14} parent=93 // pred_region
              _
            $region109: #{forward.14} parent=93 // pred_fallthru
              _
          $region94: #{forward.14} parent=89 // pred_fallthru
            _
          %1654 = vnop
        $region90: #{forward.14} parent=69 // pred_fallthru
          _
      $region70: #{forward.14} parent=5 // pred_fallthru
        _
      %p1655 = scmp.le.s32.totalorder 2, %s9
      // Predicated region
      $region110: #{forward.14} parent=5 // pred_check
        %p1656 = pneg %p1655
      $region111: #{forward.14} parent=5 // pred_check_branch
        %1658 = sbr.rel (%p1656) target = $region113
      $region112: #{forward.14} parent=5 // pred_region
        %s1659 = ssub.s32 %s9, 2
        // Predicated region
        $region114: #{forward.14} parent=112 // pred_check
          %p1660 = pneg %p141
        $region115: #{forward.14} parent=112 // pred_check_branch
          %1662 = sbr.rel (%p1660) target = $region117
        $region116: #{forward.14} parent=112 // pred_region
          %s1663 = sand.u32 %s126, 1
          %s1664 = sand.u32 %s126, 1
          %s1665 = smul.addr %s1664, 32
          %s1666 = scalar_lea.vmem [#allocation5], %s1665
        $region117: #{forward.14} parent=112 // pred_fallthru
          _
      $region113: #{forward.14} parent=5 // pred_fallthru
        _
    $region6: #{forward.14} parent=1 // loop_footer
      %s13 = sadd.s32 1, %s9
    $region7: #{forward.14} parent=1 // loop_footer_branch
      %8 = sbr.rel target = $region3
    $region8: #{forward.14} parent=1 // loop_exit
      _

// kernel: forward.15
$region0: #{forward.15}
  #allocation0 [shape = 'u32[]', space=smem, size = 0x4, offset = 0x4, fixed_abs, tag = 'smem constant byte address 0x4 - core index']
  #allocation1 [shape = 'u32[144,128]{1,0:T(1,128)}', space=vmem, size = 0x12000, scoped, tag = 'internal scratch']
  #allocation2 [shape = 'f32[16,128]{1,0:T(8,128)}', space=vmem, size = 0x2000, scoped, tag = 'scratch operand']
  %s0 = inlined_call_operand.vmem [shape: bf16[16,4096], index: 0, kind: input, shape index: {}]
  %s1 = inlined_call_operand.vmem [shape: bf16[4096,128], index: 1, kind: input, shape index: {}]
  %s2 = inlined_call_operand.vmem [shape: f32[1,128], index: 2, kind: input, shape index: {}]
  %s3 = inlined_call_operand.vmem [shape: f32[16,128], index: 3, kind: output, shape index: {}]
  %s4 = sld [smem:[#allocation0]]
  $region76: #{forward.15} parent=0
    _
  %s6 = ssub.s32 1, %s4
  %s7 = scalar_select 0, %s6, %s4
  $region1: #{forward.15} parent=0
    #allocation3 [shape = 'u8[32768]{0}', space=vmem, size = 0x8000, scoped, tag = 'input window, operand 0']
    loop: start=0, step=1, limit=10
    $region2: #{forward.15} parent=1 // loop_pre_header
      _
    $region3: #{forward.15} parent=1 // loop_header
      %s9 = sphi 0, %s13
      %p10 = scmp.ge.s32.totalorder %s9, 10
      %s16 = sphi 0, %s35
      %s17 = sphi 0, %s31
      %s18 = sphi 0, %s27
      %s19 = sphi 0, %s16
      %s20 = sphi 0, %s17
      %s21 = sphi 0, %s18
      %s22 = sphi 0, %s19
      %s23 = sphi 0, %s20
      %s24 = sphi 0, %s21
      %s40 = sphi 0, %s42
      %s43 = sphi 0, %s40
      %s44 = sphi 0, %s43
      %s60 = sphi 0, %s44
      %s68 = sphi 0, %s70
      %s71 = sphi 0, %s68
      %s72 = sphi 0, %s71
      %s88 = sphi 0, %s72
      %s94 = sphi 0, %s96
      %s97 = sphi 0, %s94
      %s98 = sphi 0, %s97
      %s114 = sphi 0, %s98
      %s122 = sphi 0, %s124
      %s125 = sphi 0, %s122
      %s126 = sphi 0, %s125
      %s142 = sphi 0, %s126
    $region4: #{forward.15} parent=1 // loop_header_branch
      %12 = sbr.rel (%p10) target = $region8
    $region5: #{forward.15} parent=1 // loop_body
      %s14 = ssub.s32 %s9, 1
      %s15 = ssub.s32 %s9, 2
      %s25 = sadd.s32 1, %s18
      %p26 = scmp.ge.s32.totalorder %s25, 8
      %s27 = scalar_select %p26, 0, %s25
      %s28 = sadd.s32 1, %s17
      %s29 = scalar_select %p26, %s28, %s17
      %p30 = scmp.ge.s32.totalorder %s29, 1
      %s31 = scalar_select %p30, 0, %s29
      %s32 = sadd.s32 1, %s16
      %s33 = scalar_select %p30, %s32, %s16
      %p34 = scmp.ge.s32.totalorder %s33, 1
      %s35 = scalar_select %p34, 0, %s33
      %s36 = ssub.s32 %s16, %s35
      %s37 = ssub.s32 %s18, %s27
      %s38 = sor.u32 %s36, %s37
      %p39 = scmp.eq.s32.totalorder %s38, 0
      %s41 = sadd.s32 %s40, 1
      %s42 = scalar_select %p39, %s40, %s41
      %p45 = pneg %p39
      %p46 = scmp.eq.s32.totalorder %s9, 7
      %p47 = por %p45, %p46
      %p48 = scmp.ne.s32.totalorder %s40, %s43
      %p49 = scmp.eq.s32.totalorder %s9, 0
      %p50 = por %p48, %p49
      %p51 = scmp.ne.s32.totalorder %s40, %s43
      %p52 = scmp.eq.s32.totalorder %s14, 7
      %p53 = por %p51, %p52
      %p54 = scmp.ne.s32.totalorder %s43, %s44
      %p55 = scmp.eq.s32.totalorder %s14, 0
      %p56 = por %p54, %p55
      %p57 = scmp.ne.s32.totalorder %s43, %s44
      %p58 = scmp.eq.s32.totalorder %s15, 7
      %p59 = por %p57, %p58
      %p61 = scmp.ne.s32.totalorder %s44, %s60
      %p62 = scmp.eq.s32.totalorder %s15, 0
      %p63 = por %p61, %p62
      %s64 = ssub.s32 %s18, %s27
      %s65 = ssub.s32 %s17, %s31
      %s66 = sor.u32 %s64, %s65
      %p67 = scmp.eq.s32.totalorder %s66, 0
      %s69 = sadd.s32 %s68, 1
      %s70 = scalar_select %p67, %s68, %s69
      %p73 = pneg %p67
      %p74 = scmp.eq.s32.totalorder %s9, 7
      %p75 = por %p73, %p74
      %p76 = scmp.ne.s32.totalorder %s68, %s71
      %p77 = scmp.eq.s32.totalorder %s9, 0
      %p78 = por %p76, %p77
      %p79 = scmp.ne.s32.totalorder %s68, %s71
      %p80 = scmp.eq.s32.totalorder %s14, 7
      %p81 = por %p79, %p80
      %p82 = scmp.ne.s32.totalorder %s71, %s72
      %p83 = scmp.eq.s32.totalorder %s14, 0
      %p84 = por %p82, %p83
      %p85 = scmp.ne.s32.totalorder %s71, %s72
      %p86 = scmp.eq.s32.totalorder %s15, 7
      %p87 = por %p85, %p86
      %p89 = scmp.ne.s32.totalorder %s72, %s88
      %p90 = scmp.eq.s32.totalorder %s15, 0
      %p91 = por %p89, %p90
      %s92 = ssub.s32 %s17, %s31
      %p93 = scmp.eq.s32.totalorder %s92, 0
      %s95 = sadd.s32 %s94, 1
      %s96 = scalar_select %p93, %s94, %s95
      %p99 = pneg %p93
      %p100 = scmp.eq.s32.totalorder %s9, 7
      %p101 = por %p99, %p100
      %p102 = scmp.ne.s32.totalorder %s94, %s97
      %p103 = scmp.eq.s32.totalorder %s9, 0
      %p104 = por %p102, %p103
      %p105 = scmp.ne.s32.totalorder %s94, %s97
      %p106 = scmp.eq.s32.totalorder %s14, 7
      %p107 = por %p105, %p106
      %p108 = scmp.ne.s32.totalorder %s97, %s98
      %p109 = scmp.eq.s32.totalorder %s14, 0
      %p110 = por %p108, %p109
      %p111 = scmp.ne.s32.totalorder %s97, %s98
      %p112 = scmp.eq.s32.totalorder %s15, 7
      %p113 = por %p111, %p112
      %p115 = scmp.ne.s32.totalorder %s98, %s114
      %p116 = scmp.eq.s32.totalorder %s15, 0
      %p117 = por %p115, %p116
      %s118 = ssub.s32 %s16, %s35
      %s119 = ssub.s32 %s17, %s31
      %s120 = sor.u32 %s118, %s119
      %p121 = scmp.eq.s32.totalorder %s120, 0
      %s123 = sadd.s32 %s122, 1
      %s124 = scalar_select %p121, %s122, %s123
      %p127 = pneg %p121
      %p128 = scmp.eq.s32.totalorder %s9, 7
      %p129 = por %p127, %p128
      %p130 = scmp.ne.s32.totalorder %s122, %s125
      %p131 = scmp.eq.s32.totalorder %s9, 0
      %p132 = por %p130, %p131
      %p133 = scmp.ne.s32.totalorder %s122, %s125
      %p134 = scmp.eq.s32.totalorder %s14, 7
      %p135 = por %p133, %p134
      %p136 = scmp.ne.s32.totalorder %s125, %s126
      %p137 = scmp.eq.s32.totalorder %s14, 0
      %p138 = por %p136, %p137
      %p139 = scmp.ne.s32.totalorder %s125, %s126
      %p140 = scmp.eq.s32.totalorder %s15, 7
      %p141 = por %p139, %p140
      %p143 = scmp.ne.s32.totalorder %s126, %s142
      %p144 = scmp.eq.s32.totalorder %s15, 0
      %p145 = por %p143, %p144
      %p146 = scmp.le.s32.totalorder 1, %s9
      %p147 = scmp.lt.s32.totalorder %s9, 9
      %p148 = pnand %p146, %p147
      %p149 = pneg %p148
      // Predicated region
      $region9: #{forward.15} parent=5 // pred_check
        _
      $region10: #{forward.15} parent=5 // pred_check_branch
        %151 = sbr.rel (%p148) target = $region12
      $region11: #{forward.15} parent=5 // pred_region
        %s152 = ssub.s32 %s9, 1
        // Predicated region
        $region13: #{forward.15} parent=11 // pred_check
          %p153 = pneg %p110
        $region14: #{forward.15} parent=11 // pred_check_branch
          %155 = sbr.rel (%p153) target = $region16
        $region15: #{forward.15} parent=11 // pred_region
          %p156 = scmp.lt.s32.totalorder %s20, 0
          %s157 = scalar_select %p156, %s20, 0
          %s158 = scalar_lea.vmem %s2, %s157
        $region16: #{forward.15} parent=11 // pred_fallthru
          _
      $region12: #{forward.15} parent=5 // pred_fallthru
        _
      %p159 = scmp.lt.s32.totalorder %s9, 8
      // Predicated region
      $region17: #{forward.15} parent=5 // pred_check
        %p160 = pneg %p159
      $region18: #{forward.15} parent=5 // pred_check_branch
        %162 = sbr.rel (%p160) target = $region20
      $region19: #{forward.15} parent=5 // pred_region
        // Predicated region
        $region21: #{forward.15} parent=19 // pred_check
          %p163 = pneg %p50
        $region22: #{forward.15} parent=19 // pred_check_branch
          %165 = sbr.rel (%p163) target = $region24
        $region23: #{forward.15} parent=19 // pred_region
          %s166 = sand.u32 %s40, 1
          %s167 = sand.u32 %s40, 1
          %s168 = smul.addr %s167, 32
          %s169 = scalar_lea.vmem [#allocation3], %s168
          %s170 = smul.u32 2, %s16
          %s171 = smul.u32 4, %s18
          %s172 = smul.addr %s170, 32
          %s173 = sadd.s32 %s171, %s172
          %s174 = smul.addr %s173, 4
          %s175 = scalar_lea.vmem %s0, %s174
          // Predicated region
          $region25: #{forward.15} parent=23 // pred_check
            _
          $region26: #{forward.15} parent=23 // pred_check_branch
            %177 = sbr.rel (0) target = $region28
          $region27: #{forward.15} parent=23 // pred_region
            // Predicated region
            $region29: #{forward.15} parent=27 // pred_check
              _
            $region30: #{forward.15} parent=27 // pred_check_branch
              %179 = sbr.rel (0) target = $region32
            $region31: #{forward.15} parent=27 // pred_region
              loop: start=0, step=1, limit=1
              $region33: #{forward.15} parent=31 // loop_pre_header
                _
              $region34: #{forward.15} parent=31 // loop_header
                %s181 = sphi 0, %s185
                %p182 = scmp.ge.s32.totalorder %s181, 1
                %s186 = sphi %s175, %s175
                %s187 = sphi %s169, %s169
              $region35: #{forward.15} parent=31 // loop_header_branch
                %184 = sbr.rel (%p182) target = $region39
              $region36: #{forward.15} parent=31 // loop_body
                %v188 = vld [vmem:[%s186] sm:$0xff]
                %189 = vst [vmem:[%s187] sm:$0xff] %v188
                %v190 = vld [vmem:[%s186 + $0x8] sm:$0xff]
                %191 = vst [vmem:[%s187 + $0x8] sm:$0xff] %v190
                %v192 = vld [vmem:[%s186 + $0x80] sm:$0xff]
                %193 = vst [vmem:[%s187 + $0x10] sm:$0xff] %v192
                %v194 = vld [vmem:[%s186 + $0x88] sm:$0xff]
                %195 = vst [vmem:[%s187 + $0x18] sm:$0xff] %v194
              $region37: #{forward.15} parent=31 // loop_footer
                %s185 = sadd.s32 1, %s181
              $region38: #{forward.15} parent=31 // loop_footer_branch
                %180 = sbr.rel target = $region34
              $region39: #{forward.15} parent=31 // loop_exit
                _
            $region32: #{forward.15} parent=27 // pred_fallthru
              _
            // Predicated region
            $region40: #{forward.15} parent=27 // pred_check
              _
            $region41: #{forward.15} parent=27 // pred_check_branch
              %197 = sbr.rel target = $region43
            $region42: #{forward.15} parent=27 // pred_region
              _
            $region43: #{forward.15} parent=27 // pred_fallthru
              _
          $region28: #{forward.15} parent=23 // pred_fallthru
            _
          %198 = vnop
        $region24: #{forward.15} parent=19 // pred_fallthru
          _
        // Predicated region
        $region44: #{forward.15} parent=19 // pred_check
          %p199 = pneg %p78
        $region45: #{forward.15} parent=19 // pred_check_branch
          %201 = sbr.rel (%p199) target = $region47
        $region46: #{forward.15} parent=19 // pred_region
          %s202 = smul.u32 64, %s18
          %p203 = scmp.lt.s32.totalorder %s202, 511
          %s204 = scalar_select %p203, %s202, 511
          %p205 = scmp.lt.s32.totalorder %s17, 0
          %s206 = scalar_select %p205, %s17, 0
          %s207 = sadd.s32 %s206, %s204
          %s208 = smul.addr %s207, 4
          %s209 = scalar_lea.vmem %s1, %s208
          %s210 = smul.u32 64, %s18
        $region47: #{forward.15} parent=19 // pred_fallthru
          _
      $region20: #{forward.15} parent=5 // pred_fallthru
        _
      %p211 = scmp.le.s32.totalorder 1, %s9
      %p212 = scmp.lt.s32.totalorder %s9, 9
      %p213 = pnand %p211, %p212
      %p214 = pneg %p213
      // Predicated region
      $region48: #{forward.15} parent=5 // pred_check
        _
      $region49: #{forward.15} parent=5 // pred_check_branch
        %216 = sbr.rel (%p213) target = $region51
      $region50: #{forward.15} parent=5 // pred_region
        %s217 = ssub.s32 %s9, 1
        %s218 = sand.u32 %s43, 1
        %s219 = sand.u32 %s43, 1
        %s220 = smul.addr %s219, 32
        %s221 = scalar_lea.vmem [#allocation3], %s220
        // Predicated region
        $region52: #{forward.15} parent=50 // pred_check
          %p222 = pneg %p56
        $region53: #{forward.15} parent=50 // pred_check_branch
          %224 = sbr.rel (%p222) target = $region55
        $region54: #{forward.15} parent=50 // pred_region
          _
        $region55: #{forward.15} parent=50 // pred_fallthru
          _
        %s225 = sand.u32 %s43, 1
        %s226 = sand.u32 %s43, 1
        %s227 = smul.addr %s226, 32
        %s228 = scalar_lea.vmem [#allocation3], %s227
        %p229 = pneg %p56
        %p230 = pneg %p53
        %s231 = smul.u32 64, %s21
        %p232 = scmp.lt.s32.totalorder %s231, 511
        %s233 = scalar_select %p232, %s231, 511
        %p234 = scmp.lt.s32.totalorder %s20, 0
        %s235 = scalar_select %p234, %s20, 0
        %s236 = sadd.s32 %s235, %s233
        %s237 = smul.addr %s236, 4
        %s238 = scalar_lea.vmem %s1, %s237
        %p239 = pneg %p84
        %p240 = pneg %p81
        %p241 = scmp.lt.s32.totalorder %s20, 0
        %s242 = scalar_select %p241, %s20, 0
        %s243 = scalar_lea.vmem %s2, %s242
        %p244 = pneg %p110
        %p245 = pneg %p107
        %p246 = pneg %p138
        %p247 = pneg %p135
        %s248 = smul.u32 2, %s19
        %p249 = scmp.lt.s32.totalorder %s248, 1
        %s250 = scalar_select %p249, %s248, 1
        %p251 = scmp.lt.s32.totalorder %s20, 0
        %s252 = scalar_select %p251, %s20, 0
        %s253 = sadd.s32 %s252, %s250
        %s254 = smul.addr %s253, 8
        %s255 = scalar_lea.vmem %s3, %s254
        %s256 = smul.u32 2, %s19
        %s257 = smul.u32 4, %s21
        %s258 = smul.u32 64, %s21
        %p259 = scmp.lt.s32.totalorder %s258, 511
        %s260 = scalar_select %p259, %s258, 511
        %p261 = scmp.lt.s32.totalorder %s20, 0
        %s262 = scalar_select %p261, %s20, 0
        %s263 = sadd.s32 %s262, %s260
        %s264 = smul.addr %s263, 4
        %s265 = scalar_lea.vmem %s1, %s264
        %s266 = smul.u32 64, %s21
        %p267 = scmp.lt.s32.totalorder %s20, 0
        %s268 = scalar_select %p267, %s20, 0
        %s269 = scalar_lea.vmem %s2, %s268
        %s270 = smul.u32 2, %s19
        %p271 = scmp.lt.s32.totalorder %s270, 1
        %s272 = scalar_select %p271, %s270, 1
        %p273 = scmp.lt.s32.totalorder %s20, 0
        %s274 = scalar_select %p273, %s20, 0
        %s275 = sadd.s32 %s274, %s272
        %s276 = smul.addr %s275, 8
        %s277 = scalar_lea.vmem %s3, %s276
        %s278 = smul.u32 2, %s19
        %p280 = scmp.eq.s32.totalorder %s21, 0
        // Predicated region
        $region56: #{forward.15} parent=50 // pred_check
          %p281 = pneg %p280
        $region57: #{forward.15} parent=50 // pred_check_branch
          %283 = sbr.rel (%p281) target = $region59
        $region58: #{forward.15} parent=50 // pred_region
          %284 = vst [vmem:[#allocation2] sm:$0xff] 0.0
          %285 = vst [vmem:[#allocation2 + $0x8] sm:$0xff] 0.0
        $region59: #{forward.15} parent=50 // pred_fallthru
          _
        %v286 = vld [vmem:[#allocation2] sm:$0xff]
        %v287 = vld [vmem:[#allocation2 + $0x8] sm:$0xff]
        %v288 = vld [vmem:[%s221] sm:$0xff]
        %v289 = vld [vmem:[%s221 + $0x8] sm:$0xff]
        %v290 = vld [vmem:[%s221 + $0x10] sm:$0xff]
        %v291 = vld [vmem:[%s221 + $0x18] sm:$0xff]
        %v292 = vld [vmem:[%s265] sm:$0xf]
        %v293 = vld [vmem:[%s265 + $0x4] sm:$0xf]
        %v294 = vld [vmem:[%s265 + $0x8] sm:$0xf]
        %v295 = vld [vmem:[%s265 + $0xc] sm:$0xf]
        %v296 = vld [vmem:[%s265 + $0x10] sm:$0xf]
        %v297 = vld [vmem:[%s265 + $0x14] sm:$0xf]
        %v298 = vld [vmem:[%s265 + $0x18] sm:$0xf]
        %v299 = vld [vmem:[%s265 + $0x1c] sm:$0xf]
        %v300 = vld [vmem:[%s265 + $0x20] sm:$0xf]
        %v301 = vld [vmem:[%s265 + $0x24] sm:$0xf]
        %v302 = vld [vmem:[%s265 + $0x28] sm:$0xf]
        %v303 = vld [vmem:[%s265 + $0x2c] sm:$0xf]
        %v304 = vld [vmem:[%s265 + $0x30] sm:$0xf]
        %v305 = vld [vmem:[%s265 + $0x34] sm:$0xf]
        %v306 = vld [vmem:[%s265 + $0x38] sm:$0xf]
        %v307 = vld [vmem:[%s265 + $0x3c] sm:$0xf]
        %v308 = vld [vmem:[%s265 + $0x40] sm:$0xf]
        %v309 = vld [vmem:[%s265 + $0x44] sm:$0xf]
        %v310 = vld [vmem:[%s265 + $0x48] sm:$0xf]
        %v311 = vld [vmem:[%s265 + $0x4c] sm:$0xf]
        %v312 = vld [vmem:[%s265 + $0x50] sm:$0xf]
        %v313 = vld [vmem:[%s265 + $0x54] sm:$0xf]
        %v314 = vld [vmem:[%s265 + $0x58] sm:$0xf]
        %v315 = vld [vmem:[%s265 + $0x5c] sm:$0xf]
        %v316 = vld [vmem:[%s265 + $0x60] sm:$0xf]
        %v317 = vld [vmem:[%s265 + $0x64] sm:$0xf]
        %v318 = vld [vmem:[%s265 + $0x68] sm:$0xf]
        %v319 = vld [vmem:[%s265 + $0x6c] sm:$0xf]
        %v320 = vld [vmem:[%s265 + $0x70] sm:$0xf]
        %v321 = vld [vmem:[%s265 + $0x74] sm:$0xf]
        %v322 = vld [vmem:[%s265 + $0x78] sm:$0xf]
        %v323 = vld [vmem:[%s265 + $0x7c] sm:$0xf]
        %v324 = vld [vmem:[%s265 + $0x80] sm:$0xf]
        %v325 = vld [vmem:[%s265 + $0x84] sm:$0xf]
        %v326 = vld [vmem:[%s265 + $0x88] sm:$0xf]
        %v327 = vld [vmem:[%s265 + $0x8c] sm:$0xf]
        %v328 = vld [vmem:[%s265 + $0x90] sm:$0xf]
        %v329 = vld [vmem:[%s265 + $0x94] sm:$0xf]
        %v330 = vld [vmem:[%s265 + $0x98] sm:$0xf]
        %v331 = vld [vmem:[%s265 + $0x9c] sm:$0xf]
        %v332 = vld [vmem:[%s265 + $0xa0] sm:$0xf]
        %v333 = vld [vmem:[%s265 + $0xa4] sm:$0xf]
        %v334 = vld [vmem:[%s265 + $0xa8] sm:$0xf]
        %v335 = vld [vmem:[%s265 + $0xac] sm:$0xf]
        %v336 = vld [vmem:[%s265 + $0xb0] sm:$0xf]
        %v337 = vld [vmem:[%s265 + $0xb4] sm:$0xf]
        %v338 = vld [vmem:[%s265 + $0xb8] sm:$0xf]
        %v339 = vld [vmem:[%s265 + $0xbc] sm:$0xf]
        %v340 = vld [vmem:[%s265 + $0xc0] sm:$0xf]
        %v341 = vld [vmem:[%s265 + $0xc4] sm:$0xf]
        %v342 = vld [vmem:[%s265 + $0xc8] sm:$0xf]
        %v343 = vld [vmem:[%s265 + $0xcc] sm:$0xf]
        %v344 = vld [vmem:[%s265 + $0xd0] sm:$0xf]
        %v345 = vld [vmem:[%s265 + $0xd4] sm:$0xf]
        %v346 = vld [vmem:[%s265 + $0xd8] sm:$0xf]
        %v347 = vld [vmem:[%s265 + $0xdc] sm:$0xf]
        %v348 = vld [vmem:[%s265 + $0xe0] sm:$0xf]
        %v349 = vld [vmem:[%s265 + $0xe4] sm:$0xf]
        %v350 = vld [vmem:[%s265 + $0xe8] sm:$0xf]
        %v351 = vld [vmem:[%s265 + $0xec] sm:$0xf]
        %v352 = vld [vmem:[%s265 + $0xf0] sm:$0xf]
        %v353 = vld [vmem:[%s265 + $0xf4] sm:$0xf]
        %v354 = vld [vmem:[%s265 + $0xf8] sm:$0xf]
        %v355 = vld [vmem:[%s265 + $0xfc] sm:$0xf]
        %v360 = vunpack.c.l.b16 %v288
        %v361 = vunpack.c.h.b16 %v288
        %v362 = vunpack.c.l.b16 %v289
        %v363 = vunpack.c.h.b16 %v289
        %v364 = vunpack.c.l.b16 %v290
        %v365 = vunpack.c.h.b16 %v290
        %v366 = vunpack.c.l.b16 %v291
        %v367 = vunpack.c.h.b16 %v291
        %v368 = vpack.c.b16 %v364, %v360
        %v369 = vpack.c.b16 %v365, %v361
        %v370 = vpack.c.b16 %v366, %v362
        %v371 = vpack.c.b16 %v367, %v363
        %v440 = vunpack.c.l.b16 %v292
        %v441 = vunpack.c.l.b16 %v293
        %v442 = vunpack.c.l.b16 %v294
        %v443 = vunpack.c.l.b16 %v295
        %v444 = vunpack.c.l.b16 %v296
        %v445 = vunpack.c.l.b16 %v297
        %v446 = vunpack.c.l.b16 %v298
        %v447 = vunpack.c.l.b16 %v299
        %v448 = vunpack.c.l.b16 %v300
        %v449 = vunpack.c.l.b16 %v301
        %v450 = vunpack.c.l.b16 %v302
        %v451 = vunpack.c.l.b16 %v303
        %v452 = vunpack.c.l.b16 %v304
        %v453 = vunpack.c.l.b16 %v305
        %v454 = vunpack.c.l.b16 %v306
        %v455 = vunpack.c.l.b16 %v307
        %v456 = vunpack.c.l.b16 %v308
        %v457 = vunpack.c.l.b16 %v309
        %v458 = vunpack.c.l.b16 %v310
        %v459 = vunpack.c.l.b16 %v311
        %v460 = vunpack.c.l.b16 %v312
        %v461 = vunpack.c.l.b16 %v313
        %v462 = vunpack.c.l.b16 %v314
        %v463 = vunpack.c.l.b16 %v315
        %v464 = vunpack.c.l.b16 %v316
        %v465 = vunpack.c.l.b16 %v317
        %v466 = vunpack.c.l.b16 %v318
        %v467 = vunpack.c.l.b16 %v319
        %v468 = vunpack.c.l.b16 %v320
        %v469 = vunpack.c.l.b16 %v321
        %v470 = vunpack.c.l.b16 %v322
        %v471 = vunpack.c.l.b16 %v323
        %v472 = vunpack.c.l.b16 %v324
        %v473 = vunpack.c.l.b16 %v325
        %v474 = vunpack.c.l.b16 %v326
        %v475 = vunpack.c.l.b16 %v327
        %v476 = vunpack.c.l.b16 %v328
        %v477 = vunpack.c.l.b16 %v329
        %v478 = vunpack.c.l.b16 %v330
        %v479 = vunpack.c.l.b16 %v331
        %v480 = vunpack.c.l.b16 %v332
        %v481 = vunpack.c.l.b16 %v333
        %v482 = vunpack.c.l.b16 %v334
        %v483 = vunpack.c.l.b16 %v335
        %v484 = vunpack.c.l.b16 %v336
        %v485 = vunpack.c.l.b16 %v337
        %v486 = vunpack.c.l.b16 %v338
        %v487 = vunpack.c.l.b16 %v339
        %v488 = vunpack.c.l.b16 %v340
        %v489 = vunpack.c.l.b16 %v341
        %v490 = vunpack.c.l.b16 %v342
        %v491 = vunpack.c.l.b16 %v343
        %v492 = vunpack.c.l.b16 %v344
        %v493 = vunpack.c.l.b16 %v345
        %v494 = vunpack.c.l.b16 %v346
        %v495 = vunpack.c.l.b16 %v347
        %v496 = vunpack.c.l.b16 %v348
        %v497 = vunpack.c.l.b16 %v349
        %v498 = vunpack.c.l.b16 %v350
        %v499 = vunpack.c.l.b16 %v351
        %v500 = vunpack.c.l.b16 %v352
        %v501 = vunpack.c.l.b16 %v353
        %v502 = vunpack.c.l.b16 %v354
        %v503 = vunpack.c.l.b16 %v355
        %v504 = vpack.c.b16 %v441, %v440
        %v505 = vpack.c.b16 %v443, %v442
        %v506 = vpack.c.b16 %v445, %v444
        %v507 = vpack.c.b16 %v447, %v446
        %v508 = vpack.c.b16 %v449, %v448
        %v509 = vpack.c.b16 %v451, %v450
        %v510 = vpack.c.b16 %v453, %v452
        %v511 = vpack.c.b16 %v455, %v454
        %v512 = vpack.c.b16 %v457, %v456
        %v513 = vpack.c.b16 %v459, %v458
        %v514 = vpack.c.b16 %v461, %v460
        %v515 = vpack.c.b16 %v463, %v462
        %v516 = vpack.c.b16 %v465, %v464
        %v517 = vpack.c.b16 %v467, %v466
        %v518 = vpack.c.b16 %v469, %v468
        %v519 = vpack.c.b16 %v471, %v470
        %v520 = vpack.c.b16 %v473, %v472
        %v521 = vpack.c.b16 %v475, %v474
        %v522 = vpack.c.b16 %v477, %v476
        %v523 = vpack.c.b16 %v479, %v478
        %v524 = vpack.c.b16 %v481, %v480
        %v525 = vpack.c.b16 %v483, %v482
        %v526 = vpack.c.b16 %v485, %v484
        %v527 = vpack.c.b16 %v487, %v486
        %v528 = vpack.c.b16 %v489, %v488
        %v529 = vpack.c.b16 %v491, %v490
        %v530 = vpack.c.b16 %v493, %v492
        %v531 = vpack.c.b16 %v495, %v494
        %v532 = vpack.c.b16 %v497, %v496
        %v533 = vpack.c.b16 %v499, %v498
        %v534 = vpack.c.b16 %v501, %v500
        %v535 = vpack.c.b16 %v503, %v502
        %568 = vmatprep.subr.bf16.mxu0 0
        %569 = vmatpush1.bf16.msra.mxu0 %v511
        %570 = vmatprep.subr.bf16.mxu0 0
        %571 = vmatpush1.bf16.msra.mxu0 %v510
        %572 = vmatprep.subr.bf16.mxu0 0
        %573 = vmatpush1.bf16.msra.mxu0 %v509
        %574 = vmatprep.subr.bf16.mxu0 0
        %575 = vmatpush1.bf16.msra.mxu0 %v508
        %576 = vmatprep.subr.bf16.mxu0 0
        %577 = vmatpush1.bf16.msra.mxu0 %v507
        %578 = vmatprep.subr.bf16.mxu0 0
        %579 = vmatpush1.bf16.msra.mxu0 %v506
        %580 = vmatprep.subr.bf16.mxu0 0
        %581 = vmatpush1.bf16.msra.mxu0 %v505
        %582 = vmatprep.subr.bf16.mxu0 0
        %583 = vmatpush1.bf16.msra.mxu0 %v504
        %584 = vmatprep.subr.bf16.mxu0 0
        %585 = vmatpush2.bf16.msra.mxu0 %v519
        %586 = vmatprep.subr.bf16.mxu0 0
        %587 = vmatpush2.bf16.msra.mxu0 %v518
        %588 = vmatprep.subr.bf16.mxu0 0
        %589 = vmatpush2.bf16.msra.mxu0 %v517
        %590 = vmatprep.subr.bf16.mxu0 0
        %591 = vmatpush2.bf16.msra.mxu0 %v516
        %592 = vmatprep.subr.bf16.mxu0 0
        %593 = vmatpush2.bf16.msra.mxu0 %v515
        %594 = vmatprep.subr.bf16.mxu0 0
        %595 = vmatpush2.bf16.msra.mxu0 %v514
        %596 = vmatprep.subr.bf16.mxu0 0
        %597 = vmatpush2.bf16.msra.mxu0 %v513
        %598 = vmatprep.subr.bf16.mxu0 0
        %599 = vmatpush2.bf16.msra.mxu0 %v512
        %600 = vmatprep.mubr.bf16.mxu0 %v369
        %601 = vmatmul.mubr.bf16.gmra.mxu0 %v368
        %v602 = vpop.f32.mrf.mxu0
        %v603 = vadd.f32 0.0, %v602
        %v604 = vpop.f32.mrf.mxu0
        %v605 = vpop.f32.mrf.mxu0
        %v606 = vadd.f32 0.0, %v605
        %v607 = vpop.f32.mrf.mxu0
        %608 = vdwg.mxu0
        %609 = vmatprep.subr.bf16.mxu0 0
        %610 = vmatpush1.bf16.msra.mxu0 %v527
        %611 = vmatprep.subr.bf16.mxu0 0
        %612 = vmatpush1.bf16.msra.mxu0 %v526
        %613 = vmatprep.subr.bf16.mxu0 0
        %614 = vmatpush1.bf16.msra.mxu0 %v525
        %615 = vmatprep.subr.bf16.mxu0 0
        %616 = vmatpush1.bf16.msra.mxu0 %v524
        %617 = vmatprep.subr.bf16.mxu0 0
        %618 = vmatpush1.bf16.msra.mxu0 %v523
        %619 = vmatprep.subr.bf16.mxu0 0
        %620 = vmatpush1.bf16.msra.mxu0 %v522
        %621 = vmatprep.subr.bf16.mxu0 0
        %622 = vmatpush1.bf16.msra.mxu0 %v521
        %623 = vmatprep.subr.bf16.mxu0 0
        %624 = vmatpush1.bf16.msra.mxu0 %v520
        %625 = vmatprep.subr.bf16.mxu0 0
        %626 = vmatpush2.bf16.msra.mxu0 %v535
        %627 = vmatprep.subr.bf16.mxu0 0
        %628 = vmatpush2.bf16.msra.mxu0 %v534
        %629 = vmatprep.subr.bf16.mxu0 0
        %630 = vmatpush2.bf16.msra.mxu0 %v533
        %631 = vmatprep.subr.bf16.mxu0 0
        %632 = vmatpush2.bf16.msra.mxu0 %v532
        %633 = vmatprep.subr.bf16.mxu0 0
        %634 = vmatpush2.bf16.msra.mxu0 %v531
        %635 = vmatprep.subr.bf16.mxu0 0
        %636 = vmatpush2.bf16.msra.mxu0 %v530
        %637 = vmatprep.subr.bf16.mxu0 0
        %638 = vmatpush2.bf16.msra.mxu0 %v529
        %639 = vmatprep.subr.bf16.mxu0 0
        %640 = vmatpush2.bf16.msra.mxu0 %v528
        %641 = vmatprep.mubr.bf16.mxu0 %v371
        %642 = vmatmul.mubr.bf16.gmra.mxu0 %v370
        %v643 = vpop.f32.mrf.mxu0
        %v644 = vadd.f32 %v603, %v643
        %v645 = vpop.f32.mrf.mxu0
        %v646 = vpop.f32.mrf.mxu0
        %v647 = vadd.f32 %v606, %v646
        %v648 = vpop.f32.mrf.mxu0
        %649 = vdwg.mxu0
        %v650 = vadd.f32 %v286, %v644
        %v651 = vadd.f32 %v287, %v647
        %652 = vst [vmem:[#allocation2] sm:$0xff] %v650
        %653 = vst [vmem:[#allocation2 + $0x8] sm:$0xff] %v651
        %p654 = scmp.eq.s32.totalorder %s21, 7
        // Predicated region
        $region60: #{forward.15} parent=50 // pred_check
          %p655 = pneg %p654
        $region61: #{forward.15} parent=50 // pred_check_branch
          %657 = sbr.rel (%p655) target = $region63
        $region62: #{forward.15} parent=50 // pred_region
          %v658 = vld [vmem:[#allocation2] sm:$0xff]
          %v659 = vld [vmem:[#allocation2 + $0x8] sm:$0xff]
          %v660 = vld [vmem:[%s269] sm:$0x1]
          %v662 = vlaneseq
          %v663 = vshrl.u32 %v662, 7
          %v664 = vsub.s32 0, %v663
          %v665 = vrot.slane %v660, %v664
          %v667 = vadd.f32 %v658, %v665
          %v668 = vadd.f32 %v659, %v665
          %669 = vst [vmem:[%s277] sm:$0xff] %v667
          %670 = vst [vmem:[%s277 + $0x8] sm:$0xff] %v668
        $region63: #{forward.15} parent=50 // pred_fallthru
          _
        %s671 = smul.u32 2, %s19
        %p672 = scmp.lt.s32.totalorder %s671, 1
        %s673 = scalar_select %p672, %s671, 1
        %p674 = scmp.lt.s32.totalorder %s20, 0
        %s675 = scalar_select %p674, %s20, 0
        %s676 = sadd.s32 %s675, %s673
        %s677 = smul.addr %s676, 8
        %s678 = scalar_lea.vmem %s3, %s677
        // Predicated region
        $region64: #{forward.15} parent=50 // pred_check
          %p679 = pneg %p135
        $region65: #{forward.15} parent=50 // pred_check_branch
          %681 = sbr.rel (%p679) target = $region67
        $region66: #{forward.15} parent=50 // pred_region
          %s682 = smul.u32 2, %s19
        $region67: #{forward.15} parent=50 // pred_fallthru
          _
        // Predicated region
        $region68: #{forward.15} parent=50 // pred_check
          %p683 = pneg %p135
        $region69: #{forward.15} parent=50 // pred_check_branch
          %685 = sbr.rel (%p683) target = $region71
        $region70: #{forward.15} parent=50 // pred_region
          %s686 = smul.u32 2, %s19
          %p687 = scmp.lt.s32.totalorder %s686, 1
          %s688 = scalar_select %p687, %s686, 1
          %p689 = scmp.lt.s32.totalorder %s20, 0
          %s690 = scalar_select %p689, %s20, 0
          %s691 = sadd.s32 %s690, %s688
          %s692 = smul.addr %s691, 8
          %s693 = scalar_lea.vmem %s3, %s692
        $region71: #{forward.15} parent=50 // pred_fallthru
          _
      $region51: #{forward.15} parent=5 // pred_fallthru
        _
      %p694 = scmp.le.s32.totalorder 2, %s9
      // Predicated region
      $region72: #{forward.15} parent=5 // pred_check
        %p695 = pneg %p694
      $region73: #{forward.15} parent=5 // pred_check_branch
        %697 = sbr.rel (%p695) target = $region75
      $region74: #{forward.15} parent=5 // pred_region
        %s698 = ssub.s32 %s9, 2
      $region75: #{forward.15} parent=5 // pred_fallthru
        _
    $region6: #{forward.15} parent=1 // loop_footer
      %s13 = sadd.s32 1, %s9
    $region7: #{forward.15} parent=1 // loop_footer_branch
      %8 = sbr.rel target = $region3
    $region8: #{forward.15} parent=1 // loop_exit
      _

</llo_original>
